<compile_context>
chip_gen: v7x
topology: tpu7x:2x2x1
jax: 0.10.0
libtpu: 0.0.40
codegen_flags: <defaults>
</compile_context>

<pallas_src>
import functools
import math

import jax
import jax.numpy as jnp
from jax.experimental import pallas as pl
from jax.experimental.pallas import tpu as pltpu


def _elu(x):
    # TODO(synk): jnp.expm1 would be marginally more accurate near x~0.
    return jnp.where(x > 0, x, jnp.exp(x) - 1.0)


def _nbytes(shape, dtype):
    return math.prod(shape) * jnp.dtype(dtype).itemsize


def _vmem_limit(block_bytes, scratch_bytes):
    # double-buffered in/out blocks + persistent scratch + headroom,
    # clamped to stay under v7x's 64 MiB physical VMEM.
    need = 2 * block_bytes + scratch_bytes + (2 << 20)
    return int(min(max(need, 4 << 20), 48 << 20))


def _compiler_params(vmem_limit_bytes):
    return pltpu.CompilerParams(
        dimension_semantics=("parallel",),
        vmem_limit_bytes=int(vmem_limit_bytes),
    )


# --------------------------- kernel 1: conv1 + stats ------------------------

def _conv1_stats_kernel(x_ref, w1_ref, y1_ref, s1_ref, q1_ref,
                        pad_ref, col_ref, *, H, W):
    Cin = x_ref.shape[3]
    C = y1_ref.shape[3]

    # In-kernel 1-px zero padding into a persistent bf16 VMEM scratch: only
    # the border is (re)zeroed each step (megacore-safe), interior overwritten.
    # TODO(synk): the two column writes are sublane-strided masked stores;
    # fold into the im2col as VALU selects if they ever show up in the bundle.
    pad_ref[0:1, :, :] = jnp.zeros((1, W + 2, Cin), jnp.bfloat16)
    pad_ref[H + 1:H + 2, :, :] = jnp.zeros((1, W + 2, Cin), jnp.bfloat16)
    pad_ref[:, 0:1, :] = jnp.zeros((H + 2, 1, Cin), jnp.bfloat16)
    pad_ref[:, W + 1:W + 2, :] = jnp.zeros((H + 2, 1, Cin), jnp.bfloat16)
    pad_ref[1:H + 1, 1:W + 1, :] = x_ref[0]

    # 3x3 conv = three accumulated K=3*Cin MXU matmuls (one per kernel row);
    # bounds the im2col scratch to 3 tap copies instead of 9.
    acc = jnp.zeros((H * W, C), jnp.float32)
    for dy in range(3):
        for dx in range(3):
            col_ref[:, dx * Cin:(dx + 1) * Cin] = (
                pad_ref[dy:dy + H, dx:dx + W, :].reshape(H * W, Cin))
        acc = acc + jnp.dot(col_ref[...], w1_ref[dy],
                            preferred_element_type=jnp.float32)

    # Per-tile partial BN statistics in f32, then one cast to bf16 for the
    # HBM round-trip (halves y1 write + read bytes).
    s1_ref[...] = jnp.sum(acc, axis=0).reshape(1, 1, C)
    q1_ref[...] = jnp.sum(acc * acc, axis=0).reshape(1, 1, C)
    y1_ref[...] = acc.astype(jnp.bfloat16).reshape(1, H, W, C)


# ------------------ kernel 2: BN1 + ELU + conv2 + stats ---------------------

def _bn1_elu_conv2_stats_kernel(y1_ref, sc1_ref, sh1_ref, w2_ref,
                                y2_ref, s2_ref, q2_ref,
                                pad_ref, col_ref, *, H, W):
    C = y2_ref.shape[3]

    # BN1 pre-folded to a single multiply-add, then ELU, all in f32
    # (v5e has no bf16 VPU).
    h1 = _elu(y1_ref[0].astype(jnp.float32) * sc1_ref[...] + sh1_ref[...])

    # bf16 pad scratch; h1 is cast to bf16 exactly once here.
    pad_ref[0:1, :, :] = jnp.zeros((1, W + 2, C), jnp.bfloat16)
    pad_ref[H + 1:H + 2, :, :] = jnp.zeros((1, W + 2, C), jnp.bfloat16)
    pad_ref[:, 0:1, :] = jnp.zeros((H + 2, 1, C), jnp.bfloat16)
    pad_ref[:, W + 1:W + 2, :] = jnp.zeros((H + 2, 1, C), jnp.bfloat16)
    pad_ref[1:H + 1, 1:W + 1, :] = h1.astype(jnp.bfloat16)

    acc = jnp.zeros((H * W, C), jnp.float32)
    for dy in range(3):
        for dx in range(3):
            col_ref[:, dx * C:(dx + 1) * C] = (
                pad_ref[dy:dy + H, dx:dx + W, :].reshape(H * W, C))
        acc = acc + jnp.dot(col_ref[...], w2_ref[dy],
                            preferred_element_type=jnp.float32)

    s2_ref[...] = jnp.sum(acc, axis=0).reshape(1, 1, C)
    q2_ref[...] = jnp.sum(acc * acc, axis=0).reshape(1, 1, C)
    y2_ref[...] = acc.astype(jnp.bfloat16).reshape(1, H, W, C)


# ------------------ kernel 3: BN2 + residual add + ELU ----------------------

def _bn2_residual_elu_kernel(y2_ref, sc2_ref, sh2_ref, xres_ref, out_ref):
    # Lane-dense (1, 1, H*W*C) blocks; scale/shift pre-tiled per channel.
    out_ref[...] = _elu(y2_ref[...].astype(jnp.float32) * sc2_ref[...]
                        + sh2_ref[...] + xres_ref[...].astype(jnp.float32))


# ------------------------------ pallas_call wrappers ------------------------

def _conv1_call(x_bf16, w1_3d, H, W, C):
    N, _, _, Cin = x_bf16.shape
    kernel = functools.partial(_conv1_stats_kernel, H=H, W=W)
    block_bytes = (_nbytes((1, H, W, Cin), jnp.bfloat16)
                   + _nbytes(w1_3d.shape, jnp.bfloat16)
                   + _nbytes((1, H, W, C), jnp.bfloat16)
                   + 2 * _nbytes((1, 1, C), jnp.float32))
    scratch_bytes = (_nbytes((H + 2, W + 2, Cin), jnp.bfloat16)
                     + _nbytes((H * W, 3 * Cin), jnp.bfloat16))
    return pl.pallas_call(
        kernel,
        out_shape=(jax.ShapeDtypeStruct((N, H, W, C), jnp.bfloat16),
                   jax.ShapeDtypeStruct((N, 1, C), jnp.float32),
                   jax.ShapeDtypeStruct((N, 1, C), jnp.float32)),
        grid_spec=pltpu.PrefetchScalarGridSpec(
            num_scalar_prefetch=0,
            grid=(N,),
            in_specs=[
                pl.BlockSpec((1, H, W, Cin), lambda n: (n, 0, 0, 0)),
                pl.BlockSpec(tuple(w1_3d.shape), lambda n: (0, 0, 0)),
            ],
            out_specs=[
                pl.BlockSpec((1, H, W, C), lambda n: (n, 0, 0, 0)),
                pl.BlockSpec((1, 1, C), lambda n: (n, 0, 0)),
                pl.BlockSpec((1, 1, C), lambda n: (n, 0, 0)),
            ],
            scratch_shapes=[pltpu.VMEM((H + 2, W + 2, Cin), jnp.bfloat16),
                            pltpu.VMEM((H * W, 3 * Cin), jnp.bfloat16)],
        ),
        compiler_params=_compiler_params(_vmem_limit(block_bytes, scratch_bytes)),
    )(x_bf16, w1_3d)


def _conv2_call(y1, sc1, sh1, w2_3d, H, W, C):
    N = y1.shape[0]
    kernel = functools.partial(_bn1_elu_conv2_stats_kernel, H=H, W=W)
    block_bytes = (_nbytes((1, H, W, C), jnp.bfloat16)
                   + 2 * _nbytes((1, C), jnp.float32)
                   + _nbytes(w2_3d.shape, jnp.bfloat16)
                   + _nbytes((1, H, W, C), jnp.bfloat16)
                   + 2 * _nbytes((1, 1, C), jnp.float32))
    scratch_bytes = (_nbytes((H + 2, W + 2, C), jnp.bfloat16)
                     + _nbytes((H * W, 3 * C), jnp.bfloat16))
    return pl.pallas_call(
        kernel,
        out_shape=(jax.ShapeDtypeStruct((N, H, W, C), jnp.bfloat16),
                   jax.ShapeDtypeStruct((N, 1, C), jnp.float32),
                   jax.ShapeDtypeStruct((N, 1, C), jnp.float32)),
        grid_spec=pltpu.PrefetchScalarGridSpec(
            num_scalar_prefetch=0,
            grid=(N,),
            in_specs=[
                pl.BlockSpec((1, H, W, C), lambda n: (n, 0, 0, 0)),
                pl.BlockSpec((1, C), lambda n: (0, 0)),
                pl.BlockSpec((1, C), lambda n: (0, 0)),
                pl.BlockSpec(tuple(w2_3d.shape), lambda n: (0, 0, 0)),
            ],
            out_specs=[
                pl.BlockSpec((1, H, W, C), lambda n: (n, 0, 0, 0)),
                pl.BlockSpec((1, 1, C), lambda n: (n, 0, 0)),
                pl.BlockSpec((1, 1, C), lambda n: (n, 0, 0)),
            ],
            scratch_shapes=[pltpu.VMEM((H + 2, W + 2, C), jnp.bfloat16),
                            pltpu.VMEM((H * W, 3 * C), jnp.bfloat16)],
        ),
        compiler_params=_compiler_params(_vmem_limit(block_bytes, scratch_bytes)),
    )(y1, sc1, sh1, w2_3d)


def _final_call(y2_flat, sc2_flat, sh2_flat, xres_flat):
    N, _, HWC = y2_flat.shape
    block_bytes = (2 * _nbytes((1, 1, HWC), jnp.bfloat16)
                   + 2 * _nbytes((1, 1, HWC), jnp.float32)
                   + _nbytes((1, 1, HWC), jnp.float32))
    return pl.pallas_call(
        _bn2_residual_elu_kernel,
        out_shape=jax.ShapeDtypeStruct((N, 1, HWC), jnp.float32),
        grid_spec=pltpu.PrefetchScalarGridSpec(
            num_scalar_prefetch=0,
            grid=(N,),
            in_specs=[
                pl.BlockSpec((1, 1, HWC), lambda n: (n, 0, 0)),
                pl.BlockSpec((1, 1, HWC), lambda n: (0, 0, 0)),
                pl.BlockSpec((1, 1, HWC), lambda n: (0, 0, 0)),
                pl.BlockSpec((1, 1, HWC), lambda n: (n, 0, 0)),
            ],
            out_specs=pl.BlockSpec((1, 1, HWC), lambda n: (n, 0, 0)),
        ),
        compiler_params=_compiler_params(_vmem_limit(block_bytes, 0)),
    )(y2_flat, sc2_flat, sh2_flat, xres_flat)


# ------------------------------ public wrapper ------------------------------

def _fold_bn(s, q, count, gamma, beta, eps):
    mean = s / count
    var = jnp.maximum(q / count - mean * mean, 0.0)   # biased (training-mode) var
    scale = gamma * jax.lax.rsqrt(var + eps)
    shift = beta - mean * scale
    return scale, shift                                # (C,), (C,)


def residual_block_2d(x_nchw, w1, g1, b1, w2, g2, b2, *, eps=1e-5):
    """x_nchw: (N, C, H, W) f32; w1/w2: (3, 3, C_in, C_out) HWIO. Returns NCHW f32."""
    N, Cin, H, W = x_nchw.shape
    C = w1.shape[-1]
    assert Cin == C, "residual add requires in_channels == out_channels (downsample=None)"

    # NCHW -> NHWC bf16: one materialization, reused as conv1 input and as the
    # bf16 residual for K3.  No pre-padded HBM copy (padding is done in-kernel).
    x_bf16 = jnp.transpose(x_nchw, (0, 2, 3, 1)).astype(jnp.bfloat16)

    # Weights (3, 3, Cin, C) HWIO -> (3, 3*Cin, C): one contiguous K=3*Cin slab
    # per kernel row for the 3-group accumulated matmul.
    w1_3d = w1.astype(jnp.bfloat16).reshape(3, 3 * Cin, C)
    w2_3d = w2.astype(jnp.bfloat16).reshape(3, 3 * C, C)

    count = float(N * H * W)

    # pass 1: conv1 + per-tile partial stats
    y1, s1, q1 = _conv1_call(x_bf16, w1_3d, H, W, C)
    sc1, sh1 = _fold_bn(jnp.sum(s1, axis=(0, 1)), jnp.sum(q1, axis=(0, 1)),
                        count, g1.astype(jnp.float32), b1.astype(jnp.float32), eps)

    # pass 2: BN1 + ELU + conv2 + per-tile partial stats
    y2, s2, q2 = _conv2_call(y1, sc1.reshape(1, C), sh1.reshape(1, C),
                             w2_3d, H, W, C)
    sc2, sh2 = _fold_bn(jnp.sum(s2, axis=(0, 1)), jnp.sum(q2, axis=(0, 1)),
                        count, g2.astype(jnp.float32), b2.astype(jnp.float32), eps)

    # pass 3: BN2 + residual add + ELU, lane-dense flattened blocks.
    HWC = H * W * C
    out_flat = _final_call(
        y2.reshape(N, 1, HWC),
        jnp.tile(sc2, H * W).reshape(1, 1, HWC),
        jnp.tile(sh2, H * W).reshape(1, 1, HWC),
        x_bf16.reshape(N, 1, HWC))
    return jnp.transpose(out_flat.reshape(N, H, W, C), (0, 3, 1, 2))


# ------------------------------ pure-JAX reference --------------------------

def _reference(x_nchw, w1, g1, b1, w2, g2, b2, eps=1e-5):
    x = jnp.transpose(x_nchw, (0, 2, 3, 1))

    def conv(h, w):
        return jax.lax.conv_general_dilated(
            h, w, window_strides=(1, 1), padding=((1, 1), (1, 1)),
            dimension_numbers=("NHWC", "HWIO", "NHWC"))

    def bn(h, g, b):
        m = jnp.mean(h, axis=(0, 1, 2))
        v = jnp.mean((h - m) ** 2, axis=(0, 1, 2))
        return g * (h - m) * jax.lax.rsqrt(v + eps) + b

    h = _elu(bn(conv(x, w1), g1, b1))
    h = bn(conv(h, w2), g2, b2) + x
    return jnp.transpose(_elu(h), (0, 3, 1, 2))


if __name__ == "__main__":
    key = jax.random.PRNGKey(0)
    kx, kw1, kw2, kg1, kb1, kg2, kb2 = jax.random.split(key, 7)

    N, C, H, W = 2, 4, 16, 16   # in_channels == out_channels == 4, stride=1

    x = jax.random.normal(kx, (N, C, H, W), jnp.float32)

    # conv weights stored HWIO = (3, 3, C_in, C_out), bias=False
    w1 = 0.1 * jax.random.normal(kw1, (3, 3, C, C), jnp.float32)
    w2 = 0.1 * jax.random.normal(kw2, (3, 3, C, C), jnp.float32)

    # BatchNorm affine params (near PyTorch init gamma=1, beta=0)
    g1 = 1.0 + 0.1 * jax.random.normal(kg1, (C,), jnp.float32)
    b1 = 0.05 * jax.random.normal(kb1, (C,), jnp.float32)
    g2 = 1.0 + 0.1 * jax.random.normal(kg2, (C,), jnp.float32)
    b2 = 0.05 * jax.random.normal(kb2, (C,), jnp.float32)

    fn = jax.jit(residual_block_2d)
    out = fn(x, w1, g1, b1, w2, g2, b2)
    jax.block_until_ready(out)

    ref = _reference(x, w1, g1, b1, w2, g2, b2)
    err = float(jnp.max(jnp.abs(out - ref)))

    assert out.shape == (N, C, H, W), out.shape
    assert bool(jnp.all(jnp.isfinite(out)))
    # loose tolerance: bf16 matmul inputs, bf16 y1/y2/residual, f32 accumulation
    assert err < 0.2, f"max abs err vs f32 reference: {err}"
    print("KERNEL_OK")
</pallas_src>

<mosaic_0001>
module attributes {stable_mosaic.version = 11 : i64} {
  func.func @_conv1_stats_kernel(%arg0: i32, %arg1: memref<1x16x16x4xbf16, #tpu.memory_space<vmem>>, %arg2: memref<3x12x4xbf16, #tpu.memory_space<vmem>>, %arg3: memref<1x16x16x4xbf16, #tpu.memory_space<vmem>>, %arg4: memref<1x1x4xf32, #tpu.memory_space<vmem>>, %arg5: memref<1x1x4xf32, #tpu.memory_space<vmem>>, %arg6: memref<18x18x4xbf16, #tpu.memory_space<vmem>>, %arg7: memref<256x12xbf16, #tpu.memory_space<vmem>>) attributes {dimension_semantics = [#tpu.dimension_semantics<parallel>], iteration_bounds = array<i64: 2>, scalar_prefetch = 0 : i64, scratch_operands = 2 : i64, tpu.core_type = #tpu.core_type<tc>, window_params = [{transform_indices = @transform_0, window_bounds = array<i64: 1, 16, 16, 4>}, {pipeline_mode = #tpu.pipeline_mode<synchronous>, transform_indices = @transform_1, window_bounds = array<i64: 3, 12, 4>}, {transform_indices = @transform_2, window_bounds = array<i64: 1, 16, 16, 4>}, {transform_indices = @transform_3, window_bounds = array<i64: 1, 1, 4>}, {transform_indices = @transform_4, window_bounds = array<i64: 1, 1, 4>}]} {
    %cst = arith.constant 0.000000e+00 : bf16
    %0 = vector.broadcast %cst : bf16 to vector<1x18x4xbf16>
    %c0 = arith.constant 0 : index
    %c0_0 = arith.constant 0 : index
    %c0_1 = arith.constant 0 : index
    %1 = vector.load %arg6[%c0, %c0_0, %c0_1] : memref<18x18x4xbf16, #tpu.memory_space<vmem>>, vector<1x18x4xbf16>
    tpu.vector_store %arg6[%c0, %c0_0, %c0_1], %0 {strides = array<i32>} : memref<18x18x4xbf16, #tpu.memory_space<vmem>>, vector<1x18x4xbf16>,
    %cst_2 = arith.constant 0.000000e+00 : bf16
    %2 = vector.broadcast %cst_2 : bf16 to vector<1x18x4xbf16>
    %c17 = arith.constant 17 : index
    %c0_3 = arith.constant 0 : index
    %c0_4 = arith.constant 0 : index
    %3 = vector.load %arg6[%c17, %c0_3, %c0_4] : memref<18x18x4xbf16, #tpu.memory_space<vmem>>, vector<1x18x4xbf16>
    tpu.vector_store %arg6[%c17, %c0_3, %c0_4], %2 {strides = array<i32>} : memref<18x18x4xbf16, #tpu.memory_space<vmem>>, vector<1x18x4xbf16>,
    %cst_5 = arith.constant 0.000000e+00 : bf16
    %4 = vector.broadcast %cst_5 : bf16 to vector<18x1x4xbf16>
    %c0_6 = arith.constant 0 : index
    %c0_7 = arith.constant 0 : index
    %c0_8 = arith.constant 0 : index
    %5 = vector.load %arg6[%c0_6, %c0_7, %c0_8] : memref<18x18x4xbf16, #tpu.memory_space<vmem>>, vector<18x1x4xbf16>
    tpu.vector_store %arg6[%c0_6, %c0_7, %c0_8], %4 {strides = array<i32>} : memref<18x18x4xbf16, #tpu.memory_space<vmem>>, vector<18x1x4xbf16>,
    %cst_9 = arith.constant 0.000000e+00 : bf16
    %6 = vector.broadcast %cst_9 : bf16 to vector<18x1x4xbf16>
    %c0_10 = arith.constant 0 : index
    %c17_11 = arith.constant 17 : index
    %c0_12 = arith.constant 0 : index
    %7 = vector.load %arg6[%c0_10, %c17_11, %c0_12] : memref<18x18x4xbf16, #tpu.memory_space<vmem>>, vector<18x1x4xbf16>
    tpu.vector_store %arg6[%c0_10, %c17_11, %c0_12], %6 {strides = array<i32>} : memref<18x18x4xbf16, #tpu.memory_space<vmem>>, vector<18x1x4xbf16>,
    %c0_13 = arith.constant 0 : index
    %c0_14 = arith.constant 0 : index
    %c0_15 = arith.constant 0 : index
    %c0_16 = arith.constant 0 : index
    %8 = vector.load %arg1[%c0_13, %c0_14, %c0_15, %c0_16] : memref<1x16x16x4xbf16, #tpu.memory_space<vmem>>, vector<1x16x16x4xbf16>
    %9 = vector.shape_cast %8 : vector<1x16x16x4xbf16> to vector<16x16x4xbf16>
    %c1 = arith.constant 1 : index
    %c1_17 = arith.constant 1 : index
    %c0_18 = arith.constant 0 : index
    %10 = vector.load %arg6[%c1, %c1_17, %c0_18] : memref<18x18x4xbf16, #tpu.memory_space<vmem>>, vector<16x16x4xbf16>
    tpu.vector_store %arg6[%c1, %c1_17, %c0_18], %9 {strides = array<i32>} : memref<18x18x4xbf16, #tpu.memory_space<vmem>>, vector<16x16x4xbf16>,
    %cst_19 = arith.constant 0.000000e+00 : f32
    %11 = vector.broadcast %cst_19 : f32 to vector<256x4xf32>
    %c0_20 = arith.constant 0 : index
    %c0_21 = arith.constant 0 : index
    %c0_22 = arith.constant 0 : index
    %12 = vector.load %arg6[%c0_20, %c0_21, %c0_22] : memref<18x18x4xbf16, #tpu.memory_space<vmem>>, vector<16x16x4xbf16>
    %13 = vector.shape_cast %12 : vector<16x16x4xbf16> to vector<256x4xbf16>
    %c0_23 = arith.constant 0 : index
    %c0_24 = arith.constant 0 : index
    %14 = vector.load %arg7[%c0_23, %c0_24] : memref<256x12xbf16, #tpu.memory_space<vmem>>, vector<256x4xbf16>
    tpu.vector_store %arg7[%c0_23, %c0_24], %13 {strides = array<i32>} : memref<256x12xbf16, #tpu.memory_space<vmem>>, vector<256x4xbf16>,
    %c0_25 = arith.constant 0 : index
    %c1_26 = arith.constant 1 : index
    %c0_27 = arith.constant 0 : index
    %15 = vector.load %arg6[%c0_25, %c1_26, %c0_27] : memref<18x18x4xbf16, #tpu.memory_space<vmem>>, vector<16x16x4xbf16>
    %16 = vector.shape_cast %15 : vector<16x16x4xbf16> to vector<256x4xbf16>
    %c0_28 = arith.constant 0 : index
    %c4 = arith.constant 4 : index
    %17 = vector.load %arg7[%c0_28, %c4] : memref<256x12xbf16, #tpu.memory_space<vmem>>, vector<256x4xbf16>
    tpu.vector_store %arg7[%c0_28, %c4], %16 {strides = array<i32>} : memref<256x12xbf16, #tpu.memory_space<vmem>>, vector<256x4xbf16>,
    %c0_29 = arith.constant 0 : index
    %c2 = arith.constant 2 : index
    %c0_30 = arith.constant 0 : index
    %18 = vector.load %arg6[%c0_29, %c2, %c0_30] : memref<18x18x4xbf16, #tpu.memory_space<vmem>>, vector<16x16x4xbf16>
    %19 = vector.shape_cast %18 : vector<16x16x4xbf16> to vector<256x4xbf16>
    %c0_31 = arith.constant 0 : index
    %c8 = arith.constant 8 : index
    %20 = vector.load %arg7[%c0_31, %c8] : memref<256x12xbf16, #tpu.memory_space<vmem>>, vector<256x4xbf16>
    tpu.vector_store %arg7[%c0_31, %c8], %19 {strides = array<i32>} : memref<256x12xbf16, #tpu.memory_space<vmem>>, vector<256x4xbf16>,
    %c0_32 = arith.constant 0 : index
    %c0_33 = arith.constant 0 : index
    %21 = vector.load %arg7[%c0_32, %c0_33] : memref<256x12xbf16, #tpu.memory_space<vmem>>, vector<256x12xbf16>
    %c0_34 = arith.constant 0 : index
    %c0_35 = arith.constant 0 : index
    %c0_36 = arith.constant 0 : index
    %22 = vector.load %arg2[%c0_34, %c0_35, %c0_36] : memref<3x12x4xbf16, #tpu.memory_space<vmem>>, vector<1x12x4xbf16>
    %23 = vector.shape_cast %22 : vector<1x12x4xbf16> to vector<12x4xbf16>
    %cst_37 = arith.constant dense<0.000000e+00> : vector<256x4xf32>
    %24 = tpu.matmul %21, %23, %cst_37 {dimension_numbers = #tpu.dot_dimension_numbers<[1], [0], [0], [1], [0, 0, 1, 1], [], []>} : vector<256x12xbf16>, vector<12x4xbf16>, vector<256x4xf32> -> vector<256x4xf32>
    %25 = arith.addf %11, %24 : vector<256x4xf32>
    %c1_38 = arith.constant 1 : index
    %c0_39 = arith.constant 0 : index
    %c0_40 = arith.constant 0 : index
    %26 = vector.load %arg6[%c1_38, %c0_39, %c0_40] : memref<18x18x4xbf16, #tpu.memory_space<vmem>>, vector<16x16x4xbf16>
    %27 = vector.shape_cast %26 : vector<16x16x4xbf16> to vector<256x4xbf16>
    %c0_41 = arith.constant 0 : index
    %c0_42 = arith.constant 0 : index
    %28 = vector.load %arg7[%c0_41, %c0_42] : memref<256x12xbf16, #tpu.memory_space<vmem>>, vector<256x4xbf16>
    tpu.vector_store %arg7[%c0_41, %c0_42], %27 {strides = array<i32>} : memref<256x12xbf16, #tpu.memory_space<vmem>>, vector<256x4xbf16>,
    %c1_43 = arith.constant 1 : index
    %c1_44 = arith.constant 1 : index
    %c0_45 = arith.constant 0 : index
    %29 = vector.load %arg6[%c1_43, %c1_44, %c0_45] : memref<18x18x4xbf16, #tpu.memory_space<vmem>>, vector<16x16x4xbf16>
    %30 = vector.shape_cast %29 : vector<16x16x4xbf16> to vector<256x4xbf16>
    %c0_46 = arith.constant 0 : index
    %c4_47 = arith.constant 4 : index
    %31 = vector.load %arg7[%c0_46, %c4_47] : memref<256x12xbf16, #tpu.memory_space<vmem>>, vector<256x4xbf16>
    tpu.vector_store %arg7[%c0_46, %c4_47], %30 {strides = array<i32>} : memref<256x12xbf16, #tpu.memory_space<vmem>>, vector<256x4xbf16>,
    %c1_48 = arith.constant 1 : index
    %c2_49 = arith.constant 2 : index
    %c0_50 = arith.constant 0 : index
    %32 = vector.load %arg6[%c1_48, %c2_49, %c0_50] : memref<18x18x4xbf16, #tpu.memory_space<vmem>>, vector<16x16x4xbf16>
    %33 = vector.shape_cast %32 : vector<16x16x4xbf16> to vector<256x4xbf16>
    %c0_51 = arith.constant 0 : index
    %c8_52 = arith.constant 8 : index
    %34 = vector.load %arg7[%c0_51, %c8_52] : memref<256x12xbf16, #tpu.memory_space<vmem>>, vector<256x4xbf16>
    tpu.vector_store %arg7[%c0_51, %c8_52], %33 {strides = array<i32>} : memref<256x12xbf16, #tpu.memory_space<vmem>>, vector<256x4xbf16>,
    %c0_53 = arith.constant 0 : index
    %c0_54 = arith.constant 0 : index
    %35 = vector.load %arg7[%c0_53, %c0_54] : memref<256x12xbf16, #tpu.memory_space<vmem>>, vector<256x12xbf16>
    %c1_55 = arith.constant 1 : index
    %c0_56 = arith.constant 0 : index
    %c0_57 = arith.constant 0 : index
    %36 = vector.load %arg2[%c1_55, %c0_56, %c0_57] : memref<3x12x4xbf16, #tpu.memory_space<vmem>>, vector<1x12x4xbf16>
    %37 = vector.shape_cast %36 : vector<1x12x4xbf16> to vector<12x4xbf16>
    %cst_58 = arith.constant dense<0.000000e+00> : vector<256x4xf32>
    %38 = tpu.matmul %35, %37, %cst_58 {dimension_numbers = #tpu.dot_dimension_numbers<[1], [0], [0], [1], [0, 0, 1, 1], [], []>} : vector<256x12xbf16>, vector<12x4xbf16>, vector<256x4xf32> -> vector<256x4xf32>
    %39 = arith.addf %25, %38 : vector<256x4xf32>
    %c2_59 = arith.constant 2 : index
    %c0_60 = arith.constant 0 : index
    %c0_61 = arith.constant 0 : index
    %40 = vector.load %arg6[%c2_59, %c0_60, %c0_61] : memref<18x18x4xbf16, #tpu.memory_space<vmem>>, vector<16x16x4xbf16>
    %41 = vector.shape_cast %40 : vector<16x16x4xbf16> to vector<256x4xbf16>
    %c0_62 = arith.constant 0 : index
    %c0_63 = arith.constant 0 : index
    %42 = vector.load %arg7[%c0_62, %c0_63] : memref<256x12xbf16, #tpu.memory_space<vmem>>, vector<256x4xbf16>
    tpu.vector_store %arg7[%c0_62, %c0_63], %41 {strides = array<i32>} : memref<256x12xbf16, #tpu.memory_space<vmem>>, vector<256x4xbf16>,
    %c2_64 = arith.constant 2 : index
    %c1_65 = arith.constant 1 : index
    %c0_66 = arith.constant 0 : index
    %43 = vector.load %arg6[%c2_64, %c1_65, %c0_66] : memref<18x18x4xbf16, #tpu.memory_space<vmem>>, vector<16x16x4xbf16>
    %44 = vector.shape_cast %43 : vector<16x16x4xbf16> to vector<256x4xbf16>
    %c0_67 = arith.constant 0 : index
    %c4_68 = arith.constant 4 : index
    %45 = vector.load %arg7[%c0_67, %c4_68] : memref<256x12xbf16, #tpu.memory_space<vmem>>, vector<256x4xbf16>
    tpu.vector_store %arg7[%c0_67, %c4_68], %44 {strides = array<i32>} : memref<256x12xbf16, #tpu.memory_space<vmem>>, vector<256x4xbf16>,
    %c2_69 = arith.constant 2 : index
    %c2_70 = arith.constant 2 : index
    %c0_71 = arith.constant 0 : index
    %46 = vector.load %arg6[%c2_69, %c2_70, %c0_71] : memref<18x18x4xbf16, #tpu.memory_space<vmem>>, vector<16x16x4xbf16>
    %47 = vector.shape_cast %46 : vector<16x16x4xbf16> to vector<256x4xbf16>
    %c0_72 = arith.constant 0 : index
    %c8_73 = arith.constant 8 : index
    %48 = vector.load %arg7[%c0_72, %c8_73] : memref<256x12xbf16, #tpu.memory_space<vmem>>, vector<256x4xbf16>
    tpu.vector_store %arg7[%c0_72, %c8_73], %47 {strides = array<i32>} : memref<256x12xbf16, #tpu.memory_space<vmem>>, vector<256x4xbf16>,
    %c0_74 = arith.constant 0 : index
    %c0_75 = arith.constant 0 : index
    %49 = vector.load %arg7[%c0_74, %c0_75] : memref<256x12xbf16, #tpu.memory_space<vmem>>, vector<256x12xbf16>
    %c2_76 = arith.constant 2 : index
    %c0_77 = arith.constant 0 : index
    %c0_78 = arith.constant 0 : index
    %50 = vector.load %arg2[%c2_76, %c0_77, %c0_78] : memref<3x12x4xbf16, #tpu.memory_space<vmem>>, vector<1x12x4xbf16>
    %51 = vector.shape_cast %50 : vector<1x12x4xbf16> to vector<12x4xbf16>
    %cst_79 = arith.constant dense<0.000000e+00> : vector<256x4xf32>
    %52 = tpu.matmul %49, %51, %cst_79 {dimension_numbers = #tpu.dot_dimension_numbers<[1], [0], [0], [1], [0, 0, 1, 1], [], []>} : vector<256x12xbf16>, vector<12x4xbf16>, vector<256x4xf32> -> vector<256x4xf32>
    %53 = arith.addf %39, %52 : vector<256x4xf32>
    %cst_80 = arith.constant dense<0.000000e+00> : vector<4xf32>
    %54 = vector.multi_reduction <add>, %53, %cst_80 [0] : vector<256x4xf32> to vector<4xf32>
    %55 = vector.shape_cast %54 : vector<4xf32> to vector<1x1x4xf32>
    %c0_81 = arith.constant 0 : index
    %c0_82 = arith.constant 0 : index
    %c0_83 = arith.constant 0 : index
    %56 = vector.load %arg4[%c0_81, %c0_82, %c0_83] : memref<1x1x4xf32, #tpu.memory_space<vmem>>, vector<1x1x4xf32>
    tpu.vector_store %arg4[%c0_81, %c0_82, %c0_83], %55 {strides = array<i32>} : memref<1x1x4xf32, #tpu.memory_space<vmem>>, vector<1x1x4xf32>,
    %57 = arith.mulf %53, %53 : vector<256x4xf32>
    %cst_84 = arith.constant dense<0.000000e+00> : vector<4xf32>
    %58 = vector.multi_reduction <add>, %57, %cst_84 [0] : vector<256x4xf32> to vector<4xf32>
    %59 = vector.shape_cast %58 : vector<4xf32> to vector<1x1x4xf32>
    %c0_85 = arith.constant 0 : index
    %c0_86 = arith.constant 0 : index
    %c0_87 = arith.constant 0 : index
    %60 = vector.load %arg5[%c0_85, %c0_86, %c0_87] : memref<1x1x4xf32, #tpu.memory_space<vmem>>, vector<1x1x4xf32>
    tpu.vector_store %arg5[%c0_85, %c0_86, %c0_87], %59 {strides = array<i32>} : memref<1x1x4xf32, #tpu.memory_space<vmem>>, vector<1x1x4xf32>,
    %61 = arith.truncf %53 : vector<256x4xf32> to vector<256x4xbf16>
    %62 = vector.shape_cast %61 : vector<256x4xbf16> to vector<1x16x16x4xbf16>
    %c0_88 = arith.constant 0 : index
    %c0_89 = arith.constant 0 : index
    %c0_90 = arith.constant 0 : index
    %c0_91 = arith.constant 0 : index
    %63 = vector.load %arg3[%c0_88, %c0_89, %c0_90, %c0_91] : memref<1x16x16x4xbf16, #tpu.memory_space<vmem>>, vector<1x16x16x4xbf16>
    tpu.vector_store %arg3[%c0_88, %c0_89, %c0_90, %c0_91], %62 {strides = array<i32>} : memref<1x16x16x4xbf16, #tpu.memory_space<vmem>>, vector<1x16x16x4xbf16>,
    return
  }
  func.func @transform_0(%arg0: i32) -> (i32, i32, i32, i32) {
    %c0_i32 = arith.constant 0 : i32
    %c0_i32_0 = arith.constant 0 : i32
    %c0_i32_1 = arith.constant 0 : i32
    %c0_i32_2 = arith.constant 0 : i32
    return %arg0, %c0_i32, %c0_i32_0, %c0_i32_1 : i32, i32, i32, i32
  }
  func.func @transform_1(%arg0: i32) -> (i32, i32, i32) {
    %c0_i32 = arith.constant 0 : i32
    %c0_i32_0 = arith.constant 0 : i32
    %c0_i32_1 = arith.constant 0 : i32
    %c0_i32_2 = arith.constant 0 : i32
    return %c0_i32, %c0_i32_0, %c0_i32_1 : i32, i32, i32
  }
  func.func @transform_2(%arg0: i32) -> (i32, i32, i32, i32) {
    %c0_i32 = arith.constant 0 : i32
    %c0_i32_0 = arith.constant 0 : i32
    %c0_i32_1 = arith.constant 0 : i32
    %c0_i32_2 = arith.constant 0 : i32
    return %arg0, %c0_i32, %c0_i32_0, %c0_i32_1 : i32, i32, i32, i32
  }
  func.func @transform_3(%arg0: i32) -> (i32, i32, i32) {
    %c0_i32 = arith.constant 0 : i32
    %c0_i32_0 = arith.constant 0 : i32
    %c0_i32_1 = arith.constant 0 : i32
    return %arg0, %c0_i32, %c0_i32_0 : i32, i32, i32
  }
  func.func @transform_4(%arg0: i32) -> (i32, i32, i32) {
    %c0_i32 = arith.constant 0 : i32
    %c0_i32_0 = arith.constant 0 : i32
    %c0_i32_1 = arith.constant 0 : i32
    return %arg0, %c0_i32, %c0_i32_0 : i32, i32, i32
  }
}

module attributes {stable_mosaic.version = 11 : i64} {
  func.func @_bn1_elu_conv2_stats_kernel(%arg0: i32, %arg1: memref<1x16x16x4xbf16, #tpu.memory_space<vmem>>, %arg2: memref<1x4xf32, #tpu.memory_space<vmem>>, %arg3: memref<1x4xf32, #tpu.memory_space<vmem>>, %arg4: memref<3x12x4xbf16, #tpu.memory_space<vmem>>, %arg5: memref<1x16x16x4xbf16, #tpu.memory_space<vmem>>, %arg6: memref<1x1x4xf32, #tpu.memory_space<vmem>>, %arg7: memref<1x1x4xf32, #tpu.memory_space<vmem>>, %arg8: memref<18x18x4xbf16, #tpu.memory_space<vmem>>, %arg9: memref<256x12xbf16, #tpu.memory_space<vmem>>) attributes {dimension_semantics = [#tpu.dimension_semantics<parallel>], iteration_bounds = array<i64: 2>, scalar_prefetch = 0 : i64, scratch_operands = 2 : i64, tpu.core_type = #tpu.core_type<tc>, window_params = [{transform_indices = @transform_0, window_bounds = array<i64: 1, 16, 16, 4>}, {pipeline_mode = #tpu.pipeline_mode<synchronous>, transform_indices = @transform_1, window_bounds = array<i64: 1, 4>}, {pipeline_mode = #tpu.pipeline_mode<synchronous>, transform_indices = @transform_2, window_bounds = array<i64: 1, 4>}, {pipeline_mode = #tpu.pipeline_mode<synchronous>, transform_indices = @transform_3, window_bounds = array<i64: 3, 12, 4>}, {transform_indices = @transform_4, window_bounds = array<i64: 1, 16, 16, 4>}, {transform_indices = @transform_5, window_bounds = array<i64: 1, 1, 4>}, {transform_indices = @transform_6, window_bounds = array<i64: 1, 1, 4>}]} {
    %c0 = arith.constant 0 : index
    %c0_0 = arith.constant 0 : index
    %c0_1 = arith.constant 0 : index
    %c0_2 = arith.constant 0 : index
    %0 = vector.load %arg1[%c0, %c0_0, %c0_1, %c0_2] : memref<1x16x16x4xbf16, #tpu.memory_space<vmem>>, vector<1x16x16x4xbf16>
    %1 = vector.shape_cast %0 : vector<1x16x16x4xbf16> to vector<16x16x4xbf16>
    %2 = arith.extf %1 : vector<16x16x4xbf16> to vector<16x16x4xf32>
    %c0_3 = arith.constant 0 : index
    %c0_4 = arith.constant 0 : index
    %3 = vector.load %arg2[%c0_3, %c0_4] : memref<1x4xf32, #tpu.memory_space<vmem>>, vector<1x4xf32>
    %4 = vector.shape_cast %3 : vector<1x4xf32> to vector<1x1x4xf32>
    %5 = vector.broadcast %4 : vector<1x1x4xf32> to vector<16x16x4xf32>
    %6 = arith.mulf %2, %5 : vector<16x16x4xf32>
    %c0_5 = arith.constant 0 : index
    %c0_6 = arith.constant 0 : index
    %7 = vector.load %arg3[%c0_5, %c0_6] : memref<1x4xf32, #tpu.memory_space<vmem>>, vector<1x4xf32>
    %8 = vector.shape_cast %7 : vector<1x4xf32> to vector<1x1x4xf32>
    %9 = vector.broadcast %8 : vector<1x1x4xf32> to vector<16x16x4xf32>
    %10 = arith.addf %6, %9 : vector<16x16x4xf32>
    %cst = arith.constant 0.000000e+00 : f32
    %11 = vector.broadcast %cst : f32 to vector<16x16x4xf32>
    %12 = arith.cmpf ogt, %10, %11 : vector<16x16x4xf32>
    %13 = math.exp %10 : vector<16x16x4xf32>
    %cst_7 = arith.constant 1.000000e+00 : f32
    %14 = vector.broadcast %cst_7 : f32 to vector<16x16x4xf32>
    %15 = arith.subf %13, %14 : vector<16x16x4xf32>
    %16 = arith.select %12, %10, %15 : vector<16x16x4xi1>, vector<16x16x4xf32>
    %cst_8 = arith.constant 0.000000e+00 : bf16
    %17 = vector.broadcast %cst_8 : bf16 to vector<1x18x4xbf16>
    %c0_9 = arith.constant 0 : index
    %c0_10 = arith.constant 0 : index
    %c0_11 = arith.constant 0 : index
    %18 = vector.load %arg8[%c0_9, %c0_10, %c0_11] : memref<18x18x4xbf16, #tpu.memory_space<vmem>>, vector<1x18x4xbf16>
    tpu.vector_store %arg8[%c0_9, %c0_10, %c0_11], %17 {strides = array<i32>} : memref<18x18x4xbf16, #tpu.memory_space<vmem>>, vector<1x18x4xbf16>,
    %cst_12 = arith.constant 0.000000e+00 : bf16
    %19 = vector.broadcast %cst_12 : bf16 to vector<1x18x4xbf16>
    %c17 = arith.constant 17 : index
    %c0_13 = arith.constant 0 : index
    %c0_14 = arith.constant 0 : index
    %20 = vector.load %arg8[%c17, %c0_13, %c0_14] : memref<18x18x4xbf16, #tpu.memory_space<vmem>>, vector<1x18x4xbf16>
    tpu.vector_store %arg8[%c17, %c0_13, %c0_14], %19 {strides = array<i32>} : memref<18x18x4xbf16, #tpu.memory_space<vmem>>, vector<1x18x4xbf16>,
    %cst_15 = arith.constant 0.000000e+00 : bf16
    %21 = vector.broadcast %cst_15 : bf16 to vector<18x1x4xbf16>
    %c0_16 = arith.constant 0 : index
    %c0_17 = arith.constant 0 : index
    %c0_18 = arith.constant 0 : index
    %22 = vector.load %arg8[%c0_16, %c0_17, %c0_18] : memref<18x18x4xbf16, #tpu.memory_space<vmem>>, vector<18x1x4xbf16>
    tpu.vector_store %arg8[%c0_16, %c0_17, %c0_18], %21 {strides = array<i32>} : memref<18x18x4xbf16, #tpu.memory_space<vmem>>, vector<18x1x4xbf16>,
    %cst_19 = arith.constant 0.000000e+00 : bf16
    %23 = vector.broadcast %cst_19 : bf16 to vector<18x1x4xbf16>
    %c0_20 = arith.constant 0 : index
    %c17_21 = arith.constant 17 : index
    %c0_22 = arith.constant 0 : index
    %24 = vector.load %arg8[%c0_20, %c17_21, %c0_22] : memref<18x18x4xbf16, #tpu.memory_space<vmem>>, vector<18x1x4xbf16>
    tpu.vector_store %arg8[%c0_20, %c17_21, %c0_22], %23 {strides = array<i32>} : memref<18x18x4xbf16, #tpu.memory_space<vmem>>, vector<18x1x4xbf16>,
    %25 = arith.truncf %16 : vector<16x16x4xf32> to vector<16x16x4xbf16>
    %c1 = arith.constant 1 : index
    %c1_23 = arith.constant 1 : index
    %c0_24 = arith.constant 0 : index
    %26 = vector.load %arg8[%c1, %c1_23, %c0_24] : memref<18x18x4xbf16, #tpu.memory_space<vmem>>, vector<16x16x4xbf16>
    tpu.vector_store %arg8[%c1, %c1_23, %c0_24], %25 {strides = array<i32>} : memref<18x18x4xbf16, #tpu.memory_space<vmem>>, vector<16x16x4xbf16>,
    %cst_25 = arith.constant 0.000000e+00 : f32
    %27 = vector.broadcast %cst_25 : f32 to vector<256x4xf32>
    %c0_26 = arith.constant 0 : index
    %c0_27 = arith.constant 0 : index
    %c0_28 = arith.constant 0 : index
    %28 = vector.load %arg8[%c0_26, %c0_27, %c0_28] : memref<18x18x4xbf16, #tpu.memory_space<vmem>>, vector<16x16x4xbf16>
    %29 = vector.shape_cast %28 : vector<16x16x4xbf16> to vector<256x4xbf16>
    %c0_29 = arith.constant 0 : index
    %c0_30 = arith.constant 0 : index
    %30 = vector.load %arg9[%c0_29, %c0_30] : memref<256x12xbf16, #tpu.memory_space<vmem>>, vector<256x4xbf16>
    tpu.vector_store %arg9[%c0_29, %c0_30], %29 {strides = array<i32>} : memref<256x12xbf16, #tpu.memory_space<vmem>>, vector<256x4xbf16>,
    %c0_31 = arith.constant 0 : index
    %c1_32 = arith.constant 1 : index
    %c0_33 = arith.constant 0 : index
    %31 = vector.load %arg8[%c0_31, %c1_32, %c0_33] : memref<18x18x4xbf16, #tpu.memory_space<vmem>>, vector<16x16x4xbf16>
    %32 = vector.shape_cast %31 : vector<16x16x4xbf16> to vector<256x4xbf16>
    %c0_34 = arith.constant 0 : index
    %c4 = arith.constant 4 : index
    %33 = vector.load %arg9[%c0_34, %c4] : memref<256x12xbf16, #tpu.memory_space<vmem>>, vector<256x4xbf16>
    tpu.vector_store %arg9[%c0_34, %c4], %32 {strides = array<i32>} : memref<256x12xbf16, #tpu.memory_space<vmem>>, vector<256x4xbf16>,
    %c0_35 = arith.constant 0 : index
    %c2 = arith.constant 2 : index
    %c0_36 = arith.constant 0 : index
    %34 = vector.load %arg8[%c0_35, %c2, %c0_36] : memref<18x18x4xbf16, #tpu.memory_space<vmem>>, vector<16x16x4xbf16>
    %35 = vector.shape_cast %34 : vector<16x16x4xbf16> to vector<256x4xbf16>
    %c0_37 = arith.constant 0 : index
    %c8 = arith.constant 8 : index
    %36 = vector.load %arg9[%c0_37, %c8] : memref<256x12xbf16, #tpu.memory_space<vmem>>, vector<256x4xbf16>
    tpu.vector_store %arg9[%c0_37, %c8], %35 {strides = array<i32>} : memref<256x12xbf16, #tpu.memory_space<vmem>>, vector<256x4xbf16>,
    %c0_38 = arith.constant 0 : index
    %c0_39 = arith.constant 0 : index
    %37 = vector.load %arg9[%c0_38, %c0_39] : memref<256x12xbf16, #tpu.memory_space<vmem>>, vector<256x12xbf16>
    %c0_40 = arith.constant 0 : index
    %c0_41 = arith.constant 0 : index
    %c0_42 = arith.constant 0 : index
    %38 = vector.load %arg4[%c0_40, %c0_41, %c0_42] : memref<3x12x4xbf16, #tpu.memory_space<vmem>>, vector<1x12x4xbf16>
    %39 = vector.shape_cast %38 : vector<1x12x4xbf16> to vector<12x4xbf16>
    %cst_43 = arith.constant dense<0.000000e+00> : vector<256x4xf32>
    %40 = tpu.matmul %37, %39, %cst_43 {dimension_numbers = #tpu.dot_dimension_numbers<[1], [0], [0], [1], [0, 0, 1, 1], [], []>} : vector<256x12xbf16>, vector<12x4xbf16>, vector<256x4xf32> -> vector<256x4xf32>
    %41 = arith.addf %27, %40 : vector<256x4xf32>
    %c1_44 = arith.constant 1 : index
    %c0_45 = arith.constant 0 : index
    %c0_46 = arith.constant 0 : index
    %42 = vector.load %arg8[%c1_44, %c0_45, %c0_46] : memref<18x18x4xbf16, #tpu.memory_space<vmem>>, vector<16x16x4xbf16>
    %43 = vector.shape_cast %42 : vector<16x16x4xbf16> to vector<256x4xbf16>
    %c0_47 = arith.constant 0 : index
    %c0_48 = arith.constant 0 : index
    %44 = vector.load %arg9[%c0_47, %c0_48] : memref<256x12xbf16, #tpu.memory_space<vmem>>, vector<256x4xbf16>
    tpu.vector_store %arg9[%c0_47, %c0_48], %43 {strides = array<i32>} : memref<256x12xbf16, #tpu.memory_space<vmem>>, vector<256x4xbf16>,
    %c1_49 = arith.constant 1 : index
    %c1_50 = arith.constant 1 : index
    %c0_51 = arith.constant 0 : index
    %45 = vector.load %arg8[%c1_49, %c1_50, %c0_51] : memref<18x18x4xbf16, #tpu.memory_space<vmem>>, vector<16x16x4xbf16>
    %46 = vector.shape_cast %45 : vector<16x16x4xbf16> to vector<256x4xbf16>
    %c0_52 = arith.constant 0 : index
    %c4_53 = arith.constant 4 : index
    %47 = vector.load %arg9[%c0_52, %c4_53] : memref<256x12xbf16, #tpu.memory_space<vmem>>, vector<256x4xbf16>
    tpu.vector_store %arg9[%c0_52, %c4_53], %46 {strides = array<i32>} : memref<256x12xbf16, #tpu.memory_space<vmem>>, vector<256x4xbf16>,
    %c1_54 = arith.constant 1 : index
    %c2_55 = arith.constant 2 : index
    %c0_56 = arith.constant 0 : index
    %48 = vector.load %arg8[%c1_54, %c2_55, %c0_56] : memref<18x18x4xbf16, #tpu.memory_space<vmem>>, vector<16x16x4xbf16>
    %49 = vector.shape_cast %48 : vector<16x16x4xbf16> to vector<256x4xbf16>
    %c0_57 = arith.constant 0 : index
    %c8_58 = arith.constant 8 : index
    %50 = vector.load %arg9[%c0_57, %c8_58] : memref<256x12xbf16, #tpu.memory_space<vmem>>, vector<256x4xbf16>
    tpu.vector_store %arg9[%c0_57, %c8_58], %49 {strides = array<i32>} : memref<256x12xbf16, #tpu.memory_space<vmem>>, vector<256x4xbf16>,
    %c0_59 = arith.constant 0 : index
    %c0_60 = arith.constant 0 : index
    %51 = vector.load %arg9[%c0_59, %c0_60] : memref<256x12xbf16, #tpu.memory_space<vmem>>, vector<256x12xbf16>
    %c1_61 = arith.constant 1 : index
    %c0_62 = arith.constant 0 : index
    %c0_63 = arith.constant 0 : index
    %52 = vector.load %arg4[%c1_61, %c0_62, %c0_63] : memref<3x12x4xbf16, #tpu.memory_space<vmem>>, vector<1x12x4xbf16>
    %53 = vector.shape_cast %52 : vector<1x12x4xbf16> to vector<12x4xbf16>
    %cst_64 = arith.constant dense<0.000000e+00> : vector<256x4xf32>
    %54 = tpu.matmul %51, %53, %cst_64 {dimension_numbers = #tpu.dot_dimension_numbers<[1], [0], [0], [1], [0, 0, 1, 1], [], []>} : vector<256x12xbf16>, vector<12x4xbf16>, vector<256x4xf32> -> vector<256x4xf32>
    %55 = arith.addf %41, %54 : vector<256x4xf32>
    %c2_65 = arith.constant 2 : index
    %c0_66 = arith.constant 0 : index
    %c0_67 = arith.constant 0 : index
    %56 = vector.load %arg8[%c2_65, %c0_66, %c0_67] : memref<18x18x4xbf16, #tpu.memory_space<vmem>>, vector<16x16x4xbf16>
    %57 = vector.shape_cast %56 : vector<16x16x4xbf16> to vector<256x4xbf16>
    %c0_68 = arith.constant 0 : index
    %c0_69 = arith.constant 0 : index
    %58 = vector.load %arg9[%c0_68, %c0_69] : memref<256x12xbf16, #tpu.memory_space<vmem>>, vector<256x4xbf16>
    tpu.vector_store %arg9[%c0_68, %c0_69], %57 {strides = array<i32>} : memref<256x12xbf16, #tpu.memory_space<vmem>>, vector<256x4xbf16>,
    %c2_70 = arith.constant 2 : index
    %c1_71 = arith.constant 1 : index
    %c0_72 = arith.constant 0 : index
    %59 = vector.load %arg8[%c2_70, %c1_71, %c0_72] : memref<18x18x4xbf16, #tpu.memory_space<vmem>>, vector<16x16x4xbf16>
    %60 = vector.shape_cast %59 : vector<16x16x4xbf16> to vector<256x4xbf16>
    %c0_73 = arith.constant 0 : index
    %c4_74 = arith.constant 4 : index
    %61 = vector.load %arg9[%c0_73, %c4_74] : memref<256x12xbf16, #tpu.memory_space<vmem>>, vector<256x4xbf16>
    tpu.vector_store %arg9[%c0_73, %c4_74], %60 {strides = array<i32>} : memref<256x12xbf16, #tpu.memory_space<vmem>>, vector<256x4xbf16>,
    %c2_75 = arith.constant 2 : index
    %c2_76 = arith.constant 2 : index
    %c0_77 = arith.constant 0 : index
    %62 = vector.load %arg8[%c2_75, %c2_76, %c0_77] : memref<18x18x4xbf16, #tpu.memory_space<vmem>>, vector<16x16x4xbf16>
    %63 = vector.shape_cast %62 : vector<16x16x4xbf16> to vector<256x4xbf16>
    %c0_78 = arith.constant 0 : index
    %c8_79 = arith.constant 8 : index
    %64 = vector.load %arg9[%c0_78, %c8_79] : memref<256x12xbf16, #tpu.memory_space<vmem>>, vector<256x4xbf16>
    tpu.vector_store %arg9[%c0_78, %c8_79], %63 {strides = array<i32>} : memref<256x12xbf16, #tpu.memory_space<vmem>>, vector<256x4xbf16>,
    %c0_80 = arith.constant 0 : index
    %c0_81 = arith.constant 0 : index
    %65 = vector.load %arg9[%c0_80, %c0_81] : memref<256x12xbf16, #tpu.memory_space<vmem>>, vector<256x12xbf16>
    %c2_82 = arith.constant 2 : index
    %c0_83 = arith.constant 0 : index
    %c0_84 = arith.constant 0 : index
    %66 = vector.load %arg4[%c2_82, %c0_83, %c0_84] : memref<3x12x4xbf16, #tpu.memory_space<vmem>>, vector<1x12x4xbf16>
    %67 = vector.shape_cast %66 : vector<1x12x4xbf16> to vector<12x4xbf16>
    %cst_85 = arith.constant dense<0.000000e+00> : vector<256x4xf32>
    %68 = tpu.matmul %65, %67, %cst_85 {dimension_numbers = #tpu.dot_dimension_numbers<[1], [0], [0], [1], [0, 0, 1, 1], [], []>} : vector<256x12xbf16>, vector<12x4xbf16>, vector<256x4xf32> -> vector<256x4xf32>
    %69 = arith.addf %55, %68 : vector<256x4xf32>
    %cst_86 = arith.constant dense<0.000000e+00> : vector<4xf32>
    %70 = vector.multi_reduction <add>, %69, %cst_86 [0] : vector<256x4xf32> to vector<4xf32>
    %71 = vector.shape_cast %70 : vector<4xf32> to vector<1x1x4xf32>
    %c0_87 = arith.constant 0 : index
    %c0_88 = arith.constant 0 : index
    %c0_89 = arith.constant 0 : index
    %72 = vector.load %arg6[%c0_87, %c0_88, %c0_89] : memref<1x1x4xf32, #tpu.memory_space<vmem>>, vector<1x1x4xf32>
    tpu.vector_store %arg6[%c0_87, %c0_88, %c0_89], %71 {strides = array<i32>} : memref<1x1x4xf32, #tpu.memory_space<vmem>>, vector<1x1x4xf32>,
    %73 = arith.mulf %69, %69 : vector<256x4xf32>
    %cst_90 = arith.constant dense<0.000000e+00> : vector<4xf32>
    %74 = vector.multi_reduction <add>, %73, %cst_90 [0] : vector<256x4xf32> to vector<4xf32>
    %75 = vector.shape_cast %74 : vector<4xf32> to vector<1x1x4xf32>
    %c0_91 = arith.constant 0 : index
    %c0_92 = arith.constant 0 : index
    %c0_93 = arith.constant 0 : index
    %76 = vector.load %arg7[%c0_91, %c0_92, %c0_93] : memref<1x1x4xf32, #tpu.memory_space<vmem>>, vector<1x1x4xf32>
    tpu.vector_store %arg7[%c0_91, %c0_92, %c0_93], %75 {strides = array<i32>} : memref<1x1x4xf32, #tpu.memory_space<vmem>>, vector<1x1x4xf32>,
    %77 = arith.truncf %69 : vector<256x4xf32> to vector<256x4xbf16>
    %78 = vector.shape_cast %77 : vector<256x4xbf16> to vector<1x16x16x4xbf16>
    %c0_94 = arith.constant 0 : index
    %c0_95 = arith.constant 0 : index
    %c0_96 = arith.constant 0 : index
    %c0_97 = arith.constant 0 : index
    %79 = vector.load %arg5[%c0_94, %c0_95, %c0_96, %c0_97] : memref<1x16x16x4xbf16, #tpu.memory_space<vmem>>, vector<1x16x16x4xbf16>
    tpu.vector_store %arg5[%c0_94, %c0_95, %c0_96, %c0_97], %78 {strides = array<i32>} : memref<1x16x16x4xbf16, #tpu.memory_space<vmem>>, vector<1x16x16x4xbf16>,
    return
  }
  func.func @transform_0(%arg0: i32) -> (i32, i32, i32, i32) {
    %c0_i32 = arith.constant 0 : i32
    %c0_i32_0 = arith.constant 0 : i32
    %c0_i32_1 = arith.constant 0 : i32
    %c0_i32_2 = arith.constant 0 : i32
    return %arg0, %c0_i32, %c0_i32_0, %c0_i32_1 : i32, i32, i32, i32
  }
  func.func @transform_1(%arg0: i32) -> (i32, i32) {
    %c0_i32 = arith.constant 0 : i32
    %c0_i32_0 = arith.constant 0 : i32
    %c0_i32_1 = arith.constant 0 : i32
    return %c0_i32, %c0_i32_0 : i32, i32
  }
  func.func @transform_2(%arg0: i32) -> (i32, i32) {
    %c0_i32 = arith.constant 0 : i32
    %c0_i32_0 = arith.constant 0 : i32
    %c0_i32_1 = arith.constant 0 : i32
    return %c0_i32, %c0_i32_0 : i32, i32
  }
  func.func @transform_3(%arg0: i32) -> (i32, i32, i32) {
    %c0_i32 = arith.constant 0 : i32
    %c0_i32_0 = arith.constant 0 : i32
    %c0_i32_1 = arith.constant 0 : i32
    %c0_i32_2 = arith.constant 0 : i32
    return %c0_i32, %c0_i32_0, %c0_i32_1 : i32, i32, i32
  }
  func.func @transform_4(%arg0: i32) -> (i32, i32, i32, i32) {
    %c0_i32 = arith.constant 0 : i32
    %c0_i32_0 = arith.constant 0 : i32
    %c0_i32_1 = arith.constant 0 : i32
    %c0_i32_2 = arith.constant 0 : i32
    return %arg0, %c0_i32, %c0_i32_0, %c0_i32_1 : i32, i32, i32, i32
  }
  func.func @transform_5(%arg0: i32) -> (i32, i32, i32) {
    %c0_i32 = arith.constant 0 : i32
    %c0_i32_0 = arith.constant 0 : i32
    %c0_i32_1 = arith.constant 0 : i32
    return %arg0, %c0_i32, %c0_i32_0 : i32, i32, i32
  }
  func.func @transform_6(%arg0: i32) -> (i32, i32, i32) {
    %c0_i32 = arith.constant 0 : i32
    %c0_i32_0 = arith.constant 0 : i32
    %c0_i32_1 = arith.constant 0 : i32
    return %arg0, %c0_i32, %c0_i32_0 : i32, i32, i32
  }
}

module attributes {stable_mosaic.version = 11 : i64} {
  func.func @_bn2_residual_elu_kernel(%arg0: i32, %arg1: memref<1x1x1024xbf16, #tpu.memory_space<vmem>>, %arg2: memref<1x1x1024xf32, #tpu.memory_space<vmem>>, %arg3: memref<1x1x1024xf32, #tpu.memory_space<vmem>>, %arg4: memref<1x1x1024xbf16, #tpu.memory_space<vmem>>, %arg5: memref<1x1x1024xf32, #tpu.memory_space<vmem>>) attributes {dimension_semantics = [#tpu.dimension_semantics<parallel>], iteration_bounds = array<i64: 2>, scalar_prefetch = 0 : i64, scratch_operands = 0 : i64, tpu.core_type = #tpu.core_type<tc>, window_params = [{transform_indices = @transform_0, window_bounds = array<i64: 1, 1, 1024>}, {pipeline_mode = #tpu.pipeline_mode<synchronous>, transform_indices = @transform_1, window_bounds = array<i64: 1, 1, 1024>}, {pipeline_mode = #tpu.pipeline_mode<synchronous>, transform_indices = @transform_2, window_bounds = array<i64: 1, 1, 1024>}, {transform_indices = @transform_3, window_bounds = array<i64: 1, 1, 1024>}, {transform_indices = @transform_4, window_bounds = array<i64: 1, 1, 1024>}]} {
    %c0 = arith.constant 0 : index
    %c0_0 = arith.constant 0 : index
    %c0_1 = arith.constant 0 : index
    %0 = vector.load %arg1[%c0, %c0_0, %c0_1] : memref<1x1x1024xbf16, #tpu.memory_space<vmem>>, vector<1x1x1024xbf16>
    %1 = arith.extf %0 : vector<1x1x1024xbf16> to vector<1x1x1024xf32>
    %c0_2 = arith.constant 0 : index
    %c0_3 = arith.constant 0 : index
    %c0_4 = arith.constant 0 : index
    %2 = vector.load %arg2[%c0_2, %c0_3, %c0_4] : memref<1x1x1024xf32, #tpu.memory_space<vmem>>, vector<1x1x1024xf32>
    %3 = arith.mulf %1, %2 : vector<1x1x1024xf32>
    %c0_5 = arith.constant 0 : index
    %c0_6 = arith.constant 0 : index
    %c0_7 = arith.constant 0 : index
    %4 = vector.load %arg3[%c0_5, %c0_6, %c0_7] : memref<1x1x1024xf32, #tpu.memory_space<vmem>>, vector<1x1x1024xf32>
    %5 = arith.addf %3, %4 : vector<1x1x1024xf32>
    %c0_8 = arith.constant 0 : index
    %c0_9 = arith.constant 0 : index
    %c0_10 = arith.constant 0 : index
    %6 = vector.load %arg4[%c0_8, %c0_9, %c0_10] : memref<1x1x1024xbf16, #tpu.memory_space<vmem>>, vector<1x1x1024xbf16>
    %7 = arith.extf %6 : vector<1x1x1024xbf16> to vector<1x1x1024xf32>
    %8 = arith.addf %5, %7 : vector<1x1x1024xf32>
    %cst = arith.constant 0.000000e+00 : f32
    %9 = vector.broadcast %cst : f32 to vector<1x1x1024xf32>
    %10 = arith.cmpf ogt, %8, %9 : vector<1x1x1024xf32>
    %11 = math.exp %8 : vector<1x1x1024xf32>
    %cst_11 = arith.constant 1.000000e+00 : f32
    %12 = vector.broadcast %cst_11 : f32 to vector<1x1x1024xf32>
    %13 = arith.subf %11, %12 : vector<1x1x1024xf32>
    %14 = arith.select %10, %8, %13 : vector<1x1x1024xi1>, vector<1x1x1024xf32>
    %c0_12 = arith.constant 0 : index
    %c0_13 = arith.constant 0 : index
    %c0_14 = arith.constant 0 : index
    %15 = vector.load %arg5[%c0_12, %c0_13, %c0_14] : memref<1x1x1024xf32, #tpu.memory_space<vmem>>, vector<1x1x1024xf32>
    tpu.vector_store %arg5[%c0_12, %c0_13, %c0_14], %14 {strides = array<i32>} : memref<1x1x1024xf32, #tpu.memory_space<vmem>>, vector<1x1x1024xf32>,
    return
  }
  func.func @transform_0(%arg0: i32) -> (i32, i32, i32) {
    %c0_i32 = arith.constant 0 : i32
    %c0_i32_0 = arith.constant 0 : i32
    %c0_i32_1 = arith.constant 0 : i32
    return %arg0, %c0_i32, %c0_i32_0 : i32, i32, i32
  }
  func.func @transform_1(%arg0: i32) -> (i32, i32, i32) {
    %c0_i32 = arith.constant 0 : i32
    %c0_i32_0 = arith.constant 0 : i32
    %c0_i32_1 = arith.constant 0 : i32
    %c0_i32_2 = arith.constant 0 : i32
    return %c0_i32, %c0_i32_0, %c0_i32_1 : i32, i32, i32
  }
  func.func @transform_2(%arg0: i32) -> (i32, i32, i32) {
    %c0_i32 = arith.constant 0 : i32
    %c0_i32_0 = arith.constant 0 : i32
    %c0_i32_1 = arith.constant 0 : i32
    %c0_i32_2 = arith.constant 0 : i32
    return %c0_i32, %c0_i32_0, %c0_i32_1 : i32, i32, i32
  }
  func.func @transform_3(%arg0: i32) -> (i32, i32, i32) {
    %c0_i32 = arith.constant 0 : i32
    %c0_i32_0 = arith.constant 0 : i32
    %c0_i32_1 = arith.constant 0 : i32
    return %arg0, %c0_i32, %c0_i32_0 : i32, i32, i32
  }
  func.func @transform_4(%arg0: i32) -> (i32, i32, i32) {
    %c0_i32 = arith.constant 0 : i32
    %c0_i32_0 = arith.constant 0 : i32
    %c0_i32_1 = arith.constant 0 : i32
    return %arg0, %c0_i32, %c0_i32_0 : i32, i32, i32
  }
}

</mosaic_0001>

<llo_original>
// kernel: tile.18
$region0: #{tile.18}
  #allocation0 [shape = 's32[1]{0}', space=sflag, size = 0x4, scoped, tag = 'scoped memory for tile.18']
  %s0 = inlined_call_operand.vmem [shape: f32[4], index: 0, kind: input, shape index: {}]
  %s1 = inlined_call_operand.vmem [shape: f32[256,4], index: 1, kind: output, shape index: {}]
  // Predicated region
  $region2: #{tile.18} parent=0 // pred_check
    _
  $region3: #{tile.18} parent=0 // pred_check_branch
    %3 = sbr.rel (0) target = $region5
  $region4: #{tile.18} parent=0 // pred_region
    _
  $region5: #{tile.18} parent=0 // pred_fallthru
    _
  %v4 = vld [vmem:[%s0] ss:$0 sm:$0xff]
  %5 = vst [vmem:[%s1] sm:$0xff] %v4
  %s6 = scalar_lea.vmem %s1, 8
  %7 = vst [vmem:[%s6] sm:$0xff] %v4
  %s8 = scalar_lea.vmem %s1, 16
  %9 = vst [vmem:[%s8] sm:$0xff] %v4
  %s10 = scalar_lea.vmem %s1, 24
  %11 = vst [vmem:[%s10] sm:$0xff] %v4
  %s12 = scalar_lea.vmem %s1, 32
  %13 = vst [vmem:[%s12] sm:$0xff] %v4
  %s14 = scalar_lea.vmem %s1, 40
  %15 = vst [vmem:[%s14] sm:$0xff] %v4
  %s16 = scalar_lea.vmem %s1, 48
  %17 = vst [vmem:[%s16] sm:$0xff] %v4
  %s18 = scalar_lea.vmem %s1, 56
  %19 = vst [vmem:[%s18] sm:$0xff] %v4
  %s20 = scalar_lea.vmem %s1, 64
  %21 = vst [vmem:[%s20] sm:$0xff] %v4
  %s22 = scalar_lea.vmem %s1, 72
  %23 = vst [vmem:[%s22] sm:$0xff] %v4
  %s24 = scalar_lea.vmem %s1, 80
  %25 = vst [vmem:[%s24] sm:$0xff] %v4
  %s26 = scalar_lea.vmem %s1, 88
  %27 = vst [vmem:[%s26] sm:$0xff] %v4
  %s28 = scalar_lea.vmem %s1, 96
  %29 = vst [vmem:[%s28] sm:$0xff] %v4
  %s30 = scalar_lea.vmem %s1, 104
  %31 = vst [vmem:[%s30] sm:$0xff] %v4
  %s32 = scalar_lea.vmem %s1, 112
  %33 = vst [vmem:[%s32] sm:$0xff] %v4
  %s34 = scalar_lea.vmem %s1, 120
  %35 = vst [vmem:[%s34] sm:$0xff] %v4
  %s36 = scalar_lea.vmem %s1, 128
  %37 = vst [vmem:[%s36] sm:$0xff] %v4
  %s38 = scalar_lea.vmem %s1, 136
  %39 = vst [vmem:[%s38] sm:$0xff] %v4
  %s40 = scalar_lea.vmem %s1, 144
  %41 = vst [vmem:[%s40] sm:$0xff] %v4
  %s42 = scalar_lea.vmem %s1, 152
  %43 = vst [vmem:[%s42] sm:$0xff] %v4
  %s44 = scalar_lea.vmem %s1, 160
  %45 = vst [vmem:[%s44] sm:$0xff] %v4
  %s46 = scalar_lea.vmem %s1, 168
  %47 = vst [vmem:[%s46] sm:$0xff] %v4
  %s48 = scalar_lea.vmem %s1, 176
  %49 = vst [vmem:[%s48] sm:$0xff] %v4
  %s50 = scalar_lea.vmem %s1, 184
  %51 = vst [vmem:[%s50] sm:$0xff] %v4
  %s52 = scalar_lea.vmem %s1, 192
  %53 = vst [vmem:[%s52] sm:$0xff] %v4
  %s54 = scalar_lea.vmem %s1, 200
  %55 = vst [vmem:[%s54] sm:$0xff] %v4
  %s56 = scalar_lea.vmem %s1, 208
  %57 = vst [vmem:[%s56] sm:$0xff] %v4
  %s58 = scalar_lea.vmem %s1, 216
  %59 = vst [vmem:[%s58] sm:$0xff] %v4
  %s60 = scalar_lea.vmem %s1, 224
  %61 = vst [vmem:[%s60] sm:$0xff] %v4
  %s62 = scalar_lea.vmem %s1, 232
  %63 = vst [vmem:[%s62] sm:$0xff] %v4
  %s64 = scalar_lea.vmem %s1, 240
  %65 = vst [vmem:[%s64] sm:$0xff] %v4
  %s66 = scalar_lea.vmem %s1, 248
  %67 = vst [vmem:[%s66] sm:$0xff] %v4

// kernel: tile.19
$region0: #{tile.19}
  %s0 = inlined_call_operand.vmem [shape: f32[256,4], index: 0, kind: input, shape index: {}]
  %s1 = inlined_call_operand.vmem [shape: f32[1,1,1024], index: 1, kind: output, shape index: {}]
  $region1: #{tile.19} parent=0
    #allocation0 [shape = 'u8[32768]{0}', space=vmem, size = 0x8000, scoped, tag = 'scoped mem for output reshape']
    %v2 = vld [vmem:[%s0] sm:$0x1]
    %s3 = scalar_lea.vmem %s0, 31
    %v4 = vld [vmem:[%s3] sm:$0x2]
    %vm5 = vcmask 1041409
    %v6 = vsel %vm5, %v4, %v2
    %s7 = scalar_lea.vmem %s0, 62
    %v8 = vld [vmem:[%s7] sm:$0x4]
    %vm9 = vcmask 1042434
    %v10 = vsel %vm9, %v8, %v6
    %s11 = scalar_lea.vmem %s0, 93
    %v12 = vld [vmem:[%s11] sm:$0x8]
    %vm13 = vcmask 1043459
    %v14 = vsel %vm13, %v12, %v10
    %s15 = scalar_lea.vmem %s0, 124
    %v16 = vld [vmem:[%s15] sm:$0x10]
    %vm17 = vcmask 1044484
    %v18 = vsel %vm17, %v16, %v14
    %s19 = scalar_lea.vmem %s0, 155
    %v20 = vld [vmem:[%s19] sm:$0x20]
    %vm21 = vcmask 1045509
    %v22 = vsel %vm21, %v20, %v18
    %s23 = scalar_lea.vmem %s0, 186
    %v24 = vld [vmem:[%s23] sm:$0x40]
    %vm25 = vcmask 1046534
    %v26 = vsel %vm25, %v24, %v22
    %s27 = scalar_lea.vmem %s0, 217
    %v28 = vld [vmem:[%s27] sm:$0x80]
    %vm29 = vcmask 1047559
    %v30 = vsel %vm29, %v28, %v26
    %vm31 = vcmask 31744
    %32 = vst.msk [vmem:[#allocation0] ss:$8 sm:$0xf] %vm31, %v30
    %33 = vst.msk [vmem:[#allocation0] ss:$8 sm:$0xf0] %vm31, %v30
    %s34 = scalar_lea.vmem %s0, 31
    %v35 = vld [vmem:[%s34] sm:$0x1]
    %s36 = scalar_lea.vmem %s0, 62
    %v37 = vld [vmem:[%s36] sm:$0x2]
    %vm38 = vcmask 1041409
    %v39 = vsel %vm38, %v37, %v35
    %s40 = scalar_lea.vmem %s0, 93
    %v41 = vld [vmem:[%s40] sm:$0x4]
    %vm42 = vcmask 1042434
    %v43 = vsel %vm42, %v41, %v39
    %s44 = scalar_lea.vmem %s0, 124
    %v45 = vld [vmem:[%s44] sm:$0x8]
    %vm46 = vcmask 1043459
    %v47 = vsel %vm46, %v45, %v43
    %s48 = scalar_lea.vmem %s0, 155
    %v49 = vld [vmem:[%s48] sm:$0x10]
    %vm50 = vcmask 1044484
    %v51 = vsel %vm50, %v49, %v47
    %s52 = scalar_lea.vmem %s0, 186
    %v53 = vld [vmem:[%s52] sm:$0x20]
    %vm54 = vcmask 1045509
    %v55 = vsel %vm54, %v53, %v51
    %s56 = scalar_lea.vmem %s0, 217
    %v57 = vld [vmem:[%s56] sm:$0x40]
    %vm58 = vcmask 1046534
    %v59 = vsel %vm58, %v57, %v55
    %s60 = scalar_lea.vmem %s0, 248
    %v61 = vld [vmem:[%s60] sm:$0x80]
    %vm62 = vcmask 1047559
    %v63 = vsel %vm62, %v61, %v59
    %64 = vrot.lane.b32.xlu0 %v63, 124
    %v65 = vpop.permute.xlu0 %64
    %vm66 = vcmask 1048544
    %67 = vst.msk [vmem:[#allocation0] ss:$8 sm:$0xf] %vm66, %v65
    %68 = vst.msk [vmem:[#allocation0] ss:$8 sm:$0xf0] %vm66, %v65
    %s69 = scalar_lea.vmem %s0, 30
    %v70 = vld [vmem:[%s69] sm:$0x1]
    %s71 = scalar_lea.vmem %s0, 61
    %v72 = vld [vmem:[%s71] sm:$0x2]
    %vm73 = vcmask 1041409
    %v74 = vsel %vm73, %v72, %v70
    %s75 = scalar_lea.vmem %s0, 92
    %v76 = vld [vmem:[%s75] sm:$0x4]
    %vm77 = vcmask 1042434
    %v78 = vsel %vm77, %v76, %v74
    %s79 = scalar_lea.vmem %s0, 123
    %v80 = vld [vmem:[%s79] sm:$0x8]
    %vm81 = vcmask 1043459
    %v82 = vsel %vm81, %v80, %v78
    %s83 = scalar_lea.vmem %s0, 154
    %v84 = vld [vmem:[%s83] sm:$0x10]
    %vm85 = vcmask 1044484
    %v86 = vsel %vm85, %v84, %v82
    %s87 = scalar_lea.vmem %s0, 185
    %v88 = vld [vmem:[%s87] sm:$0x20]
    %vm89 = vcmask 1045509
    %v90 = vsel %vm89, %v88, %v86
    %s91 = scalar_lea.vmem %s0, 216
    %v92 = vld [vmem:[%s91] sm:$0x40]
    %vm93 = vcmask 1046534
    %v94 = vsel %vm93, %v92, %v90
    %s95 = scalar_lea.vmem %s0, 247
    %v96 = vld [vmem:[%s95] sm:$0x80]
    %vm97 = vcmask 1047559
    %v98 = vsel %vm97, %v96, %v94
    %99 = vrot.lane.b32.xlu0 %v98, 120
    %v100 = vpop.permute.xlu0 %99
    %vm101 = vcmask 1015744
    %102 = vst.msk [vmem:[#allocation0] ss:$8 sm:$0xf] %vm101, %v100
    %103 = vst.msk [vmem:[#allocation0] ss:$8 sm:$0xf0] %vm101, %v100
    %s104 = scalar_lea.vmem %s0, 29
    %v105 = vld [vmem:[%s104] sm:$0x1]
    %s106 = scalar_lea.vmem %s0, 60
    %v107 = vld [vmem:[%s106] sm:$0x2]
    %vm108 = vcmask 1041409
    %v109 = vsel %vm108, %v107, %v105
    %s110 = scalar_lea.vmem %s0, 91
    %v111 = vld [vmem:[%s110] sm:$0x4]
    %vm112 = vcmask 1042434
    %v113 = vsel %vm112, %v111, %v109
    %s114 = scalar_lea.vmem %s0, 122
    %v115 = vld [vmem:[%s114] sm:$0x8]
    %vm116 = vcmask 1043459
    %v117 = vsel %vm116, %v115, %v113
    %s118 = scalar_lea.vmem %s0, 153
    %v119 = vld [vmem:[%s118] sm:$0x10]
    %vm120 = vcmask 1044484
    %v121 = vsel %vm120, %v119, %v117
    %s122 = scalar_lea.vmem %s0, 184
    %v123 = vld [vmem:[%s122] sm:$0x20]
    %vm124 = vcmask 1045509
    %v125 = vsel %vm124, %v123, %v121
    %s126 = scalar_lea.vmem %s0, 215
    %v127 = vld [vmem:[%s126] sm:$0x40]
    %vm128 = vcmask 1046534
    %v129 = vsel %vm128, %v127, %v125
    %s130 = scalar_lea.vmem %s0, 246
    %v131 = vld [vmem:[%s130] sm:$0x80]
    %vm132 = vcmask 1047559
    %v133 = vsel %vm132, %v131, %v129
    %134 = vrot.lane.b32.xlu0 %v133, 116
    %v135 = vpop.permute.xlu0 %134
    %vm136 = vcmask 982944
    %137 = vst.msk [vmem:[#allocation0] ss:$8 sm:$0xf] %vm136, %v135
    %138 = vst.msk [vmem:[#allocation0] ss:$8 sm:$0xf0] %vm136, %v135
    %s139 = scalar_lea.vmem %s0, 28
    %v140 = vld [vmem:[%s139] sm:$0x1]
    %s141 = scalar_lea.vmem %s0, 59
    %v142 = vld [vmem:[%s141] sm:$0x2]
    %vm143 = vcmask 1041409
    %v144 = vsel %vm143, %v142, %v140
    %s145 = scalar_lea.vmem %s0, 90
    %v146 = vld [vmem:[%s145] sm:$0x4]
    %vm147 = vcmask 1042434
    %v148 = vsel %vm147, %v146, %v144
    %s149 = scalar_lea.vmem %s0, 121
    %v150 = vld [vmem:[%s149] sm:$0x8]
    %vm151 = vcmask 1043459
    %v152 = vsel %vm151, %v150, %v148
    %s153 = scalar_lea.vmem %s0, 152
    %v154 = vld [vmem:[%s153] sm:$0x10]
    %vm155 = vcmask 1044484
    %v156 = vsel %vm155, %v154, %v152
    %s157 = scalar_lea.vmem %s0, 183
    %v158 = vld [vmem:[%s157] sm:$0x20]
    %vm159 = vcmask 1045509
    %v160 = vsel %vm159, %v158, %v156
    %s161 = scalar_lea.vmem %s0, 214
    %v162 = vld [vmem:[%s161] sm:$0x40]
    %vm163 = vcmask 1046534
    %v164 = vsel %vm163, %v162, %v160
    %s165 = scalar_lea.vmem %s0, 245
    %v166 = vld [vmem:[%s165] sm:$0x80]
    %vm167 = vcmask 1047559
    %v168 = vsel %vm167, %v166, %v164
    %169 = vrot.lane.b32.xlu0 %v168, 112
    %v170 = vpop.permute.xlu0 %169
    %vm171 = vcmask 950144
    %172 = vst.msk [vmem:[#allocation0] ss:$8 sm:$0xf] %vm171, %v170
    %173 = vst.msk [vmem:[#allocation0] ss:$8 sm:$0xf0] %vm171, %v170
    %s174 = scalar_lea.vmem %s0, 27
    %v175 = vld [vmem:[%s174] sm:$0x1]
    %s176 = scalar_lea.vmem %s0, 58
    %v177 = vld [vmem:[%s176] sm:$0x2]
    %vm178 = vcmask 1041409
    %v179 = vsel %vm178, %v177, %v175
    %s180 = scalar_lea.vmem %s0, 89
    %v181 = vld [vmem:[%s180] sm:$0x4]
    %vm182 = vcmask 1042434
    %v183 = vsel %vm182, %v181, %v179
    %s184 = scalar_lea.vmem %s0, 120
    %v185 = vld [vmem:[%s184] sm:$0x8]
    %vm186 = vcmask 1043459
    %v187 = vsel %vm186, %v185, %v183
    %s188 = scalar_lea.vmem %s0, 151
    %v189 = vld [vmem:[%s188] sm:$0x10]
    %vm190 = vcmask 1044484
    %v191 = vsel %vm190, %v189, %v187
    %s192 = scalar_lea.vmem %s0, 182
    %v193 = vld [vmem:[%s192] sm:$0x20]
    %vm194 = vcmask 1045509
    %v195 = vsel %vm194, %v193, %v191
    %s196 = scalar_lea.vmem %s0, 213
    %v197 = vld [vmem:[%s196] sm:$0x40]
    %vm198 = vcmask 1046534
    %v199 = vsel %vm198, %v197, %v195
    %s200 = scalar_lea.vmem %s0, 244
    %v201 = vld [vmem:[%s200] sm:$0x80]
    %vm202 = vcmask 1047559
    %v203 = vsel %vm202, %v201, %v199
    %204 = vrot.lane.b32.xlu0 %v203, 108
    %v205 = vpop.permute.xlu0 %204
    %vm206 = vcmask 917344
    %207 = vst.msk [vmem:[#allocation0] ss:$8 sm:$0xf] %vm206, %v205
    %208 = vst.msk [vmem:[#allocation0] ss:$8 sm:$0xf0] %vm206, %v205
    %s209 = scalar_lea.vmem %s0, 26
    %v210 = vld [vmem:[%s209] sm:$0x1]
    %s211 = scalar_lea.vmem %s0, 57
    %v212 = vld [vmem:[%s211] sm:$0x2]
    %vm213 = vcmask 1041409
    %v214 = vsel %vm213, %v212, %v210
    %s215 = scalar_lea.vmem %s0, 88
    %v216 = vld [vmem:[%s215] sm:$0x4]
    %vm217 = vcmask 1042434
    %v218 = vsel %vm217, %v216, %v214
    %s219 = scalar_lea.vmem %s0, 119
    %v220 = vld [vmem:[%s219] sm:$0x8]
    %vm221 = vcmask 1043459
    %v222 = vsel %vm221, %v220, %v218
    %s223 = scalar_lea.vmem %s0, 150
    %v224 = vld [vmem:[%s223] sm:$0x10]
    %vm225 = vcmask 1044484
    %v226 = vsel %vm225, %v224, %v222
    %s227 = scalar_lea.vmem %s0, 181
    %v228 = vld [vmem:[%s227] sm:$0x20]
    %vm229 = vcmask 1045509
    %v230 = vsel %vm229, %v228, %v226
    %s231 = scalar_lea.vmem %s0, 212
    %v232 = vld [vmem:[%s231] sm:$0x40]
    %vm233 = vcmask 1046534
    %v234 = vsel %vm233, %v232, %v230
    %s235 = scalar_lea.vmem %s0, 243
    %v236 = vld [vmem:[%s235] sm:$0x80]
    %vm237 = vcmask 1047559
    %v238 = vsel %vm237, %v236, %v234
    %239 = vrot.lane.b32.xlu0 %v238, 104
    %v240 = vpop.permute.xlu0 %239
    %vm241 = vcmask 884544
    %242 = vst.msk [vmem:[#allocation0] ss:$8 sm:$0xf] %vm241, %v240
    %243 = vst.msk [vmem:[#allocation0] ss:$8 sm:$0xf0] %vm241, %v240
    %s244 = scalar_lea.vmem %s0, 25
    %v245 = vld [vmem:[%s244] sm:$0x1]
    %s246 = scalar_lea.vmem %s0, 56
    %v247 = vld [vmem:[%s246] sm:$0x2]
    %vm248 = vcmask 1041409
    %v249 = vsel %vm248, %v247, %v245
    %s250 = scalar_lea.vmem %s0, 87
    %v251 = vld [vmem:[%s250] sm:$0x4]
    %vm252 = vcmask 1042434
    %v253 = vsel %vm252, %v251, %v249
    %s254 = scalar_lea.vmem %s0, 118
    %v255 = vld [vmem:[%s254] sm:$0x8]
    %vm256 = vcmask 1043459
    %v257 = vsel %vm256, %v255, %v253
    %s258 = scalar_lea.vmem %s0, 149
    %v259 = vld [vmem:[%s258] sm:$0x10]
    %vm260 = vcmask 1044484
    %v261 = vsel %vm260, %v259, %v257
    %s262 = scalar_lea.vmem %s0, 180
    %v263 = vld [vmem:[%s262] sm:$0x20]
    %vm264 = vcmask 1045509
    %v265 = vsel %vm264, %v263, %v261
    %s266 = scalar_lea.vmem %s0, 211
    %v267 = vld [vmem:[%s266] sm:$0x40]
    %vm268 = vcmask 1046534
    %v269 = vsel %vm268, %v267, %v265
    %s270 = scalar_lea.vmem %s0, 242
    %v271 = vld [vmem:[%s270] sm:$0x80]
    %vm272 = vcmask 1047559
    %v273 = vsel %vm272, %v271, %v269
    %274 = vrot.lane.b32.xlu0 %v273, 100
    %v275 = vpop.permute.xlu0 %274
    %vm276 = vcmask 851744
    %277 = vst.msk [vmem:[#allocation0] ss:$8 sm:$0xf] %vm276, %v275
    %278 = vst.msk [vmem:[#allocation0] ss:$8 sm:$0xf0] %vm276, %v275
    %s279 = scalar_lea.vmem %s0, 24
    %v280 = vld [vmem:[%s279] sm:$0x1]
    %s281 = scalar_lea.vmem %s0, 55
    %v282 = vld [vmem:[%s281] sm:$0x2]
    %vm283 = vcmask 1041409
    %v284 = vsel %vm283, %v282, %v280
    %s285 = scalar_lea.vmem %s0, 86
    %v286 = vld [vmem:[%s285] sm:$0x4]
    %vm287 = vcmask 1042434
    %v288 = vsel %vm287, %v286, %v284
    %s289 = scalar_lea.vmem %s0, 117
    %v290 = vld [vmem:[%s289] sm:$0x8]
    %vm291 = vcmask 1043459
    %v292 = vsel %vm291, %v290, %v288
    %s293 = scalar_lea.vmem %s0, 148
    %v294 = vld [vmem:[%s293] sm:$0x10]
    %vm295 = vcmask 1044484
    %v296 = vsel %vm295, %v294, %v292
    %s297 = scalar_lea.vmem %s0, 179
    %v298 = vld [vmem:[%s297] sm:$0x20]
    %vm299 = vcmask 1045509
    %v300 = vsel %vm299, %v298, %v296
    %s301 = scalar_lea.vmem %s0, 210
    %v302 = vld [vmem:[%s301] sm:$0x40]
    %vm303 = vcmask 1046534
    %v304 = vsel %vm303, %v302, %v300
    %s305 = scalar_lea.vmem %s0, 241
    %v306 = vld [vmem:[%s305] sm:$0x80]
    %vm307 = vcmask 1047559
    %v308 = vsel %vm307, %v306, %v304
    %309 = vrot.lane.b32.xlu0 %v308, 96
    %v310 = vpop.permute.xlu0 %309
    %vm311 = vcmask 818944
    %312 = vst.msk [vmem:[#allocation0] ss:$8 sm:$0xf] %vm311, %v310
    %313 = vst.msk [vmem:[#allocation0] ss:$8 sm:$0xf0] %vm311, %v310
    %s314 = scalar_lea.vmem %s0, 23
    %v315 = vld [vmem:[%s314] sm:$0x1]
    %s316 = scalar_lea.vmem %s0, 54
    %v317 = vld [vmem:[%s316] sm:$0x2]
    %vm318 = vcmask 1041409
    %v319 = vsel %vm318, %v317, %v315
    %s320 = scalar_lea.vmem %s0, 85
    %v321 = vld [vmem:[%s320] sm:$0x4]
    %vm322 = vcmask 1042434
    %v323 = vsel %vm322, %v321, %v319
    %s324 = scalar_lea.vmem %s0, 116
    %v325 = vld [vmem:[%s324] sm:$0x8]
    %vm326 = vcmask 1043459
    %v327 = vsel %vm326, %v325, %v323
    %s328 = scalar_lea.vmem %s0, 147
    %v329 = vld [vmem:[%s328] sm:$0x10]
    %vm330 = vcmask 1044484
    %v331 = vsel %vm330, %v329, %v327
    %s332 = scalar_lea.vmem %s0, 178
    %v333 = vld [vmem:[%s332] sm:$0x20]
    %vm334 = vcmask 1045509
    %v335 = vsel %vm334, %v333, %v331
    %s336 = scalar_lea.vmem %s0, 209
    %v337 = vld [vmem:[%s336] sm:$0x40]
    %vm338 = vcmask 1046534
    %v339 = vsel %vm338, %v337, %v335
    %s340 = scalar_lea.vmem %s0, 240
    %v341 = vld [vmem:[%s340] sm:$0x80]
    %vm342 = vcmask 1047559
    %v343 = vsel %vm342, %v341, %v339
    %344 = vrot.lane.b32.xlu0 %v343, 92
    %v345 = vpop.permute.xlu0 %344
    %vm346 = vcmask 786144
    %347 = vst.msk [vmem:[#allocation0] ss:$8 sm:$0xf] %vm346, %v345
    %348 = vst.msk [vmem:[#allocation0] ss:$8 sm:$0xf0] %vm346, %v345
    %s349 = scalar_lea.vmem %s0, 22
    %v350 = vld [vmem:[%s349] sm:$0x1]
    %s351 = scalar_lea.vmem %s0, 53
    %v352 = vld [vmem:[%s351] sm:$0x2]
    %vm353 = vcmask 1041409
    %v354 = vsel %vm353, %v352, %v350
    %s355 = scalar_lea.vmem %s0, 84
    %v356 = vld [vmem:[%s355] sm:$0x4]
    %vm357 = vcmask 1042434
    %v358 = vsel %vm357, %v356, %v354
    %s359 = scalar_lea.vmem %s0, 115
    %v360 = vld [vmem:[%s359] sm:$0x8]
    %vm361 = vcmask 1043459
    %v362 = vsel %vm361, %v360, %v358
    %s363 = scalar_lea.vmem %s0, 146
    %v364 = vld [vmem:[%s363] sm:$0x10]
    %vm365 = vcmask 1044484
    %v366 = vsel %vm365, %v364, %v362
    %s367 = scalar_lea.vmem %s0, 177
    %v368 = vld [vmem:[%s367] sm:$0x20]
    %vm369 = vcmask 1045509
    %v370 = vsel %vm369, %v368, %v366
    %s371 = scalar_lea.vmem %s0, 208
    %v372 = vld [vmem:[%s371] sm:$0x40]
    %vm373 = vcmask 1046534
    %v374 = vsel %vm373, %v372, %v370
    %s375 = scalar_lea.vmem %s0, 239
    %v376 = vld [vmem:[%s375] sm:$0x80]
    %vm377 = vcmask 1047559
    %v378 = vsel %vm377, %v376, %v374
    %379 = vrot.lane.b32.xlu0 %v378, 88
    %v380 = vpop.permute.xlu0 %379
    %vm381 = vcmask 753344
    %382 = vst.msk [vmem:[#allocation0] ss:$8 sm:$0xf] %vm381, %v380
    %383 = vst.msk [vmem:[#allocation0] ss:$8 sm:$0xf0] %vm381, %v380
    %s384 = scalar_lea.vmem %s0, 21
    %v385 = vld [vmem:[%s384] sm:$0x1]
    %s386 = scalar_lea.vmem %s0, 52
    %v387 = vld [vmem:[%s386] sm:$0x2]
    %vm388 = vcmask 1041409
    %v389 = vsel %vm388, %v387, %v385
    %s390 = scalar_lea.vmem %s0, 83
    %v391 = vld [vmem:[%s390] sm:$0x4]
    %vm392 = vcmask 1042434
    %v393 = vsel %vm392, %v391, %v389
    %s394 = scalar_lea.vmem %s0, 114
    %v395 = vld [vmem:[%s394] sm:$0x8]
    %vm396 = vcmask 1043459
    %v397 = vsel %vm396, %v395, %v393
    %s398 = scalar_lea.vmem %s0, 145
    %v399 = vld [vmem:[%s398] sm:$0x10]
    %vm400 = vcmask 1044484
    %v401 = vsel %vm400, %v399, %v397
    %s402 = scalar_lea.vmem %s0, 176
    %v403 = vld [vmem:[%s402] sm:$0x20]
    %vm404 = vcmask 1045509
    %v405 = vsel %vm404, %v403, %v401
    %s406 = scalar_lea.vmem %s0, 207
    %v407 = vld [vmem:[%s406] sm:$0x40]
    %vm408 = vcmask 1046534
    %v409 = vsel %vm408, %v407, %v405
    %s410 = scalar_lea.vmem %s0, 238
    %v411 = vld [vmem:[%s410] sm:$0x80]
    %vm412 = vcmask 1047559
    %v413 = vsel %vm412, %v411, %v409
    %414 = vrot.lane.b32.xlu0 %v413, 84
    %v415 = vpop.permute.xlu0 %414
    %vm416 = vcmask 720544
    %417 = vst.msk [vmem:[#allocation0] ss:$8 sm:$0xf] %vm416, %v415
    %418 = vst.msk [vmem:[#allocation0] ss:$8 sm:$0xf0] %vm416, %v415
    %s419 = scalar_lea.vmem %s0, 20
    %v420 = vld [vmem:[%s419] sm:$0x1]
    %s421 = scalar_lea.vmem %s0, 51
    %v422 = vld [vmem:[%s421] sm:$0x2]
    %vm423 = vcmask 1041409
    %v424 = vsel %vm423, %v422, %v420
    %s425 = scalar_lea.vmem %s0, 82
    %v426 = vld [vmem:[%s425] sm:$0x4]
    %vm427 = vcmask 1042434
    %v428 = vsel %vm427, %v426, %v424
    %s429 = scalar_lea.vmem %s0, 113
    %v430 = vld [vmem:[%s429] sm:$0x8]
    %vm431 = vcmask 1043459
    %v432 = vsel %vm431, %v430, %v428
    %s433 = scalar_lea.vmem %s0, 144
    %v434 = vld [vmem:[%s433] sm:$0x10]
    %vm435 = vcmask 1044484
    %v436 = vsel %vm435, %v434, %v432
    %s437 = scalar_lea.vmem %s0, 175
    %v438 = vld [vmem:[%s437] sm:$0x20]
    %vm439 = vcmask 1045509
    %v440 = vsel %vm439, %v438, %v436
    %s441 = scalar_lea.vmem %s0, 206
    %v442 = vld [vmem:[%s441] sm:$0x40]
    %vm443 = vcmask 1046534
    %v444 = vsel %vm443, %v442, %v440
    %s445 = scalar_lea.vmem %s0, 237
    %v446 = vld [vmem:[%s445] sm:$0x80]
    %vm447 = vcmask 1047559
    %v448 = vsel %vm447, %v446, %v444
    %449 = vrot.lane.b32.xlu0 %v448, 80
    %v450 = vpop.permute.xlu0 %449
    %vm451 = vcmask 687744
    %452 = vst.msk [vmem:[#allocation0] ss:$8 sm:$0xf] %vm451, %v450
    %453 = vst.msk [vmem:[#allocation0] ss:$8 sm:$0xf0] %vm451, %v450
    %s454 = scalar_lea.vmem %s0, 19
    %v455 = vld [vmem:[%s454] sm:$0x1]
    %s456 = scalar_lea.vmem %s0, 50
    %v457 = vld [vmem:[%s456] sm:$0x2]
    %vm458 = vcmask 1041409
    %v459 = vsel %vm458, %v457, %v455
    %s460 = scalar_lea.vmem %s0, 81
    %v461 = vld [vmem:[%s460] sm:$0x4]
    %vm462 = vcmask 1042434
    %v463 = vsel %vm462, %v461, %v459
    %s464 = scalar_lea.vmem %s0, 112
    %v465 = vld [vmem:[%s464] sm:$0x8]
    %vm466 = vcmask 1043459
    %v467 = vsel %vm466, %v465, %v463
    %s468 = scalar_lea.vmem %s0, 143
    %v469 = vld [vmem:[%s468] sm:$0x10]
    %vm470 = vcmask 1044484
    %v471 = vsel %vm470, %v469, %v467
    %s472 = scalar_lea.vmem %s0, 174
    %v473 = vld [vmem:[%s472] sm:$0x20]
    %vm474 = vcmask 1045509
    %v475 = vsel %vm474, %v473, %v471
    %s476 = scalar_lea.vmem %s0, 205
    %v477 = vld [vmem:[%s476] sm:$0x40]
    %vm478 = vcmask 1046534
    %v479 = vsel %vm478, %v477, %v475
    %s480 = scalar_lea.vmem %s0, 236
    %v481 = vld [vmem:[%s480] sm:$0x80]
    %vm482 = vcmask 1047559
    %v483 = vsel %vm482, %v481, %v479
    %484 = vrot.lane.b32.xlu0 %v483, 76
    %v485 = vpop.permute.xlu0 %484
    %vm486 = vcmask 654944
    %487 = vst.msk [vmem:[#allocation0] ss:$8 sm:$0xf] %vm486, %v485
    %488 = vst.msk [vmem:[#allocation0] ss:$8 sm:$0xf0] %vm486, %v485
    %s489 = scalar_lea.vmem %s0, 18
    %v490 = vld [vmem:[%s489] sm:$0x1]
    %s491 = scalar_lea.vmem %s0, 49
    %v492 = vld [vmem:[%s491] sm:$0x2]
    %vm493 = vcmask 1041409
    %v494 = vsel %vm493, %v492, %v490
    %s495 = scalar_lea.vmem %s0, 80
    %v496 = vld [vmem:[%s495] sm:$0x4]
    %vm497 = vcmask 1042434
    %v498 = vsel %vm497, %v496, %v494
    %s499 = scalar_lea.vmem %s0, 111
    %v500 = vld [vmem:[%s499] sm:$0x8]
    %vm501 = vcmask 1043459
    %v502 = vsel %vm501, %v500, %v498
    %s503 = scalar_lea.vmem %s0, 142
    %v504 = vld [vmem:[%s503] sm:$0x10]
    %vm505 = vcmask 1044484
    %v506 = vsel %vm505, %v504, %v502
    %s507 = scalar_lea.vmem %s0, 173
    %v508 = vld [vmem:[%s507] sm:$0x20]
    %vm509 = vcmask 1045509
    %v510 = vsel %vm509, %v508, %v506
    %s511 = scalar_lea.vmem %s0, 204
    %v512 = vld [vmem:[%s511] sm:$0x40]
    %vm513 = vcmask 1046534
    %v514 = vsel %vm513, %v512, %v510
    %s515 = scalar_lea.vmem %s0, 235
    %v516 = vld [vmem:[%s515] sm:$0x80]
    %vm517 = vcmask 1047559
    %v518 = vsel %vm517, %v516, %v514
    %519 = vrot.lane.b32.xlu0 %v518, 72
    %v520 = vpop.permute.xlu0 %519
    %vm521 = vcmask 622144
    %522 = vst.msk [vmem:[#allocation0] ss:$8 sm:$0xf] %vm521, %v520
    %523 = vst.msk [vmem:[#allocation0] ss:$8 sm:$0xf0] %vm521, %v520
    %s524 = scalar_lea.vmem %s0, 17
    %v525 = vld [vmem:[%s524] sm:$0x1]
    %s526 = scalar_lea.vmem %s0, 48
    %v527 = vld [vmem:[%s526] sm:$0x2]
    %vm528 = vcmask 1041409
    %v529 = vsel %vm528, %v527, %v525
    %s530 = scalar_lea.vmem %s0, 79
    %v531 = vld [vmem:[%s530] sm:$0x4]
    %vm532 = vcmask 1042434
    %v533 = vsel %vm532, %v531, %v529
    %s534 = scalar_lea.vmem %s0, 110
    %v535 = vld [vmem:[%s534] sm:$0x8]
    %vm536 = vcmask 1043459
    %v537 = vsel %vm536, %v535, %v533
    %s538 = scalar_lea.vmem %s0, 141
    %v539 = vld [vmem:[%s538] sm:$0x10]
    %vm540 = vcmask 1044484
    %v541 = vsel %vm540, %v539, %v537
    %s542 = scalar_lea.vmem %s0, 172
    %v543 = vld [vmem:[%s542] sm:$0x20]
    %vm544 = vcmask 1045509
    %v545 = vsel %vm544, %v543, %v541
    %s546 = scalar_lea.vmem %s0, 203
    %v547 = vld [vmem:[%s546] sm:$0x40]
    %vm548 = vcmask 1046534
    %v549 = vsel %vm548, %v547, %v545
    %s550 = scalar_lea.vmem %s0, 234
    %v551 = vld [vmem:[%s550] sm:$0x80]
    %vm552 = vcmask 1047559
    %v553 = vsel %vm552, %v551, %v549
    %554 = vrot.lane.b32.xlu0 %v553, 68
    %v555 = vpop.permute.xlu0 %554
    %vm556 = vcmask 589344
    %557 = vst.msk [vmem:[#allocation0] ss:$8 sm:$0xf] %vm556, %v555
    %558 = vst.msk [vmem:[#allocation0] ss:$8 sm:$0xf0] %vm556, %v555
    %s559 = scalar_lea.vmem %s0, 16
    %v560 = vld [vmem:[%s559] sm:$0x1]
    %s561 = scalar_lea.vmem %s0, 47
    %v562 = vld [vmem:[%s561] sm:$0x2]
    %vm563 = vcmask 1041409
    %v564 = vsel %vm563, %v562, %v560
    %s565 = scalar_lea.vmem %s0, 78
    %v566 = vld [vmem:[%s565] sm:$0x4]
    %vm567 = vcmask 1042434
    %v568 = vsel %vm567, %v566, %v564
    %s569 = scalar_lea.vmem %s0, 109
    %v570 = vld [vmem:[%s569] sm:$0x8]
    %vm571 = vcmask 1043459
    %v572 = vsel %vm571, %v570, %v568
    %s573 = scalar_lea.vmem %s0, 140
    %v574 = vld [vmem:[%s573] sm:$0x10]
    %vm575 = vcmask 1044484
    %v576 = vsel %vm575, %v574, %v572
    %s577 = scalar_lea.vmem %s0, 171
    %v578 = vld [vmem:[%s577] sm:$0x20]
    %vm579 = vcmask 1045509
    %v580 = vsel %vm579, %v578, %v576
    %s581 = scalar_lea.vmem %s0, 202
    %v582 = vld [vmem:[%s581] sm:$0x40]
    %vm583 = vcmask 1046534
    %v584 = vsel %vm583, %v582, %v580
    %s585 = scalar_lea.vmem %s0, 233
    %v586 = vld [vmem:[%s585] sm:$0x80]
    %vm587 = vcmask 1047559
    %v588 = vsel %vm587, %v586, %v584
    %589 = vrot.lane.b32.xlu0 %v588, 64
    %v590 = vpop.permute.xlu0 %589
    %vm591 = vcmask 556544
    %592 = vst.msk [vmem:[#allocation0] ss:$8 sm:$0xf] %vm591, %v590
    %593 = vst.msk [vmem:[#allocation0] ss:$8 sm:$0xf0] %vm591, %v590
    %s594 = scalar_lea.vmem %s0, 15
    %v595 = vld [vmem:[%s594] sm:$0x1]
    %s596 = scalar_lea.vmem %s0, 46
    %v597 = vld [vmem:[%s596] sm:$0x2]
    %vm598 = vcmask 1041409
    %v599 = vsel %vm598, %v597, %v595
    %s600 = scalar_lea.vmem %s0, 77
    %v601 = vld [vmem:[%s600] sm:$0x4]
    %vm602 = vcmask 1042434
    %v603 = vsel %vm602, %v601, %v599
    %s604 = scalar_lea.vmem %s0, 108
    %v605 = vld [vmem:[%s604] sm:$0x8]
    %vm606 = vcmask 1043459
    %v607 = vsel %vm606, %v605, %v603
    %s608 = scalar_lea.vmem %s0, 139
    %v609 = vld [vmem:[%s608] sm:$0x10]
    %vm610 = vcmask 1044484
    %v611 = vsel %vm610, %v609, %v607
    %s612 = scalar_lea.vmem %s0, 170
    %v613 = vld [vmem:[%s612] sm:$0x20]
    %vm614 = vcmask 1045509
    %v615 = vsel %vm614, %v613, %v611
    %s616 = scalar_lea.vmem %s0, 201
    %v617 = vld [vmem:[%s616] sm:$0x40]
    %vm618 = vcmask 1046534
    %v619 = vsel %vm618, %v617, %v615
    %s620 = scalar_lea.vmem %s0, 232
    %v621 = vld [vmem:[%s620] sm:$0x80]
    %vm622 = vcmask 1047559
    %v623 = vsel %vm622, %v621, %v619
    %624 = vrot.lane.b32.xlu0 %v623, 60
    %v625 = vpop.permute.xlu0 %624
    %vm626 = vcmask 523744
    %627 = vst.msk [vmem:[#allocation0] ss:$8 sm:$0xf] %vm626, %v625
    %628 = vst.msk [vmem:[#allocation0] ss:$8 sm:$0xf0] %vm626, %v625
    %s629 = scalar_lea.vmem %s0, 14
    %v630 = vld [vmem:[%s629] sm:$0x1]
    %s631 = scalar_lea.vmem %s0, 45
    %v632 = vld [vmem:[%s631] sm:$0x2]
    %vm633 = vcmask 1041409
    %v634 = vsel %vm633, %v632, %v630
    %s635 = scalar_lea.vmem %s0, 76
    %v636 = vld [vmem:[%s635] sm:$0x4]
    %vm637 = vcmask 1042434
    %v638 = vsel %vm637, %v636, %v634
    %s639 = scalar_lea.vmem %s0, 107
    %v640 = vld [vmem:[%s639] sm:$0x8]
    %vm641 = vcmask 1043459
    %v642 = vsel %vm641, %v640, %v638
    %s643 = scalar_lea.vmem %s0, 138
    %v644 = vld [vmem:[%s643] sm:$0x10]
    %vm645 = vcmask 1044484
    %v646 = vsel %vm645, %v644, %v642
    %s647 = scalar_lea.vmem %s0, 169
    %v648 = vld [vmem:[%s647] sm:$0x20]
    %vm649 = vcmask 1045509
    %v650 = vsel %vm649, %v648, %v646
    %s651 = scalar_lea.vmem %s0, 200
    %v652 = vld [vmem:[%s651] sm:$0x40]
    %vm653 = vcmask 1046534
    %v654 = vsel %vm653, %v652, %v650
    %s655 = scalar_lea.vmem %s0, 231
    %v656 = vld [vmem:[%s655] sm:$0x80]
    %vm657 = vcmask 1047559
    %v658 = vsel %vm657, %v656, %v654
    %659 = vrot.lane.b32.xlu0 %v658, 56
    %v660 = vpop.permute.xlu0 %659
    %vm661 = vcmask 490944
    %662 = vst.msk [vmem:[#allocation0] ss:$8 sm:$0xf] %vm661, %v660
    %663 = vst.msk [vmem:[#allocation0] ss:$8 sm:$0xf0] %vm661, %v660
    %s664 = scalar_lea.vmem %s0, 13
    %v665 = vld [vmem:[%s664] sm:$0x1]
    %s666 = scalar_lea.vmem %s0, 44
    %v667 = vld [vmem:[%s666] sm:$0x2]
    %vm668 = vcmask 1041409
    %v669 = vsel %vm668, %v667, %v665
    %s670 = scalar_lea.vmem %s0, 75
    %v671 = vld [vmem:[%s670] sm:$0x4]
    %vm672 = vcmask 1042434
    %v673 = vsel %vm672, %v671, %v669
    %s674 = scalar_lea.vmem %s0, 106
    %v675 = vld [vmem:[%s674] sm:$0x8]
    %vm676 = vcmask 1043459
    %v677 = vsel %vm676, %v675, %v673
    %s678 = scalar_lea.vmem %s0, 137
    %v679 = vld [vmem:[%s678] sm:$0x10]
    %vm680 = vcmask 1044484
    %v681 = vsel %vm680, %v679, %v677
    %s682 = scalar_lea.vmem %s0, 168
    %v683 = vld [vmem:[%s682] sm:$0x20]
    %vm684 = vcmask 1045509
    %v685 = vsel %vm684, %v683, %v681
    %s686 = scalar_lea.vmem %s0, 199
    %v687 = vld [vmem:[%s686] sm:$0x40]
    %vm688 = vcmask 1046534
    %v689 = vsel %vm688, %v687, %v685
    %s690 = scalar_lea.vmem %s0, 230
    %v691 = vld [vmem:[%s690] sm:$0x80]
    %vm692 = vcmask 1047559
    %v693 = vsel %vm692, %v691, %v689
    %694 = vrot.lane.b32.xlu0 %v693, 52
    %v695 = vpop.permute.xlu0 %694
    %vm696 = vcmask 458144
    %697 = vst.msk [vmem:[#allocation0] ss:$8 sm:$0xf] %vm696, %v695
    %698 = vst.msk [vmem:[#allocation0] ss:$8 sm:$0xf0] %vm696, %v695
    %s699 = scalar_lea.vmem %s0, 12
    %v700 = vld [vmem:[%s699] sm:$0x1]
    %s701 = scalar_lea.vmem %s0, 43
    %v702 = vld [vmem:[%s701] sm:$0x2]
    %vm703 = vcmask 1041409
    %v704 = vsel %vm703, %v702, %v700
    %s705 = scalar_lea.vmem %s0, 74
    %v706 = vld [vmem:[%s705] sm:$0x4]
    %vm707 = vcmask 1042434
    %v708 = vsel %vm707, %v706, %v704
    %s709 = scalar_lea.vmem %s0, 105
    %v710 = vld [vmem:[%s709] sm:$0x8]
    %vm711 = vcmask 1043459
    %v712 = vsel %vm711, %v710, %v708
    %s713 = scalar_lea.vmem %s0, 136
    %v714 = vld [vmem:[%s713] sm:$0x10]
    %vm715 = vcmask 1044484
    %v716 = vsel %vm715, %v714, %v712
    %s717 = scalar_lea.vmem %s0, 167
    %v718 = vld [vmem:[%s717] sm:$0x20]
    %vm719 = vcmask 1045509
    %v720 = vsel %vm719, %v718, %v716
    %s721 = scalar_lea.vmem %s0, 198
    %v722 = vld [vmem:[%s721] sm:$0x40]
    %vm723 = vcmask 1046534
    %v724 = vsel %vm723, %v722, %v720
    %s725 = scalar_lea.vmem %s0, 229
    %v726 = vld [vmem:[%s725] sm:$0x80]
    %vm727 = vcmask 1047559
    %v728 = vsel %vm727, %v726, %v724
    %729 = vrot.lane.b32.xlu0 %v728, 48
    %v730 = vpop.permute.xlu0 %729
    %vm731 = vcmask 425344
    %732 = vst.msk [vmem:[#allocation0] ss:$8 sm:$0xf] %vm731, %v730
    %733 = vst.msk [vmem:[#allocation0] ss:$8 sm:$0xf0] %vm731, %v730
    %s734 = scalar_lea.vmem %s0, 11
    %v735 = vld [vmem:[%s734] sm:$0x1]
    %s736 = scalar_lea.vmem %s0, 42
    %v737 = vld [vmem:[%s736] sm:$0x2]
    %vm738 = vcmask 1041409
    %v739 = vsel %vm738, %v737, %v735
    %s740 = scalar_lea.vmem %s0, 73
    %v741 = vld [vmem:[%s740] sm:$0x4]
    %vm742 = vcmask 1042434
    %v743 = vsel %vm742, %v741, %v739
    %s744 = scalar_lea.vmem %s0, 104
    %v745 = vld [vmem:[%s744] sm:$0x8]
    %vm746 = vcmask 1043459
    %v747 = vsel %vm746, %v745, %v743
    %s748 = scalar_lea.vmem %s0, 135
    %v749 = vld [vmem:[%s748] sm:$0x10]
    %vm750 = vcmask 1044484
    %v751 = vsel %vm750, %v749, %v747
    %s752 = scalar_lea.vmem %s0, 166
    %v753 = vld [vmem:[%s752] sm:$0x20]
    %vm754 = vcmask 1045509
    %v755 = vsel %vm754, %v753, %v751
    %s756 = scalar_lea.vmem %s0, 197
    %v757 = vld [vmem:[%s756] sm:$0x40]
    %vm758 = vcmask 1046534
    %v759 = vsel %vm758, %v757, %v755
    %s760 = scalar_lea.vmem %s0, 228
    %v761 = vld [vmem:[%s760] sm:$0x80]
    %vm762 = vcmask 1047559
    %v763 = vsel %vm762, %v761, %v759
    %764 = vrot.lane.b32.xlu0 %v763, 44
    %v765 = vpop.permute.xlu0 %764
    %vm766 = vcmask 392544
    %767 = vst.msk [vmem:[#allocation0] ss:$8 sm:$0xf] %vm766, %v765
    %768 = vst.msk [vmem:[#allocation0] ss:$8 sm:$0xf0] %vm766, %v765
    %s769 = scalar_lea.vmem %s0, 10
    %v770 = vld [vmem:[%s769] sm:$0x1]
    %s771 = scalar_lea.vmem %s0, 41
    %v772 = vld [vmem:[%s771] sm:$0x2]
    %vm773 = vcmask 1041409
    %v774 = vsel %vm773, %v772, %v770
    %s775 = scalar_lea.vmem %s0, 72
    %v776 = vld [vmem:[%s775] sm:$0x4]
    %vm777 = vcmask 1042434
    %v778 = vsel %vm777, %v776, %v774
    %s779 = scalar_lea.vmem %s0, 103
    %v780 = vld [vmem:[%s779] sm:$0x8]
    %vm781 = vcmask 1043459
    %v782 = vsel %vm781, %v780, %v778
    %s783 = scalar_lea.vmem %s0, 134
    %v784 = vld [vmem:[%s783] sm:$0x10]
    %vm785 = vcmask 1044484
    %v786 = vsel %vm785, %v784, %v782
    %s787 = scalar_lea.vmem %s0, 165
    %v788 = vld [vmem:[%s787] sm:$0x20]
    %vm789 = vcmask 1045509
    %v790 = vsel %vm789, %v788, %v786
    %s791 = scalar_lea.vmem %s0, 196
    %v792 = vld [vmem:[%s791] sm:$0x40]
    %vm793 = vcmask 1046534
    %v794 = vsel %vm793, %v792, %v790
    %s795 = scalar_lea.vmem %s0, 227
    %v796 = vld [vmem:[%s795] sm:$0x80]
    %vm797 = vcmask 1047559
    %v798 = vsel %vm797, %v796, %v794
    %799 = vrot.lane.b32.xlu0 %v798, 40
    %v800 = vpop.permute.xlu0 %799
    %vm801 = vcmask 359744
    %802 = vst.msk [vmem:[#allocation0] ss:$8 sm:$0xf] %vm801, %v800
    %803 = vst.msk [vmem:[#allocation0] ss:$8 sm:$0xf0] %vm801, %v800
    %s804 = scalar_lea.vmem %s0, 9
    %v805 = vld [vmem:[%s804] sm:$0x1]
    %s806 = scalar_lea.vmem %s0, 40
    %v807 = vld [vmem:[%s806] sm:$0x2]
    %vm808 = vcmask 1041409
    %v809 = vsel %vm808, %v807, %v805
    %s810 = scalar_lea.vmem %s0, 71
    %v811 = vld [vmem:[%s810] sm:$0x4]
    %vm812 = vcmask 1042434
    %v813 = vsel %vm812, %v811, %v809
    %s814 = scalar_lea.vmem %s0, 102
    %v815 = vld [vmem:[%s814] sm:$0x8]
    %vm816 = vcmask 1043459
    %v817 = vsel %vm816, %v815, %v813
    %s818 = scalar_lea.vmem %s0, 133
    %v819 = vld [vmem:[%s818] sm:$0x10]
    %vm820 = vcmask 1044484
    %v821 = vsel %vm820, %v819, %v817
    %s822 = scalar_lea.vmem %s0, 164
    %v823 = vld [vmem:[%s822] sm:$0x20]
    %vm824 = vcmask 1045509
    %v825 = vsel %vm824, %v823, %v821
    %s826 = scalar_lea.vmem %s0, 195
    %v827 = vld [vmem:[%s826] sm:$0x40]
    %vm828 = vcmask 1046534
    %v829 = vsel %vm828, %v827, %v825
    %s830 = scalar_lea.vmem %s0, 226
    %v831 = vld [vmem:[%s830] sm:$0x80]
    %vm832 = vcmask 1047559
    %v833 = vsel %vm832, %v831, %v829
    %834 = vrot.lane.b32.xlu0 %v833, 36
    %v835 = vpop.permute.xlu0 %834
    %vm836 = vcmask 326944
    %837 = vst.msk [vmem:[#allocation0] ss:$8 sm:$0xf] %vm836, %v835
    %838 = vst.msk [vmem:[#allocation0] ss:$8 sm:$0xf0] %vm836, %v835
    %s839 = scalar_lea.vmem %s0, 8
    %v840 = vld [vmem:[%s839] sm:$0x1]
    %s841 = scalar_lea.vmem %s0, 39
    %v842 = vld [vmem:[%s841] sm:$0x2]
    %vm843 = vcmask 1041409
    %v844 = vsel %vm843, %v842, %v840
    %s845 = scalar_lea.vmem %s0, 70
    %v846 = vld [vmem:[%s845] sm:$0x4]
    %vm847 = vcmask 1042434
    %v848 = vsel %vm847, %v846, %v844
    %s849 = scalar_lea.vmem %s0, 101
    %v850 = vld [vmem:[%s849] sm:$0x8]
    %vm851 = vcmask 1043459
    %v852 = vsel %vm851, %v850, %v848
    %s853 = scalar_lea.vmem %s0, 132
    %v854 = vld [vmem:[%s853] sm:$0x10]
    %vm855 = vcmask 1044484
    %v856 = vsel %vm855, %v854, %v852
    %s857 = scalar_lea.vmem %s0, 163
    %v858 = vld [vmem:[%s857] sm:$0x20]
    %vm859 = vcmask 1045509
    %v860 = vsel %vm859, %v858, %v856
    %s861 = scalar_lea.vmem %s0, 194
    %v862 = vld [vmem:[%s861] sm:$0x40]
    %vm863 = vcmask 1046534
    %v864 = vsel %vm863, %v862, %v860
    %s865 = scalar_lea.vmem %s0, 225
    %v866 = vld [vmem:[%s865] sm:$0x80]
    %vm867 = vcmask 1047559
    %v868 = vsel %vm867, %v866, %v864
    %869 = vrot.lane.b32.xlu0 %v868, 32
    %v870 = vpop.permute.xlu0 %869
    %vm871 = vcmask 294144
    %872 = vst.msk [vmem:[#allocation0] ss:$8 sm:$0xf] %vm871, %v870
    %873 = vst.msk [vmem:[#allocation0] ss:$8 sm:$0xf0] %vm871, %v870
    %s874 = scalar_lea.vmem %s0, 7
    %v875 = vld [vmem:[%s874] sm:$0x1]
    %s876 = scalar_lea.vmem %s0, 38
    %v877 = vld [vmem:[%s876] sm:$0x2]
    %vm878 = vcmask 1041409
    %v879 = vsel %vm878, %v877, %v875
    %s880 = scalar_lea.vmem %s0, 69
    %v881 = vld [vmem:[%s880] sm:$0x4]
    %vm882 = vcmask 1042434
    %v883 = vsel %vm882, %v881, %v879
    %s884 = scalar_lea.vmem %s0, 100
    %v885 = vld [vmem:[%s884] sm:$0x8]
    %vm886 = vcmask 1043459
    %v887 = vsel %vm886, %v885, %v883
    %s888 = scalar_lea.vmem %s0, 131
    %v889 = vld [vmem:[%s888] sm:$0x10]
    %vm890 = vcmask 1044484
    %v891 = vsel %vm890, %v889, %v887
    %s892 = scalar_lea.vmem %s0, 162
    %v893 = vld [vmem:[%s892] sm:$0x20]
    %vm894 = vcmask 1045509
    %v895 = vsel %vm894, %v893, %v891
    %s896 = scalar_lea.vmem %s0, 193
    %v897 = vld [vmem:[%s896] sm:$0x40]
    %vm898 = vcmask 1046534
    %v899 = vsel %vm898, %v897, %v895
    %s900 = scalar_lea.vmem %s0, 224
    %v901 = vld [vmem:[%s900] sm:$0x80]
    %vm902 = vcmask 1047559
    %v903 = vsel %vm902, %v901, %v899
    %904 = vrot.lane.b32.xlu0 %v903, 28
    %v905 = vpop.permute.xlu0 %904
    %vm906 = vcmask 261344
    %907 = vst.msk [vmem:[#allocation0] ss:$8 sm:$0xf] %vm906, %v905
    %908 = vst.msk [vmem:[#allocation0] ss:$8 sm:$0xf0] %vm906, %v905
    %s909 = scalar_lea.vmem %s0, 6
    %v910 = vld [vmem:[%s909] sm:$0x1]
    %s911 = scalar_lea.vmem %s0, 37
    %v912 = vld [vmem:[%s911] sm:$0x2]
    %vm913 = vcmask 1041409
    %v914 = vsel %vm913, %v912, %v910
    %s915 = scalar_lea.vmem %s0, 68
    %v916 = vld [vmem:[%s915] sm:$0x4]
    %vm917 = vcmask 1042434
    %v918 = vsel %vm917, %v916, %v914
    %s919 = scalar_lea.vmem %s0, 99
    %v920 = vld [vmem:[%s919] sm:$0x8]
    %vm921 = vcmask 1043459
    %v922 = vsel %vm921, %v920, %v918
    %s923 = scalar_lea.vmem %s0, 130
    %v924 = vld [vmem:[%s923] sm:$0x10]
    %vm925 = vcmask 1044484
    %v926 = vsel %vm925, %v924, %v922
    %s927 = scalar_lea.vmem %s0, 161
    %v928 = vld [vmem:[%s927] sm:$0x20]
    %vm929 = vcmask 1045509
    %v930 = vsel %vm929, %v928, %v926
    %s931 = scalar_lea.vmem %s0, 192
    %v932 = vld [vmem:[%s931] sm:$0x40]
    %vm933 = vcmask 1046534
    %v934 = vsel %vm933, %v932, %v930
    %s935 = scalar_lea.vmem %s0, 223
    %v936 = vld [vmem:[%s935] sm:$0x80]
    %vm937 = vcmask 1047559
    %v938 = vsel %vm937, %v936, %v934
    %939 = vrot.lane.b32.xlu0 %v938, 24
    %v940 = vpop.permute.xlu0 %939
    %vm941 = vcmask 228544
    %942 = vst.msk [vmem:[#allocation0] ss:$8 sm:$0xf] %vm941, %v940
    %943 = vst.msk [vmem:[#allocation0] ss:$8 sm:$0xf0] %vm941, %v940
    %s944 = scalar_lea.vmem %s0, 5
    %v945 = vld [vmem:[%s944] sm:$0x1]
    %s946 = scalar_lea.vmem %s0, 36
    %v947 = vld [vmem:[%s946] sm:$0x2]
    %vm948 = vcmask 1041409
    %v949 = vsel %vm948, %v947, %v945
    %s950 = scalar_lea.vmem %s0, 67
    %v951 = vld [vmem:[%s950] sm:$0x4]
    %vm952 = vcmask 1042434
    %v953 = vsel %vm952, %v951, %v949
    %s954 = scalar_lea.vmem %s0, 98
    %v955 = vld [vmem:[%s954] sm:$0x8]
    %vm956 = vcmask 1043459
    %v957 = vsel %vm956, %v955, %v953
    %s958 = scalar_lea.vmem %s0, 129
    %v959 = vld [vmem:[%s958] sm:$0x10]
    %vm960 = vcmask 1044484
    %v961 = vsel %vm960, %v959, %v957
    %s962 = scalar_lea.vmem %s0, 160
    %v963 = vld [vmem:[%s962] sm:$0x20]
    %vm964 = vcmask 1045509
    %v965 = vsel %vm964, %v963, %v961
    %s966 = scalar_lea.vmem %s0, 191
    %v967 = vld [vmem:[%s966] sm:$0x40]
    %vm968 = vcmask 1046534
    %v969 = vsel %vm968, %v967, %v965
    %s970 = scalar_lea.vmem %s0, 222
    %v971 = vld [vmem:[%s970] sm:$0x80]
    %vm972 = vcmask 1047559
    %v973 = vsel %vm972, %v971, %v969
    %974 = vrot.lane.b32.xlu0 %v973, 20
    %v975 = vpop.permute.xlu0 %974
    %vm976 = vcmask 195744
    %977 = vst.msk [vmem:[#allocation0] ss:$8 sm:$0xf] %vm976, %v975
    %978 = vst.msk [vmem:[#allocation0] ss:$8 sm:$0xf0] %vm976, %v975
    %s979 = scalar_lea.vmem %s0, 4
    %v980 = vld [vmem:[%s979] sm:$0x1]
    %s981 = scalar_lea.vmem %s0, 35
    %v982 = vld [vmem:[%s981] sm:$0x2]
    %vm983 = vcmask 1041409
    %v984 = vsel %vm983, %v982, %v980
    %s985 = scalar_lea.vmem %s0, 66
    %v986 = vld [vmem:[%s985] sm:$0x4]
    %vm987 = vcmask 1042434
    %v988 = vsel %vm987, %v986, %v984
    %s989 = scalar_lea.vmem %s0, 97
    %v990 = vld [vmem:[%s989] sm:$0x8]
    %vm991 = vcmask 1043459
    %v992 = vsel %vm991, %v990, %v988
    %s993 = scalar_lea.vmem %s0, 128
    %v994 = vld [vmem:[%s993] sm:$0x10]
    %vm995 = vcmask 1044484
    %v996 = vsel %vm995, %v994, %v992
    %s997 = scalar_lea.vmem %s0, 159
    %v998 = vld [vmem:[%s997] sm:$0x20]
    %vm999 = vcmask 1045509
    %v1000 = vsel %vm999, %v998, %v996
    %s1001 = scalar_lea.vmem %s0, 190
    %v1002 = vld [vmem:[%s1001] sm:$0x40]
    %vm1003 = vcmask 1046534
    %v1004 = vsel %vm1003, %v1002, %v1000
    %s1005 = scalar_lea.vmem %s0, 221
    %v1006 = vld [vmem:[%s1005] sm:$0x80]
    %vm1007 = vcmask 1047559
    %v1008 = vsel %vm1007, %v1006, %v1004
    %1009 = vrot.lane.b32.xlu0 %v1008, 16
    %v1010 = vpop.permute.xlu0 %1009
    %vm1011 = vcmask 162944
    %1012 = vst.msk [vmem:[#allocation0] ss:$8 sm:$0xf] %vm1011, %v1010
    %1013 = vst.msk [vmem:[#allocation0] ss:$8 sm:$0xf0] %vm1011, %v1010
    %s1014 = scalar_lea.vmem %s0, 3
    %v1015 = vld [vmem:[%s1014] sm:$0x1]
    %s1016 = scalar_lea.vmem %s0, 34
    %v1017 = vld [vmem:[%s1016] sm:$0x2]
    %vm1018 = vcmask 1041409
    %v1019 = vsel %vm1018, %v1017, %v1015
    %s1020 = scalar_lea.vmem %s0, 65
    %v1021 = vld [vmem:[%s1020] sm:$0x4]
    %vm1022 = vcmask 1042434
    %v1023 = vsel %vm1022, %v1021, %v1019
    %s1024 = scalar_lea.vmem %s0, 96
    %v1025 = vld [vmem:[%s1024] sm:$0x8]
    %vm1026 = vcmask 1043459
    %v1027 = vsel %vm1026, %v1025, %v1023
    %s1028 = scalar_lea.vmem %s0, 127
    %v1029 = vld [vmem:[%s1028] sm:$0x10]
    %vm1030 = vcmask 1044484
    %v1031 = vsel %vm1030, %v1029, %v1027
    %s1032 = scalar_lea.vmem %s0, 158
    %v1033 = vld [vmem:[%s1032] sm:$0x20]
    %vm1034 = vcmask 1045509
    %v1035 = vsel %vm1034, %v1033, %v1031
    %s1036 = scalar_lea.vmem %s0, 189
    %v1037 = vld [vmem:[%s1036] sm:$0x40]
    %vm1038 = vcmask 1046534
    %v1039 = vsel %vm1038, %v1037, %v1035
    %s1040 = scalar_lea.vmem %s0, 220
    %v1041 = vld [vmem:[%s1040] sm:$0x80]
    %vm1042 = vcmask 1047559
    %v1043 = vsel %vm1042, %v1041, %v1039
    %1044 = vrot.lane.b32.xlu0 %v1043, 12
    %v1045 = vpop.permute.xlu0 %1044
    %vm1046 = vcmask 130144
    %1047 = vst.msk [vmem:[#allocation0] ss:$8 sm:$0xf] %vm1046, %v1045
    %1048 = vst.msk [vmem:[#allocation0] ss:$8 sm:$0xf0] %vm1046, %v1045
    %s1049 = scalar_lea.vmem %s0, 2
    %v1050 = vld [vmem:[%s1049] sm:$0x1]
    %s1051 = scalar_lea.vmem %s0, 33
    %v1052 = vld [vmem:[%s1051] sm:$0x2]
    %vm1053 = vcmask 1041409
    %v1054 = vsel %vm1053, %v1052, %v1050
    %s1055 = scalar_lea.vmem %s0, 64
    %v1056 = vld [vmem:[%s1055] sm:$0x4]
    %vm1057 = vcmask 1042434
    %v1058 = vsel %vm1057, %v1056, %v1054
    %s1059 = scalar_lea.vmem %s0, 95
    %v1060 = vld [vmem:[%s1059] sm:$0x8]
    %vm1061 = vcmask 1043459
    %v1062 = vsel %vm1061, %v1060, %v1058
    %s1063 = scalar_lea.vmem %s0, 126
    %v1064 = vld [vmem:[%s1063] sm:$0x10]
    %vm1065 = vcmask 1044484
    %v1066 = vsel %vm1065, %v1064, %v1062
    %s1067 = scalar_lea.vmem %s0, 157
    %v1068 = vld [vmem:[%s1067] sm:$0x20]
    %vm1069 = vcmask 1045509
    %v1070 = vsel %vm1069, %v1068, %v1066
    %s1071 = scalar_lea.vmem %s0, 188
    %v1072 = vld [vmem:[%s1071] sm:$0x40]
    %vm1073 = vcmask 1046534
    %v1074 = vsel %vm1073, %v1072, %v1070
    %s1075 = scalar_lea.vmem %s0, 219
    %v1076 = vld [vmem:[%s1075] sm:$0x80]
    %vm1077 = vcmask 1047559
    %v1078 = vsel %vm1077, %v1076, %v1074
    %1079 = vrot.lane.b32.xlu0 %v1078, 8
    %v1080 = vpop.permute.xlu0 %1079
    %vm1081 = vcmask 97344
    %1082 = vst.msk [vmem:[#allocation0] ss:$8 sm:$0xf] %vm1081, %v1080
    %1083 = vst.msk [vmem:[#allocation0] ss:$8 sm:$0xf0] %vm1081, %v1080
    %s1084 = scalar_lea.vmem %s0, 1
    %v1085 = vld [vmem:[%s1084] sm:$0x1]
    %s1086 = scalar_lea.vmem %s0, 32
    %v1087 = vld [vmem:[%s1086] sm:$0x2]
    %vm1088 = vcmask 1041409
    %v1089 = vsel %vm1088, %v1087, %v1085
    %s1090 = scalar_lea.vmem %s0, 63
    %v1091 = vld [vmem:[%s1090] sm:$0x4]
    %vm1092 = vcmask 1042434
    %v1093 = vsel %vm1092, %v1091, %v1089
    %s1094 = scalar_lea.vmem %s0, 94
    %v1095 = vld [vmem:[%s1094] sm:$0x8]
    %vm1096 = vcmask 1043459
    %v1097 = vsel %vm1096, %v1095, %v1093
    %s1098 = scalar_lea.vmem %s0, 125
    %v1099 = vld [vmem:[%s1098] sm:$0x10]
    %vm1100 = vcmask 1044484
    %v1101 = vsel %vm1100, %v1099, %v1097
    %s1102 = scalar_lea.vmem %s0, 156
    %v1103 = vld [vmem:[%s1102] sm:$0x20]
    %vm1104 = vcmask 1045509
    %v1105 = vsel %vm1104, %v1103, %v1101
    %s1106 = scalar_lea.vmem %s0, 187
    %v1107 = vld [vmem:[%s1106] sm:$0x40]
    %vm1108 = vcmask 1046534
    %v1109 = vsel %vm1108, %v1107, %v1105
    %s1110 = scalar_lea.vmem %s0, 218
    %v1111 = vld [vmem:[%s1110] sm:$0x80]
    %vm1112 = vcmask 1047559
    %v1113 = vsel %vm1112, %v1111, %v1109
    %1114 = vrot.lane.b32.xlu0 %v1113, 4
    %v1115 = vpop.permute.xlu0 %1114
    %vm1116 = vcmask 64544
    %1117 = vst.msk [vmem:[#allocation0] ss:$8 sm:$0xf] %vm1116, %v1115
    %1118 = vst.msk [vmem:[#allocation0] ss:$8 sm:$0xf0] %vm1116, %v1115
    %s1120 = sshllo.u32 0, 1
    %v1122 = vld [vmem:[#allocation0] sm:%s1120]
    %s1123 = sshllo.u32 0, 1
    %1124 = vst [vmem:[%s1] sm:%s1123] %v1122
    %s1125 = scalar_lea.vmem [#allocation0], 8
    %v1126 = vld [vmem:[%s1125] sm:%s1120]
    %s1127 = sshllo.u32 0, 1
    %s1128 = scalar_lea.vmem %s1, 1
    %1129 = vst [vmem:[%s1128] sm:%s1127] %v1126
    %s1130 = scalar_lea.vmem [#allocation0], 16
    %v1131 = vld [vmem:[%s1130] sm:%s1120]
    %s1132 = sshllo.u32 0, 1
    %s1133 = smul.addr 1, 2
    %s1134 = scalar_lea.vmem %s1, %s1133
    %1135 = vst [vmem:[%s1134] sm:%s1132] %v1131
    %s1136 = scalar_lea.vmem [#allocation0], 24
    %v1137 = vld [vmem:[%s1136] sm:%s1120]
    %s1138 = sshllo.u32 0, 1
    %s1139 = smul.addr 1, 3
    %s1140 = scalar_lea.vmem %s1, %s1139
    %1141 = vst [vmem:[%s1140] sm:%s1138] %v1137
    %s1142 = scalar_lea.vmem [#allocation0], 32
    %v1143 = vld [vmem:[%s1142] sm:%s1120]
    %s1144 = sshllo.u32 0, 1
    %s1145 = smul.addr 1, 4
    %s1146 = scalar_lea.vmem %s1, %s1145
    %1147 = vst [vmem:[%s1146] sm:%s1144] %v1143
    %s1148 = scalar_lea.vmem [#allocation0], 40
    %v1149 = vld [vmem:[%s1148] sm:%s1120]
    %s1150 = sshllo.u32 0, 1
    %s1151 = smul.addr 1, 5
    %s1152 = scalar_lea.vmem %s1, %s1151
    %1153 = vst [vmem:[%s1152] sm:%s1150] %v1149
    %s1154 = scalar_lea.vmem [#allocation0], 48
    %v1155 = vld [vmem:[%s1154] sm:%s1120]
    %s1156 = sshllo.u32 0, 1
    %s1157 = smul.addr 1, 6
    %s1158 = scalar_lea.vmem %s1, %s1157
    %1159 = vst [vmem:[%s1158] sm:%s1156] %v1155
    %s1160 = scalar_lea.vmem [#allocation0], 56
    %v1161 = vld [vmem:[%s1160] sm:%s1120]
    %s1162 = sshllo.u32 0, 1
    %s1163 = smul.addr 1, 7
    %s1164 = scalar_lea.vmem %s1, %s1163
    %1165 = vst [vmem:[%s1164] sm:%s1162] %v1161

// kernel: residual_block_2d.5
$region0: #{residual_block_2d.5}
  #allocation0 [shape = 'u32[]', space=smem, size = 0x4, offset = 0x4, fixed_abs, tag = 'smem constant byte address 0x4 - core index']
  #allocation1 [shape = 'u32[144,128]{1,0:T(1,128)}', space=vmem, size = 0x12000, scoped, tag = 'internal scratch']
  %s0 = inlined_call_operand.vmem [shape: bf16[2,1,1024], index: 0, kind: input, shape index: {}]
  %s1 = inlined_call_operand.vmem [shape: f32[1,1,1024], index: 1, kind: input, shape index: {}]
  %s2 = inlined_call_operand.vmem [shape: f32[1,1,1024], index: 2, kind: input, shape index: {}]
  %s3 = inlined_call_operand.vmem [shape: bf16[2,1,1024], index: 3, kind: input, shape index: {}]
  %s4 = inlined_call_operand.vmem [shape: f32[2,1,1024], index: 4, kind: output, shape index: {}]
  %s5 = sld [smem:[#allocation0]]
  $region49: #{residual_block_2d.5} parent=0
    _
  %s7 = ssub.s32 1, %s5
  %s8 = scalar_select 0, %s7, %s5
  loop: start=0, step=1, limit=4
  $region2: #{residual_block_2d.5} parent=0 // loop_pre_header
    _
  $region3: #{residual_block_2d.5} parent=0 // loop_header
    %s10 = sphi 0, %s14
    %p11 = scmp.ge.s32.totalorder %s10, 4
    %s20 = sphi 0, %s22
    %s23 = sphi 0, %s20
    %s24 = sphi 0, %s23
    %s40 = sphi 0, %s24
    %s44 = sphi 0, %s44
    %s46 = sphi 0, %s44
    %s47 = sphi 0, %s46
    %s61 = sphi 0, %s47
    %s65 = sphi 0, %s65
    %s67 = sphi 0, %s65
    %s68 = sphi 0, %s67
    %s82 = sphi 0, %s68
    %s88 = sphi 0, %s90
    %s91 = sphi 0, %s88
    %s92 = sphi 0, %s91
    %s108 = sphi 0, %s92
    %s114 = sphi 0, %s116
    %s117 = sphi 0, %s114
    %s118 = sphi 0, %s117
    %s134 = sphi 0, %s118
  $region4: #{residual_block_2d.5} parent=0 // loop_header_branch
    %13 = sbr.rel (%p11) target = $region8
  $region5: #{residual_block_2d.5} parent=0 // loop_body
    %s15 = ssub.s32 %s10, 1
    %s16 = ssub.s32 %s10, 2
    %s17 = sadd.s32 %s10, 1
    %s18 = ssub.s32 %s10, %s17
    %p19 = scmp.eq.s32.totalorder %s18, 0
    %s21 = sadd.s32 %s20, 1
    %s22 = scalar_select %p19, %s20, %s21
    %p25 = pneg %p19
    %p26 = scmp.eq.s32.totalorder %s10, 1
    %p27 = por %p25, %p26
    %p28 = scmp.ne.s32.totalorder %s20, %s23
    %p29 = scmp.eq.s32.totalorder %s10, 0
    %p30 = por %p28, %p29
    %p31 = scmp.ne.s32.totalorder %s20, %s23
    %p32 = scmp.eq.s32.totalorder %s15, 1
    %p33 = por %p31, %p32
    %p34 = scmp.ne.s32.totalorder %s23, %s24
    %p35 = scmp.eq.s32.totalorder %s15, 0
    %p36 = por %p34, %p35
    %p37 = scmp.ne.s32.totalorder %s23, %s24
    %p38 = scmp.eq.s32.totalorder %s16, 1
    %p39 = por %p37, %p38
    %p41 = scmp.ne.s32.totalorder %s24, %s40
    %p42 = scmp.eq.s32.totalorder %s16, 0
    %p43 = por %p41, %p42
    %s45 = sadd.s32 %s44, 1
    %p48 = scmp.eq.s32.totalorder %s10, 1
    %p49 = scmp.ne.s32.totalorder %s44, %s46
    %p50 = scmp.eq.s32.totalorder %s10, 0
    %p51 = por %p49, %p50
    %p52 = scmp.ne.s32.totalorder %s44, %s46
    %p53 = scmp.eq.s32.totalorder %s15, 1
    %p54 = por %p52, %p53
    %p55 = scmp.ne.s32.totalorder %s46, %s47
    %p56 = scmp.eq.s32.totalorder %s15, 0
    %p57 = por %p55, %p56
    %p58 = scmp.ne.s32.totalorder %s46, %s47
    %p59 = scmp.eq.s32.totalorder %s16, 1
    %p60 = por %p58, %p59
    %p62 = scmp.ne.s32.totalorder %s47, %s61
    %p63 = scmp.eq.s32.totalorder %s16, 0
    %p64 = por %p62, %p63
    %s66 = sadd.s32 %s65, 1
    %p69 = scmp.eq.s32.totalorder %s10, 1
    %p70 = scmp.ne.s32.totalorder %s65, %s67
    %p71 = scmp.eq.s32.totalorder %s10, 0
    %p72 = por %p70, %p71
    %p73 = scmp.ne.s32.totalorder %s65, %s67
    %p74 = scmp.eq.s32.totalorder %s15, 1
    %p75 = por %p73, %p74
    %p76 = scmp.ne.s32.totalorder %s67, %s68
    %p77 = scmp.eq.s32.totalorder %s15, 0
    %p78 = por %p76, %p77
    %p79 = scmp.ne.s32.totalorder %s67, %s68
    %p80 = scmp.eq.s32.totalorder %s16, 1
    %p81 = por %p79, %p80
    %p83 = scmp.ne.s32.totalorder %s68, %s82
    %p84 = scmp.eq.s32.totalorder %s16, 0
    %p85 = por %p83, %p84
    %s86 = ssub.s32 %s10, %s17
    %p87 = scmp.eq.s32.totalorder %s86, 0
    %s89 = sadd.s32 %s88, 1
    %s90 = scalar_select %p87, %s88, %s89
    %p93 = pneg %p87
    %p94 = scmp.eq.s32.totalorder %s10, 1
    %p95 = por %p93, %p94
    %p96 = scmp.ne.s32.totalorder %s88, %s91
    %p97 = scmp.eq.s32.totalorder %s10, 0
    %p98 = por %p96, %p97
    %p99 = scmp.ne.s32.totalorder %s88, %s91
    %p100 = scmp.eq.s32.totalorder %s15, 1
    %p101 = por %p99, %p100
    %p102 = scmp.ne.s32.totalorder %s91, %s92
    %p103 = scmp.eq.s32.totalorder %s15, 0
    %p104 = por %p102, %p103
    %p105 = scmp.ne.s32.totalorder %s91, %s92
    %p106 = scmp.eq.s32.totalorder %s16, 1
    %p107 = por %p105, %p106
    %p109 = scmp.ne.s32.totalorder %s92, %s108
    %p110 = scmp.eq.s32.totalorder %s16, 0
    %p111 = por %p109, %p110
    %s112 = ssub.s32 %s10, %s17
    %p113 = scmp.eq.s32.totalorder %s112, 0
    %s115 = sadd.s32 %s114, 1
    %s116 = scalar_select %p113, %s114, %s115
    %p119 = pneg %p113
    %p120 = scmp.eq.s32.totalorder %s10, 1
    %p121 = por %p119, %p120
    %p122 = scmp.ne.s32.totalorder %s114, %s117
    %p123 = scmp.eq.s32.totalorder %s10, 0
    %p124 = por %p122, %p123
    %p125 = scmp.ne.s32.totalorder %s114, %s117
    %p126 = scmp.eq.s32.totalorder %s15, 1
    %p127 = por %p125, %p126
    %p128 = scmp.ne.s32.totalorder %s117, %s118
    %p129 = scmp.eq.s32.totalorder %s15, 0
    %p130 = por %p128, %p129
    %p131 = scmp.ne.s32.totalorder %s117, %s118
    %p132 = scmp.eq.s32.totalorder %s16, 1
    %p133 = por %p131, %p132
    %p135 = scmp.ne.s32.totalorder %s118, %s134
    %p136 = scmp.eq.s32.totalorder %s16, 0
    %p137 = por %p135, %p136
    %p138 = scmp.le.s32.totalorder 1, %s10
    %p139 = scmp.lt.s32.totalorder %s10, 3
    %p140 = pnand %p138, %p139
    %p141 = pneg %p140
    // Predicated region
    $region9: #{residual_block_2d.5} parent=5 // pred_check
      _
    $region10: #{residual_block_2d.5} parent=5 // pred_check_branch
      %143 = sbr.rel (%p140) target = $region12
    $region11: #{residual_block_2d.5} parent=5 // pred_region
      %s144 = ssub.s32 %s10, 1
      // Predicated region
      $region13: #{residual_block_2d.5} parent=11 // pred_check
        %p145 = pneg %p57
      $region14: #{residual_block_2d.5} parent=11 // pred_check_branch
        %147 = sbr.rel (%p145) target = $region16
      $region15: #{residual_block_2d.5} parent=11 // pred_region
        _
      $region16: #{residual_block_2d.5} parent=11 // pred_fallthru
        _
      // Predicated region
      $region17: #{residual_block_2d.5} parent=11 // pred_check
        %p148 = pneg %p78
      $region18: #{residual_block_2d.5} parent=11 // pred_check_branch
        %150 = sbr.rel (%p148) target = $region20
      $region19: #{residual_block_2d.5} parent=11 // pred_region
        _
      $region20: #{residual_block_2d.5} parent=11 // pred_fallthru
        _
    $region12: #{residual_block_2d.5} parent=5 // pred_fallthru
      _
    %p151 = scmp.lt.s32.totalorder %s10, 2
    // Predicated region
    $region21: #{residual_block_2d.5} parent=5 // pred_check
      %p152 = pneg %p151
    $region22: #{residual_block_2d.5} parent=5 // pred_check_branch
      %154 = sbr.rel (%p152) target = $region24
    $region23: #{residual_block_2d.5} parent=5 // pred_region
      // Predicated region
      $region25: #{residual_block_2d.5} parent=23 // pred_check
        %p155 = pneg %p30
      $region26: #{residual_block_2d.5} parent=23 // pred_check_branch
        %157 = sbr.rel (%p155) target = $region28
      $region27: #{residual_block_2d.5} parent=23 // pred_region
        %p158 = scmp.lt.s32.totalorder %s10, 1
        %s159 = scalar_select %p158, %s10, 1
        %s160 = smul.addr %s159, 8
        %s161 = scalar_lea.vmem %s0, %s160
      $region28: #{residual_block_2d.5} parent=23 // pred_fallthru
        _
      // Predicated region
      $region29: #{residual_block_2d.5} parent=23 // pred_check
        %p162 = pneg %p98
      $region30: #{residual_block_2d.5} parent=23 // pred_check_branch
        %164 = sbr.rel (%p162) target = $region32
      $region31: #{residual_block_2d.5} parent=23 // pred_region
        %p165 = scmp.lt.s32.totalorder %s10, 1
        %s166 = scalar_select %p165, %s10, 1
        %s167 = smul.addr %s166, 8
        %s168 = scalar_lea.vmem %s3, %s167
      $region32: #{residual_block_2d.5} parent=23 // pred_fallthru
        _
    $region24: #{residual_block_2d.5} parent=5 // pred_fallthru
      _
    %p169 = scmp.le.s32.totalorder 1, %s10
    %p170 = scmp.lt.s32.totalorder %s10, 3
    %p171 = pnand %p169, %p170
    %p172 = pneg %p171
    // Predicated region
    $region33: #{residual_block_2d.5} parent=5 // pred_check
      _
    $region34: #{residual_block_2d.5} parent=5 // pred_check_branch
      %174 = sbr.rel (%p171) target = $region36
    $region35: #{residual_block_2d.5} parent=5 // pred_region
      %s175 = ssub.s32 %s10, 1
      %p176 = scmp.lt.s32.totalorder %s15, 1
      %s177 = scalar_select %p176, %s15, 1
      %s178 = smul.addr %s177, 8
      %s179 = scalar_lea.vmem %s0, %s178
      %p180 = pneg %p36
      %p181 = pneg %p33
      %p182 = pneg %p57
      %p183 = pneg %p54
      %p184 = pneg %p78
      %p185 = pneg %p75
      %p186 = scmp.lt.s32.totalorder %s15, 1
      %s187 = scalar_select %p186, %s15, 1
      %s188 = smul.addr %s187, 8
      %s189 = scalar_lea.vmem %s3, %s188
      %p190 = pneg %p104
      %p191 = pneg %p101
      %p192 = pneg %p130
      %p193 = pneg %p127
      %p194 = scmp.lt.s32.totalorder %s15, 1
      %s195 = scalar_select %p194, %s15, 1
      %s196 = smul.addr %s195, 8
      %s197 = scalar_lea.vmem %s4, %s196
      %p198 = scmp.lt.s32.totalorder %s15, 1
      %s199 = scalar_select %p198, %s15, 1
      %s200 = smul.addr %s199, 8
      %s201 = scalar_lea.vmem %s0, %s200
      %p202 = scmp.lt.s32.totalorder %s15, 1
      %s203 = scalar_select %p202, %s15, 1
      %s204 = smul.addr %s203, 8
      %s205 = scalar_lea.vmem %s3, %s204
      %p206 = scmp.lt.s32.totalorder %s15, 1
      %s207 = scalar_select %p206, %s15, 1
      %s208 = smul.addr %s207, 8
      %s209 = scalar_lea.vmem %s4, %s208
      %v210 = vld [vmem:[%s201] sm:$0xff]
      %v211 = vunpack.c.l.bf16 %v210
      %v212 = vunpack.c.h.bf16 %v210
      %v213 = vld [vmem:[%s1] sm:$0xff]
      %v216 = vunpack.c.l.s4 857870592
      %v217 = vunpack.c.0.s8 %v216
      %v218 = vlaneseq
      %v219 = vshrl.u32 %v218, 7
      %v220 = vsub.s32 %v217, %v219
      %v221 = vrot.slane %v213, %v220
      %v223 = vunpack.c.l.s4 2003195204
      %v224 = vunpack.c.0.s8 %v223
      %v225 = vlaneseq
      %v226 = vshrl.u32 %v225, 7
      %v227 = vsub.s32 %v224, %v226
      %v228 = vrot.slane %v213, %v227
      %v231 = vmul.f32 %v211, %v221
      %v232 = vmul.f32 %v212, %v228
      %v233 = vld [vmem:[%s2] sm:$0xff]
      %v236 = vunpack.c.l.s4 857870592
      %v237 = vunpack.c.0.s8 %v236
      %v238 = vlaneseq
      %v239 = vshrl.u32 %v238, 7
      %v240 = vsub.s32 %v237, %v239
      %v241 = vrot.slane %v233, %v240
      %v243 = vunpack.c.l.s4 2003195204
      %v244 = vunpack.c.0.s8 %v243
      %v245 = vlaneseq
      %v246 = vshrl.u32 %v245, 7
      %v247 = vsub.s32 %v244, %v246
      %v248 = vrot.slane %v233, %v247
      %v251 = vadd.f32 %v231, %v241
      %v252 = vadd.f32 %v232, %v248
      %v253 = vld [vmem:[%s205] sm:$0xff]
      %v254 = vunpack.c.l.bf16 %v253
      %v255 = vunpack.c.h.bf16 %v253
      %v256 = vadd.f32 %v251, %v254
      %v257 = vadd.f32 %v252, %v255
      %vm258 = vcmp.gt.f32.partialorder %v256, 0.0
      %vm259 = vcmp.gt.f32.partialorder %v257, 0.0
      %v260 = vmul.f32 %v256, 1.442695
      %v261 = vpow.pop %v260
      %v262 = vmul.f32 %v257, 1.442695
      %v263 = vpow.pop %v262
      %v264 = vsub.f32 %v261, 1.0
      %v265 = vsub.f32 %v263, 1.0
      %v266 = vsel %vm258, %v256, %v264
      %v267 = vsel %vm259, %v257, %v265
      %v271 = vunpack.c.l.s4 1966171168
      %v272 = vunpack.c.0.s8 %v271
      %v273 = vlaneseq
      %v274 = vshrl.u32 %v273, 7
      %v275 = vsub.s32 %v272, %v274
      %v276 = vrot.slane %v266, %v275
      %v278 = vunpack.c.l.s4 1966171168
      %v279 = vunpack.c.0.s8 %v278
      %v280 = vlaneseq
      %v281 = vshrl.u32 %v280, 7
      %v282 = vsub.s32 %v279, %v281
      %v283 = vrot.slane %v267, %v282
      %v284 = vcombine.low %v276, %v283
      %286 = vst [vmem:[%s209] sm:$0xff] %v284
      %p287 = scmp.lt.s32.totalorder %s15, 1
      %s288 = scalar_select %p287, %s15, 1
      %s289 = smul.addr %s288, 8
      %s290 = scalar_lea.vmem %s4, %s289
      // Predicated region
      $region37: #{residual_block_2d.5} parent=35 // pred_check
        %p291 = pneg %p127
      $region38: #{residual_block_2d.5} parent=35 // pred_check_branch
        %293 = sbr.rel (%p291) target = $region40
      $region39: #{residual_block_2d.5} parent=35 // pred_region
        _
      $region40: #{residual_block_2d.5} parent=35 // pred_fallthru
        _
    $region36: #{residual_block_2d.5} parent=5 // pred_fallthru
      _
    %p294 = scmp.le.s32.totalorder 2, %s10
    // Predicated region
    $region41: #{residual_block_2d.5} parent=5 // pred_check
      %p295 = pneg %p294
    $region42: #{residual_block_2d.5} parent=5 // pred_check_branch
      %297 = sbr.rel (%p295) target = $region44
    $region43: #{residual_block_2d.5} parent=5 // pred_region
      %s298 = ssub.s32 %s10, 2
      // Predicated region
      $region45: #{residual_block_2d.5} parent=43 // pred_check
        %p299 = pneg %p133
      $region46: #{residual_block_2d.5} parent=43 // pred_check_branch
        %301 = sbr.rel (%p299) target = $region48
      $region47: #{residual_block_2d.5} parent=43 // pred_region
        %p302 = scmp.lt.s32.totalorder %s16, 1
        %s303 = scalar_select %p302, %s16, 1
        %s304 = smul.addr %s303, 8
        %s305 = scalar_lea.vmem %s4, %s304
      $region48: #{residual_block_2d.5} parent=43 // pred_fallthru
        _
    $region44: #{residual_block_2d.5} parent=5 // pred_fallthru
      _
  $region6: #{residual_block_2d.5} parent=0 // loop_footer
    %s14 = sadd.s32 1, %s10
  $region7: #{residual_block_2d.5} parent=0 // loop_footer_branch
    %9 = sbr.rel target = $region3
  $region8: #{residual_block_2d.5} parent=0 // loop_exit
    _

// kernel: residual_block_2d.4
$region0: #{residual_block_2d.4}
  #allocation0 [shape = 'u32[]', space=smem, size = 0x4, offset = 0x4, fixed_abs, tag = 'smem constant byte address 0x4 - core index']
  #allocation1 [shape = 'u32[144,128]{1,0:T(1,128)}', space=vmem, size = 0x12000, scoped, tag = 'internal scratch']
  #allocation2 [shape = 'bf16[18,18,4]{2,1,0:T(8,128)(2,1)}', space=vmem, size = 0x1b000, scoped, tag = 'scratch operand']
  #allocation3 [shape = 'bf16[256,12]{1,0:T(16,128)(2,1)}', space=vmem, size = 0x10000, scoped, tag = 'scratch operand']
  %s0 = inlined_call_operand.vmem [shape: bf16[2,16,16,4], index: 0, kind: input, shape index: {}]
  %s1 = inlined_call_operand.vmem [shape: f32[1,4], index: 1, kind: input, shape index: {}]
  %s2 = inlined_call_operand.vmem [shape: f32[1,4], index: 2, kind: input, shape index: {}]
  %s3 = inlined_call_operand.vmem [shape: bf16[3,12,4], index: 3, kind: input, shape index: {}]
  %s4 = inlined_call_operand.vmem [shape: bf16[2,16,16,4], index: 4, kind: output, shape index: {0}]
  %s5 = inlined_call_operand.vmem [shape: f32[2,1,4], index: 5, kind: output, shape index: {1}]
  %s6 = inlined_call_operand.vmem [shape: f32[2,1,4], index: 6, kind: output, shape index: {2}]
  %7 = xla_tuple %s4, %s5, %s6
  %s8 = sld [smem:[#allocation0]]
  $region65: #{residual_block_2d.4} parent=0
    _
  %s10 = ssub.s32 1, %s8
  %s11 = scalar_select 0, %s10, %s8
  loop: start=0, step=1, limit=4
  $region2: #{residual_block_2d.4} parent=0 // loop_pre_header
    _
  $region3: #{residual_block_2d.4} parent=0 // loop_header
    %s13 = sphi 0, %s17
    %p14 = scmp.ge.s32.totalorder %s13, 4
    %s23 = sphi 0, %s25
    %s26 = sphi 0, %s23
    %s27 = sphi 0, %s26
    %s43 = sphi 0, %s27
    %s47 = sphi 0, %s47
    %s49 = sphi 0, %s47
    %s50 = sphi 0, %s49
    %s64 = sphi 0, %s50
    %s68 = sphi 0, %s68
    %s70 = sphi 0, %s68
    %s71 = sphi 0, %s70
    %s85 = sphi 0, %s71
    %s89 = sphi 0, %s89
    %s91 = sphi 0, %s89
    %s92 = sphi 0, %s91
    %s106 = sphi 0, %s92
    %s112 = sphi 0, %s114
    %s115 = sphi 0, %s112
    %s116 = sphi 0, %s115
    %s132 = sphi 0, %s116
    %s138 = sphi 0, %s140
    %s141 = sphi 0, %s138
    %s142 = sphi 0, %s141
    %s158 = sphi 0, %s142
    %s164 = sphi 0, %s166
    %s167 = sphi 0, %s164
    %s168 = sphi 0, %s167
    %s184 = sphi 0, %s168
  $region4: #{residual_block_2d.4} parent=0 // loop_header_branch
    %16 = sbr.rel (%p14) target = $region8
  $region5: #{residual_block_2d.4} parent=0 // loop_body
    %s18 = ssub.s32 %s13, 1
    %s19 = ssub.s32 %s13, 2
    %s20 = sadd.s32 %s13, 1
    %s21 = ssub.s32 %s13, %s20
    %p22 = scmp.eq.s32.totalorder %s21, 0
    %s24 = sadd.s32 %s23, 1
    %s25 = scalar_select %p22, %s23, %s24
    %p28 = pneg %p22
    %p29 = scmp.eq.s32.totalorder %s13, 1
    %p30 = por %p28, %p29
    %p31 = scmp.ne.s32.totalorder %s23, %s26
    %p32 = scmp.eq.s32.totalorder %s13, 0
    %p33 = por %p31, %p32
    %p34 = scmp.ne.s32.totalorder %s23, %s26
    %p35 = scmp.eq.s32.totalorder %s18, 1
    %p36 = por %p34, %p35
    %p37 = scmp.ne.s32.totalorder %s26, %s27
    %p38 = scmp.eq.s32.totalorder %s18, 0
    %p39 = por %p37, %p38
    %p40 = scmp.ne.s32.totalorder %s26, %s27
    %p41 = scmp.eq.s32.totalorder %s19, 1
    %p42 = por %p40, %p41
    %p44 = scmp.ne.s32.totalorder %s27, %s43
    %p45 = scmp.eq.s32.totalorder %s19, 0
    %p46 = por %p44, %p45
    %s48 = sadd.s32 %s47, 1
    %p51 = scmp.eq.s32.totalorder %s13, 1
    %p52 = scmp.ne.s32.totalorder %s47, %s49
    %p53 = scmp.eq.s32.totalorder %s13, 0
    %p54 = por %p52, %p53
    %p55 = scmp.ne.s32.totalorder %s47, %s49
    %p56 = scmp.eq.s32.totalorder %s18, 1
    %p57 = por %p55, %p56
    %p58 = scmp.ne.s32.totalorder %s49, %s50
    %p59 = scmp.eq.s32.totalorder %s18, 0
    %p60 = por %p58, %p59
    %p61 = scmp.ne.s32.totalorder %s49, %s50
    %p62 = scmp.eq.s32.totalorder %s19, 1
    %p63 = por %p61, %p62
    %p65 = scmp.ne.s32.totalorder %s50, %s64
    %p66 = scmp.eq.s32.totalorder %s19, 0
    %p67 = por %p65, %p66
    %s69 = sadd.s32 %s68, 1
    %p72 = scmp.eq.s32.totalorder %s13, 1
    %p73 = scmp.ne.s32.totalorder %s68, %s70
    %p74 = scmp.eq.s32.totalorder %s13, 0
    %p75 = por %p73, %p74
    %p76 = scmp.ne.s32.totalorder %s68, %s70
    %p77 = scmp.eq.s32.totalorder %s18, 1
    %p78 = por %p76, %p77
    %p79 = scmp.ne.s32.totalorder %s70, %s71
    %p80 = scmp.eq.s32.totalorder %s18, 0
    %p81 = por %p79, %p80
    %p82 = scmp.ne.s32.totalorder %s70, %s71
    %p83 = scmp.eq.s32.totalorder %s19, 1
    %p84 = por %p82, %p83
    %p86 = scmp.ne.s32.totalorder %s71, %s85
    %p87 = scmp.eq.s32.totalorder %s19, 0
    %p88 = por %p86, %p87
    %s90 = sadd.s32 %s89, 1
    %p93 = scmp.eq.s32.totalorder %s13, 1
    %p94 = scmp.ne.s32.totalorder %s89, %s91
    %p95 = scmp.eq.s32.totalorder %s13, 0
    %p96 = por %p94, %p95
    %p97 = scmp.ne.s32.totalorder %s89, %s91
    %p98 = scmp.eq.s32.totalorder %s18, 1
    %p99 = por %p97, %p98
    %p100 = scmp.ne.s32.totalorder %s91, %s92
    %p101 = scmp.eq.s32.totalorder %s18, 0
    %p102 = por %p100, %p101
    %p103 = scmp.ne.s32.totalorder %s91, %s92
    %p104 = scmp.eq.s32.totalorder %s19, 1
    %p105 = por %p103, %p104
    %p107 = scmp.ne.s32.totalorder %s92, %s106
    %p108 = scmp.eq.s32.totalorder %s19, 0
    %p109 = por %p107, %p108
    %s110 = ssub.s32 %s13, %s20
    %p111 = scmp.eq.s32.totalorder %s110, 0
    %s113 = sadd.s32 %s112, 1
    %s114 = scalar_select %p111, %s112, %s113
    %p117 = pneg %p111
    %p118 = scmp.eq.s32.totalorder %s13, 1
    %p119 = por %p117, %p118
    %p120 = scmp.ne.s32.totalorder %s112, %s115
    %p121 = scmp.eq.s32.totalorder %s13, 0
    %p122 = por %p120, %p121
    %p123 = scmp.ne.s32.totalorder %s112, %s115
    %p124 = scmp.eq.s32.totalorder %s18, 1
    %p125 = por %p123, %p124
    %p126 = scmp.ne.s32.totalorder %s115, %s116
    %p127 = scmp.eq.s32.totalorder %s18, 0
    %p128 = por %p126, %p127
    %p129 = scmp.ne.s32.totalorder %s115, %s116
    %p130 = scmp.eq.s32.totalorder %s19, 1
    %p131 = por %p129, %p130
    %p133 = scmp.ne.s32.totalorder %s116, %s132
    %p134 = scmp.eq.s32.totalorder %s19, 0
    %p135 = por %p133, %p134
    %s136 = ssub.s32 %s13, %s20
    %p137 = scmp.eq.s32.totalorder %s136, 0
    %s139 = sadd.s32 %s138, 1
    %s140 = scalar_select %p137, %s138, %s139
    %p143 = pneg %p137
    %p144 = scmp.eq.s32.totalorder %s13, 1
    %p145 = por %p143, %p144
    %p146 = scmp.ne.s32.totalorder %s138, %s141
    %p147 = scmp.eq.s32.totalorder %s13, 0
    %p148 = por %p146, %p147
    %p149 = scmp.ne.s32.totalorder %s138, %s141
    %p150 = scmp.eq.s32.totalorder %s18, 1
    %p151 = por %p149, %p150
    %p152 = scmp.ne.s32.totalorder %s141, %s142
    %p153 = scmp.eq.s32.totalorder %s18, 0
    %p154 = por %p152, %p153
    %p155 = scmp.ne.s32.totalorder %s141, %s142
    %p156 = scmp.eq.s32.totalorder %s19, 1
    %p157 = por %p155, %p156
    %p159 = scmp.ne.s32.totalorder %s142, %s158
    %p160 = scmp.eq.s32.totalorder %s19, 0
    %p161 = por %p159, %p160
    %s162 = ssub.s32 %s13, %s20
    %p163 = scmp.eq.s32.totalorder %s162, 0
    %s165 = sadd.s32 %s164, 1
    %s166 = scalar_select %p163, %s164, %s165
    %p169 = pneg %p163
    %p170 = scmp.eq.s32.totalorder %s13, 1
    %p171 = por %p169, %p170
    %p172 = scmp.ne.s32.totalorder %s164, %s167
    %p173 = scmp.eq.s32.totalorder %s13, 0
    %p174 = por %p172, %p173
    %p175 = scmp.ne.s32.totalorder %s164, %s167
    %p176 = scmp.eq.s32.totalorder %s18, 1
    %p177 = por %p175, %p176
    %p178 = scmp.ne.s32.totalorder %s167, %s168
    %p179 = scmp.eq.s32.totalorder %s18, 0
    %p180 = por %p178, %p179
    %p181 = scmp.ne.s32.totalorder %s167, %s168
    %p182 = scmp.eq.s32.totalorder %s19, 1
    %p183 = por %p181, %p182
    %p185 = scmp.ne.s32.totalorder %s168, %s184
    %p186 = scmp.eq.s32.totalorder %s19, 0
    %p187 = por %p185, %p186
    %p188 = scmp.le.s32.totalorder 1, %s13
    %p189 = scmp.lt.s32.totalorder %s13, 3
    %p190 = pnand %p188, %p189
    %p191 = pneg %p190
    // Predicated region
    $region9: #{residual_block_2d.4} parent=5 // pred_check
      _
    $region10: #{residual_block_2d.4} parent=5 // pred_check_branch
      %193 = sbr.rel (%p190) target = $region12
    $region11: #{residual_block_2d.4} parent=5 // pred_region
      %s194 = ssub.s32 %s13, 1
      // Predicated region
      $region13: #{residual_block_2d.4} parent=11 // pred_check
        %p195 = pneg %p60
      $region14: #{residual_block_2d.4} parent=11 // pred_check_branch
        %197 = sbr.rel (%p195) target = $region16
      $region15: #{residual_block_2d.4} parent=11 // pred_region
        _
      $region16: #{residual_block_2d.4} parent=11 // pred_fallthru
        _
      // Predicated region
      $region17: #{residual_block_2d.4} parent=11 // pred_check
        %p198 = pneg %p81
      $region18: #{residual_block_2d.4} parent=11 // pred_check_branch
        %200 = sbr.rel (%p198) target = $region20
      $region19: #{residual_block_2d.4} parent=11 // pred_region
        _
      $region20: #{residual_block_2d.4} parent=11 // pred_fallthru
        _
      // Predicated region
      $region21: #{residual_block_2d.4} parent=11 // pred_check
        %p201 = pneg %p102
      $region22: #{residual_block_2d.4} parent=11 // pred_check_branch
        %203 = sbr.rel (%p201) target = $region24
      $region23: #{residual_block_2d.4} parent=11 // pred_region
        _
      $region24: #{residual_block_2d.4} parent=11 // pred_fallthru
        _
    $region12: #{residual_block_2d.4} parent=5 // pred_fallthru
      _
    %p204 = scmp.lt.s32.totalorder %s13, 2
    // Predicated region
    $region25: #{residual_block_2d.4} parent=5 // pred_check
      %p205 = pneg %p204
    $region26: #{residual_block_2d.4} parent=5 // pred_check_branch
      %207 = sbr.rel (%p205) target = $region28
    $region27: #{residual_block_2d.4} parent=5 // pred_region
      // Predicated region
      $region29: #{residual_block_2d.4} parent=27 // pred_check
        %p208 = pneg %p33
      $region30: #{residual_block_2d.4} parent=27 // pred_check_branch
        %210 = sbr.rel (%p208) target = $region32
      $region31: #{residual_block_2d.4} parent=27 // pred_region
        %p211 = scmp.lt.s32.totalorder %s13, 1
        %s212 = scalar_select %p211, %s13, 1
        %s213 = smul.addr %s212, 32
        %s214 = smul.addr %s213, 4
        %s215 = scalar_lea.vmem %s0, %s214
      $region32: #{residual_block_2d.4} parent=27 // pred_fallthru
        _
    $region28: #{residual_block_2d.4} parent=5 // pred_fallthru
      _
    %p216 = scmp.le.s32.totalorder 1, %s13
    %p217 = scmp.lt.s32.totalorder %s13, 3
    %p218 = pnand %p216, %p217
    %p219 = pneg %p218
    // Predicated region
    $region33: #{residual_block_2d.4} parent=5 // pred_check
      _
    $region34: #{residual_block_2d.4} parent=5 // pred_check_branch
      %221 = sbr.rel (%p218) target = $region36
    $region35: #{residual_block_2d.4} parent=5 // pred_region
      %s222 = ssub.s32 %s13, 1
      %p223 = scmp.lt.s32.totalorder %s18, 1
      %s224 = scalar_select %p223, %s18, 1
      %s225 = smul.addr %s224, 32
      %s226 = smul.addr %s225, 4
      %s227 = scalar_lea.vmem %s0, %s226
      %p228 = pneg %p39
      %p229 = pneg %p36
      %p230 = pneg %p60
      %p231 = pneg %p57
      %p232 = pneg %p81
      %p233 = pneg %p78
      %p234 = pneg %p102
      %p235 = pneg %p99
      %p236 = pneg %p128
      %p237 = pneg %p125
      %p238 = scmp.lt.s32.totalorder %s18, 1
      %s239 = scalar_select %p238, %s18, 1
      %s240 = smul.addr %s239, 32
      %s241 = smul.addr %s240, 4
      %s242 = scalar_lea.vmem %s4, %s241
      %p243 = pneg %p154
      %p244 = pneg %p151
      %p245 = scmp.lt.s32.totalorder %s18, 1
      %s246 = scalar_select %p245, %s18, 1
      %s247 = scalar_lea.vmem %s5, %s246
      %p248 = pneg %p180
      %p249 = pneg %p177
      %p250 = scmp.lt.s32.totalorder %s18, 1
      %s251 = scalar_select %p250, %s18, 1
      %s252 = scalar_lea.vmem %s6, %s251
      %p253 = scmp.lt.s32.totalorder %s18, 1
      %s254 = scalar_select %p253, %s18, 1
      %s255 = smul.addr %s254, 32
      %s256 = smul.addr %s255, 4
      %s257 = scalar_lea.vmem %s0, %s256
      %p258 = scmp.lt.s32.totalorder %s18, 1
      %s259 = scalar_select %p258, %s18, 1
      %s260 = smul.addr %s259, 32
      %s261 = smul.addr %s260, 4
      %s262 = scalar_lea.vmem %s4, %s261
      %p263 = scmp.lt.s32.totalorder %s18, 1
      %s264 = scalar_select %p263, %s18, 1
      %s265 = scalar_lea.vmem %s5, %s264
      %p266 = scmp.lt.s32.totalorder %s18, 1
      %s267 = scalar_select %p266, %s18, 1
      %s268 = scalar_lea.vmem %s6, %s267
      %v270 = vld [vmem:[%s257] sm:$0xf]
      %v271 = vld [vmem:[%s257 + $0x4] sm:$0xf]
      %v272 = vld [vmem:[%s257 + $0x8] sm:$0xf]
      %v273 = vld [vmem:[%s257 + $0xc] sm:$0xf]
      %v274 = vld [vmem:[%s257 + $0x10] sm:$0xf]
      %v275 = vld [vmem:[%s257 + $0x14] sm:$0xf]
      %v276 = vld [vmem:[%s257 + $0x18] sm:$0xf]
      %v277 = vld [vmem:[%s257 + $0x1c] sm:$0xf]
      %v278 = vld [vmem:[%s257 + $0x20] sm:$0xf]
      %v279 = vld [vmem:[%s257 + $0x24] sm:$0xf]
      %v280 = vld [vmem:[%s257 + $0x28] sm:$0xf]
      %v281 = vld [vmem:[%s257 + $0x2c] sm:$0xf]
      %v282 = vld [vmem:[%s257 + $0x30] sm:$0xf]
      %v283 = vld [vmem:[%s257 + $0x34] sm:$0xf]
      %v284 = vld [vmem:[%s257 + $0x38] sm:$0xf]
      %v285 = vld [vmem:[%s257 + $0x3c] sm:$0xf]
      %v286 = vld [vmem:[%s257 + $0x40] sm:$0xf]
      %v287 = vld [vmem:[%s257 + $0x44] sm:$0xf]
      %v288 = vld [vmem:[%s257 + $0x48] sm:$0xf]
      %v289 = vld [vmem:[%s257 + $0x4c] sm:$0xf]
      %v290 = vld [vmem:[%s257 + $0x50] sm:$0xf]
      %v291 = vld [vmem:[%s257 + $0x54] sm:$0xf]
      %v292 = vld [vmem:[%s257 + $0x58] sm:$0xf]
      %v293 = vld [vmem:[%s257 + $0x5c] sm:$0xf]
      %v294 = vld [vmem:[%s257 + $0x60] sm:$0xf]
      %v295 = vld [vmem:[%s257 + $0x64] sm:$0xf]
      %v296 = vld [vmem:[%s257 + $0x68] sm:$0xf]
      %v297 = vld [vmem:[%s257 + $0x6c] sm:$0xf]
      %v298 = vld [vmem:[%s257 + $0x70] sm:$0xf]
      %v299 = vld [vmem:[%s257 + $0x74] sm:$0xf]
      %v300 = vld [vmem:[%s257 + $0x78] sm:$0xf]
      %v301 = vld [vmem:[%s257 + $0x7c] sm:$0xf]
      %v302 = vunpack.c.l.bf16 %v270
      %v303 = vunpack.c.l.bf16 %v271
      %v304 = vunpack.c.l.bf16 %v272
      %v305 = vunpack.c.l.bf16 %v273
      %v306 = vunpack.c.l.bf16 %v274
      %v307 = vunpack.c.l.bf16 %v275
      %v308 = vunpack.c.l.bf16 %v276
      %v309 = vunpack.c.l.bf16 %v277
      %v310 = vunpack.c.l.bf16 %v278
      %v311 = vunpack.c.l.bf16 %v279
      %v312 = vunpack.c.l.bf16 %v280
      %v313 = vunpack.c.l.bf16 %v281
      %v314 = vunpack.c.l.bf16 %v282
      %v315 = vunpack.c.l.bf16 %v283
      %v316 = vunpack.c.l.bf16 %v284
      %v317 = vunpack.c.l.bf16 %v285
      %v318 = vunpack.c.l.bf16 %v286
      %v319 = vunpack.c.l.bf16 %v287
      %v320 = vunpack.c.l.bf16 %v288
      %v321 = vunpack.c.l.bf16 %v289
      %v322 = vunpack.c.l.bf16 %v290
      %v323 = vunpack.c.l.bf16 %v291
      %v324 = vunpack.c.l.bf16 %v292
      %v325 = vunpack.c.l.bf16 %v293
      %v326 = vunpack.c.l.bf16 %v294
      %v327 = vunpack.c.l.bf16 %v295
      %v328 = vunpack.c.l.bf16 %v296
      %v329 = vunpack.c.l.bf16 %v297
      %v330 = vunpack.c.l.bf16 %v298
      %v331 = vunpack.c.l.bf16 %v299
      %v332 = vunpack.c.l.bf16 %v300
      %v333 = vunpack.c.l.bf16 %v301
      %v334 = vld [vmem:[%s1] sm:$0x1]
      %v336 = vlaneseq
      %v337 = vshrl.u32 %v336, 7
      %v338 = vsub.s32 0, %v337
      %v339 = vrot.slane %v334, %v338
      %v341 = vmul.f32 %v302, %v339
      %v342 = vmul.f32 %v303, %v339
      %v343 = vmul.f32 %v304, %v339
      %v344 = vmul.f32 %v305, %v339
      %v345 = vmul.f32 %v306, %v339
      %v346 = vmul.f32 %v307, %v339
      %v347 = vmul.f32 %v308, %v339
      %v348 = vmul.f32 %v309, %v339
      %v349 = vmul.f32 %v310, %v339
      %v350 = vmul.f32 %v311, %v339
      %v351 = vmul.f32 %v312, %v339
      %v352 = vmul.f32 %v313, %v339
      %v353 = vmul.f32 %v314, %v339
      %v354 = vmul.f32 %v315, %v339
      %v355 = vmul.f32 %v316, %v339
      %v356 = vmul.f32 %v317, %v339
      %v357 = vmul.f32 %v318, %v339
      %v358 = vmul.f32 %v319, %v339
      %v359 = vmul.f32 %v320, %v339
      %v360 = vmul.f32 %v321, %v339
      %v361 = vmul.f32 %v322, %v339
      %v362 = vmul.f32 %v323, %v339
      %v363 = vmul.f32 %v324, %v339
      %v364 = vmul.f32 %v325, %v339
      %v365 = vmul.f32 %v326, %v339
      %v366 = vmul.f32 %v327, %v339
      %v367 = vmul.f32 %v328, %v339
      %v368 = vmul.f32 %v329, %v339
      %v369 = vmul.f32 %v330, %v339
      %v370 = vmul.f32 %v331, %v339
      %v371 = vmul.f32 %v332, %v339
      %v372 = vmul.f32 %v333, %v339
      %v373 = vld [vmem:[%s2] sm:$0x1]
      %v375 = vlaneseq
      %v376 = vshrl.u32 %v375, 7
      %v377 = vsub.s32 0, %v376
      %v378 = vrot.slane %v373, %v377
      %v380 = vadd.f32 %v341, %v378
      %v381 = vadd.f32 %v342, %v378
      %v382 = vadd.f32 %v343, %v378
      %v383 = vadd.f32 %v344, %v378
      %v384 = vadd.f32 %v345, %v378
      %v385 = vadd.f32 %v346, %v378
      %v386 = vadd.f32 %v347, %v378
      %v387 = vadd.f32 %v348, %v378
      %v388 = vadd.f32 %v349, %v378
      %v389 = vadd.f32 %v350, %v378
      %v390 = vadd.f32 %v351, %v378
      %v391 = vadd.f32 %v352, %v378
      %v392 = vadd.f32 %v353, %v378
      %v393 = vadd.f32 %v354, %v378
      %v394 = vadd.f32 %v355, %v378
      %v395 = vadd.f32 %v356, %v378
      %v396 = vadd.f32 %v357, %v378
      %v397 = vadd.f32 %v358, %v378
      %v398 = vadd.f32 %v359, %v378
      %v399 = vadd.f32 %v360, %v378
      %v400 = vadd.f32 %v361, %v378
      %v401 = vadd.f32 %v362, %v378
      %v402 = vadd.f32 %v363, %v378
      %v403 = vadd.f32 %v364, %v378
      %v404 = vadd.f32 %v365, %v378
      %v405 = vadd.f32 %v366, %v378
      %v406 = vadd.f32 %v367, %v378
      %v407 = vadd.f32 %v368, %v378
      %v408 = vadd.f32 %v369, %v378
      %v409 = vadd.f32 %v370, %v378
      %v410 = vadd.f32 %v371, %v378
      %v411 = vadd.f32 %v372, %v378
      %vm412 = vcmp.gt.f32.partialorder %v380, 0.0
      %vm413 = vcmp.gt.f32.partialorder %v381, 0.0
      %vm414 = vcmp.gt.f32.partialorder %v382, 0.0
      %vm415 = vcmp.gt.f32.partialorder %v383, 0.0
      %vm416 = vcmp.gt.f32.partialorder %v384, 0.0
      %vm417 = vcmp.gt.f32.partialorder %v385, 0.0
      %vm418 = vcmp.gt.f32.partialorder %v386, 0.0
      %vm419 = vcmp.gt.f32.partialorder %v387, 0.0
      %vm420 = vcmp.gt.f32.partialorder %v388, 0.0
      %vm421 = vcmp.gt.f32.partialorder %v389, 0.0
      %vm422 = vcmp.gt.f32.partialorder %v390, 0.0
      %vm423 = vcmp.gt.f32.partialorder %v391, 0.0
      %vm424 = vcmp.gt.f32.partialorder %v392, 0.0
      %vm425 = vcmp.gt.f32.partialorder %v393, 0.0
      %vm426 = vcmp.gt.f32.partialorder %v394, 0.0
      %vm427 = vcmp.gt.f32.partialorder %v395, 0.0
      %vm428 = vcmp.gt.f32.partialorder %v396, 0.0
      %vm429 = vcmp.gt.f32.partialorder %v397, 0.0
      %vm430 = vcmp.gt.f32.partialorder %v398, 0.0
      %vm431 = vcmp.gt.f32.partialorder %v399, 0.0
      %vm432 = vcmp.gt.f32.partialorder %v400, 0.0
      %vm433 = vcmp.gt.f32.partialorder %v401, 0.0
      %vm434 = vcmp.gt.f32.partialorder %v402, 0.0
      %vm435 = vcmp.gt.f32.partialorder %v403, 0.0
      %vm436 = vcmp.gt.f32.partialorder %v404, 0.0
      %vm437 = vcmp.gt.f32.partialorder %v405, 0.0
      %vm438 = vcmp.gt.f32.partialorder %v406, 0.0
      %vm439 = vcmp.gt.f32.partialorder %v407, 0.0
      %vm440 = vcmp.gt.f32.partialorder %v408, 0.0
      %vm441 = vcmp.gt.f32.partialorder %v409, 0.0
      %vm442 = vcmp.gt.f32.partialorder %v410, 0.0
      %vm443 = vcmp.gt.f32.partialorder %v411, 0.0
      %v444 = vmul.f32 %v380, 1.442695
      %v445 = vpow.pop %v444
      %v446 = vmul.f32 %v381, 1.442695
      %v447 = vpow.pop %v446
      %v448 = vmul.f32 %v382, 1.442695
      %v449 = vpow.pop %v448
      %v450 = vmul.f32 %v383, 1.442695
      %v451 = vpow.pop %v450
      %v452 = vmul.f32 %v384, 1.442695
      %v453 = vpow.pop %v452
      %v454 = vmul.f32 %v385, 1.442695
      %v455 = vpow.pop %v454
      %v456 = vmul.f32 %v386, 1.442695
      %v457 = vpow.pop %v456
      %v458 = vmul.f32 %v387, 1.442695
      %v459 = vpow.pop %v458
      %v460 = vmul.f32 %v388, 1.442695
      %v461 = vpow.pop %v460
      %v462 = vmul.f32 %v389, 1.442695
      %v463 = vpow.pop %v462
      %v464 = vmul.f32 %v390, 1.442695
      %v465 = vpow.pop %v464
      %v466 = vmul.f32 %v391, 1.442695
      %v467 = vpow.pop %v466
      %v468 = vmul.f32 %v392, 1.442695
      %v469 = vpow.pop %v468
      %v470 = vmul.f32 %v393, 1.442695
      %v471 = vpow.pop %v470
      %v472 = vmul.f32 %v394, 1.442695
      %v473 = vpow.pop %v472
      %v474 = vmul.f32 %v395, 1.442695
      %v475 = vpow.pop %v474
      %v476 = vmul.f32 %v396, 1.442695
      %v477 = vpow.pop %v476
      %v478 = vmul.f32 %v397, 1.442695
      %v479 = vpow.pop %v478
      %v480 = vmul.f32 %v398, 1.442695
      %v481 = vpow.pop %v480
      %v482 = vmul.f32 %v399, 1.442695
      %v483 = vpow.pop %v482
      %v484 = vmul.f32 %v400, 1.442695
      %v485 = vpow.pop %v484
      %v486 = vmul.f32 %v401, 1.442695
      %v487 = vpow.pop %v486
      %v488 = vmul.f32 %v402, 1.442695
      %v489 = vpow.pop %v488
      %v490 = vmul.f32 %v403, 1.442695
      %v491 = vpow.pop %v490
      %v492 = vmul.f32 %v404, 1.442695
      %v493 = vpow.pop %v492
      %v494 = vmul.f32 %v405, 1.442695
      %v495 = vpow.pop %v494
      %v496 = vmul.f32 %v406, 1.442695
      %v497 = vpow.pop %v496
      %v498 = vmul.f32 %v407, 1.442695
      %v499 = vpow.pop %v498
      %v500 = vmul.f32 %v408, 1.442695
      %v501 = vpow.pop %v500
      %v502 = vmul.f32 %v409, 1.442695
      %v503 = vpow.pop %v502
      %v504 = vmul.f32 %v410, 1.442695
      %v505 = vpow.pop %v504
      %v506 = vmul.f32 %v411, 1.442695
      %v507 = vpow.pop %v506
      %v508 = vsub.f32 %v445, 1.0
      %v509 = vsub.f32 %v447, 1.0
      %v510 = vsub.f32 %v449, 1.0
      %v511 = vsub.f32 %v451, 1.0
      %v512 = vsub.f32 %v453, 1.0
      %v513 = vsub.f32 %v455, 1.0
      %v514 = vsub.f32 %v457, 1.0
      %v515 = vsub.f32 %v459, 1.0
      %v516 = vsub.f32 %v461, 1.0
      %v517 = vsub.f32 %v463, 1.0
      %v518 = vsub.f32 %v465, 1.0
      %v519 = vsub.f32 %v467, 1.0
      %v520 = vsub.f32 %v469, 1.0
      %v521 = vsub.f32 %v471, 1.0
      %v522 = vsub.f32 %v473, 1.0
      %v523 = vsub.f32 %v475, 1.0
      %v524 = vsub.f32 %v477, 1.0
      %v525 = vsub.f32 %v479, 1.0
      %v526 = vsub.f32 %v481, 1.0
      %v527 = vsub.f32 %v483, 1.0
      %v528 = vsub.f32 %v485, 1.0
      %v529 = vsub.f32 %v487, 1.0
      %v530 = vsub.f32 %v489, 1.0
      %v531 = vsub.f32 %v491, 1.0
      %v532 = vsub.f32 %v493, 1.0
      %v533 = vsub.f32 %v495, 1.0
      %v534 = vsub.f32 %v497, 1.0
      %v535 = vsub.f32 %v499, 1.0
      %v536 = vsub.f32 %v501, 1.0
      %v537 = vsub.f32 %v503, 1.0
      %v538 = vsub.f32 %v505, 1.0
      %v539 = vsub.f32 %v507, 1.0
      %v540 = vsel %vm412, %v380, %v508
      %v541 = vsel %vm413, %v381, %v509
      %v542 = vsel %vm414, %v382, %v510
      %v543 = vsel %vm415, %v383, %v511
      %v544 = vsel %vm416, %v384, %v512
      %v545 = vsel %vm417, %v385, %v513
      %v546 = vsel %vm418, %v386, %v514
      %v547 = vsel %vm419, %v387, %v515
      %v548 = vsel %vm420, %v388, %v516
      %v549 = vsel %vm421, %v389, %v517
      %v550 = vsel %vm422, %v390, %v518
      %v551 = vsel %vm423, %v391, %v519
      %v552 = vsel %vm424, %v392, %v520
      %v553 = vsel %vm425, %v393, %v521
      %v554 = vsel %vm426, %v394, %v522
      %v555 = vsel %vm427, %v395, %v523
      %v556 = vsel %vm428, %v396, %v524
      %v557 = vsel %vm429, %v397, %v525
      %v558 = vsel %vm430, %v398, %v526
      %v559 = vsel %vm431, %v399, %v527
      %v560 = vsel %vm432, %v400, %v528
      %v561 = vsel %vm433, %v401, %v529
      %v562 = vsel %vm434, %v402, %v530
      %v563 = vsel %vm435, %v403, %v531
      %v564 = vsel %vm436, %v404, %v532
      %v565 = vsel %vm437, %v405, %v533
      %v566 = vsel %vm438, %v406, %v534
      %v567 = vsel %vm439, %v407, %v535
      %v568 = vsel %vm440, %v408, %v536
      %v569 = vsel %vm441, %v409, %v537
      %v570 = vsel %vm442, %v410, %v538
      %v571 = vsel %vm443, %v411, %v539
      %vm572 = vcmask 27648
      %573 = vst.msk [vmem:[#allocation2] sm:$0xf] %vm572, 0
      %574 = vst.msk [vmem:[#allocation2 + $0x4] sm:$0xf] %vm572, 0
      %vm575 = vcmask 24576
      %576 = vst.msk [vmem:[#allocation2 + $0x8] sm:$0x1] %vm575, 0
      %s577 = scalar_lea.vmem [#allocation2], 204
      %578 = vst.msk [vmem:[%s577] sm:$0xf] %vm572, 0
      %579 = vst.msk [vmem:[%s577 + $0x4] sm:$0xf] %vm572, 0
      %580 = vst.msk [vmem:[%s577 + $0x8] sm:$0x1] %vm575, 0
      %vm581 = vcmask 24576
      %vm582 = vsmask.f32 256
      %vm583 = vmand %vm581, %vm582
      %v584 = vld [vmem:[#allocation2] sm:$0x1]
      %v585 = vsel %vm583, 0, %v584
      %586 = vst [vmem:[#allocation2] sm:$0x1] %v585
      %v587 = vld [vmem:[#allocation2 + $0xc] sm:$0x1]
      %v588 = vsel %vm583, 0, %v587
      %589 = vst [vmem:[#allocation2 + $0xc] sm:$0x1] %v588
      %v590 = vld [vmem:[#allocation2 + $0x18] sm:$0x1]
      %v591 = vsel %vm583, 0, %v590
      %592 = vst [vmem:[#allocation2 + $0x18] sm:$0x1] %v591
      %v593 = vld [vmem:[#allocation2 + $0x24] sm:$0x1]
      %v594 = vsel %vm583, 0, %v593
      %595 = vst [vmem:[#allocation2 + $0x24] sm:$0x1] %v594
      %v596 = vld [vmem:[#allocation2 + $0x30] sm:$0x1]
      %v597 = vsel %vm583, 0, %v596
      %598 = vst [vmem:[#allocation2 + $0x30] sm:$0x1] %v597
      %v599 = vld [vmem:[#allocation2 + $0x3c] sm:$0x1]
      %v600 = vsel %vm583, 0, %v599
      %601 = vst [vmem:[#allocation2 + $0x3c] sm:$0x1] %v600
      %v602 = vld [vmem:[#allocation2 + $0x48] sm:$0x1]
      %v603 = vsel %vm583, 0, %v602
      %604 = vst [vmem:[#allocation2 + $0x48] sm:$0x1] %v603
      %v605 = vld [vmem:[#allocation2 + $0x54] sm:$0x1]
      %v606 = vsel %vm583, 0, %v605
      %607 = vst [vmem:[#allocation2 + $0x54] sm:$0x1] %v606
      %v608 = vld [vmem:[#allocation2 + $0x60] sm:$0x1]
      %v609 = vsel %vm583, 0, %v608
      %610 = vst [vmem:[#allocation2 + $0x60] sm:$0x1] %v609
      %v611 = vld [vmem:[#allocation2 + $0x6c] sm:$0x1]
      %v612 = vsel %vm583, 0, %v611
      %613 = vst [vmem:[#allocation2 + $0x6c] sm:$0x1] %v612
      %v614 = vld [vmem:[#allocation2 + $0x78] sm:$0x1]
      %v615 = vsel %vm583, 0, %v614
      %616 = vst [vmem:[#allocation2 + $0x78] sm:$0x1] %v615
      %v617 = vld [vmem:[#allocation2 + $0x84] sm:$0x1]
      %v618 = vsel %vm583, 0, %v617
      %619 = vst [vmem:[#allocation2 + $0x84] sm:$0x1] %v618
      %v620 = vld [vmem:[#allocation2 + $0x90] sm:$0x1]
      %v621 = vsel %vm583, 0, %v620
      %622 = vst [vmem:[#allocation2 + $0x90] sm:$0x1] %v621
      %v623 = vld [vmem:[#allocation2 + $0x9c] sm:$0x1]
      %v624 = vsel %vm583, 0, %v623
      %625 = vst [vmem:[#allocation2 + $0x9c] sm:$0x1] %v624
      %v626 = vld [vmem:[#allocation2 + $0xa8] sm:$0x1]
      %v627 = vsel %vm583, 0, %v626
      %628 = vst [vmem:[#allocation2 + $0xa8] sm:$0x1] %v627
      %v629 = vld [vmem:[#allocation2 + $0xb4] sm:$0x1]
      %v630 = vsel %vm583, 0, %v629
      %631 = vst [vmem:[#allocation2 + $0xb4] sm:$0x1] %v630
      %v632 = vld [vmem:[#allocation2 + $0xc0] sm:$0x1]
      %v633 = vsel %vm583, 0, %v632
      %634 = vst [vmem:[#allocation2 + $0xc0] sm:$0x1] %v633
      %v635 = vld [vmem:[#allocation2 + $0xcc] sm:$0x1]
      %v636 = vsel %vm583, 0, %v635
      %637 = vst [vmem:[#allocation2 + $0xcc] sm:$0x1] %v636
      %vm638 = vsmask.f32 7938
      %vm639 = vmand %vm581, %vm638
      %v640 = vld [vmem:[#allocation2 + $0x8] sm:$0x1]
      %v641 = vsel %vm639, 0, %v640
      %642 = vst [vmem:[#allocation2 + $0x8] sm:$0x1] %v641
      %v643 = vld [vmem:[#allocation2 + $0x14] sm:$0x1]
      %v644 = vsel %vm639, 0, %v643
      %645 = vst [vmem:[#allocation2 + $0x14] sm:$0x1] %v644
      %v646 = vld [vmem:[#allocation2 + $0x20] sm:$0x1]
      %v647 = vsel %vm639, 0, %v646
      %648 = vst [vmem:[#allocation2 + $0x20] sm:$0x1] %v647
      %v649 = vld [vmem:[#allocation2 + $0x2c] sm:$0x1]
      %v650 = vsel %vm639, 0, %v649
      %651 = vst [vmem:[#allocation2 + $0x2c] sm:$0x1] %v650
      %v652 = vld [vmem:[#allocation2 + $0x38] sm:$0x1]
      %v653 = vsel %vm639, 0, %v652
      %654 = vst [vmem:[#allocation2 + $0x38] sm:$0x1] %v653
      %v655 = vld [vmem:[#allocation2 + $0x44] sm:$0x1]
      %v656 = vsel %vm639, 0, %v655
      %657 = vst [vmem:[#allocation2 + $0x44] sm:$0x1] %v656
      %v658 = vld [vmem:[#allocation2 + $0x50] sm:$0x1]
      %v659 = vsel %vm639, 0, %v658
      %660 = vst [vmem:[#allocation2 + $0x50] sm:$0x1] %v659
      %v661 = vld [vmem:[#allocation2 + $0x5c] sm:$0x1]
      %v662 = vsel %vm639, 0, %v661
      %663 = vst [vmem:[#allocation2 + $0x5c] sm:$0x1] %v662
      %v664 = vld [vmem:[#allocation2 + $0x68] sm:$0x1]
      %v665 = vsel %vm639, 0, %v664
      %666 = vst [vmem:[#allocation2 + $0x68] sm:$0x1] %v665
      %v667 = vld [vmem:[#allocation2 + $0x74] sm:$0x1]
      %v668 = vsel %vm639, 0, %v667
      %669 = vst [vmem:[#allocation2 + $0x74] sm:$0x1] %v668
      %v670 = vld [vmem:[#allocation2 + $0x80] sm:$0x1]
      %v671 = vsel %vm639, 0, %v670
      %672 = vst [vmem:[#allocation2 + $0x80] sm:$0x1] %v671
      %v673 = vld [vmem:[#allocation2 + $0x8c] sm:$0x1]
      %v674 = vsel %vm639, 0, %v673
      %675 = vst [vmem:[#allocation2 + $0x8c] sm:$0x1] %v674
      %v676 = vld [vmem:[#allocation2 + $0x98] sm:$0x1]
      %v677 = vsel %vm639, 0, %v676
      %678 = vst [vmem:[#allocation2 + $0x98] sm:$0x1] %v677
      %v679 = vld [vmem:[#allocation2 + $0xa4] sm:$0x1]
      %v680 = vsel %vm639, 0, %v679
      %681 = vst [vmem:[#allocation2 + $0xa4] sm:$0x1] %v680
      %v682 = vld [vmem:[#allocation2 + $0xb0] sm:$0x1]
      %v683 = vsel %vm639, 0, %v682
      %684 = vst [vmem:[#allocation2 + $0xb0] sm:$0x1] %v683
      %v685 = vld [vmem:[#allocation2 + $0xbc] sm:$0x1]
      %v686 = vsel %vm639, 0, %v685
      %687 = vst [vmem:[#allocation2 + $0xbc] sm:$0x1] %v686
      %v688 = vld [vmem:[#allocation2 + $0xc8] sm:$0x1]
      %v689 = vsel %vm639, 0, %v688
      %690 = vst [vmem:[#allocation2 + $0xc8] sm:$0x1] %v689
      %v691 = vld [vmem:[#allocation2 + $0xd4] sm:$0x1]
      %v692 = vsel %vm639, 0, %v691
      %693 = vst [vmem:[#allocation2 + $0xd4] sm:$0x1] %v692
      %v694 = vpack.c.bf16 %v541, %v540
      %v695 = vpack.c.bf16 %v543, %v542
      %v696 = vpack.c.bf16 %v545, %v544
      %v697 = vpack.c.bf16 %v547, %v546
      %v698 = vpack.c.bf16 %v549, %v548
      %v699 = vpack.c.bf16 %v551, %v550
      %v700 = vpack.c.bf16 %v553, %v552
      %v701 = vpack.c.bf16 %v555, %v554
      %v702 = vpack.c.bf16 %v557, %v556
      %v703 = vpack.c.bf16 %v559, %v558
      %v704 = vpack.c.bf16 %v561, %v560
      %v705 = vpack.c.bf16 %v563, %v562
      %v706 = vpack.c.bf16 %v565, %v564
      %v707 = vpack.c.bf16 %v567, %v566
      %v708 = vpack.c.bf16 %v569, %v568
      %v709 = vpack.c.bf16 %v571, %v570
      %v726 = vunpack.c.l.b16 %v694
      %v727 = vunpack.c.h.b16 %v694
      %v728 = vunpack.c.l.b16 %v695
      %v729 = vunpack.c.h.b16 %v695
      %v730 = vunpack.c.l.b16 %v696
      %v731 = vunpack.c.h.b16 %v696
      %v732 = vunpack.c.l.b16 %v697
      %v733 = vunpack.c.h.b16 %v697
      %v734 = vunpack.c.l.b16 %v698
      %v735 = vunpack.c.h.b16 %v698
      %v736 = vunpack.c.l.b16 %v699
      %v737 = vunpack.c.h.b16 %v699
      %v738 = vunpack.c.l.b16 %v700
      %v739 = vunpack.c.h.b16 %v700
      %v740 = vunpack.c.l.b16 %v701
      %v741 = vunpack.c.h.b16 %v701
      %v742 = vunpack.c.l.b16 %v702
      %v743 = vunpack.c.h.b16 %v702
      %v744 = vunpack.c.l.b16 %v703
      %v745 = vunpack.c.h.b16 %v703
      %v746 = vunpack.c.l.b16 %v704
      %v747 = vunpack.c.h.b16 %v704
      %v748 = vunpack.c.l.b16 %v705
      %v749 = vunpack.c.h.b16 %v705
      %v750 = vunpack.c.l.b16 %v706
      %v751 = vunpack.c.h.b16 %v706
      %v752 = vunpack.c.l.b16 %v707
      %v753 = vunpack.c.h.b16 %v707
      %v754 = vunpack.c.l.b16 %v708
      %v755 = vunpack.c.h.b16 %v708
      %v756 = vunpack.c.l.b16 %v709
      %v757 = vunpack.c.h.b16 %v709
      %v758 = vpack.c.b16 %v726, %v726
      %v759 = vpack.c.b16 %v727, %v727
      %v760 = vpack.c.b16 %v728, %v728
      %v761 = vpack.c.b16 %v729, %v729
      %v762 = vpack.c.b16 %v730, %v730
      %v763 = vpack.c.b16 %v731, %v731
      %v764 = vpack.c.b16 %v732, %v732
      %v765 = vpack.c.b16 %v733, %v733
      %v766 = vpack.c.b16 %v734, %v734
      %v767 = vpack.c.b16 %v735, %v735
      %v768 = vpack.c.b16 %v736, %v736
      %v769 = vpack.c.b16 %v737, %v737
      %v770 = vpack.c.b16 %v738, %v738
      %v771 = vpack.c.b16 %v739, %v739
      %v772 = vpack.c.b16 %v740, %v740
      %v773 = vpack.c.b16 %v741, %v741
      %v774 = vpack.c.b16 %v742, %v742
      %v775 = vpack.c.b16 %v743, %v743
      %v776 = vpack.c.b16 %v744, %v744
      %v777 = vpack.c.b16 %v745, %v745
      %v778 = vpack.c.b16 %v746, %v746
      %v779 = vpack.c.b16 %v747, %v747
      %v780 = vpack.c.b16 %v748, %v748
      %v781 = vpack.c.b16 %v749, %v749
      %v782 = vpack.c.b16 %v750, %v750
      %v783 = vpack.c.b16 %v751, %v751
      %v784 = vpack.c.b16 %v752, %v752
      %v785 = vpack.c.b16 %v753, %v753
      %v786 = vpack.c.b16 %v754, %v754
      %v787 = vpack.c.b16 %v755, %v755
      %v788 = vpack.c.b16 %v756, %v756
      %v789 = vpack.c.b16 %v757, %v757
      %vm790 = vsmask.f32 4368
      %vm791 = vmor %vm582, %vm790
      %v793 = vshrl.u32 %v758, 16
      %v795 = vrot.slane %v793, 7
      %v796 = vshll.u32 %v758, 16
      %v798 = vor.u32 %v795, %v796
      %v799 = vrot.slane %v795, 4
      %v801 = vshrl.u32 %v759, 16
      %v803 = vrot.slane %v801, 7
      %v804 = vshll.u32 %v759, 16
      %v806 = vor.u32 %v803, %v804
      %v807 = vsel %vm791, %v799, %v806
      %v808 = vrot.slane %v803, 4
      %v810 = vshrl.u32 %v760, 16
      %v812 = vrot.slane %v810, 7
      %v813 = vshll.u32 %v760, 16
      %v815 = vor.u32 %v812, %v813
      %v816 = vrot.slane %v812, 4
      %v818 = vshrl.u32 %v761, 16
      %v820 = vrot.slane %v818, 7
      %v821 = vshll.u32 %v761, 16
      %v823 = vor.u32 %v820, %v821
      %v824 = vsel %vm791, %v816, %v823
      %v825 = vrot.slane %v820, 4
      %v827 = vshrl.u32 %v762, 16
      %v829 = vrot.slane %v827, 7
      %v830 = vshll.u32 %v762, 16
      %v832 = vor.u32 %v829, %v830
      %v833 = vrot.slane %v829, 4
      %v835 = vshrl.u32 %v763, 16
      %v837 = vrot.slane %v835, 7
      %v838 = vshll.u32 %v763, 16
      %v840 = vor.u32 %v837, %v838
      %v841 = vsel %vm791, %v833, %v840
      %v842 = vrot.slane %v837, 4
      %v844 = vshrl.u32 %v764, 16
      %v846 = vrot.slane %v844, 7
      %v847 = vshll.u32 %v764, 16
      %v849 = vor.u32 %v846, %v847
      %v850 = vrot.slane %v846, 4
      %v852 = vshrl.u32 %v765, 16
      %v854 = vrot.slane %v852, 7
      %v855 = vshll.u32 %v765, 16
      %v857 = vor.u32 %v854, %v855
      %v858 = vsel %vm791, %v850, %v857
      %v859 = vrot.slane %v854, 4
      %v861 = vshrl.u32 %v766, 16
      %v863 = vrot.slane %v861, 7
      %v864 = vshll.u32 %v766, 16
      %v866 = vor.u32 %v863, %v864
      %v867 = vrot.slane %v863, 4
      %v869 = vshrl.u32 %v767, 16
      %v871 = vrot.slane %v869, 7
      %v872 = vshll.u32 %v767, 16
      %v874 = vor.u32 %v871, %v872
      %v875 = vsel %vm791, %v867, %v874
      %v876 = vrot.slane %v871, 4
      %v878 = vshrl.u32 %v768, 16
      %v880 = vrot.slane %v878, 7
      %v881 = vshll.u32 %v768, 16
      %v883 = vor.u32 %v880, %v881
      %v884 = vrot.slane %v880, 4
      %v886 = vshrl.u32 %v769, 16
      %v888 = vrot.slane %v886, 7
      %v889 = vshll.u32 %v769, 16
      %v891 = vor.u32 %v888, %v889
      %v892 = vsel %vm791, %v884, %v891
      %v893 = vrot.slane %v888, 4
      %v895 = vshrl.u32 %v770, 16
      %v897 = vrot.slane %v895, 7
      %v898 = vshll.u32 %v770, 16
      %v900 = vor.u32 %v897, %v898
      %v901 = vrot.slane %v897, 4
      %v903 = vshrl.u32 %v771, 16
      %v905 = vrot.slane %v903, 7
      %v906 = vshll.u32 %v771, 16
      %v908 = vor.u32 %v905, %v906
      %v909 = vsel %vm791, %v901, %v908
      %v910 = vrot.slane %v905, 4
      %v912 = vshrl.u32 %v772, 16
      %v914 = vrot.slane %v912, 7
      %v915 = vshll.u32 %v772, 16
      %v917 = vor.u32 %v914, %v915
      %v918 = vrot.slane %v914, 4
      %v920 = vshrl.u32 %v773, 16
      %v922 = vrot.slane %v920, 7
      %v923 = vshll.u32 %v773, 16
      %v925 = vor.u32 %v922, %v923
      %v926 = vsel %vm791, %v918, %v925
      %v927 = vrot.slane %v922, 4
      %v929 = vshrl.u32 %v774, 16
      %v931 = vrot.slane %v929, 7
      %v932 = vshll.u32 %v774, 16
      %v934 = vor.u32 %v931, %v932
      %v935 = vrot.slane %v931, 4
      %v937 = vshrl.u32 %v775, 16
      %v939 = vrot.slane %v937, 7
      %v940 = vshll.u32 %v775, 16
      %v942 = vor.u32 %v939, %v940
      %v943 = vsel %vm791, %v935, %v942
      %v944 = vrot.slane %v939, 4
      %v946 = vshrl.u32 %v776, 16
      %v948 = vrot.slane %v946, 7
      %v949 = vshll.u32 %v776, 16
      %v951 = vor.u32 %v948, %v949
      %v952 = vrot.slane %v948, 4
      %v954 = vshrl.u32 %v777, 16
      %v956 = vrot.slane %v954, 7
      %v957 = vshll.u32 %v777, 16
      %v959 = vor.u32 %v956, %v957
      %v960 = vsel %vm791, %v952, %v959
      %v961 = vrot.slane %v956, 4
      %v963 = vshrl.u32 %v778, 16
      %v965 = vrot.slane %v963, 7
      %v966 = vshll.u32 %v778, 16
      %v968 = vor.u32 %v965, %v966
      %v969 = vrot.slane %v965, 4
      %v971 = vshrl.u32 %v779, 16
      %v973 = vrot.slane %v971, 7
      %v974 = vshll.u32 %v779, 16
      %v976 = vor.u32 %v973, %v974
      %v977 = vsel %vm791, %v969, %v976
      %v978 = vrot.slane %v973, 4
      %v980 = vshrl.u32 %v780, 16
      %v982 = vrot.slane %v980, 7
      %v983 = vshll.u32 %v780, 16
      %v985 = vor.u32 %v982, %v983
      %v986 = vrot.slane %v982, 4
      %v988 = vshrl.u32 %v781, 16
      %v990 = vrot.slane %v988, 7
      %v991 = vshll.u32 %v781, 16
      %v993 = vor.u32 %v990, %v991
      %v994 = vsel %vm791, %v986, %v993
      %v995 = vrot.slane %v990, 4
      %v997 = vshrl.u32 %v782, 16
      %v999 = vrot.slane %v997, 7
      %v1000 = vshll.u32 %v782, 16
      %v1002 = vor.u32 %v999, %v1000
      %v1003 = vrot.slane %v999, 4
      %v1005 = vshrl.u32 %v783, 16
      %v1007 = vrot.slane %v1005, 7
      %v1008 = vshll.u32 %v783, 16
      %v1010 = vor.u32 %v1007, %v1008
      %v1011 = vsel %vm791, %v1003, %v1010
      %v1012 = vrot.slane %v1007, 4
      %v1014 = vshrl.u32 %v784, 16
      %v1016 = vrot.slane %v1014, 7
      %v1017 = vshll.u32 %v784, 16
      %v1019 = vor.u32 %v1016, %v1017
      %v1020 = vrot.slane %v1016, 4
      %v1022 = vshrl.u32 %v785, 16
      %v1024 = vrot.slane %v1022, 7
      %v1025 = vshll.u32 %v785, 16
      %v1027 = vor.u32 %v1024, %v1025
      %v1028 = vsel %vm791, %v1020, %v1027
      %v1029 = vrot.slane %v1024, 4
      %v1031 = vshrl.u32 %v786, 16
      %v1033 = vrot.slane %v1031, 7
      %v1034 = vshll.u32 %v786, 16
      %v1036 = vor.u32 %v1033, %v1034
      %v1037 = vrot.slane %v1033, 4
      %v1039 = vshrl.u32 %v787, 16
      %v1041 = vrot.slane %v1039, 7
      %v1042 = vshll.u32 %v787, 16
      %v1044 = vor.u32 %v1041, %v1042
      %v1045 = vsel %vm791, %v1037, %v1044
      %v1046 = vrot.slane %v1041, 4
      %v1048 = vshrl.u32 %v788, 16
      %v1050 = vrot.slane %v1048, 7
      %v1051 = vshll.u32 %v788, 16
      %v1053 = vor.u32 %v1050, %v1051
      %v1054 = vrot.slane %v1050, 4
      %v1056 = vshrl.u32 %v789, 16
      %v1058 = vrot.slane %v1056, 7
      %v1059 = vshll.u32 %v789, 16
      %v1061 = vor.u32 %v1058, %v1059
      %v1062 = vsel %vm791, %v1054, %v1061
      %v1063 = vrot.slane %v1058, 4
      %s1112 = scalar_lea.vmem [#allocation2], 12
      %vm1113 = vcmask 27648
      %vm1114 = vmand %vm1113, %vm638
      %v1115 = vld [vmem:[%s1112] sm:$0xf]
      %v1116 = vsel %vm1114, %v798, %v1115
      %1117 = vst [vmem:[%s1112] sm:$0xf] %v1116
      %1118 = vst.msk [vmem:[%s1112 + $0x4] sm:$0xf] %vm572, %v807
      %v1119 = vld [vmem:[%s1112 + $0x8] sm:$0x1]
      %v1120 = vsel %vm583, %v808, %v1119
      %1121 = vst [vmem:[%s1112 + $0x8] sm:$0x1] %v1120
      %v1122 = vld [vmem:[%s1112 + $0xc] sm:$0xf]
      %v1123 = vsel %vm1114, %v815, %v1122
      %1124 = vst [vmem:[%s1112 + $0xc] sm:$0xf] %v1123
      %1125 = vst.msk [vmem:[%s1112 + $0x10] sm:$0xf] %vm572, %v824
      %v1126 = vld [vmem:[%s1112 + $0x14] sm:$0x1]
      %v1127 = vsel %vm583, %v825, %v1126
      %1128 = vst [vmem:[%s1112 + $0x14] sm:$0x1] %v1127
      %v1129 = vld [vmem:[%s1112 + $0x18] sm:$0xf]
      %v1130 = vsel %vm1114, %v832, %v1129
      %1131 = vst [vmem:[%s1112 + $0x18] sm:$0xf] %v1130
      %1132 = vst.msk [vmem:[%s1112 + $0x1c] sm:$0xf] %vm572, %v841
      %v1133 = vld [vmem:[%s1112 + $0x20] sm:$0x1]
      %v1134 = vsel %vm583, %v842, %v1133
      %1135 = vst [vmem:[%s1112 + $0x20] sm:$0x1] %v1134
      %v1136 = vld [vmem:[%s1112 + $0x24] sm:$0xf]
      %v1137 = vsel %vm1114, %v849, %v1136
      %1138 = vst [vmem:[%s1112 + $0x24] sm:$0xf] %v1137
      %1139 = vst.msk [vmem:[%s1112 + $0x28] sm:$0xf] %vm572, %v858
      %v1140 = vld [vmem:[%s1112 + $0x2c] sm:$0x1]
      %v1141 = vsel %vm583, %v859, %v1140
      %1142 = vst [vmem:[%s1112 + $0x2c] sm:$0x1] %v1141
      %v1143 = vld [vmem:[%s1112 + $0x30] sm:$0xf]
      %v1144 = vsel %vm1114, %v866, %v1143
      %1145 = vst [vmem:[%s1112 + $0x30] sm:$0xf] %v1144
      %1146 = vst.msk [vmem:[%s1112 + $0x34] sm:$0xf] %vm572, %v875
      %v1147 = vld [vmem:[%s1112 + $0x38] sm:$0x1]
      %v1148 = vsel %vm583, %v876, %v1147
      %1149 = vst [vmem:[%s1112 + $0x38] sm:$0x1] %v1148
      %v1150 = vld [vmem:[%s1112 + $0x3c] sm:$0xf]
      %v1151 = vsel %vm1114, %v883, %v1150
      %1152 = vst [vmem:[%s1112 + $0x3c] sm:$0xf] %v1151
      %1153 = vst.msk [vmem:[%s1112 + $0x40] sm:$0xf] %vm572, %v892
      %v1154 = vld [vmem:[%s1112 + $0x44] sm:$0x1]
      %v1155 = vsel %vm583, %v893, %v1154
      %1156 = vst [vmem:[%s1112 + $0x44] sm:$0x1] %v1155
      %v1157 = vld [vmem:[%s1112 + $0x48] sm:$0xf]
      %v1158 = vsel %vm1114, %v900, %v1157
      %1159 = vst [vmem:[%s1112 + $0x48] sm:$0xf] %v1158
      %1160 = vst.msk [vmem:[%s1112 + $0x4c] sm:$0xf] %vm572, %v909
      %v1161 = vld [vmem:[%s1112 + $0x50] sm:$0x1]
      %v1162 = vsel %vm583, %v910, %v1161
      %1163 = vst [vmem:[%s1112 + $0x50] sm:$0x1] %v1162
      %v1164 = vld [vmem:[%s1112 + $0x54] sm:$0xf]
      %v1165 = vsel %vm1114, %v917, %v1164
      %1166 = vst [vmem:[%s1112 + $0x54] sm:$0xf] %v1165
      %1167 = vst.msk [vmem:[%s1112 + $0x58] sm:$0xf] %vm572, %v926
      %v1168 = vld [vmem:[%s1112 + $0x5c] sm:$0x1]
      %v1169 = vsel %vm583, %v927, %v1168
      %1170 = vst [vmem:[%s1112 + $0x5c] sm:$0x1] %v1169
      %v1171 = vld [vmem:[%s1112 + $0x60] sm:$0xf]
      %v1172 = vsel %vm1114, %v934, %v1171
      %1173 = vst [vmem:[%s1112 + $0x60] sm:$0xf] %v1172
      %1174 = vst.msk [vmem:[%s1112 + $0x64] sm:$0xf] %vm572, %v943
      %v1175 = vld [vmem:[%s1112 + $0x68] sm:$0x1]
      %v1176 = vsel %vm583, %v944, %v1175
      %1177 = vst [vmem:[%s1112 + $0x68] sm:$0x1] %v1176
      %v1178 = vld [vmem:[%s1112 + $0x6c] sm:$0xf]
      %v1179 = vsel %vm1114, %v951, %v1178
      %1180 = vst [vmem:[%s1112 + $0x6c] sm:$0xf] %v1179
      %1181 = vst.msk [vmem:[%s1112 + $0x70] sm:$0xf] %vm572, %v960
      %v1182 = vld [vmem:[%s1112 + $0x74] sm:$0x1]
      %v1183 = vsel %vm583, %v961, %v1182
      %1184 = vst [vmem:[%s1112 + $0x74] sm:$0x1] %v1183
      %v1185 = vld [vmem:[%s1112 + $0x78] sm:$0xf]
      %v1186 = vsel %vm1114, %v968, %v1185
      %1187 = vst [vmem:[%s1112 + $0x78] sm:$0xf] %v1186
      %1188 = vst.msk [vmem:[%s1112 + $0x7c] sm:$0xf] %vm572, %v977
      %v1189 = vld [vmem:[%s1112 + $0x80] sm:$0x1]
      %v1190 = vsel %vm583, %v978, %v1189
      %1191 = vst [vmem:[%s1112 + $0x80] sm:$0x1] %v1190
      %v1192 = vld [vmem:[%s1112 + $0x84] sm:$0xf]
      %v1193 = vsel %vm1114, %v985, %v1192
      %1194 = vst [vmem:[%s1112 + $0x84] sm:$0xf] %v1193
      %1195 = vst.msk [vmem:[%s1112 + $0x88] sm:$0xf] %vm572, %v994
      %v1196 = vld [vmem:[%s1112 + $0x8c] sm:$0x1]
      %v1197 = vsel %vm583, %v995, %v1196
      %1198 = vst [vmem:[%s1112 + $0x8c] sm:$0x1] %v1197
      %v1199 = vld [vmem:[%s1112 + $0x90] sm:$0xf]
      %v1200 = vsel %vm1114, %v1002, %v1199
      %1201 = vst [vmem:[%s1112 + $0x90] sm:$0xf] %v1200
      %1202 = vst.msk [vmem:[%s1112 + $0x94] sm:$0xf] %vm572, %v1011
      %v1203 = vld [vmem:[%s1112 + $0x98] sm:$0x1]
      %v1204 = vsel %vm583, %v1012, %v1203
      %1205 = vst [vmem:[%s1112 + $0x98] sm:$0x1] %v1204
      %v1206 = vld [vmem:[%s1112 + $0x9c] sm:$0xf]
      %v1207 = vsel %vm1114, %v1019, %v1206
      %1208 = vst [vmem:[%s1112 + $0x9c] sm:$0xf] %v1207
      %1209 = vst.msk [vmem:[%s1112 + $0xa0] sm:$0xf] %vm572, %v1028
      %v1210 = vld [vmem:[%s1112 + $0xa4] sm:$0x1]
      %v1211 = vsel %vm583, %v1029, %v1210
      %1212 = vst [vmem:[%s1112 + $0xa4] sm:$0x1] %v1211
      %v1213 = vld [vmem:[%s1112 + $0xa8] sm:$0xf]
      %v1214 = vsel %vm1114, %v1036, %v1213
      %1215 = vst [vmem:[%s1112 + $0xa8] sm:$0xf] %v1214
      %1216 = vst.msk [vmem:[%s1112 + $0xac] sm:$0xf] %vm572, %v1045
      %v1217 = vld [vmem:[%s1112 + $0xb0] sm:$0x1]
      %v1218 = vsel %vm583, %v1046, %v1217
      %1219 = vst [vmem:[%s1112 + $0xb0] sm:$0x1] %v1218
      %v1220 = vld [vmem:[%s1112 + $0xb4] sm:$0xf]
      %v1221 = vsel %vm1114, %v1053, %v1220
      %1222 = vst [vmem:[%s1112 + $0xb4] sm:$0xf] %v1221
      %1223 = vst.msk [vmem:[%s1112 + $0xb8] sm:$0xf] %vm572, %v1062
      %v1224 = vld [vmem:[%s1112 + $0xbc] sm:$0x1]
      %v1225 = vsel %vm583, %v1063, %v1224
      %1226 = vst [vmem:[%s1112 + $0xbc] sm:$0x1] %v1225
      %v1227 = vld [vmem:[#allocation2] sm:$0xf]
      %v1228 = vld [vmem:[#allocation2 + $0x4] sm:$0xf]
      %v1229 = vld [vmem:[#allocation2 + $0xc] sm:$0xf]
      %v1230 = vld [vmem:[#allocation2 + $0x10] sm:$0xf]
      %v1231 = vld [vmem:[#allocation2 + $0x18] sm:$0xf]
      %v1232 = vld [vmem:[#allocation2 + $0x1c] sm:$0xf]
      %v1233 = vld [vmem:[#allocation2 + $0x24] sm:$0xf]
      %v1234 = vld [vmem:[#allocation2 + $0x28] sm:$0xf]
      %v1235 = vld [vmem:[#allocation2 + $0x30] sm:$0xf]
      %v1236 = vld [vmem:[#allocation2 + $0x34] sm:$0xf]
      %v1237 = vld [vmem:[#allocation2 + $0x3c] sm:$0xf]
      %v1238 = vld [vmem:[#allocation2 + $0x40] sm:$0xf]
      %v1239 = vld [vmem:[#allocation2 + $0x48] sm:$0xf]
      %v1240 = vld [vmem:[#allocation2 + $0x4c] sm:$0xf]
      %v1241 = vld [vmem:[#allocation2 + $0x54] sm:$0xf]
      %v1242 = vld [vmem:[#allocation2 + $0x58] sm:$0xf]
      %v1243 = vld [vmem:[#allocation2 + $0x60] sm:$0xf]
      %v1244 = vld [vmem:[#allocation2 + $0x64] sm:$0xf]
      %v1245 = vld [vmem:[#allocation2 + $0x6c] sm:$0xf]
      %v1246 = vld [vmem:[#allocation2 + $0x70] sm:$0xf]
      %v1247 = vld [vmem:[#allocation2 + $0x78] sm:$0xf]
      %v1248 = vld [vmem:[#allocation2 + $0x7c] sm:$0xf]
      %v1249 = vld [vmem:[#allocation2 + $0x84] sm:$0xf]
      %v1250 = vld [vmem:[#allocation2 + $0x88] sm:$0xf]
      %v1251 = vld [vmem:[#allocation2 + $0x90] sm:$0xf]
      %v1252 = vld [vmem:[#allocation2 + $0x94] sm:$0xf]
      %v1253 = vld [vmem:[#allocation2 + $0x9c] sm:$0xf]
      %v1254 = vld [vmem:[#allocation2 + $0xa0] sm:$0xf]
      %v1255 = vld [vmem:[#allocation2 + $0xa8] sm:$0xf]
      %v1256 = vld [vmem:[#allocation2 + $0xac] sm:$0xf]
      %v1257 = vld [vmem:[#allocation2 + $0xb4] sm:$0xf]
      %v1258 = vld [vmem:[#allocation2 + $0xb8] sm:$0xf]
      %v1291 = vunpack.c.l.b16 %v1227
      %v1292 = vunpack.c.l.b16 %v1228
      %v1293 = vunpack.c.l.b16 %v1229
      %v1294 = vunpack.c.l.b16 %v1230
      %v1295 = vunpack.c.l.b16 %v1231
      %v1296 = vunpack.c.l.b16 %v1232
      %v1297 = vunpack.c.l.b16 %v1233
      %v1298 = vunpack.c.l.b16 %v1234
      %v1299 = vunpack.c.l.b16 %v1235
      %v1300 = vunpack.c.l.b16 %v1236
      %v1301 = vunpack.c.l.b16 %v1237
      %v1302 = vunpack.c.l.b16 %v1238
      %v1303 = vunpack.c.l.b16 %v1239
      %v1304 = vunpack.c.l.b16 %v1240
      %v1305 = vunpack.c.l.b16 %v1241
      %v1306 = vunpack.c.l.b16 %v1242
      %v1307 = vunpack.c.l.b16 %v1243
      %v1308 = vunpack.c.l.b16 %v1244
      %v1309 = vunpack.c.l.b16 %v1245
      %v1310 = vunpack.c.l.b16 %v1246
      %v1311 = vunpack.c.l.b16 %v1247
      %v1312 = vunpack.c.l.b16 %v1248
      %v1313 = vunpack.c.l.b16 %v1249
      %v1314 = vunpack.c.l.b16 %v1250
      %v1315 = vunpack.c.l.b16 %v1251
      %v1316 = vunpack.c.l.b16 %v1252
      %v1317 = vunpack.c.l.b16 %v1253
      %v1318 = vunpack.c.l.b16 %v1254
      %v1319 = vunpack.c.l.b16 %v1255
      %v1320 = vunpack.c.l.b16 %v1256
      %v1321 = vunpack.c.l.b16 %v1257
      %v1322 = vunpack.c.l.b16 %v1258
      %v1323 = vpack.c.b16 %v1292, %v1291
      %v1324 = vpack.c.b16 %v1294, %v1293
      %v1325 = vpack.c.b16 %v1296, %v1295
      %v1326 = vpack.c.b16 %v1298, %v1297
      %v1327 = vpack.c.b16 %v1300, %v1299
      %v1328 = vpack.c.b16 %v1302, %v1301
      %v1329 = vpack.c.b16 %v1304, %v1303
      %v1330 = vpack.c.b16 %v1306, %v1305
      %v1331 = vpack.c.b16 %v1308, %v1307
      %v1332 = vpack.c.b16 %v1310, %v1309
      %v1333 = vpack.c.b16 %v1312, %v1311
      %v1334 = vpack.c.b16 %v1314, %v1313
      %v1335 = vpack.c.b16 %v1316, %v1315
      %v1336 = vpack.c.b16 %v1318, %v1317
      %v1337 = vpack.c.b16 %v1320, %v1319
      %v1338 = vpack.c.b16 %v1322, %v1321
      %vm1355 = vcmask 31744
      %1356 = vst.msk [vmem:[#allocation3] sm:$0xff] %vm1355, %v1323
      %1357 = vst.msk [vmem:[#allocation3 + $0x8] sm:$0xff] %vm1355, %v1324
      %1358 = vst.msk [vmem:[#allocation3 + $0x10] sm:$0xff] %vm1355, %v1325
      %1359 = vst.msk [vmem:[#allocation3 + $0x18] sm:$0xff] %vm1355, %v1326
      %1360 = vst.msk [vmem:[#allocation3 + $0x20] sm:$0xff] %vm1355, %v1327
      %1361 = vst.msk [vmem:[#allocation3 + $0x28] sm:$0xff] %vm1355, %v1328
      %1362 = vst.msk [vmem:[#allocation3 + $0x30] sm:$0xff] %vm1355, %v1329
      %1363 = vst.msk [vmem:[#allocation3 + $0x38] sm:$0xff] %vm1355, %v1330
      %1364 = vst.msk [vmem:[#allocation3 + $0x40] sm:$0xff] %vm1355, %v1331
      %1365 = vst.msk [vmem:[#allocation3 + $0x48] sm:$0xff] %vm1355, %v1332
      %1366 = vst.msk [vmem:[#allocation3 + $0x50] sm:$0xff] %vm1355, %v1333
      %1367 = vst.msk [vmem:[#allocation3 + $0x58] sm:$0xff] %vm1355, %v1334
      %1368 = vst.msk [vmem:[#allocation3 + $0x60] sm:$0xff] %vm1355, %v1335
      %1369 = vst.msk [vmem:[#allocation3 + $0x68] sm:$0xff] %vm1355, %v1336
      %1370 = vst.msk [vmem:[#allocation3 + $0x70] sm:$0xff] %vm1355, %v1337
      %1371 = vst.msk [vmem:[#allocation3 + $0x78] sm:$0xff] %vm1355, %v1338
      %v1372 = vld [vmem:[#allocation2] sm:$0xf]
      %v1373 = vld [vmem:[#allocation2 + $0x4] sm:$0xf]
      %v1374 = vld [vmem:[#allocation2 + $0x8] sm:$0x1]
      %v1375 = vld [vmem:[#allocation2 + $0xc] sm:$0xf]
      %v1376 = vld [vmem:[#allocation2 + $0x10] sm:$0xf]
      %v1377 = vld [vmem:[#allocation2 + $0x14] sm:$0x1]
      %v1378 = vld [vmem:[#allocation2 + $0x18] sm:$0xf]
      %v1379 = vld [vmem:[#allocation2 + $0x1c] sm:$0xf]
      %v1380 = vld [vmem:[#allocation2 + $0x20] sm:$0x1]
      %v1381 = vld [vmem:[#allocation2 + $0x24] sm:$0xf]
      %v1382 = vld [vmem:[#allocation2 + $0x28] sm:$0xf]
      %v1383 = vld [vmem:[#allocation2 + $0x2c] sm:$0x1]
      %v1384 = vld [vmem:[#allocation2 + $0x30] sm:$0xf]
      %v1385 = vld [vmem:[#allocation2 + $0x34] sm:$0xf]
      %v1386 = vld [vmem:[#allocation2 + $0x38] sm:$0x1]
      %v1387 = vld [vmem:[#allocation2 + $0x3c] sm:$0xf]
      %v1388 = vld [vmem:[#allocation2 + $0x40] sm:$0xf]
      %v1389 = vld [vmem:[#allocation2 + $0x44] sm:$0x1]
      %v1390 = vld [vmem:[#allocation2 + $0x48] sm:$0xf]
      %v1391 = vld [vmem:[#allocation2 + $0x4c] sm:$0xf]
      %v1392 = vld [vmem:[#allocation2 + $0x50] sm:$0x1]
      %v1393 = vld [vmem:[#allocation2 + $0x54] sm:$0xf]
      %v1394 = vld [vmem:[#allocation2 + $0x58] sm:$0xf]
      %v1395 = vld [vmem:[#allocation2 + $0x5c] sm:$0x1]
      %v1396 = vld [vmem:[#allocation2 + $0x60] sm:$0xf]
      %v1397 = vld [vmem:[#allocation2 + $0x64] sm:$0xf]
      %v1398 = vld [vmem:[#allocation2 + $0x68] sm:$0x1]
      %v1399 = vld [vmem:[#allocation2 + $0x6c] sm:$0xf]
      %v1400 = vld [vmem:[#allocation2 + $0x70] sm:$0xf]
      %v1401 = vld [vmem:[#allocation2 + $0x74] sm:$0x1]
      %v1402 = vld [vmem:[#allocation2 + $0x78] sm:$0xf]
      %v1403 = vld [vmem:[#allocation2 + $0x7c] sm:$0xf]
      %v1404 = vld [vmem:[#allocation2 + $0x80] sm:$0x1]
      %v1405 = vld [vmem:[#allocation2 + $0x84] sm:$0xf]
      %v1406 = vld [vmem:[#allocation2 + $0x88] sm:$0xf]
      %v1407 = vld [vmem:[#allocation2 + $0x8c] sm:$0x1]
      %v1408 = vld [vmem:[#allocation2 + $0x90] sm:$0xf]
      %v1409 = vld [vmem:[#allocation2 + $0x94] sm:$0xf]
      %v1410 = vld [vmem:[#allocation2 + $0x98] sm:$0x1]
      %v1411 = vld [vmem:[#allocation2 + $0x9c] sm:$0xf]
      %v1412 = vld [vmem:[#allocation2 + $0xa0] sm:$0xf]
      %v1413 = vld [vmem:[#allocation2 + $0xa4] sm:$0x1]
      %v1414 = vld [vmem:[#allocation2 + $0xa8] sm:$0xf]
      %v1415 = vld [vmem:[#allocation2 + $0xac] sm:$0xf]
      %v1416 = vld [vmem:[#allocation2 + $0xb0] sm:$0x1]
      %v1417 = vld [vmem:[#allocation2 + $0xb4] sm:$0xf]
      %v1418 = vld [vmem:[#allocation2 + $0xb8] sm:$0xf]
      %v1419 = vld [vmem:[#allocation2 + $0xbc] sm:$0x1]
      %vm1420 = vsmask.f32 3328
      %vm1421 = vsmask.f32 7440
      %vm1422 = vmor %vm1420, %vm1421
      %v1424 = vshrl.u32 %v1372, 16
      %v1426 = vrot.slane %v1424, 4
      %v1427 = vshll.u32 %v1372, 16
      %v1429 = vrot.slane %v1427, 5
      %v1430 = vor.u32 %v1426, %v1429
      %v1431 = vrot.slane %v1430, 4
      %v1433 = vshll.u32 %v1373, 16
      %v1435 = vrot.slane %v1433, 5
      %v1436 = vsel %vm1422, %v1431, %v1435
      %v1437 = vshrl.u32 %v1373, 16
      %v1439 = vrot.slane %v1437, 4
      %v1440 = vor.u32 %v1439, %v1435
      %v1441 = vrot.slane %v1440, 4
      %v1443 = vshll.u32 %v1374, 16
      %v1445 = vrot.slane %v1443, 5
      %v1446 = vsel %vm1422, %v1441, %v1445
      %v1448 = vshrl.u32 %v1375, 16
      %v1450 = vrot.slane %v1448, 4
      %v1451 = vshll.u32 %v1375, 16
      %v1453 = vrot.slane %v1451, 5
      %v1454 = vor.u32 %v1450, %v1453
      %v1455 = vrot.slane %v1454, 4
      %v1457 = vshll.u32 %v1376, 16
      %v1459 = vrot.slane %v1457, 5
      %v1460 = vsel %vm1422, %v1455, %v1459
      %v1461 = vshrl.u32 %v1376, 16
      %v1463 = vrot.slane %v1461, 4
      %v1464 = vor.u32 %v1463, %v1459
      %v1465 = vrot.slane %v1464, 4
      %v1467 = vshll.u32 %v1377, 16
      %v1469 = vrot.slane %v1467, 5
      %v1470 = vsel %vm1422, %v1465, %v1469
      %v1472 = vshrl.u32 %v1378, 16
      %v1474 = vrot.slane %v1472, 4
      %v1475 = vshll.u32 %v1378, 16
      %v1477 = vrot.slane %v1475, 5
      %v1478 = vor.u32 %v1474, %v1477
      %v1479 = vrot.slane %v1478, 4
      %v1481 = vshll.u32 %v1379, 16
      %v1483 = vrot.slane %v1481, 5
      %v1484 = vsel %vm1422, %v1479, %v1483
      %v1485 = vshrl.u32 %v1379, 16
      %v1487 = vrot.slane %v1485, 4
      %v1488 = vor.u32 %v1487, %v1483
      %v1489 = vrot.slane %v1488, 4
      %v1491 = vshll.u32 %v1380, 16
      %v1493 = vrot.slane %v1491, 5
      %v1494 = vsel %vm1422, %v1489, %v1493
      %v1496 = vshrl.u32 %v1381, 16
      %v1498 = vrot.slane %v1496, 4
      %v1499 = vshll.u32 %v1381, 16
      %v1501 = vrot.slane %v1499, 5
      %v1502 = vor.u32 %v1498, %v1501
      %v1503 = vrot.slane %v1502, 4
      %v1505 = vshll.u32 %v1382, 16
      %v1507 = vrot.slane %v1505, 5
      %v1508 = vsel %vm1422, %v1503, %v1507
      %v1509 = vshrl.u32 %v1382, 16
      %v1511 = vrot.slane %v1509, 4
      %v1512 = vor.u32 %v1511, %v1507
      %v1513 = vrot.slane %v1512, 4
      %v1515 = vshll.u32 %v1383, 16
      %v1517 = vrot.slane %v1515, 5
      %v1518 = vsel %vm1422, %v1513, %v1517
      %v1520 = vshrl.u32 %v1384, 16
      %v1522 = vrot.slane %v1520, 4
      %v1523 = vshll.u32 %v1384, 16
      %v1525 = vrot.slane %v1523, 5
      %v1526 = vor.u32 %v1522, %v1525
      %v1527 = vrot.slane %v1526, 4
      %v1529 = vshll.u32 %v1385, 16
      %v1531 = vrot.slane %v1529, 5
      %v1532 = vsel %vm1422, %v1527, %v1531
      %v1533 = vshrl.u32 %v1385, 16
      %v1535 = vrot.slane %v1533, 4
      %v1536 = vor.u32 %v1535, %v1531
      %v1537 = vrot.slane %v1536, 4
      %v1539 = vshll.u32 %v1386, 16
      %v1541 = vrot.slane %v1539, 5
      %v1542 = vsel %vm1422, %v1537, %v1541
      %v1544 = vshrl.u32 %v1387, 16
      %v1546 = vrot.slane %v1544, 4
      %v1547 = vshll.u32 %v1387, 16
      %v1549 = vrot.slane %v1547, 5
      %v1550 = vor.u32 %v1546, %v1549
      %v1551 = vrot.slane %v1550, 4
      %v1553 = vshll.u32 %v1388, 16
      %v1555 = vrot.slane %v1553, 5
      %v1556 = vsel %vm1422, %v1551, %v1555
      %v1557 = vshrl.u32 %v1388, 16
      %v1559 = vrot.slane %v1557, 4
      %v1560 = vor.u32 %v1559, %v1555
      %v1561 = vrot.slane %v1560, 4
      %v1563 = vshll.u32 %v1389, 16
      %v1565 = vrot.slane %v1563, 5
      %v1566 = vsel %vm1422, %v1561, %v1565
      %v1568 = vshrl.u32 %v1390, 16
      %v1570 = vrot.slane %v1568, 4
      %v1571 = vshll.u32 %v1390, 16
      %v1573 = vrot.slane %v1571, 5
      %v1574 = vor.u32 %v1570, %v1573
      %v1575 = vrot.slane %v1574, 4
      %v1577 = vshll.u32 %v1391, 16
      %v1579 = vrot.slane %v1577, 5
      %v1580 = vsel %vm1422, %v1575, %v1579
      %v1581 = vshrl.u32 %v1391, 16
      %v1583 = vrot.slane %v1581, 4
      %v1584 = vor.u32 %v1583, %v1579
      %v1585 = vrot.slane %v1584, 4
      %v1587 = vshll.u32 %v1392, 16
      %v1589 = vrot.slane %v1587, 5
      %v1590 = vsel %vm1422, %v1585, %v1589
      %v1592 = vshrl.u32 %v1393, 16
      %v1594 = vrot.slane %v1592, 4
      %v1595 = vshll.u32 %v1393, 16
      %v1597 = vrot.slane %v1595, 5
      %v1598 = vor.u32 %v1594, %v1597
      %v1599 = vrot.slane %v1598, 4
      %v1601 = vshll.u32 %v1394, 16
      %v1603 = vrot.slane %v1601, 5
      %v1604 = vsel %vm1422, %v1599, %v1603
      %v1605 = vshrl.u32 %v1394, 16
      %v1607 = vrot.slane %v1605, 4
      %v1608 = vor.u32 %v1607, %v1603
      %v1609 = vrot.slane %v1608, 4
      %v1611 = vshll.u32 %v1395, 16
      %v1613 = vrot.slane %v1611, 5
      %v1614 = vsel %vm1422, %v1609, %v1613
      %v1616 = vshrl.u32 %v1396, 16
      %v1618 = vrot.slane %v1616, 4
      %v1619 = vshll.u32 %v1396, 16
      %v1621 = vrot.slane %v1619, 5
      %v1622 = vor.u32 %v1618, %v1621
      %v1623 = vrot.slane %v1622, 4
      %v1625 = vshll.u32 %v1397, 16
      %v1627 = vrot.slane %v1625, 5
      %v1628 = vsel %vm1422, %v1623, %v1627
      %v1629 = vshrl.u32 %v1397, 16
      %v1631 = vrot.slane %v1629, 4
      %v1632 = vor.u32 %v1631, %v1627
      %v1633 = vrot.slane %v1632, 4
      %v1635 = vshll.u32 %v1398, 16
      %v1637 = vrot.slane %v1635, 5
      %v1638 = vsel %vm1422, %v1633, %v1637
      %v1640 = vshrl.u32 %v1399, 16
      %v1642 = vrot.slane %v1640, 4
      %v1643 = vshll.u32 %v1399, 16
      %v1645 = vrot.slane %v1643, 5
      %v1646 = vor.u32 %v1642, %v1645
      %v1647 = vrot.slane %v1646, 4
      %v1649 = vshll.u32 %v1400, 16
      %v1651 = vrot.slane %v1649, 5
      %v1652 = vsel %vm1422, %v1647, %v1651
      %v1653 = vshrl.u32 %v1400, 16
      %v1655 = vrot.slane %v1653, 4
      %v1656 = vor.u32 %v1655, %v1651
      %v1657 = vrot.slane %v1656, 4
      %v1659 = vshll.u32 %v1401, 16
      %v1661 = vrot.slane %v1659, 5
      %v1662 = vsel %vm1422, %v1657, %v1661
      %v1664 = vshrl.u32 %v1402, 16
      %v1666 = vrot.slane %v1664, 4
      %v1667 = vshll.u32 %v1402, 16
      %v1669 = vrot.slane %v1667, 5
      %v1670 = vor.u32 %v1666, %v1669
      %v1671 = vrot.slane %v1670, 4
      %v1673 = vshll.u32 %v1403, 16
      %v1675 = vrot.slane %v1673, 5
      %v1676 = vsel %vm1422, %v1671, %v1675
      %v1677 = vshrl.u32 %v1403, 16
      %v1679 = vrot.slane %v1677, 4
      %v1680 = vor.u32 %v1679, %v1675
      %v1681 = vrot.slane %v1680, 4
      %v1683 = vshll.u32 %v1404, 16
      %v1685 = vrot.slane %v1683, 5
      %v1686 = vsel %vm1422, %v1681, %v1685
      %v1688 = vshrl.u32 %v1405, 16
      %v1690 = vrot.slane %v1688, 4
      %v1691 = vshll.u32 %v1405, 16
      %v1693 = vrot.slane %v1691, 5
      %v1694 = vor.u32 %v1690, %v1693
      %v1695 = vrot.slane %v1694, 4
      %v1697 = vshll.u32 %v1406, 16
      %v1699 = vrot.slane %v1697, 5
      %v1700 = vsel %vm1422, %v1695, %v1699
      %v1701 = vshrl.u32 %v1406, 16
      %v1703 = vrot.slane %v1701, 4
      %v1704 = vor.u32 %v1703, %v1699
      %v1705 = vrot.slane %v1704, 4
      %v1707 = vshll.u32 %v1407, 16
      %v1709 = vrot.slane %v1707, 5
      %v1710 = vsel %vm1422, %v1705, %v1709
      %v1712 = vshrl.u32 %v1408, 16
      %v1714 = vrot.slane %v1712, 4
      %v1715 = vshll.u32 %v1408, 16
      %v1717 = vrot.slane %v1715, 5
      %v1718 = vor.u32 %v1714, %v1717
      %v1719 = vrot.slane %v1718, 4
      %v1721 = vshll.u32 %v1409, 16
      %v1723 = vrot.slane %v1721, 5
      %v1724 = vsel %vm1422, %v1719, %v1723
      %v1725 = vshrl.u32 %v1409, 16
      %v1727 = vrot.slane %v1725, 4
      %v1728 = vor.u32 %v1727, %v1723
      %v1729 = vrot.slane %v1728, 4
      %v1731 = vshll.u32 %v1410, 16
      %v1733 = vrot.slane %v1731, 5
      %v1734 = vsel %vm1422, %v1729, %v1733
      %v1736 = vshrl.u32 %v1411, 16
      %v1738 = vrot.slane %v1736, 4
      %v1739 = vshll.u32 %v1411, 16
      %v1741 = vrot.slane %v1739, 5
      %v1742 = vor.u32 %v1738, %v1741
      %v1743 = vrot.slane %v1742, 4
      %v1745 = vshll.u32 %v1412, 16
      %v1747 = vrot.slane %v1745, 5
      %v1748 = vsel %vm1422, %v1743, %v1747
      %v1749 = vshrl.u32 %v1412, 16
      %v1751 = vrot.slane %v1749, 4
      %v1752 = vor.u32 %v1751, %v1747
      %v1753 = vrot.slane %v1752, 4
      %v1755 = vshll.u32 %v1413, 16
      %v1757 = vrot.slane %v1755, 5
      %v1758 = vsel %vm1422, %v1753, %v1757
      %v1760 = vshrl.u32 %v1414, 16
      %v1762 = vrot.slane %v1760, 4
      %v1763 = vshll.u32 %v1414, 16
      %v1765 = vrot.slane %v1763, 5
      %v1766 = vor.u32 %v1762, %v1765
      %v1767 = vrot.slane %v1766, 4
      %v1769 = vshll.u32 %v1415, 16
      %v1771 = vrot.slane %v1769, 5
      %v1772 = vsel %vm1422, %v1767, %v1771
      %v1773 = vshrl.u32 %v1415, 16
      %v1775 = vrot.slane %v1773, 4
      %v1776 = vor.u32 %v1775, %v1771
      %v1777 = vrot.slane %v1776, 4
      %v1779 = vshll.u32 %v1416, 16
      %v1781 = vrot.slane %v1779, 5
      %v1782 = vsel %vm1422, %v1777, %v1781
      %v1784 = vshrl.u32 %v1417, 16
      %v1786 = vrot.slane %v1784, 4
      %v1787 = vshll.u32 %v1417, 16
      %v1789 = vrot.slane %v1787, 5
      %v1790 = vor.u32 %v1786, %v1789
      %v1791 = vrot.slane %v1790, 4
      %v1793 = vshll.u32 %v1418, 16
      %v1795 = vrot.slane %v1793, 5
      %v1796 = vsel %vm1422, %v1791, %v1795
      %v1797 = vshrl.u32 %v1418, 16
      %v1799 = vrot.slane %v1797, 4
      %v1800 = vor.u32 %v1799, %v1795
      %v1801 = vrot.slane %v1800, 4
      %v1803 = vshll.u32 %v1419, 16
      %v1805 = vrot.slane %v1803, 5
      %v1806 = vsel %vm1422, %v1801, %v1805
      %v1807 = vunpack.c.l.b16 %v1436
      %v1808 = vunpack.c.l.b16 %v1446
      %v1809 = vunpack.c.l.b16 %v1460
      %v1810 = vunpack.c.l.b16 %v1470
      %v1811 = vunpack.c.l.b16 %v1484
      %v1812 = vunpack.c.l.b16 %v1494
      %v1813 = vunpack.c.l.b16 %v1508
      %v1814 = vunpack.c.l.b16 %v1518
      %v1815 = vunpack.c.l.b16 %v1532
      %v1816 = vunpack.c.l.b16 %v1542
      %v1817 = vunpack.c.l.b16 %v1556
      %v1818 = vunpack.c.l.b16 %v1566
      %v1819 = vunpack.c.l.b16 %v1580
      %v1820 = vunpack.c.l.b16 %v1590
      %v1821 = vunpack.c.l.b16 %v1604
      %v1822 = vunpack.c.l.b16 %v1614
      %v1823 = vunpack.c.l.b16 %v1628
      %v1824 = vunpack.c.l.b16 %v1638
      %v1825 = vunpack.c.l.b16 %v1652
      %v1826 = vunpack.c.l.b16 %v1662
      %v1827 = vunpack.c.l.b16 %v1676
      %v1828 = vunpack.c.l.b16 %v1686
      %v1829 = vunpack.c.l.b16 %v1700
      %v1830 = vunpack.c.l.b16 %v1710
      %v1831 = vunpack.c.l.b16 %v1724
      %v1832 = vunpack.c.l.b16 %v1734
      %v1833 = vunpack.c.l.b16 %v1748
      %v1834 = vunpack.c.l.b16 %v1758
      %v1835 = vunpack.c.l.b16 %v1772
      %v1836 = vunpack.c.l.b16 %v1782
      %v1837 = vunpack.c.l.b16 %v1796
      %v1838 = vunpack.c.l.b16 %v1806
      %v1839 = vpack.c.b16 %v1808, %v1807
      %v1840 = vpack.c.b16 %v1810, %v1809
      %v1841 = vpack.c.b16 %v1812, %v1811
      %v1842 = vpack.c.b16 %v1814, %v1813
      %v1843 = vpack.c.b16 %v1816, %v1815
      %v1844 = vpack.c.b16 %v1818, %v1817
      %v1845 = vpack.c.b16 %v1820, %v1819
      %v1846 = vpack.c.b16 %v1822, %v1821
      %v1847 = vpack.c.b16 %v1824, %v1823
      %v1848 = vpack.c.b16 %v1826, %v1825
      %v1849 = vpack.c.b16 %v1828, %v1827
      %v1850 = vpack.c.b16 %v1830, %v1829
      %v1851 = vpack.c.b16 %v1832, %v1831
      %v1852 = vpack.c.b16 %v1834, %v1833
      %v1853 = vpack.c.b16 %v1836, %v1835
      %v1854 = vpack.c.b16 %v1838, %v1837
      %1855 = vrot.lane.b32.xlu0 %v1839, 4
      %v1856 = vpop.permute.xlu0 %1855
      %1857 = vrot.lane.b32.xlu0 %v1840, 4
      %v1858 = vpop.permute.xlu0 %1857
      %1859 = vrot.lane.b32.xlu0 %v1841, 4
      %v1860 = vpop.permute.xlu0 %1859
      %1861 = vrot.lane.b32.xlu0 %v1842, 4
      %v1862 = vpop.permute.xlu0 %1861
      %1863 = vrot.lane.b32.xlu0 %v1843, 4
      %v1864 = vpop.permute.xlu0 %1863
      %1865 = vrot.lane.b32.xlu0 %v1844, 4
      %v1866 = vpop.permute.xlu0 %1865
      %1867 = vrot.lane.b32.xlu0 %v1845, 4
      %v1868 = vpop.permute.xlu0 %1867
      %1869 = vrot.lane.b32.xlu0 %v1846, 4
      %v1870 = vpop.permute.xlu0 %1869
      %1871 = vrot.lane.b32.xlu0 %v1847, 4
      %v1872 = vpop.permute.xlu0 %1871
      %1873 = vrot.lane.b32.xlu0 %v1848, 4
      %v1874 = vpop.permute.xlu0 %1873
      %1875 = vrot.lane.b32.xlu0 %v1849, 4
      %v1876 = vpop.permute.xlu0 %1875
      %1877 = vrot.lane.b32.xlu0 %v1850, 4
      %v1878 = vpop.permute.xlu0 %1877
      %1879 = vrot.lane.b32.xlu0 %v1851, 4
      %v1880 = vpop.permute.xlu0 %1879
      %1881 = vrot.lane.b32.xlu0 %v1852, 4
      %v1882 = vpop.permute.xlu0 %1881
      %1883 = vrot.lane.b32.xlu0 %v1853, 4
      %v1884 = vpop.permute.xlu0 %1883
      %1885 = vrot.lane.b32.xlu0 %v1854, 4
      %v1886 = vpop.permute.xlu0 %1885
      %vm1903 = vcmask 64544
      %1904 = vst.msk [vmem:[#allocation3] sm:$0xff] %vm1903, %v1856
      %1905 = vst.msk [vmem:[#allocation3 + $0x8] sm:$0xff] %vm1903, %v1858
      %1906 = vst.msk [vmem:[#allocation3 + $0x10] sm:$0xff] %vm1903, %v1860
      %1907 = vst.msk [vmem:[#allocation3 + $0x18] sm:$0xff] %vm1903, %v1862
      %1908 = vst.msk [vmem:[#allocation3 + $0x20] sm:$0xff] %vm1903, %v1864
      %1909 = vst.msk [vmem:[#allocation3 + $0x28] sm:$0xff] %vm1903, %v1866
      %1910 = vst.msk [vmem:[#allocation3 + $0x30] sm:$0xff] %vm1903, %v1868
      %1911 = vst.msk [vmem:[#allocation3 + $0x38] sm:$0xff] %vm1903, %v1870
      %1912 = vst.msk [vmem:[#allocation3 + $0x40] sm:$0xff] %vm1903, %v1872
      %1913 = vst.msk [vmem:[#allocation3 + $0x48] sm:$0xff] %vm1903, %v1874
      %1914 = vst.msk [vmem:[#allocation3 + $0x50] sm:$0xff] %vm1903, %v1876
      %1915 = vst.msk [vmem:[#allocation3 + $0x58] sm:$0xff] %vm1903, %v1878
      %1916 = vst.msk [vmem:[#allocation3 + $0x60] sm:$0xff] %vm1903, %v1880
      %1917 = vst.msk [vmem:[#allocation3 + $0x68] sm:$0xff] %vm1903, %v1882
      %1918 = vst.msk [vmem:[#allocation3 + $0x70] sm:$0xff] %vm1903, %v1884
      %1919 = vst.msk [vmem:[#allocation3 + $0x78] sm:$0xff] %vm1903, %v1886
      %v1920 = vld [vmem:[#allocation2] sm:$0xe]
      %v1921 = vld [vmem:[#allocation2 + $0x4] sm:$0xf]
      %v1922 = vld [vmem:[#allocation2 + $0x8] sm:$0x1]
      %v1923 = vld [vmem:[#allocation2 + $0xc] sm:$0xe]
      %v1924 = vld [vmem:[#allocation2 + $0x10] sm:$0xf]
      %v1925 = vld [vmem:[#allocation2 + $0x14] sm:$0x1]
      %v1926 = vld [vmem:[#allocation2 + $0x18] sm:$0xe]
      %v1927 = vld [vmem:[#allocation2 + $0x1c] sm:$0xf]
      %v1928 = vld [vmem:[#allocation2 + $0x20] sm:$0x1]
      %v1929 = vld [vmem:[#allocation2 + $0x24] sm:$0xe]
      %v1930 = vld [vmem:[#allocation2 + $0x28] sm:$0xf]
      %v1931 = vld [vmem:[#allocation2 + $0x2c] sm:$0x1]
      %v1932 = vld [vmem:[#allocation2 + $0x30] sm:$0xe]
      %v1933 = vld [vmem:[#allocation2 + $0x34] sm:$0xf]
      %v1934 = vld [vmem:[#allocation2 + $0x38] sm:$0x1]
      %v1935 = vld [vmem:[#allocation2 + $0x3c] sm:$0xe]
      %v1936 = vld [vmem:[#allocation2 + $0x40] sm:$0xf]
      %v1937 = vld [vmem:[#allocation2 + $0x44] sm:$0x1]
      %v1938 = vld [vmem:[#allocation2 + $0x48] sm:$0xe]
      %v1939 = vld [vmem:[#allocation2 + $0x4c] sm:$0xf]
      %v1940 = vld [vmem:[#allocation2 + $0x50] sm:$0x1]
      %v1941 = vld [vmem:[#allocation2 + $0x54] sm:$0xe]
      %v1942 = vld [vmem:[#allocation2 + $0x58] sm:$0xf]
      %v1943 = vld [vmem:[#allocation2 + $0x5c] sm:$0x1]
      %v1944 = vld [vmem:[#allocation2 + $0x60] sm:$0xe]
      %v1945 = vld [vmem:[#allocation2 + $0x64] sm:$0xf]
      %v1946 = vld [vmem:[#allocation2 + $0x68] sm:$0x1]
      %v1947 = vld [vmem:[#allocation2 + $0x6c] sm:$0xe]
      %v1948 = vld [vmem:[#allocation2 + $0x70] sm:$0xf]
      %v1949 = vld [vmem:[#allocation2 + $0x74] sm:$0x1]
      %v1950 = vld [vmem:[#allocation2 + $0x78] sm:$0xe]
      %v1951 = vld [vmem:[#allocation2 + $0x7c] sm:$0xf]
      %v1952 = vld [vmem:[#allocation2 + $0x80] sm:$0x1]
      %v1953 = vld [vmem:[#allocation2 + $0x84] sm:$0xe]
      %v1954 = vld [vmem:[#allocation2 + $0x88] sm:$0xf]
      %v1955 = vld [vmem:[#allocation2 + $0x8c] sm:$0x1]
      %v1956 = vld [vmem:[#allocation2 + $0x90] sm:$0xe]
      %v1957 = vld [vmem:[#allocation2 + $0x94] sm:$0xf]
      %v1958 = vld [vmem:[#allocation2 + $0x98] sm:$0x1]
      %v1959 = vld [vmem:[#allocation2 + $0x9c] sm:$0xe]
      %v1960 = vld [vmem:[#allocation2 + $0xa0] sm:$0xf]
      %v1961 = vld [vmem:[#allocation2 + $0xa4] sm:$0x1]
      %v1962 = vld [vmem:[#allocation2 + $0xa8] sm:$0xe]
      %v1963 = vld [vmem:[#allocation2 + $0xac] sm:$0xf]
      %v1964 = vld [vmem:[#allocation2 + $0xb0] sm:$0x1]
      %v1965 = vld [vmem:[#allocation2 + $0xb4] sm:$0xe]
      %v1966 = vld [vmem:[#allocation2 + $0xb8] sm:$0xf]
      %v1967 = vld [vmem:[#allocation2 + $0xbc] sm:$0x1]
      %vm2016 = vcmask 1042432
      %vm2017 = vcmask 1046532
      %vm2018 = vmor %vm2016, %vm2017
      %v2019 = vrot.slane %v1920, 5
      %v2020 = vrot.slane %v2019, 4
      %v2021 = vrot.slane %v1921, 5
      %v2022 = vsel %vm2018, %v2020, %v2021
      %v2023 = vrot.slane %v2021, 4
      %v2024 = vrot.slane %v1922, 5
      %v2025 = vsel %vm2018, %v2023, %v2024
      %v2026 = vrot.slane %v1923, 5
      %v2027 = vrot.slane %v2026, 4
      %v2028 = vrot.slane %v1924, 5
      %v2029 = vsel %vm2018, %v2027, %v2028
      %v2030 = vrot.slane %v2028, 4
      %v2031 = vrot.slane %v1925, 5
      %v2032 = vsel %vm2018, %v2030, %v2031
      %v2033 = vrot.slane %v1926, 5
      %v2034 = vrot.slane %v2033, 4
      %v2035 = vrot.slane %v1927, 5
      %v2036 = vsel %vm2018, %v2034, %v2035
      %v2037 = vrot.slane %v2035, 4
      %v2038 = vrot.slane %v1928, 5
      %v2039 = vsel %vm2018, %v2037, %v2038
      %v2040 = vrot.slane %v1929, 5
      %v2041 = vrot.slane %v2040, 4
      %v2042 = vrot.slane %v1930, 5
      %v2043 = vsel %vm2018, %v2041, %v2042
      %v2044 = vrot.slane %v2042, 4
      %v2045 = vrot.slane %v1931, 5
      %v2046 = vsel %vm2018, %v2044, %v2045
      %v2047 = vrot.slane %v1932, 5
      %v2048 = vrot.slane %v2047, 4
      %v2049 = vrot.slane %v1933, 5
      %v2050 = vsel %vm2018, %v2048, %v2049
      %v2051 = vrot.slane %v2049, 4
      %v2052 = vrot.slane %v1934, 5
      %v2053 = vsel %vm2018, %v2051, %v2052
      %v2054 = vrot.slane %v1935, 5
      %v2055 = vrot.slane %v2054, 4
      %v2056 = vrot.slane %v1936, 5
      %v2057 = vsel %vm2018, %v2055, %v2056
      %v2058 = vrot.slane %v2056, 4
      %v2059 = vrot.slane %v1937, 5
      %v2060 = vsel %vm2018, %v2058, %v2059
      %v2061 = vrot.slane %v1938, 5
      %v2062 = vrot.slane %v2061, 4
      %v2063 = vrot.slane %v1939, 5
      %v2064 = vsel %vm2018, %v2062, %v2063
      %v2065 = vrot.slane %v2063, 4
      %v2066 = vrot.slane %v1940, 5
      %v2067 = vsel %vm2018, %v2065, %v2066
      %v2068 = vrot.slane %v1941, 5
      %v2069 = vrot.slane %v2068, 4
      %v2070 = vrot.slane %v1942, 5
      %v2071 = vsel %vm2018, %v2069, %v2070
      %v2072 = vrot.slane %v2070, 4
      %v2073 = vrot.slane %v1943, 5
      %v2074 = vsel %vm2018, %v2072, %v2073
      %v2075 = vrot.slane %v1944, 5
      %v2076 = vrot.slane %v2075, 4
      %v2077 = vrot.slane %v1945, 5
      %v2078 = vsel %vm2018, %v2076, %v2077
      %v2079 = vrot.slane %v2077, 4
      %v2080 = vrot.slane %v1946, 5
      %v2081 = vsel %vm2018, %v2079, %v2080
      %v2082 = vrot.slane %v1947, 5
      %v2083 = vrot.slane %v2082, 4
      %v2084 = vrot.slane %v1948, 5
      %v2085 = vsel %vm2018, %v2083, %v2084
      %v2086 = vrot.slane %v2084, 4
      %v2087 = vrot.slane %v1949, 5
      %v2088 = vsel %vm2018, %v2086, %v2087
      %v2089 = vrot.slane %v1950, 5
      %v2090 = vrot.slane %v2089, 4
      %v2091 = vrot.slane %v1951, 5
      %v2092 = vsel %vm2018, %v2090, %v2091
      %v2093 = vrot.slane %v2091, 4
      %v2094 = vrot.slane %v1952, 5
      %v2095 = vsel %vm2018, %v2093, %v2094
      %v2096 = vrot.slane %v1953, 5
      %v2097 = vrot.slane %v2096, 4
      %v2098 = vrot.slane %v1954, 5
      %v2099 = vsel %vm2018, %v2097, %v2098
      %v2100 = vrot.slane %v2098, 4
      %v2101 = vrot.slane %v1955, 5
      %v2102 = vsel %vm2018, %v2100, %v2101
      %v2103 = vrot.slane %v1956, 5
      %v2104 = vrot.slane %v2103, 4
      %v2105 = vrot.slane %v1957, 5
      %v2106 = vsel %vm2018, %v2104, %v2105
      %v2107 = vrot.slane %v2105, 4
      %v2108 = vrot.slane %v1958, 5
      %v2109 = vsel %vm2018, %v2107, %v2108
      %v2110 = vrot.slane %v1959, 5
      %v2111 = vrot.slane %v2110, 4
      %v2112 = vrot.slane %v1960, 5
      %v2113 = vsel %vm2018, %v2111, %v2112
      %v2114 = vrot.slane %v2112, 4
      %v2115 = vrot.slane %v1961, 5
      %v2116 = vsel %vm2018, %v2114, %v2115
      %v2117 = vrot.slane %v1962, 5
      %v2118 = vrot.slane %v2117, 4
      %v2119 = vrot.slane %v1963, 5
      %v2120 = vsel %vm2018, %v2118, %v2119
      %v2121 = vrot.slane %v2119, 4
      %v2122 = vrot.slane %v1964, 5
      %v2123 = vsel %vm2018, %v2121, %v2122
      %v2124 = vrot.slane %v1965, 5
      %v2125 = vrot.slane %v2124, 4
      %v2126 = vrot.slane %v1966, 5
      %v2127 = vsel %vm2018, %v2125, %v2126
      %v2128 = vrot.slane %v2126, 4
      %v2129 = vrot.slane %v1967, 5
      %v2130 = vsel %vm2018, %v2128, %v2129
      %v2131 = vunpack.c.l.b16 %v2022
      %v2132 = vunpack.c.l.b16 %v2025
      %v2133 = vunpack.c.l.b16 %v2029
      %v2134 = vunpack.c.l.b16 %v2032
      %v2135 = vunpack.c.l.b16 %v2036
      %v2136 = vunpack.c.l.b16 %v2039
      %v2137 = vunpack.c.l.b16 %v2043
      %v2138 = vunpack.c.l.b16 %v2046
      %v2139 = vunpack.c.l.b16 %v2050
      %v2140 = vunpack.c.l.b16 %v2053
      %v2141 = vunpack.c.l.b16 %v2057
      %v2142 = vunpack.c.l.b16 %v2060
      %v2143 = vunpack.c.l.b16 %v2064
      %v2144 = vunpack.c.l.b16 %v2067
      %v2145 = vunpack.c.l.b16 %v2071
      %v2146 = vunpack.c.l.b16 %v2074
      %v2147 = vunpack.c.l.b16 %v2078
      %v2148 = vunpack.c.l.b16 %v2081
      %v2149 = vunpack.c.l.b16 %v2085
      %v2150 = vunpack.c.l.b16 %v2088
      %v2151 = vunpack.c.l.b16 %v2092
      %v2152 = vunpack.c.l.b16 %v2095
      %v2153 = vunpack.c.l.b16 %v2099
      %v2154 = vunpack.c.l.b16 %v2102
      %v2155 = vunpack.c.l.b16 %v2106
      %v2156 = vunpack.c.l.b16 %v2109
      %v2157 = vunpack.c.l.b16 %v2113
      %v2158 = vunpack.c.l.b16 %v2116
      %v2159 = vunpack.c.l.b16 %v2120
      %v2160 = vunpack.c.l.b16 %v2123
      %v2161 = vunpack.c.l.b16 %v2127
      %v2162 = vunpack.c.l.b16 %v2130
      %v2163 = vpack.c.b16 %v2132, %v2131
      %v2164 = vpack.c.b16 %v2134, %v2133
      %v2165 = vpack.c.b16 %v2136, %v2135
      %v2166 = vpack.c.b16 %v2138, %v2137
      %v2167 = vpack.c.b16 %v2140, %v2139
      %v2168 = vpack.c.b16 %v2142, %v2141
      %v2169 = vpack.c.b16 %v2144, %v2143
      %v2170 = vpack.c.b16 %v2146, %v2145
      %v2171 = vpack.c.b16 %v2148, %v2147
      %v2172 = vpack.c.b16 %v2150, %v2149
      %v2173 = vpack.c.b16 %v2152, %v2151
      %v2174 = vpack.c.b16 %v2154, %v2153
      %v2175 = vpack.c.b16 %v2156, %v2155
      %v2176 = vpack.c.b16 %v2158, %v2157
      %v2177 = vpack.c.b16 %v2160, %v2159
      %v2178 = vpack.c.b16 %v2162, %v2161
      %2179 = vrot.lane.b32.xlu0 %v2163, 8
      %v2180 = vpop.permute.xlu0 %2179
      %2181 = vrot.lane.b32.xlu0 %v2164, 8
      %v2182 = vpop.permute.xlu0 %2181
      %2183 = vrot.lane.b32.xlu0 %v2165, 8
      %v2184 = vpop.permute.xlu0 %2183
      %2185 = vrot.lane.b32.xlu0 %v2166, 8
      %v2186 = vpop.permute.xlu0 %2185
      %2187 = vrot.lane.b32.xlu0 %v2167, 8
      %v2188 = vpop.permute.xlu0 %2187
      %2189 = vrot.lane.b32.xlu0 %v2168, 8
      %v2190 = vpop.permute.xlu0 %2189
      %2191 = vrot.lane.b32.xlu0 %v2169, 8
      %v2192 = vpop.permute.xlu0 %2191
      %2193 = vrot.lane.b32.xlu0 %v2170, 8
      %v2194 = vpop.permute.xlu0 %2193
      %2195 = vrot.lane.b32.xlu0 %v2171, 8
      %v2196 = vpop.permute.xlu0 %2195
      %2197 = vrot.lane.b32.xlu0 %v2172, 8
      %v2198 = vpop.permute.xlu0 %2197
      %2199 = vrot.lane.b32.xlu0 %v2173, 8
      %v2200 = vpop.permute.xlu0 %2199
      %2201 = vrot.lane.b32.xlu0 %v2174, 8
      %v2202 = vpop.permute.xlu0 %2201
      %2203 = vrot.lane.b32.xlu0 %v2175, 8
      %v2204 = vpop.permute.xlu0 %2203
      %2205 = vrot.lane.b32.xlu0 %v2176, 8
      %v2206 = vpop.permute.xlu0 %2205
      %2207 = vrot.lane.b32.xlu0 %v2177, 8
      %v2208 = vpop.permute.xlu0 %2207
      %2209 = vrot.lane.b32.xlu0 %v2178, 8
      %v2210 = vpop.permute.xlu0 %2209
      %vm2227 = vcmask 97344
      %2228 = vst.msk [vmem:[#allocation3] sm:$0xff] %vm2227, %v2180
      %2229 = vst.msk [vmem:[#allocation3 + $0x8] sm:$0xff] %vm2227, %v2182
      %2230 = vst.msk [vmem:[#allocation3 + $0x10] sm:$0xff] %vm2227, %v2184
      %2231 = vst.msk [vmem:[#allocation3 + $0x18] sm:$0xff] %vm2227, %v2186
      %2232 = vst.msk [vmem:[#allocation3 + $0x20] sm:$0xff] %vm2227, %v2188
      %2233 = vst.msk [vmem:[#allocation3 + $0x28] sm:$0xff] %vm2227, %v2190
      %2234 = vst.msk [vmem:[#allocation3 + $0x30] sm:$0xff] %vm2227, %v2192
      %2235 = vst.msk [vmem:[#allocation3 + $0x38] sm:$0xff] %vm2227, %v2194
      %2236 = vst.msk [vmem:[#allocation3 + $0x40] sm:$0xff] %vm2227, %v2196
      %2237 = vst.msk [vmem:[#allocation3 + $0x48] sm:$0xff] %vm2227, %v2198
      %2238 = vst.msk [vmem:[#allocation3 + $0x50] sm:$0xff] %vm2227, %v2200
      %2239 = vst.msk [vmem:[#allocation3 + $0x58] sm:$0xff] %vm2227, %v2202
      %2240 = vst.msk [vmem:[#allocation3 + $0x60] sm:$0xff] %vm2227, %v2204
      %2241 = vst.msk [vmem:[#allocation3 + $0x68] sm:$0xff] %vm2227, %v2206
      %2242 = vst.msk [vmem:[#allocation3 + $0x70] sm:$0xff] %vm2227, %v2208
      %2243 = vst.msk [vmem:[#allocation3 + $0x78] sm:$0xff] %vm2227, %v2210
      %v2244 = vld [vmem:[#allocation3] sm:$0xff]
      %v2245 = vld [vmem:[#allocation3 + $0x8] sm:$0xff]
      %v2246 = vld [vmem:[#allocation3 + $0x10] sm:$0xff]
      %v2247 = vld [vmem:[#allocation3 + $0x18] sm:$0xff]
      %v2248 = vld [vmem:[#allocation3 + $0x20] sm:$0xff]
      %v2249 = vld [vmem:[#allocation3 + $0x28] sm:$0xff]
      %v2250 = vld [vmem:[#allocation3 + $0x30] sm:$0xff]
      %v2251 = vld [vmem:[#allocation3 + $0x38] sm:$0xff]
      %v2252 = vld [vmem:[#allocation3 + $0x40] sm:$0xff]
      %v2253 = vld [vmem:[#allocation3 + $0x48] sm:$0xff]
      %v2254 = vld [vmem:[#allocation3 + $0x50] sm:$0xff]
      %v2255 = vld [vmem:[#allocation3 + $0x58] sm:$0xff]
      %v2256 = vld [vmem:[#allocation3 + $0x60] sm:$0xff]
      %v2257 = vld [vmem:[#allocation3 + $0x68] sm:$0xff]
      %v2258 = vld [vmem:[#allocation3 + $0x70] sm:$0xff]
      %v2259 = vld [vmem:[#allocation3 + $0x78] sm:$0xff]
      %v2260 = vld [vmem:[%s3] sm:$0xf]
      %v2261 = vld [vmem:[%s3 + $0x4] sm:$0x3]
      %v2262 = vld [vmem:[%s1112] sm:$0xf]
      %v2263 = vld [vmem:[%s1112 + $0x4] sm:$0xf]
      %v2264 = vld [vmem:[%s1112 + $0xc] sm:$0xf]
      %v2265 = vld [vmem:[%s1112 + $0x10] sm:$0xf]
      %v2266 = vld [vmem:[%s1112 + $0x18] sm:$0xf]
      %v2267 = vld [vmem:[%s1112 + $0x1c] sm:$0xf]
      %v2268 = vld [vmem:[%s1112 + $0x24] sm:$0xf]
      %v2269 = vld [vmem:[%s1112 + $0x28] sm:$0xf]
      %v2270 = vld [vmem:[%s1112 + $0x30] sm:$0xf]
      %v2271 = vld [vmem:[%s1112 + $0x34] sm:$0xf]
      %v2272 = vld [vmem:[%s1112 + $0x3c] sm:$0xf]
      %v2273 = vld [vmem:[%s1112 + $0x40] sm:$0xf]
      %v2274 = vld [vmem:[%s1112 + $0x48] sm:$0xf]
      %v2275 = vld [vmem:[%s1112 + $0x4c] sm:$0xf]
      %v2276 = vld [vmem:[%s1112 + $0x54] sm:$0xf]
      %v2277 = vld [vmem:[%s1112 + $0x58] sm:$0xf]
      %v2278 = vld [vmem:[%s1112 + $0x60] sm:$0xf]
      %v2279 = vld [vmem:[%s1112 + $0x64] sm:$0xf]
      %v2280 = vld [vmem:[%s1112 + $0x6c] sm:$0xf]
      %v2281 = vld [vmem:[%s1112 + $0x70] sm:$0xf]
      %v2282 = vld [vmem:[%s1112 + $0x78] sm:$0xf]
      %v2283 = vld [vmem:[%s1112 + $0x7c] sm:$0xf]
      %v2284 = vld [vmem:[%s1112 + $0x84] sm:$0xf]
      %v2285 = vld [vmem:[%s1112 + $0x88] sm:$0xf]
      %v2286 = vld [vmem:[%s1112 + $0x90] sm:$0xf]
      %v2287 = vld [vmem:[%s1112 + $0x94] sm:$0xf]
      %v2288 = vld [vmem:[%s1112 + $0x9c] sm:$0xf]
      %v2289 = vld [vmem:[%s1112 + $0xa0] sm:$0xf]
      %v2290 = vld [vmem:[%s1112 + $0xa8] sm:$0xf]
      %v2291 = vld [vmem:[%s1112 + $0xac] sm:$0xf]
      %v2292 = vld [vmem:[%s1112 + $0xb4] sm:$0xf]
      %v2293 = vld [vmem:[%s1112 + $0xb8] sm:$0xf]
      %v2326 = vunpack.c.l.b16 %v2262
      %v2327 = vunpack.c.l.b16 %v2263
      %v2328 = vunpack.c.l.b16 %v2264
      %v2329 = vunpack.c.l.b16 %v2265
      %v2330 = vunpack.c.l.b16 %v2266
      %v2331 = vunpack.c.l.b16 %v2267
      %v2332 = vunpack.c.l.b16 %v2268
      %v2333 = vunpack.c.l.b16 %v2269
      %v2334 = vunpack.c.l.b16 %v2270
      %v2335 = vunpack.c.l.b16 %v2271
      %v2336 = vunpack.c.l.b16 %v2272
      %v2337 = vunpack.c.l.b16 %v2273
      %v2338 = vunpack.c.l.b16 %v2274
      %v2339 = vunpack.c.l.b16 %v2275
      %v2340 = vunpack.c.l.b16 %v2276
      %v2341 = vunpack.c.l.b16 %v2277
      %v2342 = vunpack.c.l.b16 %v2278
      %v2343 = vunpack.c.l.b16 %v2279
      %v2344 = vunpack.c.l.b16 %v2280
      %v2345 = vunpack.c.l.b16 %v2281
      %v2346 = vunpack.c.l.b16 %v2282
      %v2347 = vunpack.c.l.b16 %v2283
      %v2348 = vunpack.c.l.b16 %v2284
      %v2349 = vunpack.c.l.b16 %v2285
      %v2350 = vunpack.c.l.b16 %v2286
      %v2351 = vunpack.c.l.b16 %v2287
      %v2352 = vunpack.c.l.b16 %v2288
      %v2353 = vunpack.c.l.b16 %v2289
      %v2354 = vunpack.c.l.b16 %v2290
      %v2355 = vunpack.c.l.b16 %v2291
      %v2356 = vunpack.c.l.b16 %v2292
      %v2357 = vunpack.c.l.b16 %v2293
      %v2358 = vpack.c.b16 %v2327, %v2326
      %v2359 = vpack.c.b16 %v2329, %v2328
      %v2360 = vpack.c.b16 %v2331, %v2330
      %v2361 = vpack.c.b16 %v2333, %v2332
      %v2362 = vpack.c.b16 %v2335, %v2334
      %v2363 = vpack.c.b16 %v2337, %v2336
      %v2364 = vpack.c.b16 %v2339, %v2338
      %v2365 = vpack.c.b16 %v2341, %v2340
      %v2366 = vpack.c.b16 %v2343, %v2342
      %v2367 = vpack.c.b16 %v2345, %v2344
      %v2368 = vpack.c.b16 %v2347, %v2346
      %v2369 = vpack.c.b16 %v2349, %v2348
      %v2370 = vpack.c.b16 %v2351, %v2350
      %v2371 = vpack.c.b16 %v2353, %v2352
      %v2372 = vpack.c.b16 %v2355, %v2354
      %v2373 = vpack.c.b16 %v2357, %v2356
      %2390 = vst.msk [vmem:[#allocation3] sm:$0xff] %vm1355, %v2358
      %2391 = vst.msk [vmem:[#allocation3 + $0x8] sm:$0xff] %vm1355, %v2359
      %2392 = vst.msk [vmem:[#allocation3 + $0x10] sm:$0xff] %vm1355, %v2360
      %2393 = vst.msk [vmem:[#allocation3 + $0x18] sm:$0xff] %vm1355, %v2361
      %2394 = vst.msk [vmem:[#allocation3 + $0x20] sm:$0xff] %vm1355, %v2362
      %2395 = vst.msk [vmem:[#allocation3 + $0x28] sm:$0xff] %vm1355, %v2363
      %2396 = vst.msk [vmem:[#allocation3 + $0x30] sm:$0xff] %vm1355, %v2364
      %2397 = vst.msk [vmem:[#allocation3 + $0x38] sm:$0xff] %vm1355, %v2365
      %2398 = vst.msk [vmem:[#allocation3 + $0x40] sm:$0xff] %vm1355, %v2366
      %2399 = vst.msk [vmem:[#allocation3 + $0x48] sm:$0xff] %vm1355, %v2367
      %2400 = vst.msk [vmem:[#allocation3 + $0x50] sm:$0xff] %vm1355, %v2368
      %2401 = vst.msk [vmem:[#allocation3 + $0x58] sm:$0xff] %vm1355, %v2369
      %2402 = vst.msk [vmem:[#allocation3 + $0x60] sm:$0xff] %vm1355, %v2370
      %2403 = vst.msk [vmem:[#allocation3 + $0x68] sm:$0xff] %vm1355, %v2371
      %2404 = vst.msk [vmem:[#allocation3 + $0x70] sm:$0xff] %vm1355, %v2372
      %2405 = vst.msk [vmem:[#allocation3 + $0x78] sm:$0xff] %vm1355, %v2373
      %v2406 = vld [vmem:[%s1112] sm:$0xf]
      %v2407 = vld [vmem:[%s1112 + $0x4] sm:$0xf]
      %v2408 = vld [vmem:[%s1112 + $0x8] sm:$0x1]
      %v2409 = vld [vmem:[%s1112 + $0xc] sm:$0xf]
      %v2410 = vld [vmem:[%s1112 + $0x10] sm:$0xf]
      %v2411 = vld [vmem:[%s1112 + $0x14] sm:$0x1]
      %v2412 = vld [vmem:[%s1112 + $0x18] sm:$0xf]
      %v2413 = vld [vmem:[%s1112 + $0x1c] sm:$0xf]
      %v2414 = vld [vmem:[%s1112 + $0x20] sm:$0x1]
      %v2415 = vld [vmem:[%s1112 + $0x24] sm:$0xf]
      %v2416 = vld [vmem:[%s1112 + $0x28] sm:$0xf]
      %v2417 = vld [vmem:[%s1112 + $0x2c] sm:$0x1]
      %v2418 = vld [vmem:[%s1112 + $0x30] sm:$0xf]
      %v2419 = vld [vmem:[%s1112 + $0x34] sm:$0xf]
      %v2420 = vld [vmem:[%s1112 + $0x38] sm:$0x1]
      %v2421 = vld [vmem:[%s1112 + $0x3c] sm:$0xf]
      %v2422 = vld [vmem:[%s1112 + $0x40] sm:$0xf]
      %v2423 = vld [vmem:[%s1112 + $0x44] sm:$0x1]
      %v2424 = vld [vmem:[%s1112 + $0x48] sm:$0xf]
      %v2425 = vld [vmem:[%s1112 + $0x4c] sm:$0xf]
      %v2426 = vld [vmem:[%s1112 + $0x50] sm:$0x1]
      %v2427 = vld [vmem:[%s1112 + $0x54] sm:$0xf]
      %v2428 = vld [vmem:[%s1112 + $0x58] sm:$0xf]
      %v2429 = vld [vmem:[%s1112 + $0x5c] sm:$0x1]
      %v2430 = vld [vmem:[%s1112 + $0x60] sm:$0xf]
      %v2431 = vld [vmem:[%s1112 + $0x64] sm:$0xf]
      %v2432 = vld [vmem:[%s1112 + $0x68] sm:$0x1]
      %v2433 = vld [vmem:[%s1112 + $0x6c] sm:$0xf]
      %v2434 = vld [vmem:[%s1112 + $0x70] sm:$0xf]
      %v2435 = vld [vmem:[%s1112 + $0x74] sm:$0x1]
      %v2436 = vld [vmem:[%s1112 + $0x78] sm:$0xf]
      %v2437 = vld [vmem:[%s1112 + $0x7c] sm:$0xf]
      %v2438 = vld [vmem:[%s1112 + $0x80] sm:$0x1]
      %v2439 = vld [vmem:[%s1112 + $0x84] sm:$0xf]
      %v2440 = vld [vmem:[%s1112 + $0x88] sm:$0xf]
      %v2441 = vld [vmem:[%s1112 + $0x8c] sm:$0x1]
      %v2442 = vld [vmem:[%s1112 + $0x90] sm:$0xf]
      %v2443 = vld [vmem:[%s1112 + $0x94] sm:$0xf]
      %v2444 = vld [vmem:[%s1112 + $0x98] sm:$0x1]
      %v2445 = vld [vmem:[%s1112 + $0x9c] sm:$0xf]
      %v2446 = vld [vmem:[%s1112 + $0xa0] sm:$0xf]
      %v2447 = vld [vmem:[%s1112 + $0xa4] sm:$0x1]
      %v2448 = vld [vmem:[%s1112 + $0xa8] sm:$0xf]
      %v2449 = vld [vmem:[%s1112 + $0xac] sm:$0xf]
      %v2450 = vld [vmem:[%s1112 + $0xb0] sm:$0x1]
      %v2451 = vld [vmem:[%s1112 + $0xb4] sm:$0xf]
      %v2452 = vld [vmem:[%s1112 + $0xb8] sm:$0xf]
      %v2453 = vld [vmem:[%s1112 + $0xbc] sm:$0x1]
      %v2455 = vshrl.u32 %v2406, 16
      %v2457 = vrot.slane %v2455, 4
      %v2458 = vshll.u32 %v2406, 16
      %v2460 = vrot.slane %v2458, 5
      %v2461 = vor.u32 %v2457, %v2460
      %v2462 = vrot.slane %v2461, 4
      %v2464 = vshll.u32 %v2407, 16
      %v2466 = vrot.slane %v2464, 5
      %v2467 = vsel %vm1422, %v2462, %v2466
      %v2468 = vshrl.u32 %v2407, 16
      %v2470 = vrot.slane %v2468, 4
      %v2471 = vor.u32 %v2470, %v2466
      %v2472 = vrot.slane %v2471, 4
      %v2474 = vshll.u32 %v2408, 16
      %v2476 = vrot.slane %v2474, 5
      %v2477 = vsel %vm1422, %v2472, %v2476
      %v2479 = vshrl.u32 %v2409, 16
      %v2481 = vrot.slane %v2479, 4
      %v2482 = vshll.u32 %v2409, 16
      %v2484 = vrot.slane %v2482, 5
      %v2485 = vor.u32 %v2481, %v2484
      %v2486 = vrot.slane %v2485, 4
      %v2488 = vshll.u32 %v2410, 16
      %v2490 = vrot.slane %v2488, 5
      %v2491 = vsel %vm1422, %v2486, %v2490
      %v2492 = vshrl.u32 %v2410, 16
      %v2494 = vrot.slane %v2492, 4
      %v2495 = vor.u32 %v2494, %v2490
      %v2496 = vrot.slane %v2495, 4
      %v2498 = vshll.u32 %v2411, 16
      %v2500 = vrot.slane %v2498, 5
      %v2501 = vsel %vm1422, %v2496, %v2500
      %v2503 = vshrl.u32 %v2412, 16
      %v2505 = vrot.slane %v2503, 4
      %v2506 = vshll.u32 %v2412, 16
      %v2508 = vrot.slane %v2506, 5
      %v2509 = vor.u32 %v2505, %v2508
      %v2510 = vrot.slane %v2509, 4
      %v2512 = vshll.u32 %v2413, 16
      %v2514 = vrot.slane %v2512, 5
      %v2515 = vsel %vm1422, %v2510, %v2514
      %v2516 = vshrl.u32 %v2413, 16
      %v2518 = vrot.slane %v2516, 4
      %v2519 = vor.u32 %v2518, %v2514
      %v2520 = vrot.slane %v2519, 4
      %v2522 = vshll.u32 %v2414, 16
      %v2524 = vrot.slane %v2522, 5
      %v2525 = vsel %vm1422, %v2520, %v2524
      %v2527 = vshrl.u32 %v2415, 16
      %v2529 = vrot.slane %v2527, 4
      %v2530 = vshll.u32 %v2415, 16
      %v2532 = vrot.slane %v2530, 5
      %v2533 = vor.u32 %v2529, %v2532
      %v2534 = vrot.slane %v2533, 4
      %v2536 = vshll.u32 %v2416, 16
      %v2538 = vrot.slane %v2536, 5
      %v2539 = vsel %vm1422, %v2534, %v2538
      %v2540 = vshrl.u32 %v2416, 16
      %v2542 = vrot.slane %v2540, 4
      %v2543 = vor.u32 %v2542, %v2538
      %v2544 = vrot.slane %v2543, 4
      %v2546 = vshll.u32 %v2417, 16
      %v2548 = vrot.slane %v2546, 5
      %v2549 = vsel %vm1422, %v2544, %v2548
      %v2551 = vshrl.u32 %v2418, 16
      %v2553 = vrot.slane %v2551, 4
      %v2554 = vshll.u32 %v2418, 16
      %v2556 = vrot.slane %v2554, 5
      %v2557 = vor.u32 %v2553, %v2556
      %v2558 = vrot.slane %v2557, 4
      %v2560 = vshll.u32 %v2419, 16
      %v2562 = vrot.slane %v2560, 5
      %v2563 = vsel %vm1422, %v2558, %v2562
      %v2564 = vshrl.u32 %v2419, 16
      %v2566 = vrot.slane %v2564, 4
      %v2567 = vor.u32 %v2566, %v2562
      %v2568 = vrot.slane %v2567, 4
      %v2570 = vshll.u32 %v2420, 16
      %v2572 = vrot.slane %v2570, 5
      %v2573 = vsel %vm1422, %v2568, %v2572
      %v2575 = vshrl.u32 %v2421, 16
      %v2577 = vrot.slane %v2575, 4
      %v2578 = vshll.u32 %v2421, 16
      %v2580 = vrot.slane %v2578, 5
      %v2581 = vor.u32 %v2577, %v2580
      %v2582 = vrot.slane %v2581, 4
      %v2584 = vshll.u32 %v2422, 16
      %v2586 = vrot.slane %v2584, 5
      %v2587 = vsel %vm1422, %v2582, %v2586
      %v2588 = vshrl.u32 %v2422, 16
      %v2590 = vrot.slane %v2588, 4
      %v2591 = vor.u32 %v2590, %v2586
      %v2592 = vrot.slane %v2591, 4
      %v2594 = vshll.u32 %v2423, 16
      %v2596 = vrot.slane %v2594, 5
      %v2597 = vsel %vm1422, %v2592, %v2596
      %v2599 = vshrl.u32 %v2424, 16
      %v2601 = vrot.slane %v2599, 4
      %v2602 = vshll.u32 %v2424, 16
      %v2604 = vrot.slane %v2602, 5
      %v2605 = vor.u32 %v2601, %v2604
      %v2606 = vrot.slane %v2605, 4
      %v2608 = vshll.u32 %v2425, 16
      %v2610 = vrot.slane %v2608, 5
      %v2611 = vsel %vm1422, %v2606, %v2610
      %v2612 = vshrl.u32 %v2425, 16
      %v2614 = vrot.slane %v2612, 4
      %v2615 = vor.u32 %v2614, %v2610
      %v2616 = vrot.slane %v2615, 4
      %v2618 = vshll.u32 %v2426, 16
      %v2620 = vrot.slane %v2618, 5
      %v2621 = vsel %vm1422, %v2616, %v2620
      %v2623 = vshrl.u32 %v2427, 16
      %v2625 = vrot.slane %v2623, 4
      %v2626 = vshll.u32 %v2427, 16
      %v2628 = vrot.slane %v2626, 5
      %v2629 = vor.u32 %v2625, %v2628
      %v2630 = vrot.slane %v2629, 4
      %v2632 = vshll.u32 %v2428, 16
      %v2634 = vrot.slane %v2632, 5
      %v2635 = vsel %vm1422, %v2630, %v2634
      %v2636 = vshrl.u32 %v2428, 16
      %v2638 = vrot.slane %v2636, 4
      %v2639 = vor.u32 %v2638, %v2634
      %v2640 = vrot.slane %v2639, 4
      %v2642 = vshll.u32 %v2429, 16
      %v2644 = vrot.slane %v2642, 5
      %v2645 = vsel %vm1422, %v2640, %v2644
      %v2647 = vshrl.u32 %v2430, 16
      %v2649 = vrot.slane %v2647, 4
      %v2650 = vshll.u32 %v2430, 16
      %v2652 = vrot.slane %v2650, 5
      %v2653 = vor.u32 %v2649, %v2652
      %v2654 = vrot.slane %v2653, 4
      %v2656 = vshll.u32 %v2431, 16
      %v2658 = vrot.slane %v2656, 5
      %v2659 = vsel %vm1422, %v2654, %v2658
      %v2660 = vshrl.u32 %v2431, 16
      %v2662 = vrot.slane %v2660, 4
      %v2663 = vor.u32 %v2662, %v2658
      %v2664 = vrot.slane %v2663, 4
      %v2666 = vshll.u32 %v2432, 16
      %v2668 = vrot.slane %v2666, 5
      %v2669 = vsel %vm1422, %v2664, %v2668
      %v2671 = vshrl.u32 %v2433, 16
      %v2673 = vrot.slane %v2671, 4
      %v2674 = vshll.u32 %v2433, 16
      %v2676 = vrot.slane %v2674, 5
      %v2677 = vor.u32 %v2673, %v2676
      %v2678 = vrot.slane %v2677, 4
      %v2680 = vshll.u32 %v2434, 16
      %v2682 = vrot.slane %v2680, 5
      %v2683 = vsel %vm1422, %v2678, %v2682
      %v2684 = vshrl.u32 %v2434, 16
      %v2686 = vrot.slane %v2684, 4
      %v2687 = vor.u32 %v2686, %v2682
      %v2688 = vrot.slane %v2687, 4
      %v2690 = vshll.u32 %v2435, 16
      %v2692 = vrot.slane %v2690, 5
      %v2693 = vsel %vm1422, %v2688, %v2692
      %v2695 = vshrl.u32 %v2436, 16
      %v2697 = vrot.slane %v2695, 4
      %v2698 = vshll.u32 %v2436, 16
      %v2700 = vrot.slane %v2698, 5
      %v2701 = vor.u32 %v2697, %v2700
      %v2702 = vrot.slane %v2701, 4
      %v2704 = vshll.u32 %v2437, 16
      %v2706 = vrot.slane %v2704, 5
      %v2707 = vsel %vm1422, %v2702, %v2706
      %v2708 = vshrl.u32 %v2437, 16
      %v2710 = vrot.slane %v2708, 4
      %v2711 = vor.u32 %v2710, %v2706
      %v2712 = vrot.slane %v2711, 4
      %v2714 = vshll.u32 %v2438, 16
      %v2716 = vrot.slane %v2714, 5
      %v2717 = vsel %vm1422, %v2712, %v2716
      %v2719 = vshrl.u32 %v2439, 16
      %v2721 = vrot.slane %v2719, 4
      %v2722 = vshll.u32 %v2439, 16
      %v2724 = vrot.slane %v2722, 5
      %v2725 = vor.u32 %v2721, %v2724
      %v2726 = vrot.slane %v2725, 4
      %v2728 = vshll.u32 %v2440, 16
      %v2730 = vrot.slane %v2728, 5
      %v2731 = vsel %vm1422, %v2726, %v2730
      %v2732 = vshrl.u32 %v2440, 16
      %v2734 = vrot.slane %v2732, 4
      %v2735 = vor.u32 %v2734, %v2730
      %v2736 = vrot.slane %v2735, 4
      %v2738 = vshll.u32 %v2441, 16
      %v2740 = vrot.slane %v2738, 5
      %v2741 = vsel %vm1422, %v2736, %v2740
      %v2743 = vshrl.u32 %v2442, 16
      %v2745 = vrot.slane %v2743, 4
      %v2746 = vshll.u32 %v2442, 16
      %v2748 = vrot.slane %v2746, 5
      %v2749 = vor.u32 %v2745, %v2748
      %v2750 = vrot.slane %v2749, 4
      %v2752 = vshll.u32 %v2443, 16
      %v2754 = vrot.slane %v2752, 5
      %v2755 = vsel %vm1422, %v2750, %v2754
      %v2756 = vshrl.u32 %v2443, 16
      %v2758 = vrot.slane %v2756, 4
      %v2759 = vor.u32 %v2758, %v2754
      %v2760 = vrot.slane %v2759, 4
      %v2762 = vshll.u32 %v2444, 16
      %v2764 = vrot.slane %v2762, 5
      %v2765 = vsel %vm1422, %v2760, %v2764
      %v2767 = vshrl.u32 %v2445, 16
      %v2769 = vrot.slane %v2767, 4
      %v2770 = vshll.u32 %v2445, 16
      %v2772 = vrot.slane %v2770, 5
      %v2773 = vor.u32 %v2769, %v2772
      %v2774 = vrot.slane %v2773, 4
      %v2776 = vshll.u32 %v2446, 16
      %v2778 = vrot.slane %v2776, 5
      %v2779 = vsel %vm1422, %v2774, %v2778
      %v2780 = vshrl.u32 %v2446, 16
      %v2782 = vrot.slane %v2780, 4
      %v2783 = vor.u32 %v2782, %v2778
      %v2784 = vrot.slane %v2783, 4
      %v2786 = vshll.u32 %v2447, 16
      %v2788 = vrot.slane %v2786, 5
      %v2789 = vsel %vm1422, %v2784, %v2788
      %v2791 = vshrl.u32 %v2448, 16
      %v2793 = vrot.slane %v2791, 4
      %v2794 = vshll.u32 %v2448, 16
      %v2796 = vrot.slane %v2794, 5
      %v2797 = vor.u32 %v2793, %v2796
      %v2798 = vrot.slane %v2797, 4
      %v2800 = vshll.u32 %v2449, 16
      %v2802 = vrot.slane %v2800, 5
      %v2803 = vsel %vm1422, %v2798, %v2802
      %v2804 = vshrl.u32 %v2449, 16
      %v2806 = vrot.slane %v2804, 4
      %v2807 = vor.u32 %v2806, %v2802
      %v2808 = vrot.slane %v2807, 4
      %v2810 = vshll.u32 %v2450, 16
      %v2812 = vrot.slane %v2810, 5
      %v2813 = vsel %vm1422, %v2808, %v2812
      %v2815 = vshrl.u32 %v2451, 16
      %v2817 = vrot.slane %v2815, 4
      %v2818 = vshll.u32 %v2451, 16
      %v2820 = vrot.slane %v2818, 5
      %v2821 = vor.u32 %v2817, %v2820
      %v2822 = vrot.slane %v2821, 4
      %v2824 = vshll.u32 %v2452, 16
      %v2826 = vrot.slane %v2824, 5
      %v2827 = vsel %vm1422, %v2822, %v2826
      %v2828 = vshrl.u32 %v2452, 16
      %v2830 = vrot.slane %v2828, 4
      %v2831 = vor.u32 %v2830, %v2826
      %v2832 = vrot.slane %v2831, 4
      %v2834 = vshll.u32 %v2453, 16
      %v2836 = vrot.slane %v2834, 5
      %v2837 = vsel %vm1422, %v2832, %v2836
      %v2838 = vunpack.c.l.b16 %v2467
      %v2839 = vunpack.c.l.b16 %v2477
      %v2840 = vunpack.c.l.b16 %v2491
      %v2841 = vunpack.c.l.b16 %v2501
      %v2842 = vunpack.c.l.b16 %v2515
      %v2843 = vunpack.c.l.b16 %v2525
      %v2844 = vunpack.c.l.b16 %v2539
      %v2845 = vunpack.c.l.b16 %v2549
      %v2846 = vunpack.c.l.b16 %v2563
      %v2847 = vunpack.c.l.b16 %v2573
      %v2848 = vunpack.c.l.b16 %v2587
      %v2849 = vunpack.c.l.b16 %v2597
      %v2850 = vunpack.c.l.b16 %v2611
      %v2851 = vunpack.c.l.b16 %v2621
      %v2852 = vunpack.c.l.b16 %v2635
      %v2853 = vunpack.c.l.b16 %v2645
      %v2854 = vunpack.c.l.b16 %v2659
      %v2855 = vunpack.c.l.b16 %v2669
      %v2856 = vunpack.c.l.b16 %v2683
      %v2857 = vunpack.c.l.b16 %v2693
      %v2858 = vunpack.c.l.b16 %v2707
      %v2859 = vunpack.c.l.b16 %v2717
      %v2860 = vunpack.c.l.b16 %v2731
      %v2861 = vunpack.c.l.b16 %v2741
      %v2862 = vunpack.c.l.b16 %v2755
      %v2863 = vunpack.c.l.b16 %v2765
      %v2864 = vunpack.c.l.b16 %v2779
      %v2865 = vunpack.c.l.b16 %v2789
      %v2866 = vunpack.c.l.b16 %v2803
      %v2867 = vunpack.c.l.b16 %v2813
      %v2868 = vunpack.c.l.b16 %v2827
      %v2869 = vunpack.c.l.b16 %v2837
      %v2870 = vpack.c.b16 %v2839, %v2838
      %v2871 = vpack.c.b16 %v2841, %v2840
      %v2872 = vpack.c.b16 %v2843, %v2842
      %v2873 = vpack.c.b16 %v2845, %v2844
      %v2874 = vpack.c.b16 %v2847, %v2846
      %v2875 = vpack.c.b16 %v2849, %v2848
      %v2876 = vpack.c.b16 %v2851, %v2850
      %v2877 = vpack.c.b16 %v2853, %v2852
      %v2878 = vpack.c.b16 %v2855, %v2854
      %v2879 = vpack.c.b16 %v2857, %v2856
      %v2880 = vpack.c.b16 %v2859, %v2858
      %v2881 = vpack.c.b16 %v2861, %v2860
      %v2882 = vpack.c.b16 %v2863, %v2862
      %v2883 = vpack.c.b16 %v2865, %v2864
      %v2884 = vpack.c.b16 %v2867, %v2866
      %v2885 = vpack.c.b16 %v2869, %v2868
      %2886 = vrot.lane.b32.xlu0 %v2870, 4
      %v2887 = vpop.permute.xlu0 %2886
      %2888 = vrot.lane.b32.xlu0 %v2871, 4
      %v2889 = vpop.permute.xlu0 %2888
      %2890 = vrot.lane.b32.xlu0 %v2872, 4
      %v2891 = vpop.permute.xlu0 %2890
      %2892 = vrot.lane.b32.xlu0 %v2873, 4
      %v2893 = vpop.permute.xlu0 %2892
      %2894 = vrot.lane.b32.xlu0 %v2874, 4
      %v2895 = vpop.permute.xlu0 %2894
      %2896 = vrot.lane.b32.xlu0 %v2875, 4
      %v2897 = vpop.permute.xlu0 %2896
      %2898 = vrot.lane.b32.xlu0 %v2876, 4
      %v2899 = vpop.permute.xlu0 %2898
      %2900 = vrot.lane.b32.xlu0 %v2877, 4
      %v2901 = vpop.permute.xlu0 %2900
      %2902 = vrot.lane.b32.xlu0 %v2878, 4
      %v2903 = vpop.permute.xlu0 %2902
      %2904 = vrot.lane.b32.xlu0 %v2879, 4
      %v2905 = vpop.permute.xlu0 %2904
      %2906 = vrot.lane.b32.xlu0 %v2880, 4
      %v2907 = vpop.permute.xlu0 %2906
      %2908 = vrot.lane.b32.xlu0 %v2881, 4
      %v2909 = vpop.permute.xlu0 %2908
      %2910 = vrot.lane.b32.xlu0 %v2882, 4
      %v2911 = vpop.permute.xlu0 %2910
      %2912 = vrot.lane.b32.xlu0 %v2883, 4
      %v2913 = vpop.permute.xlu0 %2912
      %2914 = vrot.lane.b32.xlu0 %v2884, 4
      %v2915 = vpop.permute.xlu0 %2914
      %2916 = vrot.lane.b32.xlu0 %v2885, 4
      %v2917 = vpop.permute.xlu0 %2916
      %2934 = vst.msk [vmem:[#allocation3] sm:$0xff] %vm1903, %v2887
      %2935 = vst.msk [vmem:[#allocation3 + $0x8] sm:$0xff] %vm1903, %v2889
      %2936 = vst.msk [vmem:[#allocation3 + $0x10] sm:$0xff] %vm1903, %v2891
      %2937 = vst.msk [vmem:[#allocation3 + $0x18] sm:$0xff] %vm1903, %v2893
      %2938 = vst.msk [vmem:[#allocation3 + $0x20] sm:$0xff] %vm1903, %v2895
      %2939 = vst.msk [vmem:[#allocation3 + $0x28] sm:$0xff] %vm1903, %v2897
      %2940 = vst.msk [vmem:[#allocation3 + $0x30] sm:$0xff] %vm1903, %v2899
      %2941 = vst.msk [vmem:[#allocation3 + $0x38] sm:$0xff] %vm1903, %v2901
      %2942 = vst.msk [vmem:[#allocation3 + $0x40] sm:$0xff] %vm1903, %v2903
      %2943 = vst.msk [vmem:[#allocation3 + $0x48] sm:$0xff] %vm1903, %v2905
      %2944 = vst.msk [vmem:[#allocation3 + $0x50] sm:$0xff] %vm1903, %v2907
      %2945 = vst.msk [vmem:[#allocation3 + $0x58] sm:$0xff] %vm1903, %v2909
      %2946 = vst.msk [vmem:[#allocation3 + $0x60] sm:$0xff] %vm1903, %v2911
      %2947 = vst.msk [vmem:[#allocation3 + $0x68] sm:$0xff] %vm1903, %v2913
      %2948 = vst.msk [vmem:[#allocation3 + $0x70] sm:$0xff] %vm1903, %v2915
      %2949 = vst.msk [vmem:[#allocation3 + $0x78] sm:$0xff] %vm1903, %v2917
      %v2950 = vld [vmem:[%s1112] sm:$0xe]
      %v2951 = vld [vmem:[%s1112 + $0x4] sm:$0xf]
      %v2952 = vld [vmem:[%s1112 + $0x8] sm:$0x1]
      %v2953 = vld [vmem:[%s1112 + $0xc] sm:$0xe]
      %v2954 = vld [vmem:[%s1112 + $0x10] sm:$0xf]
      %v2955 = vld [vmem:[%s1112 + $0x14] sm:$0x1]
      %v2956 = vld [vmem:[%s1112 + $0x18] sm:$0xe]
      %v2957 = vld [vmem:[%s1112 + $0x1c] sm:$0xf]
      %v2958 = vld [vmem:[%s1112 + $0x20] sm:$0x1]
      %v2959 = vld [vmem:[%s1112 + $0x24] sm:$0xe]
      %v2960 = vld [vmem:[%s1112 + $0x28] sm:$0xf]
      %v2961 = vld [vmem:[%s1112 + $0x2c] sm:$0x1]
      %v2962 = vld [vmem:[%s1112 + $0x30] sm:$0xe]
      %v2963 = vld [vmem:[%s1112 + $0x34] sm:$0xf]
      %v2964 = vld [vmem:[%s1112 + $0x38] sm:$0x1]
      %v2965 = vld [vmem:[%s1112 + $0x3c] sm:$0xe]
      %v2966 = vld [vmem:[%s1112 + $0x40] sm:$0xf]
      %v2967 = vld [vmem:[%s1112 + $0x44] sm:$0x1]
      %v2968 = vld [vmem:[%s1112 + $0x48] sm:$0xe]
      %v2969 = vld [vmem:[%s1112 + $0x4c] sm:$0xf]
      %v2970 = vld [vmem:[%s1112 + $0x50] sm:$0x1]
      %v2971 = vld [vmem:[%s1112 + $0x54] sm:$0xe]
      %v2972 = vld [vmem:[%s1112 + $0x58] sm:$0xf]
      %v2973 = vld [vmem:[%s1112 + $0x5c] sm:$0x1]
      %v2974 = vld [vmem:[%s1112 + $0x60] sm:$0xe]
      %v2975 = vld [vmem:[%s1112 + $0x64] sm:$0xf]
      %v2976 = vld [vmem:[%s1112 + $0x68] sm:$0x1]
      %v2977 = vld [vmem:[%s1112 + $0x6c] sm:$0xe]
      %v2978 = vld [vmem:[%s1112 + $0x70] sm:$0xf]
      %v2979 = vld [vmem:[%s1112 + $0x74] sm:$0x1]
      %v2980 = vld [vmem:[%s1112 + $0x78] sm:$0xe]
      %v2981 = vld [vmem:[%s1112 + $0x7c] sm:$0xf]
      %v2982 = vld [vmem:[%s1112 + $0x80] sm:$0x1]
      %v2983 = vld [vmem:[%s1112 + $0x84] sm:$0xe]
      %v2984 = vld [vmem:[%s1112 + $0x88] sm:$0xf]
      %v2985 = vld [vmem:[%s1112 + $0x8c] sm:$0x1]
      %v2986 = vld [vmem:[%s1112 + $0x90] sm:$0xe]
      %v2987 = vld [vmem:[%s1112 + $0x94] sm:$0xf]
      %v2988 = vld [vmem:[%s1112 + $0x98] sm:$0x1]
      %v2989 = vld [vmem:[%s1112 + $0x9c] sm:$0xe]
      %v2990 = vld [vmem:[%s1112 + $0xa0] sm:$0xf]
      %v2991 = vld [vmem:[%s1112 + $0xa4] sm:$0x1]
      %v2992 = vld [vmem:[%s1112 + $0xa8] sm:$0xe]
      %v2993 = vld [vmem:[%s1112 + $0xac] sm:$0xf]
      %v2994 = vld [vmem:[%s1112 + $0xb0] sm:$0x1]
      %v2995 = vld [vmem:[%s1112 + $0xb4] sm:$0xe]
      %v2996 = vld [vmem:[%s1112 + $0xb8] sm:$0xf]
      %v2997 = vld [vmem:[%s1112 + $0xbc] sm:$0x1]
      %v3046 = vrot.slane %v2950, 5
      %v3047 = vrot.slane %v3046, 4
      %v3048 = vrot.slane %v2951, 5
      %v3049 = vsel %vm2018, %v3047, %v3048
      %v3050 = vrot.slane %v3048, 4
      %v3051 = vrot.slane %v2952, 5
      %v3052 = vsel %vm2018, %v3050, %v3051
      %v3053 = vrot.slane %v2953, 5
      %v3054 = vrot.slane %v3053, 4
      %v3055 = vrot.slane %v2954, 5
      %v3056 = vsel %vm2018, %v3054, %v3055
      %v3057 = vrot.slane %v3055, 4
      %v3058 = vrot.slane %v2955, 5
      %v3059 = vsel %vm2018, %v3057, %v3058
      %v3060 = vrot.slane %v2956, 5
      %v3061 = vrot.slane %v3060, 4
      %v3062 = vrot.slane %v2957, 5
      %v3063 = vsel %vm2018, %v3061, %v3062
      %v3064 = vrot.slane %v3062, 4
      %v3065 = vrot.slane %v2958, 5
      %v3066 = vsel %vm2018, %v3064, %v3065
      %v3067 = vrot.slane %v2959, 5
      %v3068 = vrot.slane %v3067, 4
      %v3069 = vrot.slane %v2960, 5
      %v3070 = vsel %vm2018, %v3068, %v3069
      %v3071 = vrot.slane %v3069, 4
      %v3072 = vrot.slane %v2961, 5
      %v3073 = vsel %vm2018, %v3071, %v3072
      %v3074 = vrot.slane %v2962, 5
      %v3075 = vrot.slane %v3074, 4
      %v3076 = vrot.slane %v2963, 5
      %v3077 = vsel %vm2018, %v3075, %v3076
      %v3078 = vrot.slane %v3076, 4
      %v3079 = vrot.slane %v2964, 5
      %v3080 = vsel %vm2018, %v3078, %v3079
      %v3081 = vrot.slane %v2965, 5
      %v3082 = vrot.slane %v3081, 4
      %v3083 = vrot.slane %v2966, 5
      %v3084 = vsel %vm2018, %v3082, %v3083
      %v3085 = vrot.slane %v3083, 4
      %v3086 = vrot.slane %v2967, 5
      %v3087 = vsel %vm2018, %v3085, %v3086
      %v3088 = vrot.slane %v2968, 5
      %v3089 = vrot.slane %v3088, 4
      %v3090 = vrot.slane %v2969, 5
      %v3091 = vsel %vm2018, %v3089, %v3090
      %v3092 = vrot.slane %v3090, 4
      %v3093 = vrot.slane %v2970, 5
      %v3094 = vsel %vm2018, %v3092, %v3093
      %v3095 = vrot.slane %v2971, 5
      %v3096 = vrot.slane %v3095, 4
      %v3097 = vrot.slane %v2972, 5
      %v3098 = vsel %vm2018, %v3096, %v3097
      %v3099 = vrot.slane %v3097, 4
      %v3100 = vrot.slane %v2973, 5
      %v3101 = vsel %vm2018, %v3099, %v3100
      %v3102 = vrot.slane %v2974, 5
      %v3103 = vrot.slane %v3102, 4
      %v3104 = vrot.slane %v2975, 5
      %v3105 = vsel %vm2018, %v3103, %v3104
      %v3106 = vrot.slane %v3104, 4
      %v3107 = vrot.slane %v2976, 5
      %v3108 = vsel %vm2018, %v3106, %v3107
      %v3109 = vrot.slane %v2977, 5
      %v3110 = vrot.slane %v3109, 4
      %v3111 = vrot.slane %v2978, 5
      %v3112 = vsel %vm2018, %v3110, %v3111
      %v3113 = vrot.slane %v3111, 4
      %v3114 = vrot.slane %v2979, 5
      %v3115 = vsel %vm2018, %v3113, %v3114
      %v3116 = vrot.slane %v2980, 5
      %v3117 = vrot.slane %v3116, 4
      %v3118 = vrot.slane %v2981, 5
      %v3119 = vsel %vm2018, %v3117, %v3118
      %v3120 = vrot.slane %v3118, 4
      %v3121 = vrot.slane %v2982, 5
      %v3122 = vsel %vm2018, %v3120, %v3121
      %v3123 = vrot.slane %v2983, 5
      %v3124 = vrot.slane %v3123, 4
      %v3125 = vrot.slane %v2984, 5
      %v3126 = vsel %vm2018, %v3124, %v3125
      %v3127 = vrot.slane %v3125, 4
      %v3128 = vrot.slane %v2985, 5
      %v3129 = vsel %vm2018, %v3127, %v3128
      %v3130 = vrot.slane %v2986, 5
      %v3131 = vrot.slane %v3130, 4
      %v3132 = vrot.slane %v2987, 5
      %v3133 = vsel %vm2018, %v3131, %v3132
      %v3134 = vrot.slane %v3132, 4
      %v3135 = vrot.slane %v2988, 5
      %v3136 = vsel %vm2018, %v3134, %v3135
      %v3137 = vrot.slane %v2989, 5
      %v3138 = vrot.slane %v3137, 4
      %v3139 = vrot.slane %v2990, 5
      %v3140 = vsel %vm2018, %v3138, %v3139
      %v3141 = vrot.slane %v3139, 4
      %v3142 = vrot.slane %v2991, 5
      %v3143 = vsel %vm2018, %v3141, %v3142
      %v3144 = vrot.slane %v2992, 5
      %v3145 = vrot.slane %v3144, 4
      %v3146 = vrot.slane %v2993, 5
      %v3147 = vsel %vm2018, %v3145, %v3146
      %v3148 = vrot.slane %v3146, 4
      %v3149 = vrot.slane %v2994, 5
      %v3150 = vsel %vm2018, %v3148, %v3149
      %v3151 = vrot.slane %v2995, 5
      %v3152 = vrot.slane %v3151, 4
      %v3153 = vrot.slane %v2996, 5
      %v3154 = vsel %vm2018, %v3152, %v3153
      %v3155 = vrot.slane %v3153, 4
      %v3156 = vrot.slane %v2997, 5
      %v3157 = vsel %vm2018, %v3155, %v3156
      %v3158 = vunpack.c.l.b16 %v3049
      %v3159 = vunpack.c.l.b16 %v3052
      %v3160 = vunpack.c.l.b16 %v3056
      %v3161 = vunpack.c.l.b16 %v3059
      %v3162 = vunpack.c.l.b16 %v3063
      %v3163 = vunpack.c.l.b16 %v3066
      %v3164 = vunpack.c.l.b16 %v3070
      %v3165 = vunpack.c.l.b16 %v3073
      %v3166 = vunpack.c.l.b16 %v3077
      %v3167 = vunpack.c.l.b16 %v3080
      %v3168 = vunpack.c.l.b16 %v3084
      %v3169 = vunpack.c.l.b16 %v3087
      %v3170 = vunpack.c.l.b16 %v3091
      %v3171 = vunpack.c.l.b16 %v3094
      %v3172 = vunpack.c.l.b16 %v3098
      %v3173 = vunpack.c.l.b16 %v3101
      %v3174 = vunpack.c.l.b16 %v3105
      %v3175 = vunpack.c.l.b16 %v3108
      %v3176 = vunpack.c.l.b16 %v3112
      %v3177 = vunpack.c.l.b16 %v3115
      %v3178 = vunpack.c.l.b16 %v3119
      %v3179 = vunpack.c.l.b16 %v3122
      %v3180 = vunpack.c.l.b16 %v3126
      %v3181 = vunpack.c.l.b16 %v3129
      %v3182 = vunpack.c.l.b16 %v3133
      %v3183 = vunpack.c.l.b16 %v3136
      %v3184 = vunpack.c.l.b16 %v3140
      %v3185 = vunpack.c.l.b16 %v3143
      %v3186 = vunpack.c.l.b16 %v3147
      %v3187 = vunpack.c.l.b16 %v3150
      %v3188 = vunpack.c.l.b16 %v3154
      %v3189 = vunpack.c.l.b16 %v3157
      %v3190 = vpack.c.b16 %v3159, %v3158
      %v3191 = vpack.c.b16 %v3161, %v3160
      %v3192 = vpack.c.b16 %v3163, %v3162
      %v3193 = vpack.c.b16 %v3165, %v3164
      %v3194 = vpack.c.b16 %v3167, %v3166
      %v3195 = vpack.c.b16 %v3169, %v3168
      %v3196 = vpack.c.b16 %v3171, %v3170
      %v3197 = vpack.c.b16 %v3173, %v3172
      %v3198 = vpack.c.b16 %v3175, %v3174
      %v3199 = vpack.c.b16 %v3177, %v3176
      %v3200 = vpack.c.b16 %v3179, %v3178
      %v3201 = vpack.c.b16 %v3181, %v3180
      %v3202 = vpack.c.b16 %v3183, %v3182
      %v3203 = vpack.c.b16 %v3185, %v3184
      %v3204 = vpack.c.b16 %v3187, %v3186
      %v3205 = vpack.c.b16 %v3189, %v3188
      %3206 = vrot.lane.b32.xlu0 %v3190, 8
      %v3207 = vpop.permute.xlu0 %3206
      %3208 = vrot.lane.b32.xlu0 %v3191, 8
      %v3209 = vpop.permute.xlu0 %3208
      %3210 = vrot.lane.b32.xlu0 %v3192, 8
      %v3211 = vpop.permute.xlu0 %3210
      %3212 = vrot.lane.b32.xlu0 %v3193, 8
      %v3213 = vpop.permute.xlu0 %3212
      %3214 = vrot.lane.b32.xlu0 %v3194, 8
      %v3215 = vpop.permute.xlu0 %3214
      %3216 = vrot.lane.b32.xlu0 %v3195, 8
      %v3217 = vpop.permute.xlu0 %3216
      %3218 = vrot.lane.b32.xlu0 %v3196, 8
      %v3219 = vpop.permute.xlu0 %3218
      %3220 = vrot.lane.b32.xlu0 %v3197, 8
      %v3221 = vpop.permute.xlu0 %3220
      %3222 = vrot.lane.b32.xlu0 %v3198, 8
      %v3223 = vpop.permute.xlu0 %3222
      %3224 = vrot.lane.b32.xlu0 %v3199, 8
      %v3225 = vpop.permute.xlu0 %3224
      %3226 = vrot.lane.b32.xlu0 %v3200, 8
      %v3227 = vpop.permute.xlu0 %3226
      %3228 = vrot.lane.b32.xlu0 %v3201, 8
      %v3229 = vpop.permute.xlu0 %3228
      %3230 = vrot.lane.b32.xlu0 %v3202, 8
      %v3231 = vpop.permute.xlu0 %3230
      %3232 = vrot.lane.b32.xlu0 %v3203, 8
      %v3233 = vpop.permute.xlu0 %3232
      %3234 = vrot.lane.b32.xlu0 %v3204, 8
      %v3235 = vpop.permute.xlu0 %3234
      %3236 = vrot.lane.b32.xlu0 %v3205, 8
      %v3237 = vpop.permute.xlu0 %3236
      %3254 = vst.msk [vmem:[#allocation3] sm:$0xff] %vm2227, %v3207
      %3255 = vst.msk [vmem:[#allocation3 + $0x8] sm:$0xff] %vm2227, %v3209
      %3256 = vst.msk [vmem:[#allocation3 + $0x10] sm:$0xff] %vm2227, %v3211
      %3257 = vst.msk [vmem:[#allocation3 + $0x18] sm:$0xff] %vm2227, %v3213
      %3258 = vst.msk [vmem:[#allocation3 + $0x20] sm:$0xff] %vm2227, %v3215
      %3259 = vst.msk [vmem:[#allocation3 + $0x28] sm:$0xff] %vm2227, %v3217
      %3260 = vst.msk [vmem:[#allocation3 + $0x30] sm:$0xff] %vm2227, %v3219
      %3261 = vst.msk [vmem:[#allocation3 + $0x38] sm:$0xff] %vm2227, %v3221
      %3262 = vst.msk [vmem:[#allocation3 + $0x40] sm:$0xff] %vm2227, %v3223
      %3263 = vst.msk [vmem:[#allocation3 + $0x48] sm:$0xff] %vm2227, %v3225
      %3264 = vst.msk [vmem:[#allocation3 + $0x50] sm:$0xff] %vm2227, %v3227
      %3265 = vst.msk [vmem:[#allocation3 + $0x58] sm:$0xff] %vm2227, %v3229
      %3266 = vst.msk [vmem:[#allocation3 + $0x60] sm:$0xff] %vm2227, %v3231
      %3267 = vst.msk [vmem:[#allocation3 + $0x68] sm:$0xff] %vm2227, %v3233
      %3268 = vst.msk [vmem:[#allocation3 + $0x70] sm:$0xff] %vm2227, %v3235
      %3269 = vst.msk [vmem:[#allocation3 + $0x78] sm:$0xff] %vm2227, %v3237
      %v3270 = vld [vmem:[#allocation3] sm:$0xff]
      %v3271 = vld [vmem:[#allocation3 + $0x8] sm:$0xff]
      %v3272 = vld [vmem:[#allocation3 + $0x10] sm:$0xff]
      %v3273 = vld [vmem:[#allocation3 + $0x18] sm:$0xff]
      %v3274 = vld [vmem:[#allocation3 + $0x20] sm:$0xff]
      %v3275 = vld [vmem:[#allocation3 + $0x28] sm:$0xff]
      %v3276 = vld [vmem:[#allocation3 + $0x30] sm:$0xff]
      %v3277 = vld [vmem:[#allocation3 + $0x38] sm:$0xff]
      %v3278 = vld [vmem:[#allocation3 + $0x40] sm:$0xff]
      %v3279 = vld [vmem:[#allocation3 + $0x48] sm:$0xff]
      %v3280 = vld [vmem:[#allocation3 + $0x50] sm:$0xff]
      %v3281 = vld [vmem:[#allocation3 + $0x58] sm:$0xff]
      %v3282 = vld [vmem:[#allocation3 + $0x60] sm:$0xff]
      %v3283 = vld [vmem:[#allocation3 + $0x68] sm:$0xff]
      %v3284 = vld [vmem:[#allocation3 + $0x70] sm:$0xff]
      %v3285 = vld [vmem:[#allocation3 + $0x78] sm:$0xff]
      %s3286 = scalar_lea.vmem %s3, 8
      %v3287 = vld [vmem:[%s3286] sm:$0xf]
      %v3288 = vld [vmem:[%s3286 + $0x4] sm:$0x3]
      %v3291 = vunpack.c.l.b16 %v3287
      %v3292 = vunpack.c.l.b16 %v3288
      %v3293 = vpack.c.b16 %v3292, %v3291
      %vm3294 = vcmask 97280
      %v3296 = vsel %vm3294, %v3270, 0
      %v3299 = vsel %vm3294, %v3271, 0
      %v3302 = vsel %vm3294, %v3272, 0
      %v3305 = vsel %vm3294, %v3273, 0
      %v3308 = vsel %vm3294, %v3274, 0
      %v3311 = vsel %vm3294, %v3275, 0
      %v3314 = vsel %vm3294, %v3276, 0
      %v3317 = vsel %vm3294, %v3277, 0
      %v3320 = vsel %vm3294, %v3278, 0
      %v3323 = vsel %vm3294, %v3279, 0
      %v3326 = vsel %vm3294, %v3280, 0
      %v3329 = vsel %vm3294, %v3281, 0
      %v3332 = vsel %vm3294, %v3282, 0
      %v3335 = vsel %vm3294, %v3283, 0
      %v3338 = vsel %vm3294, %v3284, 0
      %v3341 = vsel %vm3294, %v3285, 0
      %vm3343 = vcmask 1045504
      %v3345 = vsel %vm3343, %v3293, 0
      %3347 = vmatprep.subr.bf16.mxu0 0
      %3348 = vmatpush1.bf16.msra.mxu0 %v3345
      %3349 = vmatprep.subr.bf16.mxu0 0
      %3350 = vmatpush1.bf16.msra.mxu0 0
      %3351 = vmatprep.subr.bf16.mxu0 0
      %3352 = vmatpush1.bf16.msra.mxu0 0
      %3353 = vmatprep.subr.bf16.mxu0 0
      %3354 = vmatpush1.bf16.msra.mxu0 0
      %3355 = vmatprep.subr.bf16.mxu0 0
      %3356 = vmatpush1.bf16.msra.mxu0 0
      %3357 = vmatprep.subr.bf16.mxu0 0
      %3358 = vmatpush1.bf16.msra.mxu0 0
      %3359 = vmatprep.subr.bf16.mxu0 0
      %3360 = vmatpush1.bf16.msra.mxu0 0
      %3361 = vmatprep.subr.bf16.mxu0 0
      %3362 = vmatpush1.bf16.msra.mxu0 0
      %3363 = vmatprep.subr.bf16.mxu0 0
      %3364 = vmatpush1.bf16.msra.mxu0 0
      %3365 = vmatprep.subr.bf16.mxu0 0
      %3366 = vmatpush1.bf16.msra.mxu0 0
      %3367 = vmatprep.subr.bf16.mxu0 0
      %3368 = vmatpush1.bf16.msra.mxu0 0
      %3369 = vmatprep.subr.bf16.mxu0 0
      %3370 = vmatpush1.bf16.msra.mxu0 0
      %3371 = vmatprep.subr.bf16.mxu0 0
      %3372 = vmatpush1.bf16.msra.mxu0 0
      %3373 = vmatprep.subr.bf16.mxu0 0
      %3374 = vmatpush1.bf16.msra.mxu0 0
      %3375 = vmatprep.subr.bf16.mxu0 0
      %3376 = vmatpush1.bf16.msra.mxu0 0
      %3377 = vmatprep.subr.bf16.mxu0 0
      %3378 = vmatpush1.bf16.msra.mxu0 0
      %3379 = vmatprep.mubr.bf16.mxu0 0
      %3380 = vmatmul.mubr.bf16.gmra.mrb[0].mxu0 %v3296
      %v3381 = vpop.f32.mrb[0].mxu0
      %v3382 = vadd.f32 0.0, %v3381
      %v3383 = vpop.f32.mrb[0].mxu0
      %v3384 = vpop.f32.mrb[0].mxu0
      %v3385 = vadd.f32 0.0, %v3384
      %v3386 = vpop.f32.mrb[0].mxu0
      %3387 = vmatprep.mubr.bf16.mxu0 0
      %3388 = vmatmul.mubr.bf16.gmra.mrb[0].mxu0 %v3299
      %v3389 = vpop.f32.mrb[0].mxu0
      %v3390 = vadd.f32 0.0, %v3389
      %v3391 = vpop.f32.mrb[0].mxu0
      %v3392 = vpop.f32.mrb[0].mxu0
      %v3393 = vadd.f32 0.0, %v3392
      %v3394 = vpop.f32.mrb[0].mxu0
      %3395 = vmatprep.mubr.bf16.mxu0 0
      %3396 = vmatmul.mubr.bf16.gmra.mrb[0].mxu0 %v3302
      %v3397 = vpop.f32.mrb[0].mxu0
      %v3398 = vadd.f32 0.0, %v3397
      %v3399 = vpop.f32.mrb[0].mxu0
      %v3400 = vpop.f32.mrb[0].mxu0
      %v3401 = vadd.f32 0.0, %v3400
      %v3402 = vpop.f32.mrb[0].mxu0
      %3403 = vmatprep.mubr.bf16.mxu0 0
      %3404 = vmatmul.mubr.bf16.gmra.mrb[0].mxu0 %v3305
      %v3405 = vpop.f32.mrb[0].mxu0
      %v3406 = vadd.f32 0.0, %v3405
      %v3407 = vpop.f32.mrb[0].mxu0
      %v3408 = vpop.f32.mrb[0].mxu0
      %v3409 = vadd.f32 0.0, %v3408
      %v3410 = vpop.f32.mrb[0].mxu0
      %3411 = vmatprep.mubr.bf16.mxu0 0
      %3412 = vmatmul.mubr.bf16.gmra.mrb[0].mxu0 %v3308
      %v3413 = vpop.f32.mrb[0].mxu0
      %v3414 = vadd.f32 0.0, %v3413
      %v3415 = vpop.f32.mrb[0].mxu0
      %v3416 = vpop.f32.mrb[0].mxu0
      %v3417 = vadd.f32 0.0, %v3416
      %v3418 = vpop.f32.mrb[0].mxu0
      %3419 = vmatprep.mubr.bf16.mxu0 0
      %3420 = vmatmul.mubr.bf16.gmra.mrb[0].mxu0 %v3311
      %v3421 = vpop.f32.mrb[0].mxu0
      %v3422 = vadd.f32 0.0, %v3421
      %v3423 = vpop.f32.mrb[0].mxu0
      %v3424 = vpop.f32.mrb[0].mxu0
      %v3425 = vadd.f32 0.0, %v3424
      %v3426 = vpop.f32.mrb[0].mxu0
      %3427 = vmatprep.mubr.bf16.mxu0 0
      %3428 = vmatmul.mubr.bf16.gmra.mrb[0].mxu0 %v3314
      %v3429 = vpop.f32.mrb[0].mxu0
      %v3430 = vadd.f32 0.0, %v3429
      %v3431 = vpop.f32.mrb[0].mxu0
      %v3432 = vpop.f32.mrb[0].mxu0
      %v3433 = vadd.f32 0.0, %v3432
      %v3434 = vpop.f32.mrb[0].mxu0
      %3435 = vmatprep.mubr.bf16.mxu0 0
      %3436 = vmatmul.mubr.bf16.gmra.mrb[0].mxu0 %v3317
      %v3437 = vpop.f32.mrb[0].mxu0
      %v3438 = vadd.f32 0.0, %v3437
      %v3439 = vpop.f32.mrb[0].mxu0
      %v3440 = vpop.f32.mrb[0].mxu0
      %v3441 = vadd.f32 0.0, %v3440
      %v3442 = vpop.f32.mrb[0].mxu0
      %3443 = vmatprep.mubr.bf16.mxu0 0
      %3444 = vmatmul.mubr.bf16.gmra.mrb[0].mxu0 %v3320
      %v3445 = vpop.f32.mrb[0].mxu0
      %v3446 = vadd.f32 0.0, %v3445
      %v3447 = vpop.f32.mrb[0].mxu0
      %v3448 = vpop.f32.mrb[0].mxu0
      %v3449 = vadd.f32 0.0, %v3448
      %v3450 = vpop.f32.mrb[0].mxu0
      %3451 = vmatprep.mubr.bf16.mxu0 0
      %3452 = vmatmul.mubr.bf16.gmra.mrb[0].mxu0 %v3323
      %v3453 = vpop.f32.mrb[0].mxu0
      %v3454 = vadd.f32 0.0, %v3453
      %v3455 = vpop.f32.mrb[0].mxu0
      %v3456 = vpop.f32.mrb[0].mxu0
      %v3457 = vadd.f32 0.0, %v3456
      %v3458 = vpop.f32.mrb[0].mxu0
      %3459 = vmatprep.mubr.bf16.mxu0 0
      %3460 = vmatmul.mubr.bf16.gmra.mrb[0].mxu0 %v3326
      %v3461 = vpop.f32.mrb[0].mxu0
      %v3462 = vadd.f32 0.0, %v3461
      %v3463 = vpop.f32.mrb[0].mxu0
      %v3464 = vpop.f32.mrb[0].mxu0
      %v3465 = vadd.f32 0.0, %v3464
      %v3466 = vpop.f32.mrb[0].mxu0
      %3467 = vmatprep.mubr.bf16.mxu0 0
      %3468 = vmatmul.mubr.bf16.gmra.mrb[0].mxu0 %v3329
      %v3469 = vpop.f32.mrb[0].mxu0
      %v3470 = vadd.f32 0.0, %v3469
      %v3471 = vpop.f32.mrb[0].mxu0
      %v3472 = vpop.f32.mrb[0].mxu0
      %v3473 = vadd.f32 0.0, %v3472
      %v3474 = vpop.f32.mrb[0].mxu0
      %3475 = vmatprep.mubr.bf16.mxu0 0
      %3476 = vmatmul.mubr.bf16.gmra.mrb[0].mxu0 %v3332
      %v3477 = vpop.f32.mrb[0].mxu0
      %v3478 = vadd.f32 0.0, %v3477
      %v3479 = vpop.f32.mrb[0].mxu0
      %v3480 = vpop.f32.mrb[0].mxu0
      %v3481 = vadd.f32 0.0, %v3480
      %v3482 = vpop.f32.mrb[0].mxu0
      %3483 = vmatprep.mubr.bf16.mxu0 0
      %3484 = vmatmul.mubr.bf16.gmra.mrb[0].mxu0 %v3335
      %v3485 = vpop.f32.mrb[0].mxu0
      %v3486 = vadd.f32 0.0, %v3485
      %v3487 = vpop.f32.mrb[0].mxu0
      %v3488 = vpop.f32.mrb[0].mxu0
      %v3489 = vadd.f32 0.0, %v3488
      %v3490 = vpop.f32.mrb[0].mxu0
      %3491 = vmatprep.mubr.bf16.mxu0 0
      %3492 = vmatmul.mubr.bf16.gmra.mrb[0].mxu0 %v3338
      %v3493 = vpop.f32.mrb[0].mxu0
      %v3494 = vadd.f32 0.0, %v3493
      %v3495 = vpop.f32.mrb[0].mxu0
      %v3496 = vpop.f32.mrb[0].mxu0
      %v3497 = vadd.f32 0.0, %v3496
      %v3498 = vpop.f32.mrb[0].mxu0
      %3499 = vmatprep.mubr.bf16.mxu0 0
      %3500 = vmatmul.mubr.bf16.gmra.mrb[0].mxu0 %v3341
      %v3501 = vpop.f32.mrb[0].mxu0
      %v3502 = vadd.f32 0.0, %v3501
      %v3503 = vpop.f32.mrb[0].mxu0
      %v3504 = vpop.f32.mrb[0].mxu0
      %v3505 = vadd.f32 0.0, %v3504
      %v3506 = vpop.f32.mrb[0].mxu0
      %3507 = vdwg.mxu0
      %v3510 = vunpack.c.l.b16 %v2260
      %v3511 = vunpack.c.l.b16 %v2261
      %v3512 = vpack.c.b16 %v3511, %v3510
      %v3514 = vsel %vm3294, %v2244, 0
      %v3517 = vsel %vm3294, %v2245, 0
      %v3520 = vsel %vm3294, %v2246, 0
      %v3523 = vsel %vm3294, %v2247, 0
      %v3526 = vsel %vm3294, %v2248, 0
      %v3529 = vsel %vm3294, %v2249, 0
      %v3532 = vsel %vm3294, %v2250, 0
      %v3535 = vsel %vm3294, %v2251, 0
      %v3538 = vsel %vm3294, %v2252, 0
      %v3541 = vsel %vm3294, %v2253, 0
      %v3544 = vsel %vm3294, %v2254, 0
      %v3547 = vsel %vm3294, %v2255, 0
      %v3550 = vsel %vm3294, %v2256, 0
      %v3553 = vsel %vm3294, %v2257, 0
      %v3556 = vsel %vm3294, %v2258, 0
      %v3559 = vsel %vm3294, %v2259, 0
      %v3562 = vsel %vm3343, %v3512, 0
      %3564 = vmatprep.subr.bf16.mxu0 0
      %3565 = vmatpush1.bf16.msra.mxu0 %v3562
      %3566 = vmatprep.subr.bf16.mxu0 0
      %3567 = vmatpush1.bf16.msra.mxu0 0
      %3568 = vmatprep.subr.bf16.mxu0 0
      %3569 = vmatpush1.bf16.msra.mxu0 0
      %3570 = vmatprep.subr.bf16.mxu0 0
      %3571 = vmatpush1.bf16.msra.mxu0 0
      %3572 = vmatprep.subr.bf16.mxu0 0
      %3573 = vmatpush1.bf16.msra.mxu0 0
      %3574 = vmatprep.subr.bf16.mxu0 0
      %3575 = vmatpush1.bf16.msra.mxu0 0
      %3576 = vmatprep.subr.bf16.mxu0 0
      %3577 = vmatpush1.bf16.msra.mxu0 0
      %3578 = vmatprep.subr.bf16.mxu0 0
      %3579 = vmatpush1.bf16.msra.mxu0 0
      %3580 = vmatprep.subr.bf16.mxu0 0
      %3581 = vmatpush1.bf16.msra.mxu0 0
      %3582 = vmatprep.subr.bf16.mxu0 0
      %3583 = vmatpush1.bf16.msra.mxu0 0
      %3584 = vmatprep.subr.bf16.mxu0 0
      %3585 = vmatpush1.bf16.msra.mxu0 0
      %3586 = vmatprep.subr.bf16.mxu0 0
      %3587 = vmatpush1.bf16.msra.mxu0 0
      %3588 = vmatprep.subr.bf16.mxu0 0
      %3589 = vmatpush1.bf16.msra.mxu0 0
      %3590 = vmatprep.subr.bf16.mxu0 0
      %3591 = vmatpush1.bf16.msra.mxu0 0
      %3592 = vmatprep.subr.bf16.mxu0 0
      %3593 = vmatpush1.bf16.msra.mxu0 0
      %3594 = vmatprep.subr.bf16.mxu0 0
      %3595 = vmatpush1.bf16.msra.mxu0 0
      %3596 = vmatprep.mubr.bf16.mxu0 0
      %3597 = vmatmul.mubr.bf16.gmra.mrb[0].mxu0 %v3514
      %v3598 = vpop.f32.mrb[0].mxu0
      %v3599 = vadd.f32 %v3382, %v3598
      %v3600 = vpop.f32.mrb[0].mxu0
      %v3601 = vpop.f32.mrb[0].mxu0
      %v3602 = vadd.f32 %v3385, %v3601
      %v3603 = vpop.f32.mrb[0].mxu0
      %3604 = vmatprep.mubr.bf16.mxu0 0
      %3605 = vmatmul.mubr.bf16.gmra.mrb[0].mxu0 %v3517
      %v3606 = vpop.f32.mrb[0].mxu0
      %v3607 = vadd.f32 %v3390, %v3606
      %v3608 = vpop.f32.mrb[0].mxu0
      %v3609 = vpop.f32.mrb[0].mxu0
      %v3610 = vadd.f32 %v3393, %v3609
      %v3611 = vpop.f32.mrb[0].mxu0
      %3612 = vmatprep.mubr.bf16.mxu0 0
      %3613 = vmatmul.mubr.bf16.gmra.mrb[0].mxu0 %v3520
      %v3614 = vpop.f32.mrb[0].mxu0
      %v3615 = vadd.f32 %v3398, %v3614
      %v3616 = vpop.f32.mrb[0].mxu0
      %v3617 = vpop.f32.mrb[0].mxu0
      %v3618 = vadd.f32 %v3401, %v3617
      %v3619 = vpop.f32.mrb[0].mxu0
      %3620 = vmatprep.mubr.bf16.mxu0 0
      %3621 = vmatmul.mubr.bf16.gmra.mrb[0].mxu0 %v3523
      %v3622 = vpop.f32.mrb[0].mxu0
      %v3623 = vadd.f32 %v3406, %v3622
      %v3624 = vpop.f32.mrb[0].mxu0
      %v3625 = vpop.f32.mrb[0].mxu0
      %v3626 = vadd.f32 %v3409, %v3625
      %v3627 = vpop.f32.mrb[0].mxu0
      %3628 = vmatprep.mubr.bf16.mxu0 0
      %3629 = vmatmul.mubr.bf16.gmra.mrb[0].mxu0 %v3526
      %v3630 = vpop.f32.mrb[0].mxu0
      %v3631 = vadd.f32 %v3414, %v3630
      %v3632 = vpop.f32.mrb[0].mxu0
      %v3633 = vpop.f32.mrb[0].mxu0
      %v3634 = vadd.f32 %v3417, %v3633
      %v3635 = vpop.f32.mrb[0].mxu0
      %3636 = vmatprep.mubr.bf16.mxu0 0
      %3637 = vmatmul.mubr.bf16.gmra.mrb[0].mxu0 %v3529
      %v3638 = vpop.f32.mrb[0].mxu0
      %v3639 = vadd.f32 %v3422, %v3638
      %v3640 = vpop.f32.mrb[0].mxu0
      %v3641 = vpop.f32.mrb[0].mxu0
      %v3642 = vadd.f32 %v3425, %v3641
      %v3643 = vpop.f32.mrb[0].mxu0
      %3644 = vmatprep.mubr.bf16.mxu0 0
      %3645 = vmatmul.mubr.bf16.gmra.mrb[0].mxu0 %v3532
      %v3646 = vpop.f32.mrb[0].mxu0
      %v3647 = vadd.f32 %v3430, %v3646
      %v3648 = vpop.f32.mrb[0].mxu0
      %v3649 = vpop.f32.mrb[0].mxu0
      %v3650 = vadd.f32 %v3433, %v3649
      %v3651 = vpop.f32.mrb[0].mxu0
      %3652 = vmatprep.mubr.bf16.mxu0 0
      %3653 = vmatmul.mubr.bf16.gmra.mrb[0].mxu0 %v3535
      %v3654 = vpop.f32.mrb[0].mxu0
      %v3655 = vadd.f32 %v3438, %v3654
      %v3656 = vpop.f32.mrb[0].mxu0
      %v3657 = vpop.f32.mrb[0].mxu0
      %v3658 = vadd.f32 %v3441, %v3657
      %v3659 = vpop.f32.mrb[0].mxu0
      %3660 = vmatprep.mubr.bf16.mxu0 0
      %3661 = vmatmul.mubr.bf16.gmra.mrb[0].mxu0 %v3538
      %v3662 = vpop.f32.mrb[0].mxu0
      %v3663 = vadd.f32 %v3446, %v3662
      %v3664 = vpop.f32.mrb[0].mxu0
      %v3665 = vpop.f32.mrb[0].mxu0
      %v3666 = vadd.f32 %v3449, %v3665
      %v3667 = vpop.f32.mrb[0].mxu0
      %3668 = vmatprep.mubr.bf16.mxu0 0
      %3669 = vmatmul.mubr.bf16.gmra.mrb[0].mxu0 %v3541
      %v3670 = vpop.f32.mrb[0].mxu0
      %v3671 = vadd.f32 %v3454, %v3670
      %v3672 = vpop.f32.mrb[0].mxu0
      %v3673 = vpop.f32.mrb[0].mxu0
      %v3674 = vadd.f32 %v3457, %v3673
      %v3675 = vpop.f32.mrb[0].mxu0
      %3676 = vmatprep.mubr.bf16.mxu0 0
      %3677 = vmatmul.mubr.bf16.gmra.mrb[0].mxu0 %v3544
      %v3678 = vpop.f32.mrb[0].mxu0
      %v3679 = vadd.f32 %v3462, %v3678
      %v3680 = vpop.f32.mrb[0].mxu0
      %v3681 = vpop.f32.mrb[0].mxu0
      %v3682 = vadd.f32 %v3465, %v3681
      %v3683 = vpop.f32.mrb[0].mxu0
      %3684 = vmatprep.mubr.bf16.mxu0 0
      %3685 = vmatmul.mubr.bf16.gmra.mrb[0].mxu0 %v3547
      %v3686 = vpop.f32.mrb[0].mxu0
      %v3687 = vadd.f32 %v3470, %v3686
      %v3688 = vpop.f32.mrb[0].mxu0
      %v3689 = vpop.f32.mrb[0].mxu0
      %v3690 = vadd.f32 %v3473, %v3689
      %v3691 = vpop.f32.mrb[0].mxu0
      %3692 = vmatprep.mubr.bf16.mxu0 0
      %3693 = vmatmul.mubr.bf16.gmra.mrb[0].mxu0 %v3550
      %v3694 = vpop.f32.mrb[0].mxu0
      %v3695 = vadd.f32 %v3478, %v3694
      %v3696 = vpop.f32.mrb[0].mxu0
      %v3697 = vpop.f32.mrb[0].mxu0
      %v3698 = vadd.f32 %v3481, %v3697
      %v3699 = vpop.f32.mrb[0].mxu0
      %3700 = vmatprep.mubr.bf16.mxu0 0
      %3701 = vmatmul.mubr.bf16.gmra.mrb[0].mxu0 %v3553
      %v3702 = vpop.f32.mrb[0].mxu0
      %v3703 = vadd.f32 %v3486, %v3702
      %v3704 = vpop.f32.mrb[0].mxu0
      %v3705 = vpop.f32.mrb[0].mxu0
      %v3706 = vadd.f32 %v3489, %v3705
      %v3707 = vpop.f32.mrb[0].mxu0
      %3708 = vmatprep.mubr.bf16.mxu0 0
      %3709 = vmatmul.mubr.bf16.gmra.mrb[0].mxu0 %v3556
      %v3710 = vpop.f32.mrb[0].mxu0
      %v3711 = vadd.f32 %v3494, %v3710
      %v3712 = vpop.f32.mrb[0].mxu0
      %v3713 = vpop.f32.mrb[0].mxu0
      %v3714 = vadd.f32 %v3497, %v3713
      %v3715 = vpop.f32.mrb[0].mxu0
      %3716 = vmatprep.mubr.bf16.mxu0 0
      %3717 = vmatmul.mubr.bf16.gmra.mrb[0].mxu0 %v3559
      %v3718 = vpop.f32.mrb[0].mxu0
      %v3719 = vadd.f32 %v3502, %v3718
      %v3720 = vpop.f32.mrb[0].mxu0
      %v3721 = vpop.f32.mrb[0].mxu0
      %v3722 = vadd.f32 %v3505, %v3721
      %v3723 = vpop.f32.mrb[0].mxu0
      %3724 = vdwg.mxu0
      %s3725 = scalar_lea.vmem [#allocation2], 24
      %v3726 = vld [vmem:[%s3725] sm:$0xf]
      %v3727 = vld [vmem:[%s3725 + $0x4] sm:$0xf]
      %v3728 = vld [vmem:[%s3725 + $0xc] sm:$0xf]
      %v3729 = vld [vmem:[%s3725 + $0x10] sm:$0xf]
      %v3730 = vld [vmem:[%s3725 + $0x18] sm:$0xf]
      %v3731 = vld [vmem:[%s3725 + $0x1c] sm:$0xf]
      %v3732 = vld [vmem:[%s3725 + $0x24] sm:$0xf]
      %v3733 = vld [vmem:[%s3725 + $0x28] sm:$0xf]
      %v3734 = vld [vmem:[%s3725 + $0x30] sm:$0xf]
      %v3735 = vld [vmem:[%s3725 + $0x34] sm:$0xf]
      %v3736 = vld [vmem:[%s3725 + $0x3c] sm:$0xf]
      %v3737 = vld [vmem:[%s3725 + $0x40] sm:$0xf]
      %v3738 = vld [vmem:[%s3725 + $0x48] sm:$0xf]
      %v3739 = vld [vmem:[%s3725 + $0x4c] sm:$0xf]
      %v3740 = vld [vmem:[%s3725 + $0x54] sm:$0xf]
      %v3741 = vld [vmem:[%s3725 + $0x58] sm:$0xf]
      %v3742 = vld [vmem:[%s3725 + $0x60] sm:$0xf]
      %v3743 = vld [vmem:[%s3725 + $0x64] sm:$0xf]
      %v3744 = vld [vmem:[%s3725 + $0x6c] sm:$0xf]
      %v3745 = vld [vmem:[%s3725 + $0x70] sm:$0xf]
      %v3746 = vld [vmem:[%s3725 + $0x78] sm:$0xf]
      %v3747 = vld [vmem:[%s3725 + $0x7c] sm:$0xf]
      %v3748 = vld [vmem:[%s3725 + $0x84] sm:$0xf]
      %v3749 = vld [vmem:[%s3725 + $0x88] sm:$0xf]
      %v3750 = vld [vmem:[%s3725 + $0x90] sm:$0xf]
      %v3751 = vld [vmem:[%s3725 + $0x94] sm:$0xf]
      %v3752 = vld [vmem:[%s3725 + $0x9c] sm:$0xf]
      %v3753 = vld [vmem:[%s3725 + $0xa0] sm:$0xf]
      %v3754 = vld [vmem:[%s3725 + $0xa8] sm:$0xf]
      %v3755 = vld [vmem:[%s3725 + $0xac] sm:$0xf]
      %v3756 = vld [vmem:[%s3725 + $0xb4] sm:$0xf]
      %v3757 = vld [vmem:[%s3725 + $0xb8] sm:$0xf]
      %v3790 = vunpack.c.l.b16 %v3726
      %v3791 = vunpack.c.l.b16 %v3727
      %v3792 = vunpack.c.l.b16 %v3728
      %v3793 = vunpack.c.l.b16 %v3729
      %v3794 = vunpack.c.l.b16 %v3730
      %v3795 = vunpack.c.l.b16 %v3731
      %v3796 = vunpack.c.l.b16 %v3732
      %v3797 = vunpack.c.l.b16 %v3733
      %v3798 = vunpack.c.l.b16 %v3734
      %v3799 = vunpack.c.l.b16 %v3735
      %v3800 = vunpack.c.l.b16 %v3736
      %v3801 = vunpack.c.l.b16 %v3737
      %v3802 = vunpack.c.l.b16 %v3738
      %v3803 = vunpack.c.l.b16 %v3739
      %v3804 = vunpack.c.l.b16 %v3740
      %v3805 = vunpack.c.l.b16 %v3741
      %v3806 = vunpack.c.l.b16 %v3742
      %v3807 = vunpack.c.l.b16 %v3743
      %v3808 = vunpack.c.l.b16 %v3744
      %v3809 = vunpack.c.l.b16 %v3745
      %v3810 = vunpack.c.l.b16 %v3746
      %v3811 = vunpack.c.l.b16 %v3747
      %v3812 = vunpack.c.l.b16 %v3748
      %v3813 = vunpack.c.l.b16 %v3749
      %v3814 = vunpack.c.l.b16 %v3750
      %v3815 = vunpack.c.l.b16 %v3751
      %v3816 = vunpack.c.l.b16 %v3752
      %v3817 = vunpack.c.l.b16 %v3753
      %v3818 = vunpack.c.l.b16 %v3754
      %v3819 = vunpack.c.l.b16 %v3755
      %v3820 = vunpack.c.l.b16 %v3756
      %v3821 = vunpack.c.l.b16 %v3757
      %v3822 = vpack.c.b16 %v3791, %v3790
      %v3823 = vpack.c.b16 %v3793, %v3792
      %v3824 = vpack.c.b16 %v3795, %v3794
      %v3825 = vpack.c.b16 %v3797, %v3796
      %v3826 = vpack.c.b16 %v3799, %v3798
      %v3827 = vpack.c.b16 %v3801, %v3800
      %v3828 = vpack.c.b16 %v3803, %v3802
      %v3829 = vpack.c.b16 %v3805, %v3804
      %v3830 = vpack.c.b16 %v3807, %v3806
      %v3831 = vpack.c.b16 %v3809, %v3808
      %v3832 = vpack.c.b16 %v3811, %v3810
      %v3833 = vpack.c.b16 %v3813, %v3812
      %v3834 = vpack.c.b16 %v3815, %v3814
      %v3835 = vpack.c.b16 %v3817, %v3816
      %v3836 = vpack.c.b16 %v3819, %v3818
      %v3837 = vpack.c.b16 %v3821, %v3820
      %3854 = vst.msk [vmem:[#allocation3] sm:$0xff] %vm1355, %v3822
      %3855 = vst.msk [vmem:[#allocation3 + $0x8] sm:$0xff] %vm1355, %v3823
      %3856 = vst.msk [vmem:[#allocation3 + $0x10] sm:$0xff] %vm1355, %v3824
      %3857 = vst.msk [vmem:[#allocation3 + $0x18] sm:$0xff] %vm1355, %v3825
      %3858 = vst.msk [vmem:[#allocation3 + $0x20] sm:$0xff] %vm1355, %v3826
      %3859 = vst.msk [vmem:[#allocation3 + $0x28] sm:$0xff] %vm1355, %v3827
      %3860 = vst.msk [vmem:[#allocation3 + $0x30] sm:$0xff] %vm1355, %v3828
      %3861 = vst.msk [vmem:[#allocation3 + $0x38] sm:$0xff] %vm1355, %v3829
      %3862 = vst.msk [vmem:[#allocation3 + $0x40] sm:$0xff] %vm1355, %v3830
      %3863 = vst.msk [vmem:[#allocation3 + $0x48] sm:$0xff] %vm1355, %v3831
      %3864 = vst.msk [vmem:[#allocation3 + $0x50] sm:$0xff] %vm1355, %v3832
      %3865 = vst.msk [vmem:[#allocation3 + $0x58] sm:$0xff] %vm1355, %v3833
      %3866 = vst.msk [vmem:[#allocation3 + $0x60] sm:$0xff] %vm1355, %v3834
      %3867 = vst.msk [vmem:[#allocation3 + $0x68] sm:$0xff] %vm1355, %v3835
      %3868 = vst.msk [vmem:[#allocation3 + $0x70] sm:$0xff] %vm1355, %v3836
      %3869 = vst.msk [vmem:[#allocation3 + $0x78] sm:$0xff] %vm1355, %v3837
      %v3870 = vld [vmem:[%s3725] sm:$0xf]
      %v3871 = vld [vmem:[%s3725 + $0x4] sm:$0xf]
      %v3872 = vld [vmem:[%s3725 + $0x8] sm:$0x1]
      %v3873 = vld [vmem:[%s3725 + $0xc] sm:$0xf]
      %v3874 = vld [vmem:[%s3725 + $0x10] sm:$0xf]
      %v3875 = vld [vmem:[%s3725 + $0x14] sm:$0x1]
      %v3876 = vld [vmem:[%s3725 + $0x18] sm:$0xf]
      %v3877 = vld [vmem:[%s3725 + $0x1c] sm:$0xf]
      %v3878 = vld [vmem:[%s3725 + $0x20] sm:$0x1]
      %v3879 = vld [vmem:[%s3725 + $0x24] sm:$0xf]
      %v3880 = vld [vmem:[%s3725 + $0x28] sm:$0xf]
      %v3881 = vld [vmem:[%s3725 + $0x2c] sm:$0x1]
      %v3882 = vld [vmem:[%s3725 + $0x30] sm:$0xf]
      %v3883 = vld [vmem:[%s3725 + $0x34] sm:$0xf]
      %v3884 = vld [vmem:[%s3725 + $0x38] sm:$0x1]
      %v3885 = vld [vmem:[%s3725 + $0x3c] sm:$0xf]
      %v3886 = vld [vmem:[%s3725 + $0x40] sm:$0xf]
      %v3887 = vld [vmem:[%s3725 + $0x44] sm:$0x1]
      %v3888 = vld [vmem:[%s3725 + $0x48] sm:$0xf]
      %v3889 = vld [vmem:[%s3725 + $0x4c] sm:$0xf]
      %v3890 = vld [vmem:[%s3725 + $0x50] sm:$0x1]
      %v3891 = vld [vmem:[%s3725 + $0x54] sm:$0xf]
      %v3892 = vld [vmem:[%s3725 + $0x58] sm:$0xf]
      %v3893 = vld [vmem:[%s3725 + $0x5c] sm:$0x1]
      %v3894 = vld [vmem:[%s3725 + $0x60] sm:$0xf]
      %v3895 = vld [vmem:[%s3725 + $0x64] sm:$0xf]
      %v3896 = vld [vmem:[%s3725 + $0x68] sm:$0x1]
      %v3897 = vld [vmem:[%s3725 + $0x6c] sm:$0xf]
      %v3898 = vld [vmem:[%s3725 + $0x70] sm:$0xf]
      %v3899 = vld [vmem:[%s3725 + $0x74] sm:$0x1]
      %v3900 = vld [vmem:[%s3725 + $0x78] sm:$0xf]
      %v3901 = vld [vmem:[%s3725 + $0x7c] sm:$0xf]
      %v3902 = vld [vmem:[%s3725 + $0x80] sm:$0x1]
      %v3903 = vld [vmem:[%s3725 + $0x84] sm:$0xf]
      %v3904 = vld [vmem:[%s3725 + $0x88] sm:$0xf]
      %v3905 = vld [vmem:[%s3725 + $0x8c] sm:$0x1]
      %v3906 = vld [vmem:[%s3725 + $0x90] sm:$0xf]
      %v3907 = vld [vmem:[%s3725 + $0x94] sm:$0xf]
      %v3908 = vld [vmem:[%s3725 + $0x98] sm:$0x1]
      %v3909 = vld [vmem:[%s3725 + $0x9c] sm:$0xf]
      %v3910 = vld [vmem:[%s3725 + $0xa0] sm:$0xf]
      %v3911 = vld [vmem:[%s3725 + $0xa4] sm:$0x1]
      %v3912 = vld [vmem:[%s3725 + $0xa8] sm:$0xf]
      %v3913 = vld [vmem:[%s3725 + $0xac] sm:$0xf]
      %v3914 = vld [vmem:[%s3725 + $0xb0] sm:$0x1]
      %v3915 = vld [vmem:[%s3725 + $0xb4] sm:$0xf]
      %v3916 = vld [vmem:[%s3725 + $0xb8] sm:$0xf]
      %v3917 = vld [vmem:[%s3725 + $0xbc] sm:$0x1]
      %v3919 = vshrl.u32 %v3870, 16
      %v3921 = vrot.slane %v3919, 4
      %v3922 = vshll.u32 %v3870, 16
      %v3924 = vrot.slane %v3922, 5
      %v3925 = vor.u32 %v3921, %v3924
      %v3926 = vrot.slane %v3925, 4
      %v3928 = vshll.u32 %v3871, 16
      %v3930 = vrot.slane %v3928, 5
      %v3931 = vsel %vm1422, %v3926, %v3930
      %v3932 = vshrl.u32 %v3871, 16
      %v3934 = vrot.slane %v3932, 4
      %v3935 = vor.u32 %v3934, %v3930
      %v3936 = vrot.slane %v3935, 4
      %v3938 = vshll.u32 %v3872, 16
      %v3940 = vrot.slane %v3938, 5
      %v3941 = vsel %vm1422, %v3936, %v3940
      %v3943 = vshrl.u32 %v3873, 16
      %v3945 = vrot.slane %v3943, 4
      %v3946 = vshll.u32 %v3873, 16
      %v3948 = vrot.slane %v3946, 5
      %v3949 = vor.u32 %v3945, %v3948
      %v3950 = vrot.slane %v3949, 4
      %v3952 = vshll.u32 %v3874, 16
      %v3954 = vrot.slane %v3952, 5
      %v3955 = vsel %vm1422, %v3950, %v3954
      %v3956 = vshrl.u32 %v3874, 16
      %v3958 = vrot.slane %v3956, 4
      %v3959 = vor.u32 %v3958, %v3954
      %v3960 = vrot.slane %v3959, 4
      %v3962 = vshll.u32 %v3875, 16
      %v3964 = vrot.slane %v3962, 5
      %v3965 = vsel %vm1422, %v3960, %v3964
      %v3967 = vshrl.u32 %v3876, 16
      %v3969 = vrot.slane %v3967, 4
      %v3970 = vshll.u32 %v3876, 16
      %v3972 = vrot.slane %v3970, 5
      %v3973 = vor.u32 %v3969, %v3972
      %v3974 = vrot.slane %v3973, 4
      %v3976 = vshll.u32 %v3877, 16
      %v3978 = vrot.slane %v3976, 5
      %v3979 = vsel %vm1422, %v3974, %v3978
      %v3980 = vshrl.u32 %v3877, 16
      %v3982 = vrot.slane %v3980, 4
      %v3983 = vor.u32 %v3982, %v3978
      %v3984 = vrot.slane %v3983, 4
      %v3986 = vshll.u32 %v3878, 16
      %v3988 = vrot.slane %v3986, 5
      %v3989 = vsel %vm1422, %v3984, %v3988
      %v3991 = vshrl.u32 %v3879, 16
      %v3993 = vrot.slane %v3991, 4
      %v3994 = vshll.u32 %v3879, 16
      %v3996 = vrot.slane %v3994, 5
      %v3997 = vor.u32 %v3993, %v3996
      %v3998 = vrot.slane %v3997, 4
      %v4000 = vshll.u32 %v3880, 16
      %v4002 = vrot.slane %v4000, 5
      %v4003 = vsel %vm1422, %v3998, %v4002
      %v4004 = vshrl.u32 %v3880, 16
      %v4006 = vrot.slane %v4004, 4
      %v4007 = vor.u32 %v4006, %v4002
      %v4008 = vrot.slane %v4007, 4
      %v4010 = vshll.u32 %v3881, 16
      %v4012 = vrot.slane %v4010, 5
      %v4013 = vsel %vm1422, %v4008, %v4012
      %v4015 = vshrl.u32 %v3882, 16
      %v4017 = vrot.slane %v4015, 4
      %v4018 = vshll.u32 %v3882, 16
      %v4020 = vrot.slane %v4018, 5
      %v4021 = vor.u32 %v4017, %v4020
      %v4022 = vrot.slane %v4021, 4
      %v4024 = vshll.u32 %v3883, 16
      %v4026 = vrot.slane %v4024, 5
      %v4027 = vsel %vm1422, %v4022, %v4026
      %v4028 = vshrl.u32 %v3883, 16
      %v4030 = vrot.slane %v4028, 4
      %v4031 = vor.u32 %v4030, %v4026
      %v4032 = vrot.slane %v4031, 4
      %v4034 = vshll.u32 %v3884, 16
      %v4036 = vrot.slane %v4034, 5
      %v4037 = vsel %vm1422, %v4032, %v4036
      %v4039 = vshrl.u32 %v3885, 16
      %v4041 = vrot.slane %v4039, 4
      %v4042 = vshll.u32 %v3885, 16
      %v4044 = vrot.slane %v4042, 5
      %v4045 = vor.u32 %v4041, %v4044
      %v4046 = vrot.slane %v4045, 4
      %v4048 = vshll.u32 %v3886, 16
      %v4050 = vrot.slane %v4048, 5
      %v4051 = vsel %vm1422, %v4046, %v4050
      %v4052 = vshrl.u32 %v3886, 16
      %v4054 = vrot.slane %v4052, 4
      %v4055 = vor.u32 %v4054, %v4050
      %v4056 = vrot.slane %v4055, 4
      %v4058 = vshll.u32 %v3887, 16
      %v4060 = vrot.slane %v4058, 5
      %v4061 = vsel %vm1422, %v4056, %v4060
      %v4063 = vshrl.u32 %v3888, 16
      %v4065 = vrot.slane %v4063, 4
      %v4066 = vshll.u32 %v3888, 16
      %v4068 = vrot.slane %v4066, 5
      %v4069 = vor.u32 %v4065, %v4068
      %v4070 = vrot.slane %v4069, 4
      %v4072 = vshll.u32 %v3889, 16
      %v4074 = vrot.slane %v4072, 5
      %v4075 = vsel %vm1422, %v4070, %v4074
      %v4076 = vshrl.u32 %v3889, 16
      %v4078 = vrot.slane %v4076, 4
      %v4079 = vor.u32 %v4078, %v4074
      %v4080 = vrot.slane %v4079, 4
      %v4082 = vshll.u32 %v3890, 16
      %v4084 = vrot.slane %v4082, 5
      %v4085 = vsel %vm1422, %v4080, %v4084
      %v4087 = vshrl.u32 %v3891, 16
      %v4089 = vrot.slane %v4087, 4
      %v4090 = vshll.u32 %v3891, 16
      %v4092 = vrot.slane %v4090, 5
      %v4093 = vor.u32 %v4089, %v4092
      %v4094 = vrot.slane %v4093, 4
      %v4096 = vshll.u32 %v3892, 16
      %v4098 = vrot.slane %v4096, 5
      %v4099 = vsel %vm1422, %v4094, %v4098
      %v4100 = vshrl.u32 %v3892, 16
      %v4102 = vrot.slane %v4100, 4
      %v4103 = vor.u32 %v4102, %v4098
      %v4104 = vrot.slane %v4103, 4
      %v4106 = vshll.u32 %v3893, 16
      %v4108 = vrot.slane %v4106, 5
      %v4109 = vsel %vm1422, %v4104, %v4108
      %v4111 = vshrl.u32 %v3894, 16
      %v4113 = vrot.slane %v4111, 4
      %v4114 = vshll.u32 %v3894, 16
      %v4116 = vrot.slane %v4114, 5
      %v4117 = vor.u32 %v4113, %v4116
      %v4118 = vrot.slane %v4117, 4
      %v4120 = vshll.u32 %v3895, 16
      %v4122 = vrot.slane %v4120, 5
      %v4123 = vsel %vm1422, %v4118, %v4122
      %v4124 = vshrl.u32 %v3895, 16
      %v4126 = vrot.slane %v4124, 4
      %v4127 = vor.u32 %v4126, %v4122
      %v4128 = vrot.slane %v4127, 4
      %v4130 = vshll.u32 %v3896, 16
      %v4132 = vrot.slane %v4130, 5
      %v4133 = vsel %vm1422, %v4128, %v4132
      %v4135 = vshrl.u32 %v3897, 16
      %v4137 = vrot.slane %v4135, 4
      %v4138 = vshll.u32 %v3897, 16
      %v4140 = vrot.slane %v4138, 5
      %v4141 = vor.u32 %v4137, %v4140
      %v4142 = vrot.slane %v4141, 4
      %v4144 = vshll.u32 %v3898, 16
      %v4146 = vrot.slane %v4144, 5
      %v4147 = vsel %vm1422, %v4142, %v4146
      %v4148 = vshrl.u32 %v3898, 16
      %v4150 = vrot.slane %v4148, 4
      %v4151 = vor.u32 %v4150, %v4146
      %v4152 = vrot.slane %v4151, 4
      %v4154 = vshll.u32 %v3899, 16
      %v4156 = vrot.slane %v4154, 5
      %v4157 = vsel %vm1422, %v4152, %v4156
      %v4159 = vshrl.u32 %v3900, 16
      %v4161 = vrot.slane %v4159, 4
      %v4162 = vshll.u32 %v3900, 16
      %v4164 = vrot.slane %v4162, 5
      %v4165 = vor.u32 %v4161, %v4164
      %v4166 = vrot.slane %v4165, 4
      %v4168 = vshll.u32 %v3901, 16
      %v4170 = vrot.slane %v4168, 5
      %v4171 = vsel %vm1422, %v4166, %v4170
      %v4172 = vshrl.u32 %v3901, 16
      %v4174 = vrot.slane %v4172, 4
      %v4175 = vor.u32 %v4174, %v4170
      %v4176 = vrot.slane %v4175, 4
      %v4178 = vshll.u32 %v3902, 16
      %v4180 = vrot.slane %v4178, 5
      %v4181 = vsel %vm1422, %v4176, %v4180
      %v4183 = vshrl.u32 %v3903, 16
      %v4185 = vrot.slane %v4183, 4
      %v4186 = vshll.u32 %v3903, 16
      %v4188 = vrot.slane %v4186, 5
      %v4189 = vor.u32 %v4185, %v4188
      %v4190 = vrot.slane %v4189, 4
      %v4192 = vshll.u32 %v3904, 16
      %v4194 = vrot.slane %v4192, 5
      %v4195 = vsel %vm1422, %v4190, %v4194
      %v4196 = vshrl.u32 %v3904, 16
      %v4198 = vrot.slane %v4196, 4
      %v4199 = vor.u32 %v4198, %v4194
      %v4200 = vrot.slane %v4199, 4
      %v4202 = vshll.u32 %v3905, 16
      %v4204 = vrot.slane %v4202, 5
      %v4205 = vsel %vm1422, %v4200, %v4204
      %v4207 = vshrl.u32 %v3906, 16
      %v4209 = vrot.slane %v4207, 4
      %v4210 = vshll.u32 %v3906, 16
      %v4212 = vrot.slane %v4210, 5
      %v4213 = vor.u32 %v4209, %v4212
      %v4214 = vrot.slane %v4213, 4
      %v4216 = vshll.u32 %v3907, 16
      %v4218 = vrot.slane %v4216, 5
      %v4219 = vsel %vm1422, %v4214, %v4218
      %v4220 = vshrl.u32 %v3907, 16
      %v4222 = vrot.slane %v4220, 4
      %v4223 = vor.u32 %v4222, %v4218
      %v4224 = vrot.slane %v4223, 4
      %v4226 = vshll.u32 %v3908, 16
      %v4228 = vrot.slane %v4226, 5
      %v4229 = vsel %vm1422, %v4224, %v4228
      %v4231 = vshrl.u32 %v3909, 16
      %v4233 = vrot.slane %v4231, 4
      %v4234 = vshll.u32 %v3909, 16
      %v4236 = vrot.slane %v4234, 5
      %v4237 = vor.u32 %v4233, %v4236
      %v4238 = vrot.slane %v4237, 4
      %v4240 = vshll.u32 %v3910, 16
      %v4242 = vrot.slane %v4240, 5
      %v4243 = vsel %vm1422, %v4238, %v4242
      %v4244 = vshrl.u32 %v3910, 16
      %v4246 = vrot.slane %v4244, 4
      %v4247 = vor.u32 %v4246, %v4242
      %v4248 = vrot.slane %v4247, 4
      %v4250 = vshll.u32 %v3911, 16
      %v4252 = vrot.slane %v4250, 5
      %v4253 = vsel %vm1422, %v4248, %v4252
      %v4255 = vshrl.u32 %v3912, 16
      %v4257 = vrot.slane %v4255, 4
      %v4258 = vshll.u32 %v3912, 16
      %v4260 = vrot.slane %v4258, 5
      %v4261 = vor.u32 %v4257, %v4260
      %v4262 = vrot.slane %v4261, 4
      %v4264 = vshll.u32 %v3913, 16
      %v4266 = vrot.slane %v4264, 5
      %v4267 = vsel %vm1422, %v4262, %v4266
      %v4268 = vshrl.u32 %v3913, 16
      %v4270 = vrot.slane %v4268, 4
      %v4271 = vor.u32 %v4270, %v4266
      %v4272 = vrot.slane %v4271, 4
      %v4274 = vshll.u32 %v3914, 16
      %v4276 = vrot.slane %v4274, 5
      %v4277 = vsel %vm1422, %v4272, %v4276
      %v4279 = vshrl.u32 %v3915, 16
      %v4281 = vrot.slane %v4279, 4
      %v4282 = vshll.u32 %v3915, 16
      %v4284 = vrot.slane %v4282, 5
      %v4285 = vor.u32 %v4281, %v4284
      %v4286 = vrot.slane %v4285, 4
      %v4288 = vshll.u32 %v3916, 16
      %v4290 = vrot.slane %v4288, 5
      %v4291 = vsel %vm1422, %v4286, %v4290
      %v4292 = vshrl.u32 %v3916, 16
      %v4294 = vrot.slane %v4292, 4
      %v4295 = vor.u32 %v4294, %v4290
      %v4296 = vrot.slane %v4295, 4
      %v4298 = vshll.u32 %v3917, 16
      %v4300 = vrot.slane %v4298, 5
      %v4301 = vsel %vm1422, %v4296, %v4300
      %v4302 = vunpack.c.l.b16 %v3931
      %v4303 = vunpack.c.l.b16 %v3941
      %v4304 = vunpack.c.l.b16 %v3955
      %v4305 = vunpack.c.l.b16 %v3965
      %v4306 = vunpack.c.l.b16 %v3979
      %v4307 = vunpack.c.l.b16 %v3989
      %v4308 = vunpack.c.l.b16 %v4003
      %v4309 = vunpack.c.l.b16 %v4013
      %v4310 = vunpack.c.l.b16 %v4027
      %v4311 = vunpack.c.l.b16 %v4037
      %v4312 = vunpack.c.l.b16 %v4051
      %v4313 = vunpack.c.l.b16 %v4061
      %v4314 = vunpack.c.l.b16 %v4075
      %v4315 = vunpack.c.l.b16 %v4085
      %v4316 = vunpack.c.l.b16 %v4099
      %v4317 = vunpack.c.l.b16 %v4109
      %v4318 = vunpack.c.l.b16 %v4123
      %v4319 = vunpack.c.l.b16 %v4133
      %v4320 = vunpack.c.l.b16 %v4147
      %v4321 = vunpack.c.l.b16 %v4157
      %v4322 = vunpack.c.l.b16 %v4171
      %v4323 = vunpack.c.l.b16 %v4181
      %v4324 = vunpack.c.l.b16 %v4195
      %v4325 = vunpack.c.l.b16 %v4205
      %v4326 = vunpack.c.l.b16 %v4219
      %v4327 = vunpack.c.l.b16 %v4229
      %v4328 = vunpack.c.l.b16 %v4243
      %v4329 = vunpack.c.l.b16 %v4253
      %v4330 = vunpack.c.l.b16 %v4267
      %v4331 = vunpack.c.l.b16 %v4277
      %v4332 = vunpack.c.l.b16 %v4291
      %v4333 = vunpack.c.l.b16 %v4301
      %v4334 = vpack.c.b16 %v4303, %v4302
      %v4335 = vpack.c.b16 %v4305, %v4304
      %v4336 = vpack.c.b16 %v4307, %v4306
      %v4337 = vpack.c.b16 %v4309, %v4308
      %v4338 = vpack.c.b16 %v4311, %v4310
      %v4339 = vpack.c.b16 %v4313, %v4312
      %v4340 = vpack.c.b16 %v4315, %v4314
      %v4341 = vpack.c.b16 %v4317, %v4316
      %v4342 = vpack.c.b16 %v4319, %v4318
      %v4343 = vpack.c.b16 %v4321, %v4320
      %v4344 = vpack.c.b16 %v4323, %v4322
      %v4345 = vpack.c.b16 %v4325, %v4324
      %v4346 = vpack.c.b16 %v4327, %v4326
      %v4347 = vpack.c.b16 %v4329, %v4328
      %v4348 = vpack.c.b16 %v4331, %v4330
      %v4349 = vpack.c.b16 %v4333, %v4332
      %4350 = vrot.lane.b32.xlu0 %v4334, 4
      %v4351 = vpop.permute.xlu0 %4350
      %4352 = vrot.lane.b32.xlu0 %v4335, 4
      %v4353 = vpop.permute.xlu0 %4352
      %4354 = vrot.lane.b32.xlu0 %v4336, 4
      %v4355 = vpop.permute.xlu0 %4354
      %4356 = vrot.lane.b32.xlu0 %v4337, 4
      %v4357 = vpop.permute.xlu0 %4356
      %4358 = vrot.lane.b32.xlu0 %v4338, 4
      %v4359 = vpop.permute.xlu0 %4358
      %4360 = vrot.lane.b32.xlu0 %v4339, 4
      %v4361 = vpop.permute.xlu0 %4360
      %4362 = vrot.lane.b32.xlu0 %v4340, 4
      %v4363 = vpop.permute.xlu0 %4362
      %4364 = vrot.lane.b32.xlu0 %v4341, 4
      %v4365 = vpop.permute.xlu0 %4364
      %4366 = vrot.lane.b32.xlu0 %v4342, 4
      %v4367 = vpop.permute.xlu0 %4366
      %4368 = vrot.lane.b32.xlu0 %v4343, 4
      %v4369 = vpop.permute.xlu0 %4368
      %4370 = vrot.lane.b32.xlu0 %v4344, 4
      %v4371 = vpop.permute.xlu0 %4370
      %4372 = vrot.lane.b32.xlu0 %v4345, 4
      %v4373 = vpop.permute.xlu0 %4372
      %4374 = vrot.lane.b32.xlu0 %v4346, 4
      %v4375 = vpop.permute.xlu0 %4374
      %4376 = vrot.lane.b32.xlu0 %v4347, 4
      %v4377 = vpop.permute.xlu0 %4376
      %4378 = vrot.lane.b32.xlu0 %v4348, 4
      %v4379 = vpop.permute.xlu0 %4378
      %4380 = vrot.lane.b32.xlu0 %v4349, 4
      %v4381 = vpop.permute.xlu0 %4380
      %4398 = vst.msk [vmem:[#allocation3] sm:$0xff] %vm1903, %v4351
      %4399 = vst.msk [vmem:[#allocation3 + $0x8] sm:$0xff] %vm1903, %v4353
      %4400 = vst.msk [vmem:[#allocation3 + $0x10] sm:$0xff] %vm1903, %v4355
      %4401 = vst.msk [vmem:[#allocation3 + $0x18] sm:$0xff] %vm1903, %v4357
      %4402 = vst.msk [vmem:[#allocation3 + $0x20] sm:$0xff] %vm1903, %v4359
      %4403 = vst.msk [vmem:[#allocation3 + $0x28] sm:$0xff] %vm1903, %v4361
      %4404 = vst.msk [vmem:[#allocation3 + $0x30] sm:$0xff] %vm1903, %v4363
      %4405 = vst.msk [vmem:[#allocation3 + $0x38] sm:$0xff] %vm1903, %v4365
      %4406 = vst.msk [vmem:[#allocation3 + $0x40] sm:$0xff] %vm1903, %v4367
      %4407 = vst.msk [vmem:[#allocation3 + $0x48] sm:$0xff] %vm1903, %v4369
      %4408 = vst.msk [vmem:[#allocation3 + $0x50] sm:$0xff] %vm1903, %v4371
      %4409 = vst.msk [vmem:[#allocation3 + $0x58] sm:$0xff] %vm1903, %v4373
      %4410 = vst.msk [vmem:[#allocation3 + $0x60] sm:$0xff] %vm1903, %v4375
      %4411 = vst.msk [vmem:[#allocation3 + $0x68] sm:$0xff] %vm1903, %v4377
      %4412 = vst.msk [vmem:[#allocation3 + $0x70] sm:$0xff] %vm1903, %v4379
      %4413 = vst.msk [vmem:[#allocation3 + $0x78] sm:$0xff] %vm1903, %v4381
      %v4414 = vld [vmem:[%s3725] sm:$0xe]
      %v4415 = vld [vmem:[%s3725 + $0x4] sm:$0xf]
      %v4416 = vld [vmem:[%s3725 + $0x8] sm:$0x1]
      %v4417 = vld [vmem:[%s3725 + $0xc] sm:$0xe]
      %v4418 = vld [vmem:[%s3725 + $0x10] sm:$0xf]
      %v4419 = vld [vmem:[%s3725 + $0x14] sm:$0x1]
      %v4420 = vld [vmem:[%s3725 + $0x18] sm:$0xe]
      %v4421 = vld [vmem:[%s3725 + $0x1c] sm:$0xf]
      %v4422 = vld [vmem:[%s3725 + $0x20] sm:$0x1]
      %v4423 = vld [vmem:[%s3725 + $0x24] sm:$0xe]
      %v4424 = vld [vmem:[%s3725 + $0x28] sm:$0xf]
      %v4425 = vld [vmem:[%s3725 + $0x2c] sm:$0x1]
      %v4426 = vld [vmem:[%s3725 + $0x30] sm:$0xe]
      %v4427 = vld [vmem:[%s3725 + $0x34] sm:$0xf]
      %v4428 = vld [vmem:[%s3725 + $0x38] sm:$0x1]
      %v4429 = vld [vmem:[%s3725 + $0x3c] sm:$0xe]
      %v4430 = vld [vmem:[%s3725 + $0x40] sm:$0xf]
      %v4431 = vld [vmem:[%s3725 + $0x44] sm:$0x1]
      %v4432 = vld [vmem:[%s3725 + $0x48] sm:$0xe]
      %v4433 = vld [vmem:[%s3725 + $0x4c] sm:$0xf]
      %v4434 = vld [vmem:[%s3725 + $0x50] sm:$0x1]
      %v4435 = vld [vmem:[%s3725 + $0x54] sm:$0xe]
      %v4436 = vld [vmem:[%s3725 + $0x58] sm:$0xf]
      %v4437 = vld [vmem:[%s3725 + $0x5c] sm:$0x1]
      %v4438 = vld [vmem:[%s3725 + $0x60] sm:$0xe]
      %v4439 = vld [vmem:[%s3725 + $0x64] sm:$0xf]
      %v4440 = vld [vmem:[%s3725 + $0x68] sm:$0x1]
      %v4441 = vld [vmem:[%s3725 + $0x6c] sm:$0xe]
      %v4442 = vld [vmem:[%s3725 + $0x70] sm:$0xf]
      %v4443 = vld [vmem:[%s3725 + $0x74] sm:$0x1]
      %v4444 = vld [vmem:[%s3725 + $0x78] sm:$0xe]
      %v4445 = vld [vmem:[%s3725 + $0x7c] sm:$0xf]
      %v4446 = vld [vmem:[%s3725 + $0x80] sm:$0x1]
      %v4447 = vld [vmem:[%s3725 + $0x84] sm:$0xe]
      %v4448 = vld [vmem:[%s3725 + $0x88] sm:$0xf]
      %v4449 = vld [vmem:[%s3725 + $0x8c] sm:$0x1]
      %v4450 = vld [vmem:[%s3725 + $0x90] sm:$0xe]
      %v4451 = vld [vmem:[%s3725 + $0x94] sm:$0xf]
      %v4452 = vld [vmem:[%s3725 + $0x98] sm:$0x1]
      %v4453 = vld [vmem:[%s3725 + $0x9c] sm:$0xe]
      %v4454 = vld [vmem:[%s3725 + $0xa0] sm:$0xf]
      %v4455 = vld [vmem:[%s3725 + $0xa4] sm:$0x1]
      %v4456 = vld [vmem:[%s3725 + $0xa8] sm:$0xe]
      %v4457 = vld [vmem:[%s3725 + $0xac] sm:$0xf]
      %v4458 = vld [vmem:[%s3725 + $0xb0] sm:$0x1]
      %v4459 = vld [vmem:[%s3725 + $0xb4] sm:$0xe]
      %v4460 = vld [vmem:[%s3725 + $0xb8] sm:$0xf]
      %v4461 = vld [vmem:[%s3725 + $0xbc] sm:$0x1]
      %v4510 = vrot.slane %v4414, 5
      %v4511 = vrot.slane %v4510, 4
      %v4512 = vrot.slane %v4415, 5
      %v4513 = vsel %vm2018, %v4511, %v4512
      %v4514 = vrot.slane %v4512, 4
      %v4515 = vrot.slane %v4416, 5
      %v4516 = vsel %vm2018, %v4514, %v4515
      %v4517 = vrot.slane %v4417, 5
      %v4518 = vrot.slane %v4517, 4
      %v4519 = vrot.slane %v4418, 5
      %v4520 = vsel %vm2018, %v4518, %v4519
      %v4521 = vrot.slane %v4519, 4
      %v4522 = vrot.slane %v4419, 5
      %v4523 = vsel %vm2018, %v4521, %v4522
      %v4524 = vrot.slane %v4420, 5
      %v4525 = vrot.slane %v4524, 4
      %v4526 = vrot.slane %v4421, 5
      %v4527 = vsel %vm2018, %v4525, %v4526
      %v4528 = vrot.slane %v4526, 4
      %v4529 = vrot.slane %v4422, 5
      %v4530 = vsel %vm2018, %v4528, %v4529
      %v4531 = vrot.slane %v4423, 5
      %v4532 = vrot.slane %v4531, 4
      %v4533 = vrot.slane %v4424, 5
      %v4534 = vsel %vm2018, %v4532, %v4533
      %v4535 = vrot.slane %v4533, 4
      %v4536 = vrot.slane %v4425, 5
      %v4537 = vsel %vm2018, %v4535, %v4536
      %v4538 = vrot.slane %v4426, 5
      %v4539 = vrot.slane %v4538, 4
      %v4540 = vrot.slane %v4427, 5
      %v4541 = vsel %vm2018, %v4539, %v4540
      %v4542 = vrot.slane %v4540, 4
      %v4543 = vrot.slane %v4428, 5
      %v4544 = vsel %vm2018, %v4542, %v4543
      %v4545 = vrot.slane %v4429, 5
      %v4546 = vrot.slane %v4545, 4
      %v4547 = vrot.slane %v4430, 5
      %v4548 = vsel %vm2018, %v4546, %v4547
      %v4549 = vrot.slane %v4547, 4
      %v4550 = vrot.slane %v4431, 5
      %v4551 = vsel %vm2018, %v4549, %v4550
      %v4552 = vrot.slane %v4432, 5
      %v4553 = vrot.slane %v4552, 4
      %v4554 = vrot.slane %v4433, 5
      %v4555 = vsel %vm2018, %v4553, %v4554
      %v4556 = vrot.slane %v4554, 4
      %v4557 = vrot.slane %v4434, 5
      %v4558 = vsel %vm2018, %v4556, %v4557
      %v4559 = vrot.slane %v4435, 5
      %v4560 = vrot.slane %v4559, 4
      %v4561 = vrot.slane %v4436, 5
      %v4562 = vsel %vm2018, %v4560, %v4561
      %v4563 = vrot.slane %v4561, 4
      %v4564 = vrot.slane %v4437, 5
      %v4565 = vsel %vm2018, %v4563, %v4564
      %v4566 = vrot.slane %v4438, 5
      %v4567 = vrot.slane %v4566, 4
      %v4568 = vrot.slane %v4439, 5
      %v4569 = vsel %vm2018, %v4567, %v4568
      %v4570 = vrot.slane %v4568, 4
      %v4571 = vrot.slane %v4440, 5
      %v4572 = vsel %vm2018, %v4570, %v4571
      %v4573 = vrot.slane %v4441, 5
      %v4574 = vrot.slane %v4573, 4
      %v4575 = vrot.slane %v4442, 5
      %v4576 = vsel %vm2018, %v4574, %v4575
      %v4577 = vrot.slane %v4575, 4
      %v4578 = vrot.slane %v4443, 5
      %v4579 = vsel %vm2018, %v4577, %v4578
      %v4580 = vrot.slane %v4444, 5
      %v4581 = vrot.slane %v4580, 4
      %v4582 = vrot.slane %v4445, 5
      %v4583 = vsel %vm2018, %v4581, %v4582
      %v4584 = vrot.slane %v4582, 4
      %v4585 = vrot.slane %v4446, 5
      %v4586 = vsel %vm2018, %v4584, %v4585
      %v4587 = vrot.slane %v4447, 5
      %v4588 = vrot.slane %v4587, 4
      %v4589 = vrot.slane %v4448, 5
      %v4590 = vsel %vm2018, %v4588, %v4589
      %v4591 = vrot.slane %v4589, 4
      %v4592 = vrot.slane %v4449, 5
      %v4593 = vsel %vm2018, %v4591, %v4592
      %v4594 = vrot.slane %v4450, 5
      %v4595 = vrot.slane %v4594, 4
      %v4596 = vrot.slane %v4451, 5
      %v4597 = vsel %vm2018, %v4595, %v4596
      %v4598 = vrot.slane %v4596, 4
      %v4599 = vrot.slane %v4452, 5
      %v4600 = vsel %vm2018, %v4598, %v4599
      %v4601 = vrot.slane %v4453, 5
      %v4602 = vrot.slane %v4601, 4
      %v4603 = vrot.slane %v4454, 5
      %v4604 = vsel %vm2018, %v4602, %v4603
      %v4605 = vrot.slane %v4603, 4
      %v4606 = vrot.slane %v4455, 5
      %v4607 = vsel %vm2018, %v4605, %v4606
      %v4608 = vrot.slane %v4456, 5
      %v4609 = vrot.slane %v4608, 4
      %v4610 = vrot.slane %v4457, 5
      %v4611 = vsel %vm2018, %v4609, %v4610
      %v4612 = vrot.slane %v4610, 4
      %v4613 = vrot.slane %v4458, 5
      %v4614 = vsel %vm2018, %v4612, %v4613
      %v4615 = vrot.slane %v4459, 5
      %v4616 = vrot.slane %v4615, 4
      %v4617 = vrot.slane %v4460, 5
      %v4618 = vsel %vm2018, %v4616, %v4617
      %v4619 = vrot.slane %v4617, 4
      %v4620 = vrot.slane %v4461, 5
      %v4621 = vsel %vm2018, %v4619, %v4620
      %v4622 = vunpack.c.l.b16 %v4513
      %v4623 = vunpack.c.l.b16 %v4516
      %v4624 = vunpack.c.l.b16 %v4520
      %v4625 = vunpack.c.l.b16 %v4523
      %v4626 = vunpack.c.l.b16 %v4527
      %v4627 = vunpack.c.l.b16 %v4530
      %v4628 = vunpack.c.l.b16 %v4534
      %v4629 = vunpack.c.l.b16 %v4537
      %v4630 = vunpack.c.l.b16 %v4541
      %v4631 = vunpack.c.l.b16 %v4544
      %v4632 = vunpack.c.l.b16 %v4548
      %v4633 = vunpack.c.l.b16 %v4551
      %v4634 = vunpack.c.l.b16 %v4555
      %v4635 = vunpack.c.l.b16 %v4558
      %v4636 = vunpack.c.l.b16 %v4562
      %v4637 = vunpack.c.l.b16 %v4565
      %v4638 = vunpack.c.l.b16 %v4569
      %v4639 = vunpack.c.l.b16 %v4572
      %v4640 = vunpack.c.l.b16 %v4576
      %v4641 = vunpack.c.l.b16 %v4579
      %v4642 = vunpack.c.l.b16 %v4583
      %v4643 = vunpack.c.l.b16 %v4586
      %v4644 = vunpack.c.l.b16 %v4590
      %v4645 = vunpack.c.l.b16 %v4593
      %v4646 = vunpack.c.l.b16 %v4597
      %v4647 = vunpack.c.l.b16 %v4600
      %v4648 = vunpack.c.l.b16 %v4604
      %v4649 = vunpack.c.l.b16 %v4607
      %v4650 = vunpack.c.l.b16 %v4611
      %v4651 = vunpack.c.l.b16 %v4614
      %v4652 = vunpack.c.l.b16 %v4618
      %v4653 = vunpack.c.l.b16 %v4621
      %v4654 = vpack.c.b16 %v4623, %v4622
      %v4655 = vpack.c.b16 %v4625, %v4624
      %v4656 = vpack.c.b16 %v4627, %v4626
      %v4657 = vpack.c.b16 %v4629, %v4628
      %v4658 = vpack.c.b16 %v4631, %v4630
      %v4659 = vpack.c.b16 %v4633, %v4632
      %v4660 = vpack.c.b16 %v4635, %v4634
      %v4661 = vpack.c.b16 %v4637, %v4636
      %v4662 = vpack.c.b16 %v4639, %v4638
      %v4663 = vpack.c.b16 %v4641, %v4640
      %v4664 = vpack.c.b16 %v4643, %v4642
      %v4665 = vpack.c.b16 %v4645, %v4644
      %v4666 = vpack.c.b16 %v4647, %v4646
      %v4667 = vpack.c.b16 %v4649, %v4648
      %v4668 = vpack.c.b16 %v4651, %v4650
      %v4669 = vpack.c.b16 %v4653, %v4652
      %4670 = vrot.lane.b32.xlu0 %v4654, 8
      %v4671 = vpop.permute.xlu0 %4670
      %4672 = vrot.lane.b32.xlu0 %v4655, 8
      %v4673 = vpop.permute.xlu0 %4672
      %4674 = vrot.lane.b32.xlu0 %v4656, 8
      %v4675 = vpop.permute.xlu0 %4674
      %4676 = vrot.lane.b32.xlu0 %v4657, 8
      %v4677 = vpop.permute.xlu0 %4676
      %4678 = vrot.lane.b32.xlu0 %v4658, 8
      %v4679 = vpop.permute.xlu0 %4678
      %4680 = vrot.lane.b32.xlu0 %v4659, 8
      %v4681 = vpop.permute.xlu0 %4680
      %4682 = vrot.lane.b32.xlu0 %v4660, 8
      %v4683 = vpop.permute.xlu0 %4682
      %4684 = vrot.lane.b32.xlu0 %v4661, 8
      %v4685 = vpop.permute.xlu0 %4684
      %4686 = vrot.lane.b32.xlu0 %v4662, 8
      %v4687 = vpop.permute.xlu0 %4686
      %4688 = vrot.lane.b32.xlu0 %v4663, 8
      %v4689 = vpop.permute.xlu0 %4688
      %4690 = vrot.lane.b32.xlu0 %v4664, 8
      %v4691 = vpop.permute.xlu0 %4690
      %4692 = vrot.lane.b32.xlu0 %v4665, 8
      %v4693 = vpop.permute.xlu0 %4692
      %4694 = vrot.lane.b32.xlu0 %v4666, 8
      %v4695 = vpop.permute.xlu0 %4694
      %4696 = vrot.lane.b32.xlu0 %v4667, 8
      %v4697 = vpop.permute.xlu0 %4696
      %4698 = vrot.lane.b32.xlu0 %v4668, 8
      %v4699 = vpop.permute.xlu0 %4698
      %4700 = vrot.lane.b32.xlu0 %v4669, 8
      %v4701 = vpop.permute.xlu0 %4700
      %4718 = vst.msk [vmem:[#allocation3] sm:$0xff] %vm2227, %v4671
      %4719 = vst.msk [vmem:[#allocation3 + $0x8] sm:$0xff] %vm2227, %v4673
      %4720 = vst.msk [vmem:[#allocation3 + $0x10] sm:$0xff] %vm2227, %v4675
      %4721 = vst.msk [vmem:[#allocation3 + $0x18] sm:$0xff] %vm2227, %v4677
      %4722 = vst.msk [vmem:[#allocation3 + $0x20] sm:$0xff] %vm2227, %v4679
      %4723 = vst.msk [vmem:[#allocation3 + $0x28] sm:$0xff] %vm2227, %v4681
      %4724 = vst.msk [vmem:[#allocation3 + $0x30] sm:$0xff] %vm2227, %v4683
      %4725 = vst.msk [vmem:[#allocation3 + $0x38] sm:$0xff] %vm2227, %v4685
      %4726 = vst.msk [vmem:[#allocation3 + $0x40] sm:$0xff] %vm2227, %v4687
      %4727 = vst.msk [vmem:[#allocation3 + $0x48] sm:$0xff] %vm2227, %v4689
      %4728 = vst.msk [vmem:[#allocation3 + $0x50] sm:$0xff] %vm2227, %v4691
      %4729 = vst.msk [vmem:[#allocation3 + $0x58] sm:$0xff] %vm2227, %v4693
      %4730 = vst.msk [vmem:[#allocation3 + $0x60] sm:$0xff] %vm2227, %v4695
      %4731 = vst.msk [vmem:[#allocation3 + $0x68] sm:$0xff] %vm2227, %v4697
      %4732 = vst.msk [vmem:[#allocation3 + $0x70] sm:$0xff] %vm2227, %v4699
      %4733 = vst.msk [vmem:[#allocation3 + $0x78] sm:$0xff] %vm2227, %v4701
      %v4734 = vld [vmem:[#allocation3] sm:$0xff]
      %v4735 = vld [vmem:[#allocation3 + $0x8] sm:$0xff]
      %v4736 = vld [vmem:[#allocation3 + $0x10] sm:$0xff]
      %v4737 = vld [vmem:[#allocation3 + $0x18] sm:$0xff]
      %v4738 = vld [vmem:[#allocation3 + $0x20] sm:$0xff]
      %v4739 = vld [vmem:[#allocation3 + $0x28] sm:$0xff]
      %v4740 = vld [vmem:[#allocation3 + $0x30] sm:$0xff]
      %v4741 = vld [vmem:[#allocation3 + $0x38] sm:$0xff]
      %v4742 = vld [vmem:[#allocation3 + $0x40] sm:$0xff]
      %v4743 = vld [vmem:[#allocation3 + $0x48] sm:$0xff]
      %v4744 = vld [vmem:[#allocation3 + $0x50] sm:$0xff]
      %v4745 = vld [vmem:[#allocation3 + $0x58] sm:$0xff]
      %v4746 = vld [vmem:[#allocation3 + $0x60] sm:$0xff]
      %v4747 = vld [vmem:[#allocation3 + $0x68] sm:$0xff]
      %v4748 = vld [vmem:[#allocation3 + $0x70] sm:$0xff]
      %v4749 = vld [vmem:[#allocation3 + $0x78] sm:$0xff]
      %s4750 = scalar_lea.vmem %s3, 16
      %v4751 = vld [vmem:[%s4750] sm:$0xf]
      %v4752 = vld [vmem:[%s4750 + $0x4] sm:$0x3]
      %v4755 = vunpack.c.l.b16 %v4751
      %v4756 = vunpack.c.l.b16 %v4752
      %v4757 = vpack.c.b16 %v4756, %v4755
      %v4759 = vsel %vm3294, %v4734, 0
      %v4762 = vsel %vm3294, %v4735, 0
      %v4765 = vsel %vm3294, %v4736, 0
      %v4768 = vsel %vm3294, %v4737, 0
      %v4771 = vsel %vm3294, %v4738, 0
      %v4774 = vsel %vm3294, %v4739, 0
      %v4777 = vsel %vm3294, %v4740, 0
      %v4780 = vsel %vm3294, %v4741, 0
      %v4783 = vsel %vm3294, %v4742, 0
      %v4786 = vsel %vm3294, %v4743, 0
      %v4789 = vsel %vm3294, %v4744, 0
      %v4792 = vsel %vm3294, %v4745, 0
      %v4795 = vsel %vm3294, %v4746, 0
      %v4798 = vsel %vm3294, %v4747, 0
      %v4801 = vsel %vm3294, %v4748, 0
      %v4804 = vsel %vm3294, %v4749, 0
      %v4807 = vsel %vm3343, %v4757, 0
      %4809 = vmatprep.subr.bf16.mxu0 0
      %4810 = vmatpush1.bf16.msra.mxu0 %v4807
      %4811 = vmatprep.subr.bf16.mxu0 0
      %4812 = vmatpush1.bf16.msra.mxu0 0
      %4813 = vmatprep.subr.bf16.mxu0 0
      %4814 = vmatpush1.bf16.msra.mxu0 0
      %4815 = vmatprep.subr.bf16.mxu0 0
      %4816 = vmatpush1.bf16.msra.mxu0 0
      %4817 = vmatprep.subr.bf16.mxu0 0
      %4818 = vmatpush1.bf16.msra.mxu0 0
      %4819 = vmatprep.subr.bf16.mxu0 0
      %4820 = vmatpush1.bf16.msra.mxu0 0
      %4821 = vmatprep.subr.bf16.mxu0 0
      %4822 = vmatpush1.bf16.msra.mxu0 0
      %4823 = vmatprep.subr.bf16.mxu0 0
      %4824 = vmatpush1.bf16.msra.mxu0 0
      %4825 = vmatprep.subr.bf16.mxu0 0
      %4826 = vmatpush1.bf16.msra.mxu0 0
      %4827 = vmatprep.subr.bf16.mxu0 0
      %4828 = vmatpush1.bf16.msra.mxu0 0
      %4829 = vmatprep.subr.bf16.mxu0 0
      %4830 = vmatpush1.bf16.msra.mxu0 0
      %4831 = vmatprep.subr.bf16.mxu0 0
      %4832 = vmatpush1.bf16.msra.mxu0 0
      %4833 = vmatprep.subr.bf16.mxu0 0
      %4834 = vmatpush1.bf16.msra.mxu0 0
      %4835 = vmatprep.subr.bf16.mxu0 0
      %4836 = vmatpush1.bf16.msra.mxu0 0
      %4837 = vmatprep.subr.bf16.mxu0 0
      %4838 = vmatpush1.bf16.msra.mxu0 0
      %4839 = vmatprep.subr.bf16.mxu0 0
      %4840 = vmatpush1.bf16.msra.mxu0 0
      %4841 = vmatprep.mubr.bf16.mxu0 0
      %4842 = vmatmul.mubr.bf16.gmra.mrb[0].mxu0 %v4759
      %v4843 = vpop.f32.mrb[0].mxu0
      %v4844 = vadd.f32 0.0, %v4843
      %v4845 = vpop.f32.mrb[0].mxu0
      %v4846 = vpop.f32.mrb[0].mxu0
      %v4847 = vadd.f32 0.0, %v4846
      %v4848 = vpop.f32.mrb[0].mxu0
      %4849 = vmatprep.mubr.bf16.mxu0 0
      %4850 = vmatmul.mubr.bf16.gmra.mrb[0].mxu0 %v4762
      %v4851 = vpop.f32.mrb[0].mxu0
      %v4852 = vadd.f32 0.0, %v4851
      %v4853 = vpop.f32.mrb[0].mxu0
      %v4854 = vpop.f32.mrb[0].mxu0
      %v4855 = vadd.f32 0.0, %v4854
      %v4856 = vpop.f32.mrb[0].mxu0
      %4857 = vmatprep.mubr.bf16.mxu0 0
      %4858 = vmatmul.mubr.bf16.gmra.mrb[0].mxu0 %v4765
      %v4859 = vpop.f32.mrb[0].mxu0
      %v4860 = vadd.f32 0.0, %v4859
      %v4861 = vpop.f32.mrb[0].mxu0
      %v4862 = vpop.f32.mrb[0].mxu0
      %v4863 = vadd.f32 0.0, %v4862
      %v4864 = vpop.f32.mrb[0].mxu0
      %4865 = vmatprep.mubr.bf16.mxu0 0
      %4866 = vmatmul.mubr.bf16.gmra.mrb[0].mxu0 %v4768
      %v4867 = vpop.f32.mrb[0].mxu0
      %v4868 = vadd.f32 0.0, %v4867
      %v4869 = vpop.f32.mrb[0].mxu0
      %v4870 = vpop.f32.mrb[0].mxu0
      %v4871 = vadd.f32 0.0, %v4870
      %v4872 = vpop.f32.mrb[0].mxu0
      %4873 = vmatprep.mubr.bf16.mxu0 0
      %4874 = vmatmul.mubr.bf16.gmra.mrb[0].mxu0 %v4771
      %v4875 = vpop.f32.mrb[0].mxu0
      %v4876 = vadd.f32 0.0, %v4875
      %v4877 = vpop.f32.mrb[0].mxu0
      %v4878 = vpop.f32.mrb[0].mxu0
      %v4879 = vadd.f32 0.0, %v4878
      %v4880 = vpop.f32.mrb[0].mxu0
      %4881 = vmatprep.mubr.bf16.mxu0 0
      %4882 = vmatmul.mubr.bf16.gmra.mrb[0].mxu0 %v4774
      %v4883 = vpop.f32.mrb[0].mxu0
      %v4884 = vadd.f32 0.0, %v4883
      %v4885 = vpop.f32.mrb[0].mxu0
      %v4886 = vpop.f32.mrb[0].mxu0
      %v4887 = vadd.f32 0.0, %v4886
      %v4888 = vpop.f32.mrb[0].mxu0
      %4889 = vmatprep.mubr.bf16.mxu0 0
      %4890 = vmatmul.mubr.bf16.gmra.mrb[0].mxu0 %v4777
      %v4891 = vpop.f32.mrb[0].mxu0
      %v4892 = vadd.f32 0.0, %v4891
      %v4893 = vpop.f32.mrb[0].mxu0
      %v4894 = vpop.f32.mrb[0].mxu0
      %v4895 = vadd.f32 0.0, %v4894
      %v4896 = vpop.f32.mrb[0].mxu0
      %4897 = vmatprep.mubr.bf16.mxu0 0
      %4898 = vmatmul.mubr.bf16.gmra.mrb[0].mxu0 %v4780
      %v4899 = vpop.f32.mrb[0].mxu0
      %v4900 = vadd.f32 0.0, %v4899
      %v4901 = vpop.f32.mrb[0].mxu0
      %v4902 = vpop.f32.mrb[0].mxu0
      %v4903 = vadd.f32 0.0, %v4902
      %v4904 = vpop.f32.mrb[0].mxu0
      %4905 = vmatprep.mubr.bf16.mxu0 0
      %4906 = vmatmul.mubr.bf16.gmra.mrb[0].mxu0 %v4783
      %v4907 = vpop.f32.mrb[0].mxu0
      %v4908 = vadd.f32 0.0, %v4907
      %v4909 = vpop.f32.mrb[0].mxu0
      %v4910 = vpop.f32.mrb[0].mxu0
      %v4911 = vadd.f32 0.0, %v4910
      %v4912 = vpop.f32.mrb[0].mxu0
      %4913 = vmatprep.mubr.bf16.mxu0 0
      %4914 = vmatmul.mubr.bf16.gmra.mrb[0].mxu0 %v4786
      %v4915 = vpop.f32.mrb[0].mxu0
      %v4916 = vadd.f32 0.0, %v4915
      %v4917 = vpop.f32.mrb[0].mxu0
      %v4918 = vpop.f32.mrb[0].mxu0
      %v4919 = vadd.f32 0.0, %v4918
      %v4920 = vpop.f32.mrb[0].mxu0
      %4921 = vmatprep.mubr.bf16.mxu0 0
      %4922 = vmatmul.mubr.bf16.gmra.mrb[0].mxu0 %v4789
      %v4923 = vpop.f32.mrb[0].mxu0
      %v4924 = vadd.f32 0.0, %v4923
      %v4925 = vpop.f32.mrb[0].mxu0
      %v4926 = vpop.f32.mrb[0].mxu0
      %v4927 = vadd.f32 0.0, %v4926
      %v4928 = vpop.f32.mrb[0].mxu0
      %4929 = vmatprep.mubr.bf16.mxu0 0
      %4930 = vmatmul.mubr.bf16.gmra.mrb[0].mxu0 %v4792
      %v4931 = vpop.f32.mrb[0].mxu0
      %v4932 = vadd.f32 0.0, %v4931
      %v4933 = vpop.f32.mrb[0].mxu0
      %v4934 = vpop.f32.mrb[0].mxu0
      %v4935 = vadd.f32 0.0, %v4934
      %v4936 = vpop.f32.mrb[0].mxu0
      %4937 = vmatprep.mubr.bf16.mxu0 0
      %4938 = vmatmul.mubr.bf16.gmra.mrb[0].mxu0 %v4795
      %v4939 = vpop.f32.mrb[0].mxu0
      %v4940 = vadd.f32 0.0, %v4939
      %v4941 = vpop.f32.mrb[0].mxu0
      %v4942 = vpop.f32.mrb[0].mxu0
      %v4943 = vadd.f32 0.0, %v4942
      %v4944 = vpop.f32.mrb[0].mxu0
      %4945 = vmatprep.mubr.bf16.mxu0 0
      %4946 = vmatmul.mubr.bf16.gmra.mrb[0].mxu0 %v4798
      %v4947 = vpop.f32.mrb[0].mxu0
      %v4948 = vadd.f32 0.0, %v4947
      %v4949 = vpop.f32.mrb[0].mxu0
      %v4950 = vpop.f32.mrb[0].mxu0
      %v4951 = vadd.f32 0.0, %v4950
      %v4952 = vpop.f32.mrb[0].mxu0
      %4953 = vmatprep.mubr.bf16.mxu0 0
      %4954 = vmatmul.mubr.bf16.gmra.mrb[0].mxu0 %v4801
      %v4955 = vpop.f32.mrb[0].mxu0
      %v4956 = vadd.f32 0.0, %v4955
      %v4957 = vpop.f32.mrb[0].mxu0
      %v4958 = vpop.f32.mrb[0].mxu0
      %v4959 = vadd.f32 0.0, %v4958
      %v4960 = vpop.f32.mrb[0].mxu0
      %4961 = vmatprep.mubr.bf16.mxu0 0
      %4962 = vmatmul.mubr.bf16.gmra.mrb[0].mxu0 %v4804
      %v4963 = vpop.f32.mrb[0].mxu0
      %v4964 = vadd.f32 0.0, %v4963
      %v4965 = vpop.f32.mrb[0].mxu0
      %v4966 = vpop.f32.mrb[0].mxu0
      %v4967 = vadd.f32 0.0, %v4966
      %v4968 = vpop.f32.mrb[0].mxu0
      %4969 = vdwg.mxu0
      %v4970 = vadd.f32 %v3599, %v4844
      %v4971 = vadd.f32 %v3602, %v4847
      %v4972 = vadd.f32 %v3607, %v4852
      %v4973 = vadd.f32 %v3610, %v4855
      %v4974 = vadd.f32 %v3615, %v4860
      %v4975 = vadd.f32 %v3618, %v4863
      %v4976 = vadd.f32 %v3623, %v4868
      %v4977 = vadd.f32 %v3626, %v4871
      %v4978 = vadd.f32 %v3631, %v4876
      %v4979 = vadd.f32 %v3634, %v4879
      %v4980 = vadd.f32 %v3639, %v4884
      %v4981 = vadd.f32 %v3642, %v4887
      %v4982 = vadd.f32 %v3647, %v4892
      %v4983 = vadd.f32 %v3650, %v4895
      %v4984 = vadd.f32 %v3655, %v4900
      %v4985 = vadd.f32 %v3658, %v4903
      %v4986 = vadd.f32 %v3663, %v4908
      %v4987 = vadd.f32 %v3666, %v4911
      %v4988 = vadd.f32 %v3671, %v4916
      %v4989 = vadd.f32 %v3674, %v4919
      %v4990 = vadd.f32 %v3679, %v4924
      %v4991 = vadd.f32 %v3682, %v4927
      %v4992 = vadd.f32 %v3687, %v4932
      %v4993 = vadd.f32 %v3690, %v4935
      %v4994 = vadd.f32 %v3695, %v4940
      %v4995 = vadd.f32 %v3698, %v4943
      %v4996 = vadd.f32 %v3703, %v4948
      %v4997 = vadd.f32 %v3706, %v4951
      %v4998 = vadd.f32 %v3711, %v4956
      %v4999 = vadd.f32 %v3714, %v4959
      %v5000 = vadd.f32 %v3719, %v4964
      %v5001 = vadd.f32 %v3722, %v4967
      %v5002 = vsel %vm1355, %v4970, 0.0
      %v5003 = vsel %vm1355, %v4971, 0.0
      %v5004 = vadd.f32 %v5002, %v5003
      %v5005 = vsel %vm1355, %v4972, 0.0
      %v5006 = vadd.f32 %v5004, %v5005
      %v5007 = vsel %vm1355, %v4973, 0.0
      %v5008 = vadd.f32 %v5006, %v5007
      %v5009 = vsel %vm1355, %v4974, 0.0
      %v5010 = vadd.f32 %v5008, %v5009
      %v5011 = vsel %vm1355, %v4975, 0.0
      %v5012 = vadd.f32 %v5010, %v5011
      %v5013 = vsel %vm1355, %v4976, 0.0
      %v5014 = vadd.f32 %v5012, %v5013
      %v5015 = vsel %vm1355, %v4977, 0.0
      %v5016 = vadd.f32 %v5014, %v5015
      %v5017 = vsel %vm1355, %v4978, 0.0
      %v5018 = vadd.f32 %v5016, %v5017
      %v5019 = vsel %vm1355, %v4979, 0.0
      %v5020 = vadd.f32 %v5018, %v5019
      %v5021 = vsel %vm1355, %v4980, 0.0
      %v5022 = vadd.f32 %v5020, %v5021
      %v5023 = vsel %vm1355, %v4981, 0.0
      %v5024 = vadd.f32 %v5022, %v5023
      %v5025 = vsel %vm1355, %v4982, 0.0
      %v5026 = vadd.f32 %v5024, %v5025
      %v5027 = vsel %vm1355, %v4983, 0.0
      %v5028 = vadd.f32 %v5026, %v5027
      %v5029 = vsel %vm1355, %v4984, 0.0
      %v5030 = vadd.f32 %v5028, %v5029
      %v5031 = vsel %vm1355, %v4985, 0.0
      %v5032 = vadd.f32 %v5030, %v5031
      %v5033 = vsel %vm1355, %v4986, 0.0
      %v5034 = vadd.f32 %v5032, %v5033
      %v5035 = vsel %vm1355, %v4987, 0.0
      %v5036 = vadd.f32 %v5034, %v5035
      %v5037 = vsel %vm1355, %v4988, 0.0
      %v5038 = vadd.f32 %v5036, %v5037
      %v5039 = vsel %vm1355, %v4989, 0.0
      %v5040 = vadd.f32 %v5038, %v5039
      %v5041 = vsel %vm1355, %v4990, 0.0
      %v5042 = vadd.f32 %v5040, %v5041
      %v5043 = vsel %vm1355, %v4991, 0.0
      %v5044 = vadd.f32 %v5042, %v5043
      %v5045 = vsel %vm1355, %v4992, 0.0
      %v5046 = vadd.f32 %v5044, %v5045
      %v5047 = vsel %vm1355, %v4993, 0.0
      %v5048 = vadd.f32 %v5046, %v5047
      %v5049 = vsel %vm1355, %v4994, 0.0
      %v5050 = vadd.f32 %v5048, %v5049
      %v5051 = vsel %vm1355, %v4995, 0.0
      %v5052 = vadd.f32 %v5050, %v5051
      %v5053 = vsel %vm1355, %v4996, 0.0
      %v5054 = vadd.f32 %v5052, %v5053
      %v5055 = vsel %vm1355, %v4997, 0.0
      %v5056 = vadd.f32 %v5054, %v5055
      %v5057 = vsel %vm1355, %v4998, 0.0
      %v5058 = vadd.f32 %v5056, %v5057
      %v5059 = vsel %vm1355, %v4999, 0.0
      %v5060 = vadd.f32 %v5058, %v5059
      %v5061 = vsel %vm1355, %v5000, 0.0
      %v5062 = vadd.f32 %v5060, %v5061
      %v5063 = vsel %vm1355, %v5001, 0.0
      %v5064 = vadd.f32 %v5062, %v5063
      %v5065 = vrot.slane %v5064, 4
      %v5066 = vadd.f32 %v5064, %v5065
      %v5067 = vrot.slane %v5066, 2
      %v5068 = vadd.f32 %v5066, %v5067
      %v5069 = vrot.slane %v5068, 1
      %v5070 = vadd.f32 %v5068, %v5069
      %5071 = vst.msk [vmem:[%s265] sm:$0x1] %vm575, %v5070
      %v5072 = vmul.f32 %v4970, %v4970
      %v5073 = vmul.f32 %v4971, %v4971
      %v5074 = vmul.f32 %v4972, %v4972
      %v5075 = vmul.f32 %v4973, %v4973
      %v5076 = vmul.f32 %v4974, %v4974
      %v5077 = vmul.f32 %v4975, %v4975
      %v5078 = vmul.f32 %v4976, %v4976
      %v5079 = vmul.f32 %v4977, %v4977
      %v5080 = vmul.f32 %v4978, %v4978
      %v5081 = vmul.f32 %v4979, %v4979
      %v5082 = vmul.f32 %v4980, %v4980
      %v5083 = vmul.f32 %v4981, %v4981
      %v5084 = vmul.f32 %v4982, %v4982
      %v5085 = vmul.f32 %v4983, %v4983
      %v5086 = vmul.f32 %v4984, %v4984
      %v5087 = vmul.f32 %v4985, %v4985
      %v5088 = vmul.f32 %v4986, %v4986
      %v5089 = vmul.f32 %v4987, %v4987
      %v5090 = vmul.f32 %v4988, %v4988
      %v5091 = vmul.f32 %v4989, %v4989
      %v5092 = vmul.f32 %v4990, %v4990
      %v5093 = vmul.f32 %v4991, %v4991
      %v5094 = vmul.f32 %v4992, %v4992
      %v5095 = vmul.f32 %v4993, %v4993
      %v5096 = vmul.f32 %v4994, %v4994
      %v5097 = vmul.f32 %v4995, %v4995
      %v5098 = vmul.f32 %v4996, %v4996
      %v5099 = vmul.f32 %v4997, %v4997
      %v5100 = vmul.f32 %v4998, %v4998
      %v5101 = vmul.f32 %v4999, %v4999
      %v5102 = vmul.f32 %v5000, %v5000
      %v5103 = vmul.f32 %v5001, %v5001
      %v5104 = vsel %vm1355, %v5072, 0.0
      %v5105 = vsel %vm1355, %v5073, 0.0
      %v5106 = vadd.f32 %v5104, %v5105
      %v5107 = vsel %vm1355, %v5074, 0.0
      %v5108 = vadd.f32 %v5106, %v5107
      %v5109 = vsel %vm1355, %v5075, 0.0
      %v5110 = vadd.f32 %v5108, %v5109
      %v5111 = vsel %vm1355, %v5076, 0.0
      %v5112 = vadd.f32 %v5110, %v5111
      %v5113 = vsel %vm1355, %v5077, 0.0
      %v5114 = vadd.f32 %v5112, %v5113
      %v5115 = vsel %vm1355, %v5078, 0.0
      %v5116 = vadd.f32 %v5114, %v5115
      %v5117 = vsel %vm1355, %v5079, 0.0
      %v5118 = vadd.f32 %v5116, %v5117
      %v5119 = vsel %vm1355, %v5080, 0.0
      %v5120 = vadd.f32 %v5118, %v5119
      %v5121 = vsel %vm1355, %v5081, 0.0
      %v5122 = vadd.f32 %v5120, %v5121
      %v5123 = vsel %vm1355, %v5082, 0.0
      %v5124 = vadd.f32 %v5122, %v5123
      %v5125 = vsel %vm1355, %v5083, 0.0
      %v5126 = vadd.f32 %v5124, %v5125
      %v5127 = vsel %vm1355, %v5084, 0.0
      %v5128 = vadd.f32 %v5126, %v5127
      %v5129 = vsel %vm1355, %v5085, 0.0
      %v5130 = vadd.f32 %v5128, %v5129
      %v5131 = vsel %vm1355, %v5086, 0.0
      %v5132 = vadd.f32 %v5130, %v5131
      %v5133 = vsel %vm1355, %v5087, 0.0
      %v5134 = vadd.f32 %v5132, %v5133
      %v5135 = vsel %vm1355, %v5088, 0.0
      %v5136 = vadd.f32 %v5134, %v5135
      %v5137 = vsel %vm1355, %v5089, 0.0
      %v5138 = vadd.f32 %v5136, %v5137
      %v5139 = vsel %vm1355, %v5090, 0.0
      %v5140 = vadd.f32 %v5138, %v5139
      %v5141 = vsel %vm1355, %v5091, 0.0
      %v5142 = vadd.f32 %v5140, %v5141
      %v5143 = vsel %vm1355, %v5092, 0.0
      %v5144 = vadd.f32 %v5142, %v5143
      %v5145 = vsel %vm1355, %v5093, 0.0
      %v5146 = vadd.f32 %v5144, %v5145
      %v5147 = vsel %vm1355, %v5094, 0.0
      %v5148 = vadd.f32 %v5146, %v5147
      %v5149 = vsel %vm1355, %v5095, 0.0
      %v5150 = vadd.f32 %v5148, %v5149
      %v5151 = vsel %vm1355, %v5096, 0.0
      %v5152 = vadd.f32 %v5150, %v5151
      %v5153 = vsel %vm1355, %v5097, 0.0
      %v5154 = vadd.f32 %v5152, %v5153
      %v5155 = vsel %vm1355, %v5098, 0.0
      %v5156 = vadd.f32 %v5154, %v5155
      %v5157 = vsel %vm1355, %v5099, 0.0
      %v5158 = vadd.f32 %v5156, %v5157
      %v5159 = vsel %vm1355, %v5100, 0.0
      %v5160 = vadd.f32 %v5158, %v5159
      %v5161 = vsel %vm1355, %v5101, 0.0
      %v5162 = vadd.f32 %v5160, %v5161
      %v5163 = vsel %vm1355, %v5102, 0.0
      %v5164 = vadd.f32 %v5162, %v5163
      %v5165 = vsel %vm1355, %v5103, 0.0
      %v5166 = vadd.f32 %v5164, %v5165
      %v5167 = vrot.slane %v5166, 4
      %v5168 = vadd.f32 %v5166, %v5167
      %v5169 = vrot.slane %v5168, 2
      %v5170 = vadd.f32 %v5168, %v5169
      %v5171 = vrot.slane %v5170, 1
      %v5172 = vadd.f32 %v5170, %v5171
      %5173 = vst.msk [vmem:[%s268] sm:$0x1] %vm575, %v5172
      %v5174 = vpack.c.bf16 %v4971, %v4970
      %v5175 = vpack.c.bf16 %v4973, %v4972
      %v5176 = vpack.c.bf16 %v4975, %v4974
      %v5177 = vpack.c.bf16 %v4977, %v4976
      %v5178 = vpack.c.bf16 %v4979, %v4978
      %v5179 = vpack.c.bf16 %v4981, %v4980
      %v5180 = vpack.c.bf16 %v4983, %v4982
      %v5181 = vpack.c.bf16 %v4985, %v4984
      %v5182 = vpack.c.bf16 %v4987, %v4986
      %v5183 = vpack.c.bf16 %v4989, %v4988
      %v5184 = vpack.c.bf16 %v4991, %v4990
      %v5185 = vpack.c.bf16 %v4993, %v4992
      %v5186 = vpack.c.bf16 %v4995, %v4994
      %v5187 = vpack.c.bf16 %v4997, %v4996
      %v5188 = vpack.c.bf16 %v4999, %v4998
      %v5189 = vpack.c.bf16 %v5001, %v5000
      %v5206 = vunpack.c.l.b16 %v5174
      %v5207 = vunpack.c.h.b16 %v5174
      %v5208 = vunpack.c.l.b16 %v5175
      %v5209 = vunpack.c.h.b16 %v5175
      %v5210 = vunpack.c.l.b16 %v5176
      %v5211 = vunpack.c.h.b16 %v5176
      %v5212 = vunpack.c.l.b16 %v5177
      %v5213 = vunpack.c.h.b16 %v5177
      %v5214 = vunpack.c.l.b16 %v5178
      %v5215 = vunpack.c.h.b16 %v5178
      %v5216 = vunpack.c.l.b16 %v5179
      %v5217 = vunpack.c.h.b16 %v5179
      %v5218 = vunpack.c.l.b16 %v5180
      %v5219 = vunpack.c.h.b16 %v5180
      %v5220 = vunpack.c.l.b16 %v5181
      %v5221 = vunpack.c.h.b16 %v5181
      %v5222 = vunpack.c.l.b16 %v5182
      %v5223 = vunpack.c.h.b16 %v5182
      %v5224 = vunpack.c.l.b16 %v5183
      %v5225 = vunpack.c.h.b16 %v5183
      %v5226 = vunpack.c.l.b16 %v5184
      %v5227 = vunpack.c.h.b16 %v5184
      %v5228 = vunpack.c.l.b16 %v5185
      %v5229 = vunpack.c.h.b16 %v5185
      %v5230 = vunpack.c.l.b16 %v5186
      %v5231 = vunpack.c.h.b16 %v5186
      %v5232 = vunpack.c.l.b16 %v5187
      %v5233 = vunpack.c.h.b16 %v5187
      %v5234 = vunpack.c.l.b16 %v5188
      %v5235 = vunpack.c.h.b16 %v5188
      %v5236 = vunpack.c.l.b16 %v5189
      %v5237 = vunpack.c.h.b16 %v5189
      %v5238 = vpack.c.b16 %v5206, %v5206
      %v5239 = vpack.c.b16 %v5207, %v5207
      %v5240 = vpack.c.b16 %v5208, %v5208
      %v5241 = vpack.c.b16 %v5209, %v5209
      %v5242 = vpack.c.b16 %v5210, %v5210
      %v5243 = vpack.c.b16 %v5211, %v5211
      %v5244 = vpack.c.b16 %v5212, %v5212
      %v5245 = vpack.c.b16 %v5213, %v5213
      %v5246 = vpack.c.b16 %v5214, %v5214
      %v5247 = vpack.c.b16 %v5215, %v5215
      %v5248 = vpack.c.b16 %v5216, %v5216
      %v5249 = vpack.c.b16 %v5217, %v5217
      %v5250 = vpack.c.b16 %v5218, %v5218
      %v5251 = vpack.c.b16 %v5219, %v5219
      %v5252 = vpack.c.b16 %v5220, %v5220
      %v5253 = vpack.c.b16 %v5221, %v5221
      %v5254 = vpack.c.b16 %v5222, %v5222
      %v5255 = vpack.c.b16 %v5223, %v5223
      %v5256 = vpack.c.b16 %v5224, %v5224
      %v5257 = vpack.c.b16 %v5225, %v5225
      %v5258 = vpack.c.b16 %v5226, %v5226
      %v5259 = vpack.c.b16 %v5227, %v5227
      %v5260 = vpack.c.b16 %v5228, %v5228
      %v5261 = vpack.c.b16 %v5229, %v5229
      %v5262 = vpack.c.b16 %v5230, %v5230
      %v5263 = vpack.c.b16 %v5231, %v5231
      %v5264 = vpack.c.b16 %v5232, %v5232
      %v5265 = vpack.c.b16 %v5233, %v5233
      %v5266 = vpack.c.b16 %v5234, %v5234
      %v5267 = vpack.c.b16 %v5235, %v5235
      %v5268 = vpack.c.b16 %v5236, %v5236
      %v5269 = vpack.c.b16 %v5237, %v5237
      %5302 = vst.msk [vmem:[%s262] sm:$0xf] %vm572, %v5238
      %5303 = vst.msk [vmem:[%s262 + $0x4] sm:$0xf] %vm572, %v5239
      %5304 = vst.msk [vmem:[%s262 + $0x8] sm:$0xf] %vm572, %v5240
      %5305 = vst.msk [vmem:[%s262 + $0xc] sm:$0xf] %vm572, %v5241
      %5306 = vst.msk [vmem:[%s262 + $0x10] sm:$0xf] %vm572, %v5242
      %5307 = vst.msk [vmem:[%s262 + $0x14] sm:$0xf] %vm572, %v5243
      %5308 = vst.msk [vmem:[%s262 + $0x18] sm:$0xf] %vm572, %v5244
      %5309 = vst.msk [vmem:[%s262 + $0x1c] sm:$0xf] %vm572, %v5245
      %5310 = vst.msk [vmem:[%s262 + $0x20] sm:$0xf] %vm572, %v5246
      %5311 = vst.msk [vmem:[%s262 + $0x24] sm:$0xf] %vm572, %v5247
      %5312 = vst.msk [vmem:[%s262 + $0x28] sm:$0xf] %vm572, %v5248
      %5313 = vst.msk [vmem:[%s262 + $0x2c] sm:$0xf] %vm572, %v5249
      %5314 = vst.msk [vmem:[%s262 + $0x30] sm:$0xf] %vm572, %v5250
      %5315 = vst.msk [vmem:[%s262 + $0x34] sm:$0xf] %vm572, %v5251
      %5316 = vst.msk [vmem:[%s262 + $0x38] sm:$0xf] %vm572, %v5252
      %5317 = vst.msk [vmem:[%s262 + $0x3c] sm:$0xf] %vm572, %v5253
      %5318 = vst.msk [vmem:[%s262 + $0x40] sm:$0xf] %vm572, %v5254
      %5319 = vst.msk [vmem:[%s262 + $0x44] sm:$0xf] %vm572, %v5255
      %5320 = vst.msk [vmem:[%s262 + $0x48] sm:$0xf] %vm572, %v5256
      %5321 = vst.msk [vmem:[%s262 + $0x4c] sm:$0xf] %vm572, %v5257
      %5322 = vst.msk [vmem:[%s262 + $0x50] sm:$0xf] %vm572, %v5258
      %5323 = vst.msk [vmem:[%s262 + $0x54] sm:$0xf] %vm572, %v5259
      %5324 = vst.msk [vmem:[%s262 + $0x58] sm:$0xf] %vm572, %v5260
      %5325 = vst.msk [vmem:[%s262 + $0x5c] sm:$0xf] %vm572, %v5261
      %5326 = vst.msk [vmem:[%s262 + $0x60] sm:$0xf] %vm572, %v5262
      %5327 = vst.msk [vmem:[%s262 + $0x64] sm:$0xf] %vm572, %v5263
      %5328 = vst.msk [vmem:[%s262 + $0x68] sm:$0xf] %vm572, %v5264
      %5329 = vst.msk [vmem:[%s262 + $0x6c] sm:$0xf] %vm572, %v5265
      %5330 = vst.msk [vmem:[%s262 + $0x70] sm:$0xf] %vm572, %v5266
      %5331 = vst.msk [vmem:[%s262 + $0x74] sm:$0xf] %vm572, %v5267
      %5332 = vst.msk [vmem:[%s262 + $0x78] sm:$0xf] %vm572, %v5268
      %5333 = vst.msk [vmem:[%s262 + $0x7c] sm:$0xf] %vm572, %v5269
      %p5334 = scmp.lt.s32.totalorder %s18, 1
      %s5335 = scalar_select %p5334, %s18, 1
      %s5336 = smul.addr %s5335, 32
      %s5337 = smul.addr %s5336, 4
      %s5338 = scalar_lea.vmem %s4, %s5337
      %p5339 = scmp.lt.s32.totalorder %s18, 1
      %s5340 = scalar_select %p5339, %s18, 1
      %s5341 = scalar_lea.vmem %s5, %s5340
      %p5342 = scmp.lt.s32.totalorder %s18, 1
      %s5343 = scalar_select %p5342, %s18, 1
      %s5344 = scalar_lea.vmem %s6, %s5343
      // Predicated region
      $region37: #{residual_block_2d.4} parent=35 // pred_check
        %p5345 = pneg %p125
      $region38: #{residual_block_2d.4} parent=35 // pred_check_branch
        %5347 = sbr.rel (%p5345) target = $region40
      $region39: #{residual_block_2d.4} parent=35 // pred_region
        _
      $region40: #{residual_block_2d.4} parent=35 // pred_fallthru
        _
      // Predicated region
      $region41: #{residual_block_2d.4} parent=35 // pred_check
        %p5348 = pneg %p151
      $region42: #{residual_block_2d.4} parent=35 // pred_check_branch
        %5350 = sbr.rel (%p5348) target = $region44
      $region43: #{residual_block_2d.4} parent=35 // pred_region
        _
      $region44: #{residual_block_2d.4} parent=35 // pred_fallthru
        _
      // Predicated region
      $region45: #{residual_block_2d.4} parent=35 // pred_check
        %p5351 = pneg %p177
      $region46: #{residual_block_2d.4} parent=35 // pred_check_branch
        %5353 = sbr.rel (%p5351) target = $region48
      $region47: #{residual_block_2d.4} parent=35 // pred_region
        _
      $region48: #{residual_block_2d.4} parent=35 // pred_fallthru
        _
    $region36: #{residual_block_2d.4} parent=5 // pred_fallthru
      _
    %p5354 = scmp.le.s32.totalorder 2, %s13
    // Predicated region
    $region49: #{residual_block_2d.4} parent=5 // pred_check
      %p5355 = pneg %p5354
    $region50: #{residual_block_2d.4} parent=5 // pred_check_branch
      %5357 = sbr.rel (%p5355) target = $region52
    $region51: #{residual_block_2d.4} parent=5 // pred_region
      %s5358 = ssub.s32 %s13, 2
      // Predicated region
      $region53: #{residual_block_2d.4} parent=51 // pred_check
        %p5359 = pneg %p131
      $region54: #{residual_block_2d.4} parent=51 // pred_check_branch
        %5361 = sbr.rel (%p5359) target = $region56
      $region55: #{residual_block_2d.4} parent=51 // pred_region
        %p5362 = scmp.lt.s32.totalorder %s19, 1
        %s5363 = scalar_select %p5362, %s19, 1
        %s5364 = smul.addr %s5363, 32
        %s5365 = smul.addr %s5364, 4
        %s5366 = scalar_lea.vmem %s4, %s5365
      $region56: #{residual_block_2d.4} parent=51 // pred_fallthru
        _
      // Predicated region
      $region57: #{residual_block_2d.4} parent=51 // pred_check
        %p5367 = pneg %p157
      $region58: #{residual_block_2d.4} parent=51 // pred_check_branch
        %5369 = sbr.rel (%p5367) target = $region60
      $region59: #{residual_block_2d.4} parent=51 // pred_region
        %p5370 = scmp.lt.s32.totalorder %s19, 1
        %s5371 = scalar_select %p5370, %s19, 1
        %s5372 = scalar_lea.vmem %s5, %s5371
      $region60: #{residual_block_2d.4} parent=51 // pred_fallthru
        _
      // Predicated region
      $region61: #{residual_block_2d.4} parent=51 // pred_check
        %p5373 = pneg %p183
      $region62: #{residual_block_2d.4} parent=51 // pred_check_branch
        %5375 = sbr.rel (%p5373) target = $region64
      $region63: #{residual_block_2d.4} parent=51 // pred_region
        %p5376 = scmp.lt.s32.totalorder %s19, 1
        %s5377 = scalar_select %p5376, %s19, 1
        %s5378 = scalar_lea.vmem %s6, %s5377
      $region64: #{residual_block_2d.4} parent=51 // pred_fallthru
        _
    $region52: #{residual_block_2d.4} parent=5 // pred_fallthru
      _
  $region6: #{residual_block_2d.4} parent=0 // loop_footer
    %s17 = sadd.s32 1, %s13
  $region7: #{residual_block_2d.4} parent=0 // loop_footer_branch
    %12 = sbr.rel target = $region3
  $region8: #{residual_block_2d.4} parent=0 // loop_exit
    _

// kernel: residual_block_2d.3
$region0: #{residual_block_2d.3}
  #allocation0 [shape = 'u32[]', space=smem, size = 0x4, offset = 0x4, fixed_abs, tag = 'smem constant byte address 0x4 - core index']
  #allocation1 [shape = 'u32[144,128]{1,0:T(1,128)}', space=vmem, size = 0x12000, scoped, tag = 'internal scratch']
  #allocation2 [shape = 'bf16[18,18,4]{2,1,0:T(8,128)(2,1)}', space=vmem, size = 0x1b000, scoped, tag = 'scratch operand']
  #allocation3 [shape = 'bf16[256,12]{1,0:T(16,128)(2,1)}', space=vmem, size = 0x10000, scoped, tag = 'scratch operand']
  %s0 = inlined_call_operand.vmem [shape: bf16[2,16,16,4], index: 0, kind: input, shape index: {}]
  %s1 = inlined_call_operand.vmem [shape: bf16[3,12,4], index: 1, kind: input, shape index: {}]
  %s2 = inlined_call_operand.vmem [shape: bf16[2,16,16,4], index: 2, kind: output, shape index: {0}]
  %s3 = inlined_call_operand.vmem [shape: f32[2,1,4], index: 3, kind: output, shape index: {1}]
  %s4 = inlined_call_operand.vmem [shape: f32[2,1,4], index: 4, kind: output, shape index: {2}]
  %5 = xla_tuple %s2, %s3, %s4
  %s6 = sld [smem:[#allocation0]]
  $region57: #{residual_block_2d.3} parent=0
    _
  %s8 = ssub.s32 1, %s6
  %s9 = scalar_select 0, %s8, %s6
  loop: start=0, step=1, limit=4
  $region2: #{residual_block_2d.3} parent=0 // loop_pre_header
    _
  $region3: #{residual_block_2d.3} parent=0 // loop_header
    %s11 = sphi 0, %s15
    %p12 = scmp.ge.s32.totalorder %s11, 4
    %s21 = sphi 0, %s23
    %s24 = sphi 0, %s21
    %s25 = sphi 0, %s24
    %s41 = sphi 0, %s25
    %s45 = sphi 0, %s45
    %s47 = sphi 0, %s45
    %s48 = sphi 0, %s47
    %s62 = sphi 0, %s48
    %s68 = sphi 0, %s70
    %s71 = sphi 0, %s68
    %s72 = sphi 0, %s71
    %s88 = sphi 0, %s72
    %s94 = sphi 0, %s96
    %s97 = sphi 0, %s94
    %s98 = sphi 0, %s97
    %s114 = sphi 0, %s98
    %s120 = sphi 0, %s122
    %s123 = sphi 0, %s120
    %s124 = sphi 0, %s123
    %s140 = sphi 0, %s124
  $region4: #{residual_block_2d.3} parent=0 // loop_header_branch
    %14 = sbr.rel (%p12) target = $region8
  $region5: #{residual_block_2d.3} parent=0 // loop_body
    %s16 = ssub.s32 %s11, 1
    %s17 = ssub.s32 %s11, 2
    %s18 = sadd.s32 %s11, 1
    %s19 = ssub.s32 %s11, %s18
    %p20 = scmp.eq.s32.totalorder %s19, 0
    %s22 = sadd.s32 %s21, 1
    %s23 = scalar_select %p20, %s21, %s22
    %p26 = pneg %p20
    %p27 = scmp.eq.s32.totalorder %s11, 1
    %p28 = por %p26, %p27
    %p29 = scmp.ne.s32.totalorder %s21, %s24
    %p30 = scmp.eq.s32.totalorder %s11, 0
    %p31 = por %p29, %p30
    %p32 = scmp.ne.s32.totalorder %s21, %s24
    %p33 = scmp.eq.s32.totalorder %s16, 1
    %p34 = por %p32, %p33
    %p35 = scmp.ne.s32.totalorder %s24, %s25
    %p36 = scmp.eq.s32.totalorder %s16, 0
    %p37 = por %p35, %p36
    %p38 = scmp.ne.s32.totalorder %s24, %s25
    %p39 = scmp.eq.s32.totalorder %s17, 1
    %p40 = por %p38, %p39
    %p42 = scmp.ne.s32.totalorder %s25, %s41
    %p43 = scmp.eq.s32.totalorder %s17, 0
    %p44 = por %p42, %p43
    %s46 = sadd.s32 %s45, 1
    %p49 = scmp.eq.s32.totalorder %s11, 1
    %p50 = scmp.ne.s32.totalorder %s45, %s47
    %p51 = scmp.eq.s32.totalorder %s11, 0
    %p52 = por %p50, %p51
    %p53 = scmp.ne.s32.totalorder %s45, %s47
    %p54 = scmp.eq.s32.totalorder %s16, 1
    %p55 = por %p53, %p54
    %p56 = scmp.ne.s32.totalorder %s47, %s48
    %p57 = scmp.eq.s32.totalorder %s16, 0
    %p58 = por %p56, %p57
    %p59 = scmp.ne.s32.totalorder %s47, %s48
    %p60 = scmp.eq.s32.totalorder %s17, 1
    %p61 = por %p59, %p60
    %p63 = scmp.ne.s32.totalorder %s48, %s62
    %p64 = scmp.eq.s32.totalorder %s17, 0
    %p65 = por %p63, %p64
    %s66 = ssub.s32 %s11, %s18
    %p67 = scmp.eq.s32.totalorder %s66, 0
    %s69 = sadd.s32 %s68, 1
    %s70 = scalar_select %p67, %s68, %s69
    %p73 = pneg %p67
    %p74 = scmp.eq.s32.totalorder %s11, 1
    %p75 = por %p73, %p74
    %p76 = scmp.ne.s32.totalorder %s68, %s71
    %p77 = scmp.eq.s32.totalorder %s11, 0
    %p78 = por %p76, %p77
    %p79 = scmp.ne.s32.totalorder %s68, %s71
    %p80 = scmp.eq.s32.totalorder %s16, 1
    %p81 = por %p79, %p80
    %p82 = scmp.ne.s32.totalorder %s71, %s72
    %p83 = scmp.eq.s32.totalorder %s16, 0
    %p84 = por %p82, %p83
    %p85 = scmp.ne.s32.totalorder %s71, %s72
    %p86 = scmp.eq.s32.totalorder %s17, 1
    %p87 = por %p85, %p86
    %p89 = scmp.ne.s32.totalorder %s72, %s88
    %p90 = scmp.eq.s32.totalorder %s17, 0
    %p91 = por %p89, %p90
    %s92 = ssub.s32 %s11, %s18
    %p93 = scmp.eq.s32.totalorder %s92, 0
    %s95 = sadd.s32 %s94, 1
    %s96 = scalar_select %p93, %s94, %s95
    %p99 = pneg %p93
    %p100 = scmp.eq.s32.totalorder %s11, 1
    %p101 = por %p99, %p100
    %p102 = scmp.ne.s32.totalorder %s94, %s97
    %p103 = scmp.eq.s32.totalorder %s11, 0
    %p104 = por %p102, %p103
    %p105 = scmp.ne.s32.totalorder %s94, %s97
    %p106 = scmp.eq.s32.totalorder %s16, 1
    %p107 = por %p105, %p106
    %p108 = scmp.ne.s32.totalorder %s97, %s98
    %p109 = scmp.eq.s32.totalorder %s16, 0
    %p110 = por %p108, %p109
    %p111 = scmp.ne.s32.totalorder %s97, %s98
    %p112 = scmp.eq.s32.totalorder %s17, 1
    %p113 = por %p111, %p112
    %p115 = scmp.ne.s32.totalorder %s98, %s114
    %p116 = scmp.eq.s32.totalorder %s17, 0
    %p117 = por %p115, %p116
    %s118 = ssub.s32 %s11, %s18
    %p119 = scmp.eq.s32.totalorder %s118, 0
    %s121 = sadd.s32 %s120, 1
    %s122 = scalar_select %p119, %s120, %s121
    %p125 = pneg %p119
    %p126 = scmp.eq.s32.totalorder %s11, 1
    %p127 = por %p125, %p126
    %p128 = scmp.ne.s32.totalorder %s120, %s123
    %p129 = scmp.eq.s32.totalorder %s11, 0
    %p130 = por %p128, %p129
    %p131 = scmp.ne.s32.totalorder %s120, %s123
    %p132 = scmp.eq.s32.totalorder %s16, 1
    %p133 = por %p131, %p132
    %p134 = scmp.ne.s32.totalorder %s123, %s124
    %p135 = scmp.eq.s32.totalorder %s16, 0
    %p136 = por %p134, %p135
    %p137 = scmp.ne.s32.totalorder %s123, %s124
    %p138 = scmp.eq.s32.totalorder %s17, 1
    %p139 = por %p137, %p138
    %p141 = scmp.ne.s32.totalorder %s124, %s140
    %p142 = scmp.eq.s32.totalorder %s17, 0
    %p143 = por %p141, %p142
    %p144 = scmp.le.s32.totalorder 1, %s11
    %p145 = scmp.lt.s32.totalorder %s11, 3
    %p146 = pnand %p144, %p145
    %p147 = pneg %p146
    // Predicated region
    $region9: #{residual_block_2d.3} parent=5 // pred_check
      _
    $region10: #{residual_block_2d.3} parent=5 // pred_check_branch
      %149 = sbr.rel (%p146) target = $region12
    $region11: #{residual_block_2d.3} parent=5 // pred_region
      %s150 = ssub.s32 %s11, 1
      // Predicated region
      $region13: #{residual_block_2d.3} parent=11 // pred_check
        %p151 = pneg %p58
      $region14: #{residual_block_2d.3} parent=11 // pred_check_branch
        %153 = sbr.rel (%p151) target = $region16
      $region15: #{residual_block_2d.3} parent=11 // pred_region
        _
      $region16: #{residual_block_2d.3} parent=11 // pred_fallthru
        _
    $region12: #{residual_block_2d.3} parent=5 // pred_fallthru
      _
    %p154 = scmp.lt.s32.totalorder %s11, 2
    // Predicated region
    $region17: #{residual_block_2d.3} parent=5 // pred_check
      %p155 = pneg %p154
    $region18: #{residual_block_2d.3} parent=5 // pred_check_branch
      %157 = sbr.rel (%p155) target = $region20
    $region19: #{residual_block_2d.3} parent=5 // pred_region
      // Predicated region
      $region21: #{residual_block_2d.3} parent=19 // pred_check
        %p158 = pneg %p31
      $region22: #{residual_block_2d.3} parent=19 // pred_check_branch
        %160 = sbr.rel (%p158) target = $region24
      $region23: #{residual_block_2d.3} parent=19 // pred_region
        %p161 = scmp.lt.s32.totalorder %s11, 1
        %s162 = scalar_select %p161, %s11, 1
        %s163 = smul.addr %s162, 32
        %s164 = smul.addr %s163, 4
        %s165 = scalar_lea.vmem %s0, %s164
      $region24: #{residual_block_2d.3} parent=19 // pred_fallthru
        _
    $region20: #{residual_block_2d.3} parent=5 // pred_fallthru
      _
    %p166 = scmp.le.s32.totalorder 1, %s11
    %p167 = scmp.lt.s32.totalorder %s11, 3
    %p168 = pnand %p166, %p167
    %p169 = pneg %p168
    // Predicated region
    $region25: #{residual_block_2d.3} parent=5 // pred_check
      _
    $region26: #{residual_block_2d.3} parent=5 // pred_check_branch
      %171 = sbr.rel (%p168) target = $region28
    $region27: #{residual_block_2d.3} parent=5 // pred_region
      %s172 = ssub.s32 %s11, 1
      %p173 = scmp.lt.s32.totalorder %s16, 1
      %s174 = scalar_select %p173, %s16, 1
      %s175 = smul.addr %s174, 32
      %s176 = smul.addr %s175, 4
      %s177 = scalar_lea.vmem %s0, %s176
      %p178 = pneg %p37
      %p179 = pneg %p34
      %p180 = pneg %p58
      %p181 = pneg %p55
      %p182 = pneg %p84
      %p183 = pneg %p81
      %p184 = scmp.lt.s32.totalorder %s16, 1
      %s185 = scalar_select %p184, %s16, 1
      %s186 = smul.addr %s185, 32
      %s187 = smul.addr %s186, 4
      %s188 = scalar_lea.vmem %s2, %s187
      %p189 = pneg %p110
      %p190 = pneg %p107
      %p191 = scmp.lt.s32.totalorder %s16, 1
      %s192 = scalar_select %p191, %s16, 1
      %s193 = scalar_lea.vmem %s3, %s192
      %p194 = pneg %p136
      %p195 = pneg %p133
      %p196 = scmp.lt.s32.totalorder %s16, 1
      %s197 = scalar_select %p196, %s16, 1
      %s198 = scalar_lea.vmem %s4, %s197
      %p199 = scmp.lt.s32.totalorder %s16, 1
      %s200 = scalar_select %p199, %s16, 1
      %s201 = smul.addr %s200, 32
      %s202 = smul.addr %s201, 4
      %s203 = scalar_lea.vmem %s0, %s202
      %p204 = scmp.lt.s32.totalorder %s16, 1
      %s205 = scalar_select %p204, %s16, 1
      %s206 = smul.addr %s205, 32
      %s207 = smul.addr %s206, 4
      %s208 = scalar_lea.vmem %s2, %s207
      %p209 = scmp.lt.s32.totalorder %s16, 1
      %s210 = scalar_select %p209, %s16, 1
      %s211 = scalar_lea.vmem %s3, %s210
      %p212 = scmp.lt.s32.totalorder %s16, 1
      %s213 = scalar_select %p212, %s16, 1
      %s214 = scalar_lea.vmem %s4, %s213
      %vm216 = vcmask 27648
      %217 = vst.msk [vmem:[#allocation2] sm:$0xf] %vm216, 0
      %218 = vst.msk [vmem:[#allocation2 + $0x4] sm:$0xf] %vm216, 0
      %vm219 = vcmask 24576
      %220 = vst.msk [vmem:[#allocation2 + $0x8] sm:$0x1] %vm219, 0
      %s221 = scalar_lea.vmem [#allocation2], 204
      %222 = vst.msk [vmem:[%s221] sm:$0xf] %vm216, 0
      %223 = vst.msk [vmem:[%s221 + $0x4] sm:$0xf] %vm216, 0
      %224 = vst.msk [vmem:[%s221 + $0x8] sm:$0x1] %vm219, 0
      %vm225 = vcmask 24576
      %vm226 = vsmask.f32 256
      %vm227 = vmand %vm225, %vm226
      %v228 = vld [vmem:[#allocation2] sm:$0x1]
      %v229 = vsel %vm227, 0, %v228
      %230 = vst [vmem:[#allocation2] sm:$0x1] %v229
      %v231 = vld [vmem:[#allocation2 + $0xc] sm:$0x1]
      %v232 = vsel %vm227, 0, %v231
      %233 = vst [vmem:[#allocation2 + $0xc] sm:$0x1] %v232
      %v234 = vld [vmem:[#allocation2 + $0x18] sm:$0x1]
      %v235 = vsel %vm227, 0, %v234
      %236 = vst [vmem:[#allocation2 + $0x18] sm:$0x1] %v235
      %v237 = vld [vmem:[#allocation2 + $0x24] sm:$0x1]
      %v238 = vsel %vm227, 0, %v237
      %239 = vst [vmem:[#allocation2 + $0x24] sm:$0x1] %v238
      %v240 = vld [vmem:[#allocation2 + $0x30] sm:$0x1]
      %v241 = vsel %vm227, 0, %v240
      %242 = vst [vmem:[#allocation2 + $0x30] sm:$0x1] %v241
      %v243 = vld [vmem:[#allocation2 + $0x3c] sm:$0x1]
      %v244 = vsel %vm227, 0, %v243
      %245 = vst [vmem:[#allocation2 + $0x3c] sm:$0x1] %v244
      %v246 = vld [vmem:[#allocation2 + $0x48] sm:$0x1]
      %v247 = vsel %vm227, 0, %v246
      %248 = vst [vmem:[#allocation2 + $0x48] sm:$0x1] %v247
      %v249 = vld [vmem:[#allocation2 + $0x54] sm:$0x1]
      %v250 = vsel %vm227, 0, %v249
      %251 = vst [vmem:[#allocation2 + $0x54] sm:$0x1] %v250
      %v252 = vld [vmem:[#allocation2 + $0x60] sm:$0x1]
      %v253 = vsel %vm227, 0, %v252
      %254 = vst [vmem:[#allocation2 + $0x60] sm:$0x1] %v253
      %v255 = vld [vmem:[#allocation2 + $0x6c] sm:$0x1]
      %v256 = vsel %vm227, 0, %v255
      %257 = vst [vmem:[#allocation2 + $0x6c] sm:$0x1] %v256
      %v258 = vld [vmem:[#allocation2 + $0x78] sm:$0x1]
      %v259 = vsel %vm227, 0, %v258
      %260 = vst [vmem:[#allocation2 + $0x78] sm:$0x1] %v259
      %v261 = vld [vmem:[#allocation2 + $0x84] sm:$0x1]
      %v262 = vsel %vm227, 0, %v261
      %263 = vst [vmem:[#allocation2 + $0x84] sm:$0x1] %v262
      %v264 = vld [vmem:[#allocation2 + $0x90] sm:$0x1]
      %v265 = vsel %vm227, 0, %v264
      %266 = vst [vmem:[#allocation2 + $0x90] sm:$0x1] %v265
      %v267 = vld [vmem:[#allocation2 + $0x9c] sm:$0x1]
      %v268 = vsel %vm227, 0, %v267
      %269 = vst [vmem:[#allocation2 + $0x9c] sm:$0x1] %v268
      %v270 = vld [vmem:[#allocation2 + $0xa8] sm:$0x1]
      %v271 = vsel %vm227, 0, %v270
      %272 = vst [vmem:[#allocation2 + $0xa8] sm:$0x1] %v271
      %v273 = vld [vmem:[#allocation2 + $0xb4] sm:$0x1]
      %v274 = vsel %vm227, 0, %v273
      %275 = vst [vmem:[#allocation2 + $0xb4] sm:$0x1] %v274
      %v276 = vld [vmem:[#allocation2 + $0xc0] sm:$0x1]
      %v277 = vsel %vm227, 0, %v276
      %278 = vst [vmem:[#allocation2 + $0xc0] sm:$0x1] %v277
      %v279 = vld [vmem:[#allocation2 + $0xcc] sm:$0x1]
      %v280 = vsel %vm227, 0, %v279
      %281 = vst [vmem:[#allocation2 + $0xcc] sm:$0x1] %v280
      %vm282 = vsmask.f32 7938
      %vm283 = vmand %vm225, %vm282
      %v284 = vld [vmem:[#allocation2 + $0x8] sm:$0x1]
      %v285 = vsel %vm283, 0, %v284
      %286 = vst [vmem:[#allocation2 + $0x8] sm:$0x1] %v285
      %v287 = vld [vmem:[#allocation2 + $0x14] sm:$0x1]
      %v288 = vsel %vm283, 0, %v287
      %289 = vst [vmem:[#allocation2 + $0x14] sm:$0x1] %v288
      %v290 = vld [vmem:[#allocation2 + $0x20] sm:$0x1]
      %v291 = vsel %vm283, 0, %v290
      %292 = vst [vmem:[#allocation2 + $0x20] sm:$0x1] %v291
      %v293 = vld [vmem:[#allocation2 + $0x2c] sm:$0x1]
      %v294 = vsel %vm283, 0, %v293
      %295 = vst [vmem:[#allocation2 + $0x2c] sm:$0x1] %v294
      %v296 = vld [vmem:[#allocation2 + $0x38] sm:$0x1]
      %v297 = vsel %vm283, 0, %v296
      %298 = vst [vmem:[#allocation2 + $0x38] sm:$0x1] %v297
      %v299 = vld [vmem:[#allocation2 + $0x44] sm:$0x1]
      %v300 = vsel %vm283, 0, %v299
      %301 = vst [vmem:[#allocation2 + $0x44] sm:$0x1] %v300
      %v302 = vld [vmem:[#allocation2 + $0x50] sm:$0x1]
      %v303 = vsel %vm283, 0, %v302
      %304 = vst [vmem:[#allocation2 + $0x50] sm:$0x1] %v303
      %v305 = vld [vmem:[#allocation2 + $0x5c] sm:$0x1]
      %v306 = vsel %vm283, 0, %v305
      %307 = vst [vmem:[#allocation2 + $0x5c] sm:$0x1] %v306
      %v308 = vld [vmem:[#allocation2 + $0x68] sm:$0x1]
      %v309 = vsel %vm283, 0, %v308
      %310 = vst [vmem:[#allocation2 + $0x68] sm:$0x1] %v309
      %v311 = vld [vmem:[#allocation2 + $0x74] sm:$0x1]
      %v312 = vsel %vm283, 0, %v311
      %313 = vst [vmem:[#allocation2 + $0x74] sm:$0x1] %v312
      %v314 = vld [vmem:[#allocation2 + $0x80] sm:$0x1]
      %v315 = vsel %vm283, 0, %v314
      %316 = vst [vmem:[#allocation2 + $0x80] sm:$0x1] %v315
      %v317 = vld [vmem:[#allocation2 + $0x8c] sm:$0x1]
      %v318 = vsel %vm283, 0, %v317
      %319 = vst [vmem:[#allocation2 + $0x8c] sm:$0x1] %v318
      %v320 = vld [vmem:[#allocation2 + $0x98] sm:$0x1]
      %v321 = vsel %vm283, 0, %v320
      %322 = vst [vmem:[#allocation2 + $0x98] sm:$0x1] %v321
      %v323 = vld [vmem:[#allocation2 + $0xa4] sm:$0x1]
      %v324 = vsel %vm283, 0, %v323
      %325 = vst [vmem:[#allocation2 + $0xa4] sm:$0x1] %v324
      %v326 = vld [vmem:[#allocation2 + $0xb0] sm:$0x1]
      %v327 = vsel %vm283, 0, %v326
      %328 = vst [vmem:[#allocation2 + $0xb0] sm:$0x1] %v327
      %v329 = vld [vmem:[#allocation2 + $0xbc] sm:$0x1]
      %v330 = vsel %vm283, 0, %v329
      %331 = vst [vmem:[#allocation2 + $0xbc] sm:$0x1] %v330
      %v332 = vld [vmem:[#allocation2 + $0xc8] sm:$0x1]
      %v333 = vsel %vm283, 0, %v332
      %334 = vst [vmem:[#allocation2 + $0xc8] sm:$0x1] %v333
      %v335 = vld [vmem:[#allocation2 + $0xd4] sm:$0x1]
      %v336 = vsel %vm283, 0, %v335
      %337 = vst [vmem:[#allocation2 + $0xd4] sm:$0x1] %v336
      %v338 = vld [vmem:[%s203] sm:$0xf]
      %v339 = vld [vmem:[%s203 + $0x4] sm:$0xf]
      %v340 = vld [vmem:[%s203 + $0x8] sm:$0xf]
      %v341 = vld [vmem:[%s203 + $0xc] sm:$0xf]
      %v342 = vld [vmem:[%s203 + $0x10] sm:$0xf]
      %v343 = vld [vmem:[%s203 + $0x14] sm:$0xf]
      %v344 = vld [vmem:[%s203 + $0x18] sm:$0xf]
      %v345 = vld [vmem:[%s203 + $0x1c] sm:$0xf]
      %v346 = vld [vmem:[%s203 + $0x20] sm:$0xf]
      %v347 = vld [vmem:[%s203 + $0x24] sm:$0xf]
      %v348 = vld [vmem:[%s203 + $0x28] sm:$0xf]
      %v349 = vld [vmem:[%s203 + $0x2c] sm:$0xf]
      %v350 = vld [vmem:[%s203 + $0x30] sm:$0xf]
      %v351 = vld [vmem:[%s203 + $0x34] sm:$0xf]
      %v352 = vld [vmem:[%s203 + $0x38] sm:$0xf]
      %v353 = vld [vmem:[%s203 + $0x3c] sm:$0xf]
      %v354 = vld [vmem:[%s203 + $0x40] sm:$0xf]
      %v355 = vld [vmem:[%s203 + $0x44] sm:$0xf]
      %v356 = vld [vmem:[%s203 + $0x48] sm:$0xf]
      %v357 = vld [vmem:[%s203 + $0x4c] sm:$0xf]
      %v358 = vld [vmem:[%s203 + $0x50] sm:$0xf]
      %v359 = vld [vmem:[%s203 + $0x54] sm:$0xf]
      %v360 = vld [vmem:[%s203 + $0x58] sm:$0xf]
      %v361 = vld [vmem:[%s203 + $0x5c] sm:$0xf]
      %v362 = vld [vmem:[%s203 + $0x60] sm:$0xf]
      %v363 = vld [vmem:[%s203 + $0x64] sm:$0xf]
      %v364 = vld [vmem:[%s203 + $0x68] sm:$0xf]
      %v365 = vld [vmem:[%s203 + $0x6c] sm:$0xf]
      %v366 = vld [vmem:[%s203 + $0x70] sm:$0xf]
      %v367 = vld [vmem:[%s203 + $0x74] sm:$0xf]
      %v368 = vld [vmem:[%s203 + $0x78] sm:$0xf]
      %v369 = vld [vmem:[%s203 + $0x7c] sm:$0xf]
      %vm370 = vsmask.f32 4368
      %vm371 = vmor %vm226, %vm370
      %v373 = vshrl.u32 %v338, 16
      %v375 = vrot.slane %v373, 7
      %v376 = vshll.u32 %v338, 16
      %v378 = vor.u32 %v375, %v376
      %v379 = vrot.slane %v375, 4
      %v381 = vshrl.u32 %v339, 16
      %v383 = vrot.slane %v381, 7
      %v384 = vshll.u32 %v339, 16
      %v386 = vor.u32 %v383, %v384
      %v387 = vsel %vm371, %v379, %v386
      %v388 = vrot.slane %v383, 4
      %v390 = vshrl.u32 %v340, 16
      %v392 = vrot.slane %v390, 7
      %v393 = vshll.u32 %v340, 16
      %v395 = vor.u32 %v392, %v393
      %v396 = vrot.slane %v392, 4
      %v398 = vshrl.u32 %v341, 16
      %v400 = vrot.slane %v398, 7
      %v401 = vshll.u32 %v341, 16
      %v403 = vor.u32 %v400, %v401
      %v404 = vsel %vm371, %v396, %v403
      %v405 = vrot.slane %v400, 4
      %v407 = vshrl.u32 %v342, 16
      %v409 = vrot.slane %v407, 7
      %v410 = vshll.u32 %v342, 16
      %v412 = vor.u32 %v409, %v410
      %v413 = vrot.slane %v409, 4
      %v415 = vshrl.u32 %v343, 16
      %v417 = vrot.slane %v415, 7
      %v418 = vshll.u32 %v343, 16
      %v420 = vor.u32 %v417, %v418
      %v421 = vsel %vm371, %v413, %v420
      %v422 = vrot.slane %v417, 4
      %v424 = vshrl.u32 %v344, 16
      %v426 = vrot.slane %v424, 7
      %v427 = vshll.u32 %v344, 16
      %v429 = vor.u32 %v426, %v427
      %v430 = vrot.slane %v426, 4
      %v432 = vshrl.u32 %v345, 16
      %v434 = vrot.slane %v432, 7
      %v435 = vshll.u32 %v345, 16
      %v437 = vor.u32 %v434, %v435
      %v438 = vsel %vm371, %v430, %v437
      %v439 = vrot.slane %v434, 4
      %v441 = vshrl.u32 %v346, 16
      %v443 = vrot.slane %v441, 7
      %v444 = vshll.u32 %v346, 16
      %v446 = vor.u32 %v443, %v444
      %v447 = vrot.slane %v443, 4
      %v449 = vshrl.u32 %v347, 16
      %v451 = vrot.slane %v449, 7
      %v452 = vshll.u32 %v347, 16
      %v454 = vor.u32 %v451, %v452
      %v455 = vsel %vm371, %v447, %v454
      %v456 = vrot.slane %v451, 4
      %v458 = vshrl.u32 %v348, 16
      %v460 = vrot.slane %v458, 7
      %v461 = vshll.u32 %v348, 16
      %v463 = vor.u32 %v460, %v461
      %v464 = vrot.slane %v460, 4
      %v466 = vshrl.u32 %v349, 16
      %v468 = vrot.slane %v466, 7
      %v469 = vshll.u32 %v349, 16
      %v471 = vor.u32 %v468, %v469
      %v472 = vsel %vm371, %v464, %v471
      %v473 = vrot.slane %v468, 4
      %v475 = vshrl.u32 %v350, 16
      %v477 = vrot.slane %v475, 7
      %v478 = vshll.u32 %v350, 16
      %v480 = vor.u32 %v477, %v478
      %v481 = vrot.slane %v477, 4
      %v483 = vshrl.u32 %v351, 16
      %v485 = vrot.slane %v483, 7
      %v486 = vshll.u32 %v351, 16
      %v488 = vor.u32 %v485, %v486
      %v489 = vsel %vm371, %v481, %v488
      %v490 = vrot.slane %v485, 4
      %v492 = vshrl.u32 %v352, 16
      %v494 = vrot.slane %v492, 7
      %v495 = vshll.u32 %v352, 16
      %v497 = vor.u32 %v494, %v495
      %v498 = vrot.slane %v494, 4
      %v500 = vshrl.u32 %v353, 16
      %v502 = vrot.slane %v500, 7
      %v503 = vshll.u32 %v353, 16
      %v505 = vor.u32 %v502, %v503
      %v506 = vsel %vm371, %v498, %v505
      %v507 = vrot.slane %v502, 4
      %v509 = vshrl.u32 %v354, 16
      %v511 = vrot.slane %v509, 7
      %v512 = vshll.u32 %v354, 16
      %v514 = vor.u32 %v511, %v512
      %v515 = vrot.slane %v511, 4
      %v517 = vshrl.u32 %v355, 16
      %v519 = vrot.slane %v517, 7
      %v520 = vshll.u32 %v355, 16
      %v522 = vor.u32 %v519, %v520
      %v523 = vsel %vm371, %v515, %v522
      %v524 = vrot.slane %v519, 4
      %v526 = vshrl.u32 %v356, 16
      %v528 = vrot.slane %v526, 7
      %v529 = vshll.u32 %v356, 16
      %v531 = vor.u32 %v528, %v529
      %v532 = vrot.slane %v528, 4
      %v534 = vshrl.u32 %v357, 16
      %v536 = vrot.slane %v534, 7
      %v537 = vshll.u32 %v357, 16
      %v539 = vor.u32 %v536, %v537
      %v540 = vsel %vm371, %v532, %v539
      %v541 = vrot.slane %v536, 4
      %v543 = vshrl.u32 %v358, 16
      %v545 = vrot.slane %v543, 7
      %v546 = vshll.u32 %v358, 16
      %v548 = vor.u32 %v545, %v546
      %v549 = vrot.slane %v545, 4
      %v551 = vshrl.u32 %v359, 16
      %v553 = vrot.slane %v551, 7
      %v554 = vshll.u32 %v359, 16
      %v556 = vor.u32 %v553, %v554
      %v557 = vsel %vm371, %v549, %v556
      %v558 = vrot.slane %v553, 4
      %v560 = vshrl.u32 %v360, 16
      %v562 = vrot.slane %v560, 7
      %v563 = vshll.u32 %v360, 16
      %v565 = vor.u32 %v562, %v563
      %v566 = vrot.slane %v562, 4
      %v568 = vshrl.u32 %v361, 16
      %v570 = vrot.slane %v568, 7
      %v571 = vshll.u32 %v361, 16
      %v573 = vor.u32 %v570, %v571
      %v574 = vsel %vm371, %v566, %v573
      %v575 = vrot.slane %v570, 4
      %v577 = vshrl.u32 %v362, 16
      %v579 = vrot.slane %v577, 7
      %v580 = vshll.u32 %v362, 16
      %v582 = vor.u32 %v579, %v580
      %v583 = vrot.slane %v579, 4
      %v585 = vshrl.u32 %v363, 16
      %v587 = vrot.slane %v585, 7
      %v588 = vshll.u32 %v363, 16
      %v590 = vor.u32 %v587, %v588
      %v591 = vsel %vm371, %v583, %v590
      %v592 = vrot.slane %v587, 4
      %v594 = vshrl.u32 %v364, 16
      %v596 = vrot.slane %v594, 7
      %v597 = vshll.u32 %v364, 16
      %v599 = vor.u32 %v596, %v597
      %v600 = vrot.slane %v596, 4
      %v602 = vshrl.u32 %v365, 16
      %v604 = vrot.slane %v602, 7
      %v605 = vshll.u32 %v365, 16
      %v607 = vor.u32 %v604, %v605
      %v608 = vsel %vm371, %v600, %v607
      %v609 = vrot.slane %v604, 4
      %v611 = vshrl.u32 %v366, 16
      %v613 = vrot.slane %v611, 7
      %v614 = vshll.u32 %v366, 16
      %v616 = vor.u32 %v613, %v614
      %v617 = vrot.slane %v613, 4
      %v619 = vshrl.u32 %v367, 16
      %v621 = vrot.slane %v619, 7
      %v622 = vshll.u32 %v367, 16
      %v624 = vor.u32 %v621, %v622
      %v625 = vsel %vm371, %v617, %v624
      %v626 = vrot.slane %v621, 4
      %v628 = vshrl.u32 %v368, 16
      %v630 = vrot.slane %v628, 7
      %v631 = vshll.u32 %v368, 16
      %v633 = vor.u32 %v630, %v631
      %v634 = vrot.slane %v630, 4
      %v636 = vshrl.u32 %v369, 16
      %v638 = vrot.slane %v636, 7
      %v639 = vshll.u32 %v369, 16
      %v641 = vor.u32 %v638, %v639
      %v642 = vsel %vm371, %v634, %v641
      %v643 = vrot.slane %v638, 4
      %s692 = scalar_lea.vmem [#allocation2], 12
      %vm693 = vcmask 27648
      %vm694 = vmand %vm693, %vm282
      %v695 = vld [vmem:[%s692] sm:$0xf]
      %v696 = vsel %vm694, %v378, %v695
      %697 = vst [vmem:[%s692] sm:$0xf] %v696
      %698 = vst.msk [vmem:[%s692 + $0x4] sm:$0xf] %vm216, %v387
      %v699 = vld [vmem:[%s692 + $0x8] sm:$0x1]
      %v700 = vsel %vm227, %v388, %v699
      %701 = vst [vmem:[%s692 + $0x8] sm:$0x1] %v700
      %v702 = vld [vmem:[%s692 + $0xc] sm:$0xf]
      %v703 = vsel %vm694, %v395, %v702
      %704 = vst [vmem:[%s692 + $0xc] sm:$0xf] %v703
      %705 = vst.msk [vmem:[%s692 + $0x10] sm:$0xf] %vm216, %v404
      %v706 = vld [vmem:[%s692 + $0x14] sm:$0x1]
      %v707 = vsel %vm227, %v405, %v706
      %708 = vst [vmem:[%s692 + $0x14] sm:$0x1] %v707
      %v709 = vld [vmem:[%s692 + $0x18] sm:$0xf]
      %v710 = vsel %vm694, %v412, %v709
      %711 = vst [vmem:[%s692 + $0x18] sm:$0xf] %v710
      %712 = vst.msk [vmem:[%s692 + $0x1c] sm:$0xf] %vm216, %v421
      %v713 = vld [vmem:[%s692 + $0x20] sm:$0x1]
      %v714 = vsel %vm227, %v422, %v713
      %715 = vst [vmem:[%s692 + $0x20] sm:$0x1] %v714
      %v716 = vld [vmem:[%s692 + $0x24] sm:$0xf]
      %v717 = vsel %vm694, %v429, %v716
      %718 = vst [vmem:[%s692 + $0x24] sm:$0xf] %v717
      %719 = vst.msk [vmem:[%s692 + $0x28] sm:$0xf] %vm216, %v438
      %v720 = vld [vmem:[%s692 + $0x2c] sm:$0x1]
      %v721 = vsel %vm227, %v439, %v720
      %722 = vst [vmem:[%s692 + $0x2c] sm:$0x1] %v721
      %v723 = vld [vmem:[%s692 + $0x30] sm:$0xf]
      %v724 = vsel %vm694, %v446, %v723
      %725 = vst [vmem:[%s692 + $0x30] sm:$0xf] %v724
      %726 = vst.msk [vmem:[%s692 + $0x34] sm:$0xf] %vm216, %v455
      %v727 = vld [vmem:[%s692 + $0x38] sm:$0x1]
      %v728 = vsel %vm227, %v456, %v727
      %729 = vst [vmem:[%s692 + $0x38] sm:$0x1] %v728
      %v730 = vld [vmem:[%s692 + $0x3c] sm:$0xf]
      %v731 = vsel %vm694, %v463, %v730
      %732 = vst [vmem:[%s692 + $0x3c] sm:$0xf] %v731
      %733 = vst.msk [vmem:[%s692 + $0x40] sm:$0xf] %vm216, %v472
      %v734 = vld [vmem:[%s692 + $0x44] sm:$0x1]
      %v735 = vsel %vm227, %v473, %v734
      %736 = vst [vmem:[%s692 + $0x44] sm:$0x1] %v735
      %v737 = vld [vmem:[%s692 + $0x48] sm:$0xf]
      %v738 = vsel %vm694, %v480, %v737
      %739 = vst [vmem:[%s692 + $0x48] sm:$0xf] %v738
      %740 = vst.msk [vmem:[%s692 + $0x4c] sm:$0xf] %vm216, %v489
      %v741 = vld [vmem:[%s692 + $0x50] sm:$0x1]
      %v742 = vsel %vm227, %v490, %v741
      %743 = vst [vmem:[%s692 + $0x50] sm:$0x1] %v742
      %v744 = vld [vmem:[%s692 + $0x54] sm:$0xf]
      %v745 = vsel %vm694, %v497, %v744
      %746 = vst [vmem:[%s692 + $0x54] sm:$0xf] %v745
      %747 = vst.msk [vmem:[%s692 + $0x58] sm:$0xf] %vm216, %v506
      %v748 = vld [vmem:[%s692 + $0x5c] sm:$0x1]
      %v749 = vsel %vm227, %v507, %v748
      %750 = vst [vmem:[%s692 + $0x5c] sm:$0x1] %v749
      %v751 = vld [vmem:[%s692 + $0x60] sm:$0xf]
      %v752 = vsel %vm694, %v514, %v751
      %753 = vst [vmem:[%s692 + $0x60] sm:$0xf] %v752
      %754 = vst.msk [vmem:[%s692 + $0x64] sm:$0xf] %vm216, %v523
      %v755 = vld [vmem:[%s692 + $0x68] sm:$0x1]
      %v756 = vsel %vm227, %v524, %v755
      %757 = vst [vmem:[%s692 + $0x68] sm:$0x1] %v756
      %v758 = vld [vmem:[%s692 + $0x6c] sm:$0xf]
      %v759 = vsel %vm694, %v531, %v758
      %760 = vst [vmem:[%s692 + $0x6c] sm:$0xf] %v759
      %761 = vst.msk [vmem:[%s692 + $0x70] sm:$0xf] %vm216, %v540
      %v762 = vld [vmem:[%s692 + $0x74] sm:$0x1]
      %v763 = vsel %vm227, %v541, %v762
      %764 = vst [vmem:[%s692 + $0x74] sm:$0x1] %v763
      %v765 = vld [vmem:[%s692 + $0x78] sm:$0xf]
      %v766 = vsel %vm694, %v548, %v765
      %767 = vst [vmem:[%s692 + $0x78] sm:$0xf] %v766
      %768 = vst.msk [vmem:[%s692 + $0x7c] sm:$0xf] %vm216, %v557
      %v769 = vld [vmem:[%s692 + $0x80] sm:$0x1]
      %v770 = vsel %vm227, %v558, %v769
      %771 = vst [vmem:[%s692 + $0x80] sm:$0x1] %v770
      %v772 = vld [vmem:[%s692 + $0x84] sm:$0xf]
      %v773 = vsel %vm694, %v565, %v772
      %774 = vst [vmem:[%s692 + $0x84] sm:$0xf] %v773
      %775 = vst.msk [vmem:[%s692 + $0x88] sm:$0xf] %vm216, %v574
      %v776 = vld [vmem:[%s692 + $0x8c] sm:$0x1]
      %v777 = vsel %vm227, %v575, %v776
      %778 = vst [vmem:[%s692 + $0x8c] sm:$0x1] %v777
      %v779 = vld [vmem:[%s692 + $0x90] sm:$0xf]
      %v780 = vsel %vm694, %v582, %v779
      %781 = vst [vmem:[%s692 + $0x90] sm:$0xf] %v780
      %782 = vst.msk [vmem:[%s692 + $0x94] sm:$0xf] %vm216, %v591
      %v783 = vld [vmem:[%s692 + $0x98] sm:$0x1]
      %v784 = vsel %vm227, %v592, %v783
      %785 = vst [vmem:[%s692 + $0x98] sm:$0x1] %v784
      %v786 = vld [vmem:[%s692 + $0x9c] sm:$0xf]
      %v787 = vsel %vm694, %v599, %v786
      %788 = vst [vmem:[%s692 + $0x9c] sm:$0xf] %v787
      %789 = vst.msk [vmem:[%s692 + $0xa0] sm:$0xf] %vm216, %v608
      %v790 = vld [vmem:[%s692 + $0xa4] sm:$0x1]
      %v791 = vsel %vm227, %v609, %v790
      %792 = vst [vmem:[%s692 + $0xa4] sm:$0x1] %v791
      %v793 = vld [vmem:[%s692 + $0xa8] sm:$0xf]
      %v794 = vsel %vm694, %v616, %v793
      %795 = vst [vmem:[%s692 + $0xa8] sm:$0xf] %v794
      %796 = vst.msk [vmem:[%s692 + $0xac] sm:$0xf] %vm216, %v625
      %v797 = vld [vmem:[%s692 + $0xb0] sm:$0x1]
      %v798 = vsel %vm227, %v626, %v797
      %799 = vst [vmem:[%s692 + $0xb0] sm:$0x1] %v798
      %v800 = vld [vmem:[%s692 + $0xb4] sm:$0xf]
      %v801 = vsel %vm694, %v633, %v800
      %802 = vst [vmem:[%s692 + $0xb4] sm:$0xf] %v801
      %803 = vst.msk [vmem:[%s692 + $0xb8] sm:$0xf] %vm216, %v642
      %v804 = vld [vmem:[%s692 + $0xbc] sm:$0x1]
      %v805 = vsel %vm227, %v643, %v804
      %806 = vst [vmem:[%s692 + $0xbc] sm:$0x1] %v805
      %v807 = vld [vmem:[#allocation2] sm:$0xf]
      %v808 = vld [vmem:[#allocation2 + $0x4] sm:$0xf]
      %v809 = vld [vmem:[#allocation2 + $0xc] sm:$0xf]
      %v810 = vld [vmem:[#allocation2 + $0x10] sm:$0xf]
      %v811 = vld [vmem:[#allocation2 + $0x18] sm:$0xf]
      %v812 = vld [vmem:[#allocation2 + $0x1c] sm:$0xf]
      %v813 = vld [vmem:[#allocation2 + $0x24] sm:$0xf]
      %v814 = vld [vmem:[#allocation2 + $0x28] sm:$0xf]
      %v815 = vld [vmem:[#allocation2 + $0x30] sm:$0xf]
      %v816 = vld [vmem:[#allocation2 + $0x34] sm:$0xf]
      %v817 = vld [vmem:[#allocation2 + $0x3c] sm:$0xf]
      %v818 = vld [vmem:[#allocation2 + $0x40] sm:$0xf]
      %v819 = vld [vmem:[#allocation2 + $0x48] sm:$0xf]
      %v820 = vld [vmem:[#allocation2 + $0x4c] sm:$0xf]
      %v821 = vld [vmem:[#allocation2 + $0x54] sm:$0xf]
      %v822 = vld [vmem:[#allocation2 + $0x58] sm:$0xf]
      %v823 = vld [vmem:[#allocation2 + $0x60] sm:$0xf]
      %v824 = vld [vmem:[#allocation2 + $0x64] sm:$0xf]
      %v825 = vld [vmem:[#allocation2 + $0x6c] sm:$0xf]
      %v826 = vld [vmem:[#allocation2 + $0x70] sm:$0xf]
      %v827 = vld [vmem:[#allocation2 + $0x78] sm:$0xf]
      %v828 = vld [vmem:[#allocation2 + $0x7c] sm:$0xf]
      %v829 = vld [vmem:[#allocation2 + $0x84] sm:$0xf]
      %v830 = vld [vmem:[#allocation2 + $0x88] sm:$0xf]
      %v831 = vld [vmem:[#allocation2 + $0x90] sm:$0xf]
      %v832 = vld [vmem:[#allocation2 + $0x94] sm:$0xf]
      %v833 = vld [vmem:[#allocation2 + $0x9c] sm:$0xf]
      %v834 = vld [vmem:[#allocation2 + $0xa0] sm:$0xf]
      %v835 = vld [vmem:[#allocation2 + $0xa8] sm:$0xf]
      %v836 = vld [vmem:[#allocation2 + $0xac] sm:$0xf]
      %v837 = vld [vmem:[#allocation2 + $0xb4] sm:$0xf]
      %v838 = vld [vmem:[#allocation2 + $0xb8] sm:$0xf]
      %v871 = vunpack.c.l.b16 %v807
      %v872 = vunpack.c.l.b16 %v808
      %v873 = vunpack.c.l.b16 %v809
      %v874 = vunpack.c.l.b16 %v810
      %v875 = vunpack.c.l.b16 %v811
      %v876 = vunpack.c.l.b16 %v812
      %v877 = vunpack.c.l.b16 %v813
      %v878 = vunpack.c.l.b16 %v814
      %v879 = vunpack.c.l.b16 %v815
      %v880 = vunpack.c.l.b16 %v816
      %v881 = vunpack.c.l.b16 %v817
      %v882 = vunpack.c.l.b16 %v818
      %v883 = vunpack.c.l.b16 %v819
      %v884 = vunpack.c.l.b16 %v820
      %v885 = vunpack.c.l.b16 %v821
      %v886 = vunpack.c.l.b16 %v822
      %v887 = vunpack.c.l.b16 %v823
      %v888 = vunpack.c.l.b16 %v824
      %v889 = vunpack.c.l.b16 %v825
      %v890 = vunpack.c.l.b16 %v826
      %v891 = vunpack.c.l.b16 %v827
      %v892 = vunpack.c.l.b16 %v828
      %v893 = vunpack.c.l.b16 %v829
      %v894 = vunpack.c.l.b16 %v830
      %v895 = vunpack.c.l.b16 %v831
      %v896 = vunpack.c.l.b16 %v832
      %v897 = vunpack.c.l.b16 %v833
      %v898 = vunpack.c.l.b16 %v834
      %v899 = vunpack.c.l.b16 %v835
      %v900 = vunpack.c.l.b16 %v836
      %v901 = vunpack.c.l.b16 %v837
      %v902 = vunpack.c.l.b16 %v838
      %v903 = vpack.c.b16 %v872, %v871
      %v904 = vpack.c.b16 %v874, %v873
      %v905 = vpack.c.b16 %v876, %v875
      %v906 = vpack.c.b16 %v878, %v877
      %v907 = vpack.c.b16 %v880, %v879
      %v908 = vpack.c.b16 %v882, %v881
      %v909 = vpack.c.b16 %v884, %v883
      %v910 = vpack.c.b16 %v886, %v885
      %v911 = vpack.c.b16 %v888, %v887
      %v912 = vpack.c.b16 %v890, %v889
      %v913 = vpack.c.b16 %v892, %v891
      %v914 = vpack.c.b16 %v894, %v893
      %v915 = vpack.c.b16 %v896, %v895
      %v916 = vpack.c.b16 %v898, %v897
      %v917 = vpack.c.b16 %v900, %v899
      %v918 = vpack.c.b16 %v902, %v901
      %vm935 = vcmask 31744
      %936 = vst.msk [vmem:[#allocation3] sm:$0xff] %vm935, %v903
      %937 = vst.msk [vmem:[#allocation3 + $0x8] sm:$0xff] %vm935, %v904
      %938 = vst.msk [vmem:[#allocation3 + $0x10] sm:$0xff] %vm935, %v905
      %939 = vst.msk [vmem:[#allocation3 + $0x18] sm:$0xff] %vm935, %v906
      %940 = vst.msk [vmem:[#allocation3 + $0x20] sm:$0xff] %vm935, %v907
      %941 = vst.msk [vmem:[#allocation3 + $0x28] sm:$0xff] %vm935, %v908
      %942 = vst.msk [vmem:[#allocation3 + $0x30] sm:$0xff] %vm935, %v909
      %943 = vst.msk [vmem:[#allocation3 + $0x38] sm:$0xff] %vm935, %v910
      %944 = vst.msk [vmem:[#allocation3 + $0x40] sm:$0xff] %vm935, %v911
      %945 = vst.msk [vmem:[#allocation3 + $0x48] sm:$0xff] %vm935, %v912
      %946 = vst.msk [vmem:[#allocation3 + $0x50] sm:$0xff] %vm935, %v913
      %947 = vst.msk [vmem:[#allocation3 + $0x58] sm:$0xff] %vm935, %v914
      %948 = vst.msk [vmem:[#allocation3 + $0x60] sm:$0xff] %vm935, %v915
      %949 = vst.msk [vmem:[#allocation3 + $0x68] sm:$0xff] %vm935, %v916
      %950 = vst.msk [vmem:[#allocation3 + $0x70] sm:$0xff] %vm935, %v917
      %951 = vst.msk [vmem:[#allocation3 + $0x78] sm:$0xff] %vm935, %v918
      %v952 = vld [vmem:[#allocation2] sm:$0xf]
      %v953 = vld [vmem:[#allocation2 + $0x4] sm:$0xf]
      %v954 = vld [vmem:[#allocation2 + $0x8] sm:$0x1]
      %v955 = vld [vmem:[#allocation2 + $0xc] sm:$0xf]
      %v956 = vld [vmem:[#allocation2 + $0x10] sm:$0xf]
      %v957 = vld [vmem:[#allocation2 + $0x14] sm:$0x1]
      %v958 = vld [vmem:[#allocation2 + $0x18] sm:$0xf]
      %v959 = vld [vmem:[#allocation2 + $0x1c] sm:$0xf]
      %v960 = vld [vmem:[#allocation2 + $0x20] sm:$0x1]
      %v961 = vld [vmem:[#allocation2 + $0x24] sm:$0xf]
      %v962 = vld [vmem:[#allocation2 + $0x28] sm:$0xf]
      %v963 = vld [vmem:[#allocation2 + $0x2c] sm:$0x1]
      %v964 = vld [vmem:[#allocation2 + $0x30] sm:$0xf]
      %v965 = vld [vmem:[#allocation2 + $0x34] sm:$0xf]
      %v966 = vld [vmem:[#allocation2 + $0x38] sm:$0x1]
      %v967 = vld [vmem:[#allocation2 + $0x3c] sm:$0xf]
      %v968 = vld [vmem:[#allocation2 + $0x40] sm:$0xf]
      %v969 = vld [vmem:[#allocation2 + $0x44] sm:$0x1]
      %v970 = vld [vmem:[#allocation2 + $0x48] sm:$0xf]
      %v971 = vld [vmem:[#allocation2 + $0x4c] sm:$0xf]
      %v972 = vld [vmem:[#allocation2 + $0x50] sm:$0x1]
      %v973 = vld [vmem:[#allocation2 + $0x54] sm:$0xf]
      %v974 = vld [vmem:[#allocation2 + $0x58] sm:$0xf]
      %v975 = vld [vmem:[#allocation2 + $0x5c] sm:$0x1]
      %v976 = vld [vmem:[#allocation2 + $0x60] sm:$0xf]
      %v977 = vld [vmem:[#allocation2 + $0x64] sm:$0xf]
      %v978 = vld [vmem:[#allocation2 + $0x68] sm:$0x1]
      %v979 = vld [vmem:[#allocation2 + $0x6c] sm:$0xf]
      %v980 = vld [vmem:[#allocation2 + $0x70] sm:$0xf]
      %v981 = vld [vmem:[#allocation2 + $0x74] sm:$0x1]
      %v982 = vld [vmem:[#allocation2 + $0x78] sm:$0xf]
      %v983 = vld [vmem:[#allocation2 + $0x7c] sm:$0xf]
      %v984 = vld [vmem:[#allocation2 + $0x80] sm:$0x1]
      %v985 = vld [vmem:[#allocation2 + $0x84] sm:$0xf]
      %v986 = vld [vmem:[#allocation2 + $0x88] sm:$0xf]
      %v987 = vld [vmem:[#allocation2 + $0x8c] sm:$0x1]
      %v988 = vld [vmem:[#allocation2 + $0x90] sm:$0xf]
      %v989 = vld [vmem:[#allocation2 + $0x94] sm:$0xf]
      %v990 = vld [vmem:[#allocation2 + $0x98] sm:$0x1]
      %v991 = vld [vmem:[#allocation2 + $0x9c] sm:$0xf]
      %v992 = vld [vmem:[#allocation2 + $0xa0] sm:$0xf]
      %v993 = vld [vmem:[#allocation2 + $0xa4] sm:$0x1]
      %v994 = vld [vmem:[#allocation2 + $0xa8] sm:$0xf]
      %v995 = vld [vmem:[#allocation2 + $0xac] sm:$0xf]
      %v996 = vld [vmem:[#allocation2 + $0xb0] sm:$0x1]
      %v997 = vld [vmem:[#allocation2 + $0xb4] sm:$0xf]
      %v998 = vld [vmem:[#allocation2 + $0xb8] sm:$0xf]
      %v999 = vld [vmem:[#allocation2 + $0xbc] sm:$0x1]
      %vm1000 = vsmask.f32 3328
      %vm1001 = vsmask.f32 7440
      %vm1002 = vmor %vm1000, %vm1001
      %v1004 = vshrl.u32 %v952, 16
      %v1006 = vrot.slane %v1004, 4
      %v1007 = vshll.u32 %v952, 16
      %v1009 = vrot.slane %v1007, 5
      %v1010 = vor.u32 %v1006, %v1009
      %v1011 = vrot.slane %v1010, 4
      %v1013 = vshll.u32 %v953, 16
      %v1015 = vrot.slane %v1013, 5
      %v1016 = vsel %vm1002, %v1011, %v1015
      %v1017 = vshrl.u32 %v953, 16
      %v1019 = vrot.slane %v1017, 4
      %v1020 = vor.u32 %v1019, %v1015
      %v1021 = vrot.slane %v1020, 4
      %v1023 = vshll.u32 %v954, 16
      %v1025 = vrot.slane %v1023, 5
      %v1026 = vsel %vm1002, %v1021, %v1025
      %v1028 = vshrl.u32 %v955, 16
      %v1030 = vrot.slane %v1028, 4
      %v1031 = vshll.u32 %v955, 16
      %v1033 = vrot.slane %v1031, 5
      %v1034 = vor.u32 %v1030, %v1033
      %v1035 = vrot.slane %v1034, 4
      %v1037 = vshll.u32 %v956, 16
      %v1039 = vrot.slane %v1037, 5
      %v1040 = vsel %vm1002, %v1035, %v1039
      %v1041 = vshrl.u32 %v956, 16
      %v1043 = vrot.slane %v1041, 4
      %v1044 = vor.u32 %v1043, %v1039
      %v1045 = vrot.slane %v1044, 4
      %v1047 = vshll.u32 %v957, 16
      %v1049 = vrot.slane %v1047, 5
      %v1050 = vsel %vm1002, %v1045, %v1049
      %v1052 = vshrl.u32 %v958, 16
      %v1054 = vrot.slane %v1052, 4
      %v1055 = vshll.u32 %v958, 16
      %v1057 = vrot.slane %v1055, 5
      %v1058 = vor.u32 %v1054, %v1057
      %v1059 = vrot.slane %v1058, 4
      %v1061 = vshll.u32 %v959, 16
      %v1063 = vrot.slane %v1061, 5
      %v1064 = vsel %vm1002, %v1059, %v1063
      %v1065 = vshrl.u32 %v959, 16
      %v1067 = vrot.slane %v1065, 4
      %v1068 = vor.u32 %v1067, %v1063
      %v1069 = vrot.slane %v1068, 4
      %v1071 = vshll.u32 %v960, 16
      %v1073 = vrot.slane %v1071, 5
      %v1074 = vsel %vm1002, %v1069, %v1073
      %v1076 = vshrl.u32 %v961, 16
      %v1078 = vrot.slane %v1076, 4
      %v1079 = vshll.u32 %v961, 16
      %v1081 = vrot.slane %v1079, 5
      %v1082 = vor.u32 %v1078, %v1081
      %v1083 = vrot.slane %v1082, 4
      %v1085 = vshll.u32 %v962, 16
      %v1087 = vrot.slane %v1085, 5
      %v1088 = vsel %vm1002, %v1083, %v1087
      %v1089 = vshrl.u32 %v962, 16
      %v1091 = vrot.slane %v1089, 4
      %v1092 = vor.u32 %v1091, %v1087
      %v1093 = vrot.slane %v1092, 4
      %v1095 = vshll.u32 %v963, 16
      %v1097 = vrot.slane %v1095, 5
      %v1098 = vsel %vm1002, %v1093, %v1097
      %v1100 = vshrl.u32 %v964, 16
      %v1102 = vrot.slane %v1100, 4
      %v1103 = vshll.u32 %v964, 16
      %v1105 = vrot.slane %v1103, 5
      %v1106 = vor.u32 %v1102, %v1105
      %v1107 = vrot.slane %v1106, 4
      %v1109 = vshll.u32 %v965, 16
      %v1111 = vrot.slane %v1109, 5
      %v1112 = vsel %vm1002, %v1107, %v1111
      %v1113 = vshrl.u32 %v965, 16
      %v1115 = vrot.slane %v1113, 4
      %v1116 = vor.u32 %v1115, %v1111
      %v1117 = vrot.slane %v1116, 4
      %v1119 = vshll.u32 %v966, 16
      %v1121 = vrot.slane %v1119, 5
      %v1122 = vsel %vm1002, %v1117, %v1121
      %v1124 = vshrl.u32 %v967, 16
      %v1126 = vrot.slane %v1124, 4
      %v1127 = vshll.u32 %v967, 16
      %v1129 = vrot.slane %v1127, 5
      %v1130 = vor.u32 %v1126, %v1129
      %v1131 = vrot.slane %v1130, 4
      %v1133 = vshll.u32 %v968, 16
      %v1135 = vrot.slane %v1133, 5
      %v1136 = vsel %vm1002, %v1131, %v1135
      %v1137 = vshrl.u32 %v968, 16
      %v1139 = vrot.slane %v1137, 4
      %v1140 = vor.u32 %v1139, %v1135
      %v1141 = vrot.slane %v1140, 4
      %v1143 = vshll.u32 %v969, 16
      %v1145 = vrot.slane %v1143, 5
      %v1146 = vsel %vm1002, %v1141, %v1145
      %v1148 = vshrl.u32 %v970, 16
      %v1150 = vrot.slane %v1148, 4
      %v1151 = vshll.u32 %v970, 16
      %v1153 = vrot.slane %v1151, 5
      %v1154 = vor.u32 %v1150, %v1153
      %v1155 = vrot.slane %v1154, 4
      %v1157 = vshll.u32 %v971, 16
      %v1159 = vrot.slane %v1157, 5
      %v1160 = vsel %vm1002, %v1155, %v1159
      %v1161 = vshrl.u32 %v971, 16
      %v1163 = vrot.slane %v1161, 4
      %v1164 = vor.u32 %v1163, %v1159
      %v1165 = vrot.slane %v1164, 4
      %v1167 = vshll.u32 %v972, 16
      %v1169 = vrot.slane %v1167, 5
      %v1170 = vsel %vm1002, %v1165, %v1169
      %v1172 = vshrl.u32 %v973, 16
      %v1174 = vrot.slane %v1172, 4
      %v1175 = vshll.u32 %v973, 16
      %v1177 = vrot.slane %v1175, 5
      %v1178 = vor.u32 %v1174, %v1177
      %v1179 = vrot.slane %v1178, 4
      %v1181 = vshll.u32 %v974, 16
      %v1183 = vrot.slane %v1181, 5
      %v1184 = vsel %vm1002, %v1179, %v1183
      %v1185 = vshrl.u32 %v974, 16
      %v1187 = vrot.slane %v1185, 4
      %v1188 = vor.u32 %v1187, %v1183
      %v1189 = vrot.slane %v1188, 4
      %v1191 = vshll.u32 %v975, 16
      %v1193 = vrot.slane %v1191, 5
      %v1194 = vsel %vm1002, %v1189, %v1193
      %v1196 = vshrl.u32 %v976, 16
      %v1198 = vrot.slane %v1196, 4
      %v1199 = vshll.u32 %v976, 16
      %v1201 = vrot.slane %v1199, 5
      %v1202 = vor.u32 %v1198, %v1201
      %v1203 = vrot.slane %v1202, 4
      %v1205 = vshll.u32 %v977, 16
      %v1207 = vrot.slane %v1205, 5
      %v1208 = vsel %vm1002, %v1203, %v1207
      %v1209 = vshrl.u32 %v977, 16
      %v1211 = vrot.slane %v1209, 4
      %v1212 = vor.u32 %v1211, %v1207
      %v1213 = vrot.slane %v1212, 4
      %v1215 = vshll.u32 %v978, 16
      %v1217 = vrot.slane %v1215, 5
      %v1218 = vsel %vm1002, %v1213, %v1217
      %v1220 = vshrl.u32 %v979, 16
      %v1222 = vrot.slane %v1220, 4
      %v1223 = vshll.u32 %v979, 16
      %v1225 = vrot.slane %v1223, 5
      %v1226 = vor.u32 %v1222, %v1225
      %v1227 = vrot.slane %v1226, 4
      %v1229 = vshll.u32 %v980, 16
      %v1231 = vrot.slane %v1229, 5
      %v1232 = vsel %vm1002, %v1227, %v1231
      %v1233 = vshrl.u32 %v980, 16
      %v1235 = vrot.slane %v1233, 4
      %v1236 = vor.u32 %v1235, %v1231
      %v1237 = vrot.slane %v1236, 4
      %v1239 = vshll.u32 %v981, 16
      %v1241 = vrot.slane %v1239, 5
      %v1242 = vsel %vm1002, %v1237, %v1241
      %v1244 = vshrl.u32 %v982, 16
      %v1246 = vrot.slane %v1244, 4
      %v1247 = vshll.u32 %v982, 16
      %v1249 = vrot.slane %v1247, 5
      %v1250 = vor.u32 %v1246, %v1249
      %v1251 = vrot.slane %v1250, 4
      %v1253 = vshll.u32 %v983, 16
      %v1255 = vrot.slane %v1253, 5
      %v1256 = vsel %vm1002, %v1251, %v1255
      %v1257 = vshrl.u32 %v983, 16
      %v1259 = vrot.slane %v1257, 4
      %v1260 = vor.u32 %v1259, %v1255
      %v1261 = vrot.slane %v1260, 4
      %v1263 = vshll.u32 %v984, 16
      %v1265 = vrot.slane %v1263, 5
      %v1266 = vsel %vm1002, %v1261, %v1265
      %v1268 = vshrl.u32 %v985, 16
      %v1270 = vrot.slane %v1268, 4
      %v1271 = vshll.u32 %v985, 16
      %v1273 = vrot.slane %v1271, 5
      %v1274 = vor.u32 %v1270, %v1273
      %v1275 = vrot.slane %v1274, 4
      %v1277 = vshll.u32 %v986, 16
      %v1279 = vrot.slane %v1277, 5
      %v1280 = vsel %vm1002, %v1275, %v1279
      %v1281 = vshrl.u32 %v986, 16
      %v1283 = vrot.slane %v1281, 4
      %v1284 = vor.u32 %v1283, %v1279
      %v1285 = vrot.slane %v1284, 4
      %v1287 = vshll.u32 %v987, 16
      %v1289 = vrot.slane %v1287, 5
      %v1290 = vsel %vm1002, %v1285, %v1289
      %v1292 = vshrl.u32 %v988, 16
      %v1294 = vrot.slane %v1292, 4
      %v1295 = vshll.u32 %v988, 16
      %v1297 = vrot.slane %v1295, 5
      %v1298 = vor.u32 %v1294, %v1297
      %v1299 = vrot.slane %v1298, 4
      %v1301 = vshll.u32 %v989, 16
      %v1303 = vrot.slane %v1301, 5
      %v1304 = vsel %vm1002, %v1299, %v1303
      %v1305 = vshrl.u32 %v989, 16
      %v1307 = vrot.slane %v1305, 4
      %v1308 = vor.u32 %v1307, %v1303
      %v1309 = vrot.slane %v1308, 4
      %v1311 = vshll.u32 %v990, 16
      %v1313 = vrot.slane %v1311, 5
      %v1314 = vsel %vm1002, %v1309, %v1313
      %v1316 = vshrl.u32 %v991, 16
      %v1318 = vrot.slane %v1316, 4
      %v1319 = vshll.u32 %v991, 16
      %v1321 = vrot.slane %v1319, 5
      %v1322 = vor.u32 %v1318, %v1321
      %v1323 = vrot.slane %v1322, 4
      %v1325 = vshll.u32 %v992, 16
      %v1327 = vrot.slane %v1325, 5
      %v1328 = vsel %vm1002, %v1323, %v1327
      %v1329 = vshrl.u32 %v992, 16
      %v1331 = vrot.slane %v1329, 4
      %v1332 = vor.u32 %v1331, %v1327
      %v1333 = vrot.slane %v1332, 4
      %v1335 = vshll.u32 %v993, 16
      %v1337 = vrot.slane %v1335, 5
      %v1338 = vsel %vm1002, %v1333, %v1337
      %v1340 = vshrl.u32 %v994, 16
      %v1342 = vrot.slane %v1340, 4
      %v1343 = vshll.u32 %v994, 16
      %v1345 = vrot.slane %v1343, 5
      %v1346 = vor.u32 %v1342, %v1345
      %v1347 = vrot.slane %v1346, 4
      %v1349 = vshll.u32 %v995, 16
      %v1351 = vrot.slane %v1349, 5
      %v1352 = vsel %vm1002, %v1347, %v1351
      %v1353 = vshrl.u32 %v995, 16
      %v1355 = vrot.slane %v1353, 4
      %v1356 = vor.u32 %v1355, %v1351
      %v1357 = vrot.slane %v1356, 4
      %v1359 = vshll.u32 %v996, 16
      %v1361 = vrot.slane %v1359, 5
      %v1362 = vsel %vm1002, %v1357, %v1361
      %v1364 = vshrl.u32 %v997, 16
      %v1366 = vrot.slane %v1364, 4
      %v1367 = vshll.u32 %v997, 16
      %v1369 = vrot.slane %v1367, 5
      %v1370 = vor.u32 %v1366, %v1369
      %v1371 = vrot.slane %v1370, 4
      %v1373 = vshll.u32 %v998, 16
      %v1375 = vrot.slane %v1373, 5
      %v1376 = vsel %vm1002, %v1371, %v1375
      %v1377 = vshrl.u32 %v998, 16
      %v1379 = vrot.slane %v1377, 4
      %v1380 = vor.u32 %v1379, %v1375
      %v1381 = vrot.slane %v1380, 4
      %v1383 = vshll.u32 %v999, 16
      %v1385 = vrot.slane %v1383, 5
      %v1386 = vsel %vm1002, %v1381, %v1385
      %v1387 = vunpack.c.l.b16 %v1016
      %v1388 = vunpack.c.l.b16 %v1026
      %v1389 = vunpack.c.l.b16 %v1040
      %v1390 = vunpack.c.l.b16 %v1050
      %v1391 = vunpack.c.l.b16 %v1064
      %v1392 = vunpack.c.l.b16 %v1074
      %v1393 = vunpack.c.l.b16 %v1088
      %v1394 = vunpack.c.l.b16 %v1098
      %v1395 = vunpack.c.l.b16 %v1112
      %v1396 = vunpack.c.l.b16 %v1122
      %v1397 = vunpack.c.l.b16 %v1136
      %v1398 = vunpack.c.l.b16 %v1146
      %v1399 = vunpack.c.l.b16 %v1160
      %v1400 = vunpack.c.l.b16 %v1170
      %v1401 = vunpack.c.l.b16 %v1184
      %v1402 = vunpack.c.l.b16 %v1194
      %v1403 = vunpack.c.l.b16 %v1208
      %v1404 = vunpack.c.l.b16 %v1218
      %v1405 = vunpack.c.l.b16 %v1232
      %v1406 = vunpack.c.l.b16 %v1242
      %v1407 = vunpack.c.l.b16 %v1256
      %v1408 = vunpack.c.l.b16 %v1266
      %v1409 = vunpack.c.l.b16 %v1280
      %v1410 = vunpack.c.l.b16 %v1290
      %v1411 = vunpack.c.l.b16 %v1304
      %v1412 = vunpack.c.l.b16 %v1314
      %v1413 = vunpack.c.l.b16 %v1328
      %v1414 = vunpack.c.l.b16 %v1338
      %v1415 = vunpack.c.l.b16 %v1352
      %v1416 = vunpack.c.l.b16 %v1362
      %v1417 = vunpack.c.l.b16 %v1376
      %v1418 = vunpack.c.l.b16 %v1386
      %v1419 = vpack.c.b16 %v1388, %v1387
      %v1420 = vpack.c.b16 %v1390, %v1389
      %v1421 = vpack.c.b16 %v1392, %v1391
      %v1422 = vpack.c.b16 %v1394, %v1393
      %v1423 = vpack.c.b16 %v1396, %v1395
      %v1424 = vpack.c.b16 %v1398, %v1397
      %v1425 = vpack.c.b16 %v1400, %v1399
      %v1426 = vpack.c.b16 %v1402, %v1401
      %v1427 = vpack.c.b16 %v1404, %v1403
      %v1428 = vpack.c.b16 %v1406, %v1405
      %v1429 = vpack.c.b16 %v1408, %v1407
      %v1430 = vpack.c.b16 %v1410, %v1409
      %v1431 = vpack.c.b16 %v1412, %v1411
      %v1432 = vpack.c.b16 %v1414, %v1413
      %v1433 = vpack.c.b16 %v1416, %v1415
      %v1434 = vpack.c.b16 %v1418, %v1417
      %1435 = vrot.lane.b32.xlu0 %v1419, 4
      %v1436 = vpop.permute.xlu0 %1435
      %1437 = vrot.lane.b32.xlu0 %v1420, 4
      %v1438 = vpop.permute.xlu0 %1437
      %1439 = vrot.lane.b32.xlu0 %v1421, 4
      %v1440 = vpop.permute.xlu0 %1439
      %1441 = vrot.lane.b32.xlu0 %v1422, 4
      %v1442 = vpop.permute.xlu0 %1441
      %1443 = vrot.lane.b32.xlu0 %v1423, 4
      %v1444 = vpop.permute.xlu0 %1443
      %1445 = vrot.lane.b32.xlu0 %v1424, 4
      %v1446 = vpop.permute.xlu0 %1445
      %1447 = vrot.lane.b32.xlu0 %v1425, 4
      %v1448 = vpop.permute.xlu0 %1447
      %1449 = vrot.lane.b32.xlu0 %v1426, 4
      %v1450 = vpop.permute.xlu0 %1449
      %1451 = vrot.lane.b32.xlu0 %v1427, 4
      %v1452 = vpop.permute.xlu0 %1451
      %1453 = vrot.lane.b32.xlu0 %v1428, 4
      %v1454 = vpop.permute.xlu0 %1453
      %1455 = vrot.lane.b32.xlu0 %v1429, 4
      %v1456 = vpop.permute.xlu0 %1455
      %1457 = vrot.lane.b32.xlu0 %v1430, 4
      %v1458 = vpop.permute.xlu0 %1457
      %1459 = vrot.lane.b32.xlu0 %v1431, 4
      %v1460 = vpop.permute.xlu0 %1459
      %1461 = vrot.lane.b32.xlu0 %v1432, 4
      %v1462 = vpop.permute.xlu0 %1461
      %1463 = vrot.lane.b32.xlu0 %v1433, 4
      %v1464 = vpop.permute.xlu0 %1463
      %1465 = vrot.lane.b32.xlu0 %v1434, 4
      %v1466 = vpop.permute.xlu0 %1465
      %vm1483 = vcmask 64544
      %1484 = vst.msk [vmem:[#allocation3] sm:$0xff] %vm1483, %v1436
      %1485 = vst.msk [vmem:[#allocation3 + $0x8] sm:$0xff] %vm1483, %v1438
      %1486 = vst.msk [vmem:[#allocation3 + $0x10] sm:$0xff] %vm1483, %v1440
      %1487 = vst.msk [vmem:[#allocation3 + $0x18] sm:$0xff] %vm1483, %v1442
      %1488 = vst.msk [vmem:[#allocation3 + $0x20] sm:$0xff] %vm1483, %v1444
      %1489 = vst.msk [vmem:[#allocation3 + $0x28] sm:$0xff] %vm1483, %v1446
      %1490 = vst.msk [vmem:[#allocation3 + $0x30] sm:$0xff] %vm1483, %v1448
      %1491 = vst.msk [vmem:[#allocation3 + $0x38] sm:$0xff] %vm1483, %v1450
      %1492 = vst.msk [vmem:[#allocation3 + $0x40] sm:$0xff] %vm1483, %v1452
      %1493 = vst.msk [vmem:[#allocation3 + $0x48] sm:$0xff] %vm1483, %v1454
      %1494 = vst.msk [vmem:[#allocation3 + $0x50] sm:$0xff] %vm1483, %v1456
      %1495 = vst.msk [vmem:[#allocation3 + $0x58] sm:$0xff] %vm1483, %v1458
      %1496 = vst.msk [vmem:[#allocation3 + $0x60] sm:$0xff] %vm1483, %v1460
      %1497 = vst.msk [vmem:[#allocation3 + $0x68] sm:$0xff] %vm1483, %v1462
      %1498 = vst.msk [vmem:[#allocation3 + $0x70] sm:$0xff] %vm1483, %v1464
      %1499 = vst.msk [vmem:[#allocation3 + $0x78] sm:$0xff] %vm1483, %v1466
      %v1500 = vld [vmem:[#allocation2] sm:$0xe]
      %v1501 = vld [vmem:[#allocation2 + $0x4] sm:$0xf]
      %v1502 = vld [vmem:[#allocation2 + $0x8] sm:$0x1]
      %v1503 = vld [vmem:[#allocation2 + $0xc] sm:$0xe]
      %v1504 = vld [vmem:[#allocation2 + $0x10] sm:$0xf]
      %v1505 = vld [vmem:[#allocation2 + $0x14] sm:$0x1]
      %v1506 = vld [vmem:[#allocation2 + $0x18] sm:$0xe]
      %v1507 = vld [vmem:[#allocation2 + $0x1c] sm:$0xf]
      %v1508 = vld [vmem:[#allocation2 + $0x20] sm:$0x1]
      %v1509 = vld [vmem:[#allocation2 + $0x24] sm:$0xe]
      %v1510 = vld [vmem:[#allocation2 + $0x28] sm:$0xf]
      %v1511 = vld [vmem:[#allocation2 + $0x2c] sm:$0x1]
      %v1512 = vld [vmem:[#allocation2 + $0x30] sm:$0xe]
      %v1513 = vld [vmem:[#allocation2 + $0x34] sm:$0xf]
      %v1514 = vld [vmem:[#allocation2 + $0x38] sm:$0x1]
      %v1515 = vld [vmem:[#allocation2 + $0x3c] sm:$0xe]
      %v1516 = vld [vmem:[#allocation2 + $0x40] sm:$0xf]
      %v1517 = vld [vmem:[#allocation2 + $0x44] sm:$0x1]
      %v1518 = vld [vmem:[#allocation2 + $0x48] sm:$0xe]
      %v1519 = vld [vmem:[#allocation2 + $0x4c] sm:$0xf]
      %v1520 = vld [vmem:[#allocation2 + $0x50] sm:$0x1]
      %v1521 = vld [vmem:[#allocation2 + $0x54] sm:$0xe]
      %v1522 = vld [vmem:[#allocation2 + $0x58] sm:$0xf]
      %v1523 = vld [vmem:[#allocation2 + $0x5c] sm:$0x1]
      %v1524 = vld [vmem:[#allocation2 + $0x60] sm:$0xe]
      %v1525 = vld [vmem:[#allocation2 + $0x64] sm:$0xf]
      %v1526 = vld [vmem:[#allocation2 + $0x68] sm:$0x1]
      %v1527 = vld [vmem:[#allocation2 + $0x6c] sm:$0xe]
      %v1528 = vld [vmem:[#allocation2 + $0x70] sm:$0xf]
      %v1529 = vld [vmem:[#allocation2 + $0x74] sm:$0x1]
      %v1530 = vld [vmem:[#allocation2 + $0x78] sm:$0xe]
      %v1531 = vld [vmem:[#allocation2 + $0x7c] sm:$0xf]
      %v1532 = vld [vmem:[#allocation2 + $0x80] sm:$0x1]
      %v1533 = vld [vmem:[#allocation2 + $0x84] sm:$0xe]
      %v1534 = vld [vmem:[#allocation2 + $0x88] sm:$0xf]
      %v1535 = vld [vmem:[#allocation2 + $0x8c] sm:$0x1]
      %v1536 = vld [vmem:[#allocation2 + $0x90] sm:$0xe]
      %v1537 = vld [vmem:[#allocation2 + $0x94] sm:$0xf]
      %v1538 = vld [vmem:[#allocation2 + $0x98] sm:$0x1]
      %v1539 = vld [vmem:[#allocation2 + $0x9c] sm:$0xe]
      %v1540 = vld [vmem:[#allocation2 + $0xa0] sm:$0xf]
      %v1541 = vld [vmem:[#allocation2 + $0xa4] sm:$0x1]
      %v1542 = vld [vmem:[#allocation2 + $0xa8] sm:$0xe]
      %v1543 = vld [vmem:[#allocation2 + $0xac] sm:$0xf]
      %v1544 = vld [vmem:[#allocation2 + $0xb0] sm:$0x1]
      %v1545 = vld [vmem:[#allocation2 + $0xb4] sm:$0xe]
      %v1546 = vld [vmem:[#allocation2 + $0xb8] sm:$0xf]
      %v1547 = vld [vmem:[#allocation2 + $0xbc] sm:$0x1]
      %vm1596 = vcmask 1042432
      %vm1597 = vcmask 1046532
      %vm1598 = vmor %vm1596, %vm1597
      %v1599 = vrot.slane %v1500, 5
      %v1600 = vrot.slane %v1599, 4
      %v1601 = vrot.slane %v1501, 5
      %v1602 = vsel %vm1598, %v1600, %v1601
      %v1603 = vrot.slane %v1601, 4
      %v1604 = vrot.slane %v1502, 5
      %v1605 = vsel %vm1598, %v1603, %v1604
      %v1606 = vrot.slane %v1503, 5
      %v1607 = vrot.slane %v1606, 4
      %v1608 = vrot.slane %v1504, 5
      %v1609 = vsel %vm1598, %v1607, %v1608
      %v1610 = vrot.slane %v1608, 4
      %v1611 = vrot.slane %v1505, 5
      %v1612 = vsel %vm1598, %v1610, %v1611
      %v1613 = vrot.slane %v1506, 5
      %v1614 = vrot.slane %v1613, 4
      %v1615 = vrot.slane %v1507, 5
      %v1616 = vsel %vm1598, %v1614, %v1615
      %v1617 = vrot.slane %v1615, 4
      %v1618 = vrot.slane %v1508, 5
      %v1619 = vsel %vm1598, %v1617, %v1618
      %v1620 = vrot.slane %v1509, 5
      %v1621 = vrot.slane %v1620, 4
      %v1622 = vrot.slane %v1510, 5
      %v1623 = vsel %vm1598, %v1621, %v1622
      %v1624 = vrot.slane %v1622, 4
      %v1625 = vrot.slane %v1511, 5
      %v1626 = vsel %vm1598, %v1624, %v1625
      %v1627 = vrot.slane %v1512, 5
      %v1628 = vrot.slane %v1627, 4
      %v1629 = vrot.slane %v1513, 5
      %v1630 = vsel %vm1598, %v1628, %v1629
      %v1631 = vrot.slane %v1629, 4
      %v1632 = vrot.slane %v1514, 5
      %v1633 = vsel %vm1598, %v1631, %v1632
      %v1634 = vrot.slane %v1515, 5
      %v1635 = vrot.slane %v1634, 4
      %v1636 = vrot.slane %v1516, 5
      %v1637 = vsel %vm1598, %v1635, %v1636
      %v1638 = vrot.slane %v1636, 4
      %v1639 = vrot.slane %v1517, 5
      %v1640 = vsel %vm1598, %v1638, %v1639
      %v1641 = vrot.slane %v1518, 5
      %v1642 = vrot.slane %v1641, 4
      %v1643 = vrot.slane %v1519, 5
      %v1644 = vsel %vm1598, %v1642, %v1643
      %v1645 = vrot.slane %v1643, 4
      %v1646 = vrot.slane %v1520, 5
      %v1647 = vsel %vm1598, %v1645, %v1646
      %v1648 = vrot.slane %v1521, 5
      %v1649 = vrot.slane %v1648, 4
      %v1650 = vrot.slane %v1522, 5
      %v1651 = vsel %vm1598, %v1649, %v1650
      %v1652 = vrot.slane %v1650, 4
      %v1653 = vrot.slane %v1523, 5
      %v1654 = vsel %vm1598, %v1652, %v1653
      %v1655 = vrot.slane %v1524, 5
      %v1656 = vrot.slane %v1655, 4
      %v1657 = vrot.slane %v1525, 5
      %v1658 = vsel %vm1598, %v1656, %v1657
      %v1659 = vrot.slane %v1657, 4
      %v1660 = vrot.slane %v1526, 5
      %v1661 = vsel %vm1598, %v1659, %v1660
      %v1662 = vrot.slane %v1527, 5
      %v1663 = vrot.slane %v1662, 4
      %v1664 = vrot.slane %v1528, 5
      %v1665 = vsel %vm1598, %v1663, %v1664
      %v1666 = vrot.slane %v1664, 4
      %v1667 = vrot.slane %v1529, 5
      %v1668 = vsel %vm1598, %v1666, %v1667
      %v1669 = vrot.slane %v1530, 5
      %v1670 = vrot.slane %v1669, 4
      %v1671 = vrot.slane %v1531, 5
      %v1672 = vsel %vm1598, %v1670, %v1671
      %v1673 = vrot.slane %v1671, 4
      %v1674 = vrot.slane %v1532, 5
      %v1675 = vsel %vm1598, %v1673, %v1674
      %v1676 = vrot.slane %v1533, 5
      %v1677 = vrot.slane %v1676, 4
      %v1678 = vrot.slane %v1534, 5
      %v1679 = vsel %vm1598, %v1677, %v1678
      %v1680 = vrot.slane %v1678, 4
      %v1681 = vrot.slane %v1535, 5
      %v1682 = vsel %vm1598, %v1680, %v1681
      %v1683 = vrot.slane %v1536, 5
      %v1684 = vrot.slane %v1683, 4
      %v1685 = vrot.slane %v1537, 5
      %v1686 = vsel %vm1598, %v1684, %v1685
      %v1687 = vrot.slane %v1685, 4
      %v1688 = vrot.slane %v1538, 5
      %v1689 = vsel %vm1598, %v1687, %v1688
      %v1690 = vrot.slane %v1539, 5
      %v1691 = vrot.slane %v1690, 4
      %v1692 = vrot.slane %v1540, 5
      %v1693 = vsel %vm1598, %v1691, %v1692
      %v1694 = vrot.slane %v1692, 4
      %v1695 = vrot.slane %v1541, 5
      %v1696 = vsel %vm1598, %v1694, %v1695
      %v1697 = vrot.slane %v1542, 5
      %v1698 = vrot.slane %v1697, 4
      %v1699 = vrot.slane %v1543, 5
      %v1700 = vsel %vm1598, %v1698, %v1699
      %v1701 = vrot.slane %v1699, 4
      %v1702 = vrot.slane %v1544, 5
      %v1703 = vsel %vm1598, %v1701, %v1702
      %v1704 = vrot.slane %v1545, 5
      %v1705 = vrot.slane %v1704, 4
      %v1706 = vrot.slane %v1546, 5
      %v1707 = vsel %vm1598, %v1705, %v1706
      %v1708 = vrot.slane %v1706, 4
      %v1709 = vrot.slane %v1547, 5
      %v1710 = vsel %vm1598, %v1708, %v1709
      %v1711 = vunpack.c.l.b16 %v1602
      %v1712 = vunpack.c.l.b16 %v1605
      %v1713 = vunpack.c.l.b16 %v1609
      %v1714 = vunpack.c.l.b16 %v1612
      %v1715 = vunpack.c.l.b16 %v1616
      %v1716 = vunpack.c.l.b16 %v1619
      %v1717 = vunpack.c.l.b16 %v1623
      %v1718 = vunpack.c.l.b16 %v1626
      %v1719 = vunpack.c.l.b16 %v1630
      %v1720 = vunpack.c.l.b16 %v1633
      %v1721 = vunpack.c.l.b16 %v1637
      %v1722 = vunpack.c.l.b16 %v1640
      %v1723 = vunpack.c.l.b16 %v1644
      %v1724 = vunpack.c.l.b16 %v1647
      %v1725 = vunpack.c.l.b16 %v1651
      %v1726 = vunpack.c.l.b16 %v1654
      %v1727 = vunpack.c.l.b16 %v1658
      %v1728 = vunpack.c.l.b16 %v1661
      %v1729 = vunpack.c.l.b16 %v1665
      %v1730 = vunpack.c.l.b16 %v1668
      %v1731 = vunpack.c.l.b16 %v1672
      %v1732 = vunpack.c.l.b16 %v1675
      %v1733 = vunpack.c.l.b16 %v1679
      %v1734 = vunpack.c.l.b16 %v1682
      %v1735 = vunpack.c.l.b16 %v1686
      %v1736 = vunpack.c.l.b16 %v1689
      %v1737 = vunpack.c.l.b16 %v1693
      %v1738 = vunpack.c.l.b16 %v1696
      %v1739 = vunpack.c.l.b16 %v1700
      %v1740 = vunpack.c.l.b16 %v1703
      %v1741 = vunpack.c.l.b16 %v1707
      %v1742 = vunpack.c.l.b16 %v1710
      %v1743 = vpack.c.b16 %v1712, %v1711
      %v1744 = vpack.c.b16 %v1714, %v1713
      %v1745 = vpack.c.b16 %v1716, %v1715
      %v1746 = vpack.c.b16 %v1718, %v1717
      %v1747 = vpack.c.b16 %v1720, %v1719
      %v1748 = vpack.c.b16 %v1722, %v1721
      %v1749 = vpack.c.b16 %v1724, %v1723
      %v1750 = vpack.c.b16 %v1726, %v1725
      %v1751 = vpack.c.b16 %v1728, %v1727
      %v1752 = vpack.c.b16 %v1730, %v1729
      %v1753 = vpack.c.b16 %v1732, %v1731
      %v1754 = vpack.c.b16 %v1734, %v1733
      %v1755 = vpack.c.b16 %v1736, %v1735
      %v1756 = vpack.c.b16 %v1738, %v1737
      %v1757 = vpack.c.b16 %v1740, %v1739
      %v1758 = vpack.c.b16 %v1742, %v1741
      %1759 = vrot.lane.b32.xlu0 %v1743, 8
      %v1760 = vpop.permute.xlu0 %1759
      %1761 = vrot.lane.b32.xlu0 %v1744, 8
      %v1762 = vpop.permute.xlu0 %1761
      %1763 = vrot.lane.b32.xlu0 %v1745, 8
      %v1764 = vpop.permute.xlu0 %1763
      %1765 = vrot.lane.b32.xlu0 %v1746, 8
      %v1766 = vpop.permute.xlu0 %1765
      %1767 = vrot.lane.b32.xlu0 %v1747, 8
      %v1768 = vpop.permute.xlu0 %1767
      %1769 = vrot.lane.b32.xlu0 %v1748, 8
      %v1770 = vpop.permute.xlu0 %1769
      %1771 = vrot.lane.b32.xlu0 %v1749, 8
      %v1772 = vpop.permute.xlu0 %1771
      %1773 = vrot.lane.b32.xlu0 %v1750, 8
      %v1774 = vpop.permute.xlu0 %1773
      %1775 = vrot.lane.b32.xlu0 %v1751, 8
      %v1776 = vpop.permute.xlu0 %1775
      %1777 = vrot.lane.b32.xlu0 %v1752, 8
      %v1778 = vpop.permute.xlu0 %1777
      %1779 = vrot.lane.b32.xlu0 %v1753, 8
      %v1780 = vpop.permute.xlu0 %1779
      %1781 = vrot.lane.b32.xlu0 %v1754, 8
      %v1782 = vpop.permute.xlu0 %1781
      %1783 = vrot.lane.b32.xlu0 %v1755, 8
      %v1784 = vpop.permute.xlu0 %1783
      %1785 = vrot.lane.b32.xlu0 %v1756, 8
      %v1786 = vpop.permute.xlu0 %1785
      %1787 = vrot.lane.b32.xlu0 %v1757, 8
      %v1788 = vpop.permute.xlu0 %1787
      %1789 = vrot.lane.b32.xlu0 %v1758, 8
      %v1790 = vpop.permute.xlu0 %1789
      %vm1807 = vcmask 97344
      %1808 = vst.msk [vmem:[#allocation3] sm:$0xff] %vm1807, %v1760
      %1809 = vst.msk [vmem:[#allocation3 + $0x8] sm:$0xff] %vm1807, %v1762
      %1810 = vst.msk [vmem:[#allocation3 + $0x10] sm:$0xff] %vm1807, %v1764
      %1811 = vst.msk [vmem:[#allocation3 + $0x18] sm:$0xff] %vm1807, %v1766
      %1812 = vst.msk [vmem:[#allocation3 + $0x20] sm:$0xff] %vm1807, %v1768
      %1813 = vst.msk [vmem:[#allocation3 + $0x28] sm:$0xff] %vm1807, %v1770
      %1814 = vst.msk [vmem:[#allocation3 + $0x30] sm:$0xff] %vm1807, %v1772
      %1815 = vst.msk [vmem:[#allocation3 + $0x38] sm:$0xff] %vm1807, %v1774
      %1816 = vst.msk [vmem:[#allocation3 + $0x40] sm:$0xff] %vm1807, %v1776
      %1817 = vst.msk [vmem:[#allocation3 + $0x48] sm:$0xff] %vm1807, %v1778
      %1818 = vst.msk [vmem:[#allocation3 + $0x50] sm:$0xff] %vm1807, %v1780
      %1819 = vst.msk [vmem:[#allocation3 + $0x58] sm:$0xff] %vm1807, %v1782
      %1820 = vst.msk [vmem:[#allocation3 + $0x60] sm:$0xff] %vm1807, %v1784
      %1821 = vst.msk [vmem:[#allocation3 + $0x68] sm:$0xff] %vm1807, %v1786
      %1822 = vst.msk [vmem:[#allocation3 + $0x70] sm:$0xff] %vm1807, %v1788
      %1823 = vst.msk [vmem:[#allocation3 + $0x78] sm:$0xff] %vm1807, %v1790
      %v1824 = vld [vmem:[#allocation3] sm:$0xff]
      %v1825 = vld [vmem:[#allocation3 + $0x8] sm:$0xff]
      %v1826 = vld [vmem:[#allocation3 + $0x10] sm:$0xff]
      %v1827 = vld [vmem:[#allocation3 + $0x18] sm:$0xff]
      %v1828 = vld [vmem:[#allocation3 + $0x20] sm:$0xff]
      %v1829 = vld [vmem:[#allocation3 + $0x28] sm:$0xff]
      %v1830 = vld [vmem:[#allocation3 + $0x30] sm:$0xff]
      %v1831 = vld [vmem:[#allocation3 + $0x38] sm:$0xff]
      %v1832 = vld [vmem:[#allocation3 + $0x40] sm:$0xff]
      %v1833 = vld [vmem:[#allocation3 + $0x48] sm:$0xff]
      %v1834 = vld [vmem:[#allocation3 + $0x50] sm:$0xff]
      %v1835 = vld [vmem:[#allocation3 + $0x58] sm:$0xff]
      %v1836 = vld [vmem:[#allocation3 + $0x60] sm:$0xff]
      %v1837 = vld [vmem:[#allocation3 + $0x68] sm:$0xff]
      %v1838 = vld [vmem:[#allocation3 + $0x70] sm:$0xff]
      %v1839 = vld [vmem:[#allocation3 + $0x78] sm:$0xff]
      %v1840 = vld [vmem:[%s1] sm:$0xf]
      %v1841 = vld [vmem:[%s1 + $0x4] sm:$0x3]
      %v1842 = vld [vmem:[%s692] sm:$0xf]
      %v1843 = vld [vmem:[%s692 + $0x4] sm:$0xf]
      %v1844 = vld [vmem:[%s692 + $0xc] sm:$0xf]
      %v1845 = vld [vmem:[%s692 + $0x10] sm:$0xf]
      %v1846 = vld [vmem:[%s692 + $0x18] sm:$0xf]
      %v1847 = vld [vmem:[%s692 + $0x1c] sm:$0xf]
      %v1848 = vld [vmem:[%s692 + $0x24] sm:$0xf]
      %v1849 = vld [vmem:[%s692 + $0x28] sm:$0xf]
      %v1850 = vld [vmem:[%s692 + $0x30] sm:$0xf]
      %v1851 = vld [vmem:[%s692 + $0x34] sm:$0xf]
      %v1852 = vld [vmem:[%s692 + $0x3c] sm:$0xf]
      %v1853 = vld [vmem:[%s692 + $0x40] sm:$0xf]
      %v1854 = vld [vmem:[%s692 + $0x48] sm:$0xf]
      %v1855 = vld [vmem:[%s692 + $0x4c] sm:$0xf]
      %v1856 = vld [vmem:[%s692 + $0x54] sm:$0xf]
      %v1857 = vld [vmem:[%s692 + $0x58] sm:$0xf]
      %v1858 = vld [vmem:[%s692 + $0x60] sm:$0xf]
      %v1859 = vld [vmem:[%s692 + $0x64] sm:$0xf]
      %v1860 = vld [vmem:[%s692 + $0x6c] sm:$0xf]
      %v1861 = vld [vmem:[%s692 + $0x70] sm:$0xf]
      %v1862 = vld [vmem:[%s692 + $0x78] sm:$0xf]
      %v1863 = vld [vmem:[%s692 + $0x7c] sm:$0xf]
      %v1864 = vld [vmem:[%s692 + $0x84] sm:$0xf]
      %v1865 = vld [vmem:[%s692 + $0x88] sm:$0xf]
      %v1866 = vld [vmem:[%s692 + $0x90] sm:$0xf]
      %v1867 = vld [vmem:[%s692 + $0x94] sm:$0xf]
      %v1868 = vld [vmem:[%s692 + $0x9c] sm:$0xf]
      %v1869 = vld [vmem:[%s692 + $0xa0] sm:$0xf]
      %v1870 = vld [vmem:[%s692 + $0xa8] sm:$0xf]
      %v1871 = vld [vmem:[%s692 + $0xac] sm:$0xf]
      %v1872 = vld [vmem:[%s692 + $0xb4] sm:$0xf]
      %v1873 = vld [vmem:[%s692 + $0xb8] sm:$0xf]
      %v1906 = vunpack.c.l.b16 %v1842
      %v1907 = vunpack.c.l.b16 %v1843
      %v1908 = vunpack.c.l.b16 %v1844
      %v1909 = vunpack.c.l.b16 %v1845
      %v1910 = vunpack.c.l.b16 %v1846
      %v1911 = vunpack.c.l.b16 %v1847
      %v1912 = vunpack.c.l.b16 %v1848
      %v1913 = vunpack.c.l.b16 %v1849
      %v1914 = vunpack.c.l.b16 %v1850
      %v1915 = vunpack.c.l.b16 %v1851
      %v1916 = vunpack.c.l.b16 %v1852
      %v1917 = vunpack.c.l.b16 %v1853
      %v1918 = vunpack.c.l.b16 %v1854
      %v1919 = vunpack.c.l.b16 %v1855
      %v1920 = vunpack.c.l.b16 %v1856
      %v1921 = vunpack.c.l.b16 %v1857
      %v1922 = vunpack.c.l.b16 %v1858
      %v1923 = vunpack.c.l.b16 %v1859
      %v1924 = vunpack.c.l.b16 %v1860
      %v1925 = vunpack.c.l.b16 %v1861
      %v1926 = vunpack.c.l.b16 %v1862
      %v1927 = vunpack.c.l.b16 %v1863
      %v1928 = vunpack.c.l.b16 %v1864
      %v1929 = vunpack.c.l.b16 %v1865
      %v1930 = vunpack.c.l.b16 %v1866
      %v1931 = vunpack.c.l.b16 %v1867
      %v1932 = vunpack.c.l.b16 %v1868
      %v1933 = vunpack.c.l.b16 %v1869
      %v1934 = vunpack.c.l.b16 %v1870
      %v1935 = vunpack.c.l.b16 %v1871
      %v1936 = vunpack.c.l.b16 %v1872
      %v1937 = vunpack.c.l.b16 %v1873
      %v1938 = vpack.c.b16 %v1907, %v1906
      %v1939 = vpack.c.b16 %v1909, %v1908
      %v1940 = vpack.c.b16 %v1911, %v1910
      %v1941 = vpack.c.b16 %v1913, %v1912
      %v1942 = vpack.c.b16 %v1915, %v1914
      %v1943 = vpack.c.b16 %v1917, %v1916
      %v1944 = vpack.c.b16 %v1919, %v1918
      %v1945 = vpack.c.b16 %v1921, %v1920
      %v1946 = vpack.c.b16 %v1923, %v1922
      %v1947 = vpack.c.b16 %v1925, %v1924
      %v1948 = vpack.c.b16 %v1927, %v1926
      %v1949 = vpack.c.b16 %v1929, %v1928
      %v1950 = vpack.c.b16 %v1931, %v1930
      %v1951 = vpack.c.b16 %v1933, %v1932
      %v1952 = vpack.c.b16 %v1935, %v1934
      %v1953 = vpack.c.b16 %v1937, %v1936
      %1970 = vst.msk [vmem:[#allocation3] sm:$0xff] %vm935, %v1938
      %1971 = vst.msk [vmem:[#allocation3 + $0x8] sm:$0xff] %vm935, %v1939
      %1972 = vst.msk [vmem:[#allocation3 + $0x10] sm:$0xff] %vm935, %v1940
      %1973 = vst.msk [vmem:[#allocation3 + $0x18] sm:$0xff] %vm935, %v1941
      %1974 = vst.msk [vmem:[#allocation3 + $0x20] sm:$0xff] %vm935, %v1942
      %1975 = vst.msk [vmem:[#allocation3 + $0x28] sm:$0xff] %vm935, %v1943
      %1976 = vst.msk [vmem:[#allocation3 + $0x30] sm:$0xff] %vm935, %v1944
      %1977 = vst.msk [vmem:[#allocation3 + $0x38] sm:$0xff] %vm935, %v1945
      %1978 = vst.msk [vmem:[#allocation3 + $0x40] sm:$0xff] %vm935, %v1946
      %1979 = vst.msk [vmem:[#allocation3 + $0x48] sm:$0xff] %vm935, %v1947
      %1980 = vst.msk [vmem:[#allocation3 + $0x50] sm:$0xff] %vm935, %v1948
      %1981 = vst.msk [vmem:[#allocation3 + $0x58] sm:$0xff] %vm935, %v1949
      %1982 = vst.msk [vmem:[#allocation3 + $0x60] sm:$0xff] %vm935, %v1950
      %1983 = vst.msk [vmem:[#allocation3 + $0x68] sm:$0xff] %vm935, %v1951
      %1984 = vst.msk [vmem:[#allocation3 + $0x70] sm:$0xff] %vm935, %v1952
      %1985 = vst.msk [vmem:[#allocation3 + $0x78] sm:$0xff] %vm935, %v1953
      %v1986 = vld [vmem:[%s692] sm:$0xf]
      %v1987 = vld [vmem:[%s692 + $0x4] sm:$0xf]
      %v1988 = vld [vmem:[%s692 + $0x8] sm:$0x1]
      %v1989 = vld [vmem:[%s692 + $0xc] sm:$0xf]
      %v1990 = vld [vmem:[%s692 + $0x10] sm:$0xf]
      %v1991 = vld [vmem:[%s692 + $0x14] sm:$0x1]
      %v1992 = vld [vmem:[%s692 + $0x18] sm:$0xf]
      %v1993 = vld [vmem:[%s692 + $0x1c] sm:$0xf]
      %v1994 = vld [vmem:[%s692 + $0x20] sm:$0x1]
      %v1995 = vld [vmem:[%s692 + $0x24] sm:$0xf]
      %v1996 = vld [vmem:[%s692 + $0x28] sm:$0xf]
      %v1997 = vld [vmem:[%s692 + $0x2c] sm:$0x1]
      %v1998 = vld [vmem:[%s692 + $0x30] sm:$0xf]
      %v1999 = vld [vmem:[%s692 + $0x34] sm:$0xf]
      %v2000 = vld [vmem:[%s692 + $0x38] sm:$0x1]
      %v2001 = vld [vmem:[%s692 + $0x3c] sm:$0xf]
      %v2002 = vld [vmem:[%s692 + $0x40] sm:$0xf]
      %v2003 = vld [vmem:[%s692 + $0x44] sm:$0x1]
      %v2004 = vld [vmem:[%s692 + $0x48] sm:$0xf]
      %v2005 = vld [vmem:[%s692 + $0x4c] sm:$0xf]
      %v2006 = vld [vmem:[%s692 + $0x50] sm:$0x1]
      %v2007 = vld [vmem:[%s692 + $0x54] sm:$0xf]
      %v2008 = vld [vmem:[%s692 + $0x58] sm:$0xf]
      %v2009 = vld [vmem:[%s692 + $0x5c] sm:$0x1]
      %v2010 = vld [vmem:[%s692 + $0x60] sm:$0xf]
      %v2011 = vld [vmem:[%s692 + $0x64] sm:$0xf]
      %v2012 = vld [vmem:[%s692 + $0x68] sm:$0x1]
      %v2013 = vld [vmem:[%s692 + $0x6c] sm:$0xf]
      %v2014 = vld [vmem:[%s692 + $0x70] sm:$0xf]
      %v2015 = vld [vmem:[%s692 + $0x74] sm:$0x1]
      %v2016 = vld [vmem:[%s692 + $0x78] sm:$0xf]
      %v2017 = vld [vmem:[%s692 + $0x7c] sm:$0xf]
      %v2018 = vld [vmem:[%s692 + $0x80] sm:$0x1]
      %v2019 = vld [vmem:[%s692 + $0x84] sm:$0xf]
      %v2020 = vld [vmem:[%s692 + $0x88] sm:$0xf]
      %v2021 = vld [vmem:[%s692 + $0x8c] sm:$0x1]
      %v2022 = vld [vmem:[%s692 + $0x90] sm:$0xf]
      %v2023 = vld [vmem:[%s692 + $0x94] sm:$0xf]
      %v2024 = vld [vmem:[%s692 + $0x98] sm:$0x1]
      %v2025 = vld [vmem:[%s692 + $0x9c] sm:$0xf]
      %v2026 = vld [vmem:[%s692 + $0xa0] sm:$0xf]
      %v2027 = vld [vmem:[%s692 + $0xa4] sm:$0x1]
      %v2028 = vld [vmem:[%s692 + $0xa8] sm:$0xf]
      %v2029 = vld [vmem:[%s692 + $0xac] sm:$0xf]
      %v2030 = vld [vmem:[%s692 + $0xb0] sm:$0x1]
      %v2031 = vld [vmem:[%s692 + $0xb4] sm:$0xf]
      %v2032 = vld [vmem:[%s692 + $0xb8] sm:$0xf]
      %v2033 = vld [vmem:[%s692 + $0xbc] sm:$0x1]
      %v2035 = vshrl.u32 %v1986, 16
      %v2037 = vrot.slane %v2035, 4
      %v2038 = vshll.u32 %v1986, 16
      %v2040 = vrot.slane %v2038, 5
      %v2041 = vor.u32 %v2037, %v2040
      %v2042 = vrot.slane %v2041, 4
      %v2044 = vshll.u32 %v1987, 16
      %v2046 = vrot.slane %v2044, 5
      %v2047 = vsel %vm1002, %v2042, %v2046
      %v2048 = vshrl.u32 %v1987, 16
      %v2050 = vrot.slane %v2048, 4
      %v2051 = vor.u32 %v2050, %v2046
      %v2052 = vrot.slane %v2051, 4
      %v2054 = vshll.u32 %v1988, 16
      %v2056 = vrot.slane %v2054, 5
      %v2057 = vsel %vm1002, %v2052, %v2056
      %v2059 = vshrl.u32 %v1989, 16
      %v2061 = vrot.slane %v2059, 4
      %v2062 = vshll.u32 %v1989, 16
      %v2064 = vrot.slane %v2062, 5
      %v2065 = vor.u32 %v2061, %v2064
      %v2066 = vrot.slane %v2065, 4
      %v2068 = vshll.u32 %v1990, 16
      %v2070 = vrot.slane %v2068, 5
      %v2071 = vsel %vm1002, %v2066, %v2070
      %v2072 = vshrl.u32 %v1990, 16
      %v2074 = vrot.slane %v2072, 4
      %v2075 = vor.u32 %v2074, %v2070
      %v2076 = vrot.slane %v2075, 4
      %v2078 = vshll.u32 %v1991, 16
      %v2080 = vrot.slane %v2078, 5
      %v2081 = vsel %vm1002, %v2076, %v2080
      %v2083 = vshrl.u32 %v1992, 16
      %v2085 = vrot.slane %v2083, 4
      %v2086 = vshll.u32 %v1992, 16
      %v2088 = vrot.slane %v2086, 5
      %v2089 = vor.u32 %v2085, %v2088
      %v2090 = vrot.slane %v2089, 4
      %v2092 = vshll.u32 %v1993, 16
      %v2094 = vrot.slane %v2092, 5
      %v2095 = vsel %vm1002, %v2090, %v2094
      %v2096 = vshrl.u32 %v1993, 16
      %v2098 = vrot.slane %v2096, 4
      %v2099 = vor.u32 %v2098, %v2094
      %v2100 = vrot.slane %v2099, 4
      %v2102 = vshll.u32 %v1994, 16
      %v2104 = vrot.slane %v2102, 5
      %v2105 = vsel %vm1002, %v2100, %v2104
      %v2107 = vshrl.u32 %v1995, 16
      %v2109 = vrot.slane %v2107, 4
      %v2110 = vshll.u32 %v1995, 16
      %v2112 = vrot.slane %v2110, 5
      %v2113 = vor.u32 %v2109, %v2112
      %v2114 = vrot.slane %v2113, 4
      %v2116 = vshll.u32 %v1996, 16
      %v2118 = vrot.slane %v2116, 5
      %v2119 = vsel %vm1002, %v2114, %v2118
      %v2120 = vshrl.u32 %v1996, 16
      %v2122 = vrot.slane %v2120, 4
      %v2123 = vor.u32 %v2122, %v2118
      %v2124 = vrot.slane %v2123, 4
      %v2126 = vshll.u32 %v1997, 16
      %v2128 = vrot.slane %v2126, 5
      %v2129 = vsel %vm1002, %v2124, %v2128
      %v2131 = vshrl.u32 %v1998, 16
      %v2133 = vrot.slane %v2131, 4
      %v2134 = vshll.u32 %v1998, 16
      %v2136 = vrot.slane %v2134, 5
      %v2137 = vor.u32 %v2133, %v2136
      %v2138 = vrot.slane %v2137, 4
      %v2140 = vshll.u32 %v1999, 16
      %v2142 = vrot.slane %v2140, 5
      %v2143 = vsel %vm1002, %v2138, %v2142
      %v2144 = vshrl.u32 %v1999, 16
      %v2146 = vrot.slane %v2144, 4
      %v2147 = vor.u32 %v2146, %v2142
      %v2148 = vrot.slane %v2147, 4
      %v2150 = vshll.u32 %v2000, 16
      %v2152 = vrot.slane %v2150, 5
      %v2153 = vsel %vm1002, %v2148, %v2152
      %v2155 = vshrl.u32 %v2001, 16
      %v2157 = vrot.slane %v2155, 4
      %v2158 = vshll.u32 %v2001, 16
      %v2160 = vrot.slane %v2158, 5
      %v2161 = vor.u32 %v2157, %v2160
      %v2162 = vrot.slane %v2161, 4
      %v2164 = vshll.u32 %v2002, 16
      %v2166 = vrot.slane %v2164, 5
      %v2167 = vsel %vm1002, %v2162, %v2166
      %v2168 = vshrl.u32 %v2002, 16
      %v2170 = vrot.slane %v2168, 4
      %v2171 = vor.u32 %v2170, %v2166
      %v2172 = vrot.slane %v2171, 4
      %v2174 = vshll.u32 %v2003, 16
      %v2176 = vrot.slane %v2174, 5
      %v2177 = vsel %vm1002, %v2172, %v2176
      %v2179 = vshrl.u32 %v2004, 16
      %v2181 = vrot.slane %v2179, 4
      %v2182 = vshll.u32 %v2004, 16
      %v2184 = vrot.slane %v2182, 5
      %v2185 = vor.u32 %v2181, %v2184
      %v2186 = vrot.slane %v2185, 4
      %v2188 = vshll.u32 %v2005, 16
      %v2190 = vrot.slane %v2188, 5
      %v2191 = vsel %vm1002, %v2186, %v2190
      %v2192 = vshrl.u32 %v2005, 16
      %v2194 = vrot.slane %v2192, 4
      %v2195 = vor.u32 %v2194, %v2190
      %v2196 = vrot.slane %v2195, 4
      %v2198 = vshll.u32 %v2006, 16
      %v2200 = vrot.slane %v2198, 5
      %v2201 = vsel %vm1002, %v2196, %v2200
      %v2203 = vshrl.u32 %v2007, 16
      %v2205 = vrot.slane %v2203, 4
      %v2206 = vshll.u32 %v2007, 16
      %v2208 = vrot.slane %v2206, 5
      %v2209 = vor.u32 %v2205, %v2208
      %v2210 = vrot.slane %v2209, 4
      %v2212 = vshll.u32 %v2008, 16
      %v2214 = vrot.slane %v2212, 5
      %v2215 = vsel %vm1002, %v2210, %v2214
      %v2216 = vshrl.u32 %v2008, 16
      %v2218 = vrot.slane %v2216, 4
      %v2219 = vor.u32 %v2218, %v2214
      %v2220 = vrot.slane %v2219, 4
      %v2222 = vshll.u32 %v2009, 16
      %v2224 = vrot.slane %v2222, 5
      %v2225 = vsel %vm1002, %v2220, %v2224
      %v2227 = vshrl.u32 %v2010, 16
      %v2229 = vrot.slane %v2227, 4
      %v2230 = vshll.u32 %v2010, 16
      %v2232 = vrot.slane %v2230, 5
      %v2233 = vor.u32 %v2229, %v2232
      %v2234 = vrot.slane %v2233, 4
      %v2236 = vshll.u32 %v2011, 16
      %v2238 = vrot.slane %v2236, 5
      %v2239 = vsel %vm1002, %v2234, %v2238
      %v2240 = vshrl.u32 %v2011, 16
      %v2242 = vrot.slane %v2240, 4
      %v2243 = vor.u32 %v2242, %v2238
      %v2244 = vrot.slane %v2243, 4
      %v2246 = vshll.u32 %v2012, 16
      %v2248 = vrot.slane %v2246, 5
      %v2249 = vsel %vm1002, %v2244, %v2248
      %v2251 = vshrl.u32 %v2013, 16
      %v2253 = vrot.slane %v2251, 4
      %v2254 = vshll.u32 %v2013, 16
      %v2256 = vrot.slane %v2254, 5
      %v2257 = vor.u32 %v2253, %v2256
      %v2258 = vrot.slane %v2257, 4
      %v2260 = vshll.u32 %v2014, 16
      %v2262 = vrot.slane %v2260, 5
      %v2263 = vsel %vm1002, %v2258, %v2262
      %v2264 = vshrl.u32 %v2014, 16
      %v2266 = vrot.slane %v2264, 4
      %v2267 = vor.u32 %v2266, %v2262
      %v2268 = vrot.slane %v2267, 4
      %v2270 = vshll.u32 %v2015, 16
      %v2272 = vrot.slane %v2270, 5
      %v2273 = vsel %vm1002, %v2268, %v2272
      %v2275 = vshrl.u32 %v2016, 16
      %v2277 = vrot.slane %v2275, 4
      %v2278 = vshll.u32 %v2016, 16
      %v2280 = vrot.slane %v2278, 5
      %v2281 = vor.u32 %v2277, %v2280
      %v2282 = vrot.slane %v2281, 4
      %v2284 = vshll.u32 %v2017, 16
      %v2286 = vrot.slane %v2284, 5
      %v2287 = vsel %vm1002, %v2282, %v2286
      %v2288 = vshrl.u32 %v2017, 16
      %v2290 = vrot.slane %v2288, 4
      %v2291 = vor.u32 %v2290, %v2286
      %v2292 = vrot.slane %v2291, 4
      %v2294 = vshll.u32 %v2018, 16
      %v2296 = vrot.slane %v2294, 5
      %v2297 = vsel %vm1002, %v2292, %v2296
      %v2299 = vshrl.u32 %v2019, 16
      %v2301 = vrot.slane %v2299, 4
      %v2302 = vshll.u32 %v2019, 16
      %v2304 = vrot.slane %v2302, 5
      %v2305 = vor.u32 %v2301, %v2304
      %v2306 = vrot.slane %v2305, 4
      %v2308 = vshll.u32 %v2020, 16
      %v2310 = vrot.slane %v2308, 5
      %v2311 = vsel %vm1002, %v2306, %v2310
      %v2312 = vshrl.u32 %v2020, 16
      %v2314 = vrot.slane %v2312, 4
      %v2315 = vor.u32 %v2314, %v2310
      %v2316 = vrot.slane %v2315, 4
      %v2318 = vshll.u32 %v2021, 16
      %v2320 = vrot.slane %v2318, 5
      %v2321 = vsel %vm1002, %v2316, %v2320
      %v2323 = vshrl.u32 %v2022, 16
      %v2325 = vrot.slane %v2323, 4
      %v2326 = vshll.u32 %v2022, 16
      %v2328 = vrot.slane %v2326, 5
      %v2329 = vor.u32 %v2325, %v2328
      %v2330 = vrot.slane %v2329, 4
      %v2332 = vshll.u32 %v2023, 16
      %v2334 = vrot.slane %v2332, 5
      %v2335 = vsel %vm1002, %v2330, %v2334
      %v2336 = vshrl.u32 %v2023, 16
      %v2338 = vrot.slane %v2336, 4
      %v2339 = vor.u32 %v2338, %v2334
      %v2340 = vrot.slane %v2339, 4
      %v2342 = vshll.u32 %v2024, 16
      %v2344 = vrot.slane %v2342, 5
      %v2345 = vsel %vm1002, %v2340, %v2344
      %v2347 = vshrl.u32 %v2025, 16
      %v2349 = vrot.slane %v2347, 4
      %v2350 = vshll.u32 %v2025, 16
      %v2352 = vrot.slane %v2350, 5
      %v2353 = vor.u32 %v2349, %v2352
      %v2354 = vrot.slane %v2353, 4
      %v2356 = vshll.u32 %v2026, 16
      %v2358 = vrot.slane %v2356, 5
      %v2359 = vsel %vm1002, %v2354, %v2358
      %v2360 = vshrl.u32 %v2026, 16
      %v2362 = vrot.slane %v2360, 4
      %v2363 = vor.u32 %v2362, %v2358
      %v2364 = vrot.slane %v2363, 4
      %v2366 = vshll.u32 %v2027, 16
      %v2368 = vrot.slane %v2366, 5
      %v2369 = vsel %vm1002, %v2364, %v2368
      %v2371 = vshrl.u32 %v2028, 16
      %v2373 = vrot.slane %v2371, 4
      %v2374 = vshll.u32 %v2028, 16
      %v2376 = vrot.slane %v2374, 5
      %v2377 = vor.u32 %v2373, %v2376
      %v2378 = vrot.slane %v2377, 4
      %v2380 = vshll.u32 %v2029, 16
      %v2382 = vrot.slane %v2380, 5
      %v2383 = vsel %vm1002, %v2378, %v2382
      %v2384 = vshrl.u32 %v2029, 16
      %v2386 = vrot.slane %v2384, 4
      %v2387 = vor.u32 %v2386, %v2382
      %v2388 = vrot.slane %v2387, 4
      %v2390 = vshll.u32 %v2030, 16
      %v2392 = vrot.slane %v2390, 5
      %v2393 = vsel %vm1002, %v2388, %v2392
      %v2395 = vshrl.u32 %v2031, 16
      %v2397 = vrot.slane %v2395, 4
      %v2398 = vshll.u32 %v2031, 16
      %v2400 = vrot.slane %v2398, 5
      %v2401 = vor.u32 %v2397, %v2400
      %v2402 = vrot.slane %v2401, 4
      %v2404 = vshll.u32 %v2032, 16
      %v2406 = vrot.slane %v2404, 5
      %v2407 = vsel %vm1002, %v2402, %v2406
      %v2408 = vshrl.u32 %v2032, 16
      %v2410 = vrot.slane %v2408, 4
      %v2411 = vor.u32 %v2410, %v2406
      %v2412 = vrot.slane %v2411, 4
      %v2414 = vshll.u32 %v2033, 16
      %v2416 = vrot.slane %v2414, 5
      %v2417 = vsel %vm1002, %v2412, %v2416
      %v2418 = vunpack.c.l.b16 %v2047
      %v2419 = vunpack.c.l.b16 %v2057
      %v2420 = vunpack.c.l.b16 %v2071
      %v2421 = vunpack.c.l.b16 %v2081
      %v2422 = vunpack.c.l.b16 %v2095
      %v2423 = vunpack.c.l.b16 %v2105
      %v2424 = vunpack.c.l.b16 %v2119
      %v2425 = vunpack.c.l.b16 %v2129
      %v2426 = vunpack.c.l.b16 %v2143
      %v2427 = vunpack.c.l.b16 %v2153
      %v2428 = vunpack.c.l.b16 %v2167
      %v2429 = vunpack.c.l.b16 %v2177
      %v2430 = vunpack.c.l.b16 %v2191
      %v2431 = vunpack.c.l.b16 %v2201
      %v2432 = vunpack.c.l.b16 %v2215
      %v2433 = vunpack.c.l.b16 %v2225
      %v2434 = vunpack.c.l.b16 %v2239
      %v2435 = vunpack.c.l.b16 %v2249
      %v2436 = vunpack.c.l.b16 %v2263
      %v2437 = vunpack.c.l.b16 %v2273
      %v2438 = vunpack.c.l.b16 %v2287
      %v2439 = vunpack.c.l.b16 %v2297
      %v2440 = vunpack.c.l.b16 %v2311
      %v2441 = vunpack.c.l.b16 %v2321
      %v2442 = vunpack.c.l.b16 %v2335
      %v2443 = vunpack.c.l.b16 %v2345
      %v2444 = vunpack.c.l.b16 %v2359
      %v2445 = vunpack.c.l.b16 %v2369
      %v2446 = vunpack.c.l.b16 %v2383
      %v2447 = vunpack.c.l.b16 %v2393
      %v2448 = vunpack.c.l.b16 %v2407
      %v2449 = vunpack.c.l.b16 %v2417
      %v2450 = vpack.c.b16 %v2419, %v2418
      %v2451 = vpack.c.b16 %v2421, %v2420
      %v2452 = vpack.c.b16 %v2423, %v2422
      %v2453 = vpack.c.b16 %v2425, %v2424
      %v2454 = vpack.c.b16 %v2427, %v2426
      %v2455 = vpack.c.b16 %v2429, %v2428
      %v2456 = vpack.c.b16 %v2431, %v2430
      %v2457 = vpack.c.b16 %v2433, %v2432
      %v2458 = vpack.c.b16 %v2435, %v2434
      %v2459 = vpack.c.b16 %v2437, %v2436
      %v2460 = vpack.c.b16 %v2439, %v2438
      %v2461 = vpack.c.b16 %v2441, %v2440
      %v2462 = vpack.c.b16 %v2443, %v2442
      %v2463 = vpack.c.b16 %v2445, %v2444
      %v2464 = vpack.c.b16 %v2447, %v2446
      %v2465 = vpack.c.b16 %v2449, %v2448
      %2466 = vrot.lane.b32.xlu0 %v2450, 4
      %v2467 = vpop.permute.xlu0 %2466
      %2468 = vrot.lane.b32.xlu0 %v2451, 4
      %v2469 = vpop.permute.xlu0 %2468
      %2470 = vrot.lane.b32.xlu0 %v2452, 4
      %v2471 = vpop.permute.xlu0 %2470
      %2472 = vrot.lane.b32.xlu0 %v2453, 4
      %v2473 = vpop.permute.xlu0 %2472
      %2474 = vrot.lane.b32.xlu0 %v2454, 4
      %v2475 = vpop.permute.xlu0 %2474
      %2476 = vrot.lane.b32.xlu0 %v2455, 4
      %v2477 = vpop.permute.xlu0 %2476
      %2478 = vrot.lane.b32.xlu0 %v2456, 4
      %v2479 = vpop.permute.xlu0 %2478
      %2480 = vrot.lane.b32.xlu0 %v2457, 4
      %v2481 = vpop.permute.xlu0 %2480
      %2482 = vrot.lane.b32.xlu0 %v2458, 4
      %v2483 = vpop.permute.xlu0 %2482
      %2484 = vrot.lane.b32.xlu0 %v2459, 4
      %v2485 = vpop.permute.xlu0 %2484
      %2486 = vrot.lane.b32.xlu0 %v2460, 4
      %v2487 = vpop.permute.xlu0 %2486
      %2488 = vrot.lane.b32.xlu0 %v2461, 4
      %v2489 = vpop.permute.xlu0 %2488
      %2490 = vrot.lane.b32.xlu0 %v2462, 4
      %v2491 = vpop.permute.xlu0 %2490
      %2492 = vrot.lane.b32.xlu0 %v2463, 4
      %v2493 = vpop.permute.xlu0 %2492
      %2494 = vrot.lane.b32.xlu0 %v2464, 4
      %v2495 = vpop.permute.xlu0 %2494
      %2496 = vrot.lane.b32.xlu0 %v2465, 4
      %v2497 = vpop.permute.xlu0 %2496
      %2514 = vst.msk [vmem:[#allocation3] sm:$0xff] %vm1483, %v2467
      %2515 = vst.msk [vmem:[#allocation3 + $0x8] sm:$0xff] %vm1483, %v2469
      %2516 = vst.msk [vmem:[#allocation3 + $0x10] sm:$0xff] %vm1483, %v2471
      %2517 = vst.msk [vmem:[#allocation3 + $0x18] sm:$0xff] %vm1483, %v2473
      %2518 = vst.msk [vmem:[#allocation3 + $0x20] sm:$0xff] %vm1483, %v2475
      %2519 = vst.msk [vmem:[#allocation3 + $0x28] sm:$0xff] %vm1483, %v2477
      %2520 = vst.msk [vmem:[#allocation3 + $0x30] sm:$0xff] %vm1483, %v2479
      %2521 = vst.msk [vmem:[#allocation3 + $0x38] sm:$0xff] %vm1483, %v2481
      %2522 = vst.msk [vmem:[#allocation3 + $0x40] sm:$0xff] %vm1483, %v2483
      %2523 = vst.msk [vmem:[#allocation3 + $0x48] sm:$0xff] %vm1483, %v2485
      %2524 = vst.msk [vmem:[#allocation3 + $0x50] sm:$0xff] %vm1483, %v2487
      %2525 = vst.msk [vmem:[#allocation3 + $0x58] sm:$0xff] %vm1483, %v2489
      %2526 = vst.msk [vmem:[#allocation3 + $0x60] sm:$0xff] %vm1483, %v2491
      %2527 = vst.msk [vmem:[#allocation3 + $0x68] sm:$0xff] %vm1483, %v2493
      %2528 = vst.msk [vmem:[#allocation3 + $0x70] sm:$0xff] %vm1483, %v2495
      %2529 = vst.msk [vmem:[#allocation3 + $0x78] sm:$0xff] %vm1483, %v2497
      %v2530 = vld [vmem:[%s692] sm:$0xe]
      %v2531 = vld [vmem:[%s692 + $0x4] sm:$0xf]
      %v2532 = vld [vmem:[%s692 + $0x8] sm:$0x1]
      %v2533 = vld [vmem:[%s692 + $0xc] sm:$0xe]
      %v2534 = vld [vmem:[%s692 + $0x10] sm:$0xf]
      %v2535 = vld [vmem:[%s692 + $0x14] sm:$0x1]
      %v2536 = vld [vmem:[%s692 + $0x18] sm:$0xe]
      %v2537 = vld [vmem:[%s692 + $0x1c] sm:$0xf]
      %v2538 = vld [vmem:[%s692 + $0x20] sm:$0x1]
      %v2539 = vld [vmem:[%s692 + $0x24] sm:$0xe]
      %v2540 = vld [vmem:[%s692 + $0x28] sm:$0xf]
      %v2541 = vld [vmem:[%s692 + $0x2c] sm:$0x1]
      %v2542 = vld [vmem:[%s692 + $0x30] sm:$0xe]
      %v2543 = vld [vmem:[%s692 + $0x34] sm:$0xf]
      %v2544 = vld [vmem:[%s692 + $0x38] sm:$0x1]
      %v2545 = vld [vmem:[%s692 + $0x3c] sm:$0xe]
      %v2546 = vld [vmem:[%s692 + $0x40] sm:$0xf]
      %v2547 = vld [vmem:[%s692 + $0x44] sm:$0x1]
      %v2548 = vld [vmem:[%s692 + $0x48] sm:$0xe]
      %v2549 = vld [vmem:[%s692 + $0x4c] sm:$0xf]
      %v2550 = vld [vmem:[%s692 + $0x50] sm:$0x1]
      %v2551 = vld [vmem:[%s692 + $0x54] sm:$0xe]
      %v2552 = vld [vmem:[%s692 + $0x58] sm:$0xf]
      %v2553 = vld [vmem:[%s692 + $0x5c] sm:$0x1]
      %v2554 = vld [vmem:[%s692 + $0x60] sm:$0xe]
      %v2555 = vld [vmem:[%s692 + $0x64] sm:$0xf]
      %v2556 = vld [vmem:[%s692 + $0x68] sm:$0x1]
      %v2557 = vld [vmem:[%s692 + $0x6c] sm:$0xe]
      %v2558 = vld [vmem:[%s692 + $0x70] sm:$0xf]
      %v2559 = vld [vmem:[%s692 + $0x74] sm:$0x1]
      %v2560 = vld [vmem:[%s692 + $0x78] sm:$0xe]
      %v2561 = vld [vmem:[%s692 + $0x7c] sm:$0xf]
      %v2562 = vld [vmem:[%s692 + $0x80] sm:$0x1]
      %v2563 = vld [vmem:[%s692 + $0x84] sm:$0xe]
      %v2564 = vld [vmem:[%s692 + $0x88] sm:$0xf]
      %v2565 = vld [vmem:[%s692 + $0x8c] sm:$0x1]
      %v2566 = vld [vmem:[%s692 + $0x90] sm:$0xe]
      %v2567 = vld [vmem:[%s692 + $0x94] sm:$0xf]
      %v2568 = vld [vmem:[%s692 + $0x98] sm:$0x1]
      %v2569 = vld [vmem:[%s692 + $0x9c] sm:$0xe]
      %v2570 = vld [vmem:[%s692 + $0xa0] sm:$0xf]
      %v2571 = vld [vmem:[%s692 + $0xa4] sm:$0x1]
      %v2572 = vld [vmem:[%s692 + $0xa8] sm:$0xe]
      %v2573 = vld [vmem:[%s692 + $0xac] sm:$0xf]
      %v2574 = vld [vmem:[%s692 + $0xb0] sm:$0x1]
      %v2575 = vld [vmem:[%s692 + $0xb4] sm:$0xe]
      %v2576 = vld [vmem:[%s692 + $0xb8] sm:$0xf]
      %v2577 = vld [vmem:[%s692 + $0xbc] sm:$0x1]
      %v2626 = vrot.slane %v2530, 5
      %v2627 = vrot.slane %v2626, 4
      %v2628 = vrot.slane %v2531, 5
      %v2629 = vsel %vm1598, %v2627, %v2628
      %v2630 = vrot.slane %v2628, 4
      %v2631 = vrot.slane %v2532, 5
      %v2632 = vsel %vm1598, %v2630, %v2631
      %v2633 = vrot.slane %v2533, 5
      %v2634 = vrot.slane %v2633, 4
      %v2635 = vrot.slane %v2534, 5
      %v2636 = vsel %vm1598, %v2634, %v2635
      %v2637 = vrot.slane %v2635, 4
      %v2638 = vrot.slane %v2535, 5
      %v2639 = vsel %vm1598, %v2637, %v2638
      %v2640 = vrot.slane %v2536, 5
      %v2641 = vrot.slane %v2640, 4
      %v2642 = vrot.slane %v2537, 5
      %v2643 = vsel %vm1598, %v2641, %v2642
      %v2644 = vrot.slane %v2642, 4
      %v2645 = vrot.slane %v2538, 5
      %v2646 = vsel %vm1598, %v2644, %v2645
      %v2647 = vrot.slane %v2539, 5
      %v2648 = vrot.slane %v2647, 4
      %v2649 = vrot.slane %v2540, 5
      %v2650 = vsel %vm1598, %v2648, %v2649
      %v2651 = vrot.slane %v2649, 4
      %v2652 = vrot.slane %v2541, 5
      %v2653 = vsel %vm1598, %v2651, %v2652
      %v2654 = vrot.slane %v2542, 5
      %v2655 = vrot.slane %v2654, 4
      %v2656 = vrot.slane %v2543, 5
      %v2657 = vsel %vm1598, %v2655, %v2656
      %v2658 = vrot.slane %v2656, 4
      %v2659 = vrot.slane %v2544, 5
      %v2660 = vsel %vm1598, %v2658, %v2659
      %v2661 = vrot.slane %v2545, 5
      %v2662 = vrot.slane %v2661, 4
      %v2663 = vrot.slane %v2546, 5
      %v2664 = vsel %vm1598, %v2662, %v2663
      %v2665 = vrot.slane %v2663, 4
      %v2666 = vrot.slane %v2547, 5
      %v2667 = vsel %vm1598, %v2665, %v2666
      %v2668 = vrot.slane %v2548, 5
      %v2669 = vrot.slane %v2668, 4
      %v2670 = vrot.slane %v2549, 5
      %v2671 = vsel %vm1598, %v2669, %v2670
      %v2672 = vrot.slane %v2670, 4
      %v2673 = vrot.slane %v2550, 5
      %v2674 = vsel %vm1598, %v2672, %v2673
      %v2675 = vrot.slane %v2551, 5
      %v2676 = vrot.slane %v2675, 4
      %v2677 = vrot.slane %v2552, 5
      %v2678 = vsel %vm1598, %v2676, %v2677
      %v2679 = vrot.slane %v2677, 4
      %v2680 = vrot.slane %v2553, 5
      %v2681 = vsel %vm1598, %v2679, %v2680
      %v2682 = vrot.slane %v2554, 5
      %v2683 = vrot.slane %v2682, 4
      %v2684 = vrot.slane %v2555, 5
      %v2685 = vsel %vm1598, %v2683, %v2684
      %v2686 = vrot.slane %v2684, 4
      %v2687 = vrot.slane %v2556, 5
      %v2688 = vsel %vm1598, %v2686, %v2687
      %v2689 = vrot.slane %v2557, 5
      %v2690 = vrot.slane %v2689, 4
      %v2691 = vrot.slane %v2558, 5
      %v2692 = vsel %vm1598, %v2690, %v2691
      %v2693 = vrot.slane %v2691, 4
      %v2694 = vrot.slane %v2559, 5
      %v2695 = vsel %vm1598, %v2693, %v2694
      %v2696 = vrot.slane %v2560, 5
      %v2697 = vrot.slane %v2696, 4
      %v2698 = vrot.slane %v2561, 5
      %v2699 = vsel %vm1598, %v2697, %v2698
      %v2700 = vrot.slane %v2698, 4
      %v2701 = vrot.slane %v2562, 5
      %v2702 = vsel %vm1598, %v2700, %v2701
      %v2703 = vrot.slane %v2563, 5
      %v2704 = vrot.slane %v2703, 4
      %v2705 = vrot.slane %v2564, 5
      %v2706 = vsel %vm1598, %v2704, %v2705
      %v2707 = vrot.slane %v2705, 4
      %v2708 = vrot.slane %v2565, 5
      %v2709 = vsel %vm1598, %v2707, %v2708
      %v2710 = vrot.slane %v2566, 5
      %v2711 = vrot.slane %v2710, 4
      %v2712 = vrot.slane %v2567, 5
      %v2713 = vsel %vm1598, %v2711, %v2712
      %v2714 = vrot.slane %v2712, 4
      %v2715 = vrot.slane %v2568, 5
      %v2716 = vsel %vm1598, %v2714, %v2715
      %v2717 = vrot.slane %v2569, 5
      %v2718 = vrot.slane %v2717, 4
      %v2719 = vrot.slane %v2570, 5
      %v2720 = vsel %vm1598, %v2718, %v2719
      %v2721 = vrot.slane %v2719, 4
      %v2722 = vrot.slane %v2571, 5
      %v2723 = vsel %vm1598, %v2721, %v2722
      %v2724 = vrot.slane %v2572, 5
      %v2725 = vrot.slane %v2724, 4
      %v2726 = vrot.slane %v2573, 5
      %v2727 = vsel %vm1598, %v2725, %v2726
      %v2728 = vrot.slane %v2726, 4
      %v2729 = vrot.slane %v2574, 5
      %v2730 = vsel %vm1598, %v2728, %v2729
      %v2731 = vrot.slane %v2575, 5
      %v2732 = vrot.slane %v2731, 4
      %v2733 = vrot.slane %v2576, 5
      %v2734 = vsel %vm1598, %v2732, %v2733
      %v2735 = vrot.slane %v2733, 4
      %v2736 = vrot.slane %v2577, 5
      %v2737 = vsel %vm1598, %v2735, %v2736
      %v2738 = vunpack.c.l.b16 %v2629
      %v2739 = vunpack.c.l.b16 %v2632
      %v2740 = vunpack.c.l.b16 %v2636
      %v2741 = vunpack.c.l.b16 %v2639
      %v2742 = vunpack.c.l.b16 %v2643
      %v2743 = vunpack.c.l.b16 %v2646
      %v2744 = vunpack.c.l.b16 %v2650
      %v2745 = vunpack.c.l.b16 %v2653
      %v2746 = vunpack.c.l.b16 %v2657
      %v2747 = vunpack.c.l.b16 %v2660
      %v2748 = vunpack.c.l.b16 %v2664
      %v2749 = vunpack.c.l.b16 %v2667
      %v2750 = vunpack.c.l.b16 %v2671
      %v2751 = vunpack.c.l.b16 %v2674
      %v2752 = vunpack.c.l.b16 %v2678
      %v2753 = vunpack.c.l.b16 %v2681
      %v2754 = vunpack.c.l.b16 %v2685
      %v2755 = vunpack.c.l.b16 %v2688
      %v2756 = vunpack.c.l.b16 %v2692
      %v2757 = vunpack.c.l.b16 %v2695
      %v2758 = vunpack.c.l.b16 %v2699
      %v2759 = vunpack.c.l.b16 %v2702
      %v2760 = vunpack.c.l.b16 %v2706
      %v2761 = vunpack.c.l.b16 %v2709
      %v2762 = vunpack.c.l.b16 %v2713
      %v2763 = vunpack.c.l.b16 %v2716
      %v2764 = vunpack.c.l.b16 %v2720
      %v2765 = vunpack.c.l.b16 %v2723
      %v2766 = vunpack.c.l.b16 %v2727
      %v2767 = vunpack.c.l.b16 %v2730
      %v2768 = vunpack.c.l.b16 %v2734
      %v2769 = vunpack.c.l.b16 %v2737
      %v2770 = vpack.c.b16 %v2739, %v2738
      %v2771 = vpack.c.b16 %v2741, %v2740
      %v2772 = vpack.c.b16 %v2743, %v2742
      %v2773 = vpack.c.b16 %v2745, %v2744
      %v2774 = vpack.c.b16 %v2747, %v2746
      %v2775 = vpack.c.b16 %v2749, %v2748
      %v2776 = vpack.c.b16 %v2751, %v2750
      %v2777 = vpack.c.b16 %v2753, %v2752
      %v2778 = vpack.c.b16 %v2755, %v2754
      %v2779 = vpack.c.b16 %v2757, %v2756
      %v2780 = vpack.c.b16 %v2759, %v2758
      %v2781 = vpack.c.b16 %v2761, %v2760
      %v2782 = vpack.c.b16 %v2763, %v2762
      %v2783 = vpack.c.b16 %v2765, %v2764
      %v2784 = vpack.c.b16 %v2767, %v2766
      %v2785 = vpack.c.b16 %v2769, %v2768
      %2786 = vrot.lane.b32.xlu0 %v2770, 8
      %v2787 = vpop.permute.xlu0 %2786
      %2788 = vrot.lane.b32.xlu0 %v2771, 8
      %v2789 = vpop.permute.xlu0 %2788
      %2790 = vrot.lane.b32.xlu0 %v2772, 8
      %v2791 = vpop.permute.xlu0 %2790
      %2792 = vrot.lane.b32.xlu0 %v2773, 8
      %v2793 = vpop.permute.xlu0 %2792
      %2794 = vrot.lane.b32.xlu0 %v2774, 8
      %v2795 = vpop.permute.xlu0 %2794
      %2796 = vrot.lane.b32.xlu0 %v2775, 8
      %v2797 = vpop.permute.xlu0 %2796
      %2798 = vrot.lane.b32.xlu0 %v2776, 8
      %v2799 = vpop.permute.xlu0 %2798
      %2800 = vrot.lane.b32.xlu0 %v2777, 8
      %v2801 = vpop.permute.xlu0 %2800
      %2802 = vrot.lane.b32.xlu0 %v2778, 8
      %v2803 = vpop.permute.xlu0 %2802
      %2804 = vrot.lane.b32.xlu0 %v2779, 8
      %v2805 = vpop.permute.xlu0 %2804
      %2806 = vrot.lane.b32.xlu0 %v2780, 8
      %v2807 = vpop.permute.xlu0 %2806
      %2808 = vrot.lane.b32.xlu0 %v2781, 8
      %v2809 = vpop.permute.xlu0 %2808
      %2810 = vrot.lane.b32.xlu0 %v2782, 8
      %v2811 = vpop.permute.xlu0 %2810
      %2812 = vrot.lane.b32.xlu0 %v2783, 8
      %v2813 = vpop.permute.xlu0 %2812
      %2814 = vrot.lane.b32.xlu0 %v2784, 8
      %v2815 = vpop.permute.xlu0 %2814
      %2816 = vrot.lane.b32.xlu0 %v2785, 8
      %v2817 = vpop.permute.xlu0 %2816
      %2834 = vst.msk [vmem:[#allocation3] sm:$0xff] %vm1807, %v2787
      %2835 = vst.msk [vmem:[#allocation3 + $0x8] sm:$0xff] %vm1807, %v2789
      %2836 = vst.msk [vmem:[#allocation3 + $0x10] sm:$0xff] %vm1807, %v2791
      %2837 = vst.msk [vmem:[#allocation3 + $0x18] sm:$0xff] %vm1807, %v2793
      %2838 = vst.msk [vmem:[#allocation3 + $0x20] sm:$0xff] %vm1807, %v2795
      %2839 = vst.msk [vmem:[#allocation3 + $0x28] sm:$0xff] %vm1807, %v2797
      %2840 = vst.msk [vmem:[#allocation3 + $0x30] sm:$0xff] %vm1807, %v2799
      %2841 = vst.msk [vmem:[#allocation3 + $0x38] sm:$0xff] %vm1807, %v2801
      %2842 = vst.msk [vmem:[#allocation3 + $0x40] sm:$0xff] %vm1807, %v2803
      %2843 = vst.msk [vmem:[#allocation3 + $0x48] sm:$0xff] %vm1807, %v2805
      %2844 = vst.msk [vmem:[#allocation3 + $0x50] sm:$0xff] %vm1807, %v2807
      %2845 = vst.msk [vmem:[#allocation3 + $0x58] sm:$0xff] %vm1807, %v2809
      %2846 = vst.msk [vmem:[#allocation3 + $0x60] sm:$0xff] %vm1807, %v2811
      %2847 = vst.msk [vmem:[#allocation3 + $0x68] sm:$0xff] %vm1807, %v2813
      %2848 = vst.msk [vmem:[#allocation3 + $0x70] sm:$0xff] %vm1807, %v2815
      %2849 = vst.msk [vmem:[#allocation3 + $0x78] sm:$0xff] %vm1807, %v2817
      %v2850 = vld [vmem:[#allocation3] sm:$0xff]
      %v2851 = vld [vmem:[#allocation3 + $0x8] sm:$0xff]
      %v2852 = vld [vmem:[#allocation3 + $0x10] sm:$0xff]
      %v2853 = vld [vmem:[#allocation3 + $0x18] sm:$0xff]
      %v2854 = vld [vmem:[#allocation3 + $0x20] sm:$0xff]
      %v2855 = vld [vmem:[#allocation3 + $0x28] sm:$0xff]
      %v2856 = vld [vmem:[#allocation3 + $0x30] sm:$0xff]
      %v2857 = vld [vmem:[#allocation3 + $0x38] sm:$0xff]
      %v2858 = vld [vmem:[#allocation3 + $0x40] sm:$0xff]
      %v2859 = vld [vmem:[#allocation3 + $0x48] sm:$0xff]
      %v2860 = vld [vmem:[#allocation3 + $0x50] sm:$0xff]
      %v2861 = vld [vmem:[#allocation3 + $0x58] sm:$0xff]
      %v2862 = vld [vmem:[#allocation3 + $0x60] sm:$0xff]
      %v2863 = vld [vmem:[#allocation3 + $0x68] sm:$0xff]
      %v2864 = vld [vmem:[#allocation3 + $0x70] sm:$0xff]
      %v2865 = vld [vmem:[#allocation3 + $0x78] sm:$0xff]
      %s2866 = scalar_lea.vmem %s1, 8
      %v2867 = vld [vmem:[%s2866] sm:$0xf]
      %v2868 = vld [vmem:[%s2866 + $0x4] sm:$0x3]
      %v2871 = vunpack.c.l.b16 %v2867
      %v2872 = vunpack.c.l.b16 %v2868
      %v2873 = vpack.c.b16 %v2872, %v2871
      %vm2874 = vcmask 97280
      %v2876 = vsel %vm2874, %v2850, 0
      %v2879 = vsel %vm2874, %v2851, 0
      %v2882 = vsel %vm2874, %v2852, 0
      %v2885 = vsel %vm2874, %v2853, 0
      %v2888 = vsel %vm2874, %v2854, 0
      %v2891 = vsel %vm2874, %v2855, 0
      %v2894 = vsel %vm2874, %v2856, 0
      %v2897 = vsel %vm2874, %v2857, 0
      %v2900 = vsel %vm2874, %v2858, 0
      %v2903 = vsel %vm2874, %v2859, 0
      %v2906 = vsel %vm2874, %v2860, 0
      %v2909 = vsel %vm2874, %v2861, 0
      %v2912 = vsel %vm2874, %v2862, 0
      %v2915 = vsel %vm2874, %v2863, 0
      %v2918 = vsel %vm2874, %v2864, 0
      %v2921 = vsel %vm2874, %v2865, 0
      %vm2923 = vcmask 1045504
      %v2925 = vsel %vm2923, %v2873, 0
      %2927 = vmatprep.subr.bf16.mxu0 0
      %2928 = vmatpush1.bf16.msra.mxu0 %v2925
      %2929 = vmatprep.subr.bf16.mxu0 0
      %2930 = vmatpush1.bf16.msra.mxu0 0
      %2931 = vmatprep.subr.bf16.mxu0 0
      %2932 = vmatpush1.bf16.msra.mxu0 0
      %2933 = vmatprep.subr.bf16.mxu0 0
      %2934 = vmatpush1.bf16.msra.mxu0 0
      %2935 = vmatprep.subr.bf16.mxu0 0
      %2936 = vmatpush1.bf16.msra.mxu0 0
      %2937 = vmatprep.subr.bf16.mxu0 0
      %2938 = vmatpush1.bf16.msra.mxu0 0
      %2939 = vmatprep.subr.bf16.mxu0 0
      %2940 = vmatpush1.bf16.msra.mxu0 0
      %2941 = vmatprep.subr.bf16.mxu0 0
      %2942 = vmatpush1.bf16.msra.mxu0 0
      %2943 = vmatprep.subr.bf16.mxu0 0
      %2944 = vmatpush1.bf16.msra.mxu0 0
      %2945 = vmatprep.subr.bf16.mxu0 0
      %2946 = vmatpush1.bf16.msra.mxu0 0
      %2947 = vmatprep.subr.bf16.mxu0 0
      %2948 = vmatpush1.bf16.msra.mxu0 0
      %2949 = vmatprep.subr.bf16.mxu0 0
      %2950 = vmatpush1.bf16.msra.mxu0 0
      %2951 = vmatprep.subr.bf16.mxu0 0
      %2952 = vmatpush1.bf16.msra.mxu0 0
      %2953 = vmatprep.subr.bf16.mxu0 0
      %2954 = vmatpush1.bf16.msra.mxu0 0
      %2955 = vmatprep.subr.bf16.mxu0 0
      %2956 = vmatpush1.bf16.msra.mxu0 0
      %2957 = vmatprep.subr.bf16.mxu0 0
      %2958 = vmatpush1.bf16.msra.mxu0 0
      %2959 = vmatprep.mubr.bf16.mxu0 0
      %2960 = vmatmul.mubr.bf16.gmra.mrb[0].mxu0 %v2876
      %v2961 = vpop.f32.mrb[0].mxu0
      %v2962 = vadd.f32 0.0, %v2961
      %v2963 = vpop.f32.mrb[0].mxu0
      %v2964 = vpop.f32.mrb[0].mxu0
      %v2965 = vadd.f32 0.0, %v2964
      %v2966 = vpop.f32.mrb[0].mxu0
      %2967 = vmatprep.mubr.bf16.mxu0 0
      %2968 = vmatmul.mubr.bf16.gmra.mrb[0].mxu0 %v2879
      %v2969 = vpop.f32.mrb[0].mxu0
      %v2970 = vadd.f32 0.0, %v2969
      %v2971 = vpop.f32.mrb[0].mxu0
      %v2972 = vpop.f32.mrb[0].mxu0
      %v2973 = vadd.f32 0.0, %v2972
      %v2974 = vpop.f32.mrb[0].mxu0
      %2975 = vmatprep.mubr.bf16.mxu0 0
      %2976 = vmatmul.mubr.bf16.gmra.mrb[0].mxu0 %v2882
      %v2977 = vpop.f32.mrb[0].mxu0
      %v2978 = vadd.f32 0.0, %v2977
      %v2979 = vpop.f32.mrb[0].mxu0
      %v2980 = vpop.f32.mrb[0].mxu0
      %v2981 = vadd.f32 0.0, %v2980
      %v2982 = vpop.f32.mrb[0].mxu0
      %2983 = vmatprep.mubr.bf16.mxu0 0
      %2984 = vmatmul.mubr.bf16.gmra.mrb[0].mxu0 %v2885
      %v2985 = vpop.f32.mrb[0].mxu0
      %v2986 = vadd.f32 0.0, %v2985
      %v2987 = vpop.f32.mrb[0].mxu0
      %v2988 = vpop.f32.mrb[0].mxu0
      %v2989 = vadd.f32 0.0, %v2988
      %v2990 = vpop.f32.mrb[0].mxu0
      %2991 = vmatprep.mubr.bf16.mxu0 0
      %2992 = vmatmul.mubr.bf16.gmra.mrb[0].mxu0 %v2888
      %v2993 = vpop.f32.mrb[0].mxu0
      %v2994 = vadd.f32 0.0, %v2993
      %v2995 = vpop.f32.mrb[0].mxu0
      %v2996 = vpop.f32.mrb[0].mxu0
      %v2997 = vadd.f32 0.0, %v2996
      %v2998 = vpop.f32.mrb[0].mxu0
      %2999 = vmatprep.mubr.bf16.mxu0 0
      %3000 = vmatmul.mubr.bf16.gmra.mrb[0].mxu0 %v2891
      %v3001 = vpop.f32.mrb[0].mxu0
      %v3002 = vadd.f32 0.0, %v3001
      %v3003 = vpop.f32.mrb[0].mxu0
      %v3004 = vpop.f32.mrb[0].mxu0
      %v3005 = vadd.f32 0.0, %v3004
      %v3006 = vpop.f32.mrb[0].mxu0
      %3007 = vmatprep.mubr.bf16.mxu0 0
      %3008 = vmatmul.mubr.bf16.gmra.mrb[0].mxu0 %v2894
      %v3009 = vpop.f32.mrb[0].mxu0
      %v3010 = vadd.f32 0.0, %v3009
      %v3011 = vpop.f32.mrb[0].mxu0
      %v3012 = vpop.f32.mrb[0].mxu0
      %v3013 = vadd.f32 0.0, %v3012
      %v3014 = vpop.f32.mrb[0].mxu0
      %3015 = vmatprep.mubr.bf16.mxu0 0
      %3016 = vmatmul.mubr.bf16.gmra.mrb[0].mxu0 %v2897
      %v3017 = vpop.f32.mrb[0].mxu0
      %v3018 = vadd.f32 0.0, %v3017
      %v3019 = vpop.f32.mrb[0].mxu0
      %v3020 = vpop.f32.mrb[0].mxu0
      %v3021 = vadd.f32 0.0, %v3020
      %v3022 = vpop.f32.mrb[0].mxu0
      %3023 = vmatprep.mubr.bf16.mxu0 0
      %3024 = vmatmul.mubr.bf16.gmra.mrb[0].mxu0 %v2900
      %v3025 = vpop.f32.mrb[0].mxu0
      %v3026 = vadd.f32 0.0, %v3025
      %v3027 = vpop.f32.mrb[0].mxu0
      %v3028 = vpop.f32.mrb[0].mxu0
      %v3029 = vadd.f32 0.0, %v3028
      %v3030 = vpop.f32.mrb[0].mxu0
      %3031 = vmatprep.mubr.bf16.mxu0 0
      %3032 = vmatmul.mubr.bf16.gmra.mrb[0].mxu0 %v2903
      %v3033 = vpop.f32.mrb[0].mxu0
      %v3034 = vadd.f32 0.0, %v3033
      %v3035 = vpop.f32.mrb[0].mxu0
      %v3036 = vpop.f32.mrb[0].mxu0
      %v3037 = vadd.f32 0.0, %v3036
      %v3038 = vpop.f32.mrb[0].mxu0
      %3039 = vmatprep.mubr.bf16.mxu0 0
      %3040 = vmatmul.mubr.bf16.gmra.mrb[0].mxu0 %v2906
      %v3041 = vpop.f32.mrb[0].mxu0
      %v3042 = vadd.f32 0.0, %v3041
      %v3043 = vpop.f32.mrb[0].mxu0
      %v3044 = vpop.f32.mrb[0].mxu0
      %v3045 = vadd.f32 0.0, %v3044
      %v3046 = vpop.f32.mrb[0].mxu0
      %3047 = vmatprep.mubr.bf16.mxu0 0
      %3048 = vmatmul.mubr.bf16.gmra.mrb[0].mxu0 %v2909
      %v3049 = vpop.f32.mrb[0].mxu0
      %v3050 = vadd.f32 0.0, %v3049
      %v3051 = vpop.f32.mrb[0].mxu0
      %v3052 = vpop.f32.mrb[0].mxu0
      %v3053 = vadd.f32 0.0, %v3052
      %v3054 = vpop.f32.mrb[0].mxu0
      %3055 = vmatprep.mubr.bf16.mxu0 0
      %3056 = vmatmul.mubr.bf16.gmra.mrb[0].mxu0 %v2912
      %v3057 = vpop.f32.mrb[0].mxu0
      %v3058 = vadd.f32 0.0, %v3057
      %v3059 = vpop.f32.mrb[0].mxu0
      %v3060 = vpop.f32.mrb[0].mxu0
      %v3061 = vadd.f32 0.0, %v3060
      %v3062 = vpop.f32.mrb[0].mxu0
      %3063 = vmatprep.mubr.bf16.mxu0 0
      %3064 = vmatmul.mubr.bf16.gmra.mrb[0].mxu0 %v2915
      %v3065 = vpop.f32.mrb[0].mxu0
      %v3066 = vadd.f32 0.0, %v3065
      %v3067 = vpop.f32.mrb[0].mxu0
      %v3068 = vpop.f32.mrb[0].mxu0
      %v3069 = vadd.f32 0.0, %v3068
      %v3070 = vpop.f32.mrb[0].mxu0
      %3071 = vmatprep.mubr.bf16.mxu0 0
      %3072 = vmatmul.mubr.bf16.gmra.mrb[0].mxu0 %v2918
      %v3073 = vpop.f32.mrb[0].mxu0
      %v3074 = vadd.f32 0.0, %v3073
      %v3075 = vpop.f32.mrb[0].mxu0
      %v3076 = vpop.f32.mrb[0].mxu0
      %v3077 = vadd.f32 0.0, %v3076
      %v3078 = vpop.f32.mrb[0].mxu0
      %3079 = vmatprep.mubr.bf16.mxu0 0
      %3080 = vmatmul.mubr.bf16.gmra.mrb[0].mxu0 %v2921
      %v3081 = vpop.f32.mrb[0].mxu0
      %v3082 = vadd.f32 0.0, %v3081
      %v3083 = vpop.f32.mrb[0].mxu0
      %v3084 = vpop.f32.mrb[0].mxu0
      %v3085 = vadd.f32 0.0, %v3084
      %v3086 = vpop.f32.mrb[0].mxu0
      %3087 = vdwg.mxu0
      %v3090 = vunpack.c.l.b16 %v1840
      %v3091 = vunpack.c.l.b16 %v1841
      %v3092 = vpack.c.b16 %v3091, %v3090
      %v3094 = vsel %vm2874, %v1824, 0
      %v3097 = vsel %vm2874, %v1825, 0
      %v3100 = vsel %vm2874, %v1826, 0
      %v3103 = vsel %vm2874, %v1827, 0
      %v3106 = vsel %vm2874, %v1828, 0
      %v3109 = vsel %vm2874, %v1829, 0
      %v3112 = vsel %vm2874, %v1830, 0
      %v3115 = vsel %vm2874, %v1831, 0
      %v3118 = vsel %vm2874, %v1832, 0
      %v3121 = vsel %vm2874, %v1833, 0
      %v3124 = vsel %vm2874, %v1834, 0
      %v3127 = vsel %vm2874, %v1835, 0
      %v3130 = vsel %vm2874, %v1836, 0
      %v3133 = vsel %vm2874, %v1837, 0
      %v3136 = vsel %vm2874, %v1838, 0
      %v3139 = vsel %vm2874, %v1839, 0
      %v3142 = vsel %vm2923, %v3092, 0
      %3144 = vmatprep.subr.bf16.mxu0 0
      %3145 = vmatpush1.bf16.msra.mxu0 %v3142
      %3146 = vmatprep.subr.bf16.mxu0 0
      %3147 = vmatpush1.bf16.msra.mxu0 0
      %3148 = vmatprep.subr.bf16.mxu0 0
      %3149 = vmatpush1.bf16.msra.mxu0 0
      %3150 = vmatprep.subr.bf16.mxu0 0
      %3151 = vmatpush1.bf16.msra.mxu0 0
      %3152 = vmatprep.subr.bf16.mxu0 0
      %3153 = vmatpush1.bf16.msra.mxu0 0
      %3154 = vmatprep.subr.bf16.mxu0 0
      %3155 = vmatpush1.bf16.msra.mxu0 0
      %3156 = vmatprep.subr.bf16.mxu0 0
      %3157 = vmatpush1.bf16.msra.mxu0 0
      %3158 = vmatprep.subr.bf16.mxu0 0
      %3159 = vmatpush1.bf16.msra.mxu0 0
      %3160 = vmatprep.subr.bf16.mxu0 0
      %3161 = vmatpush1.bf16.msra.mxu0 0
      %3162 = vmatprep.subr.bf16.mxu0 0
      %3163 = vmatpush1.bf16.msra.mxu0 0
      %3164 = vmatprep.subr.bf16.mxu0 0
      %3165 = vmatpush1.bf16.msra.mxu0 0
      %3166 = vmatprep.subr.bf16.mxu0 0
      %3167 = vmatpush1.bf16.msra.mxu0 0
      %3168 = vmatprep.subr.bf16.mxu0 0
      %3169 = vmatpush1.bf16.msra.mxu0 0
      %3170 = vmatprep.subr.bf16.mxu0 0
      %3171 = vmatpush1.bf16.msra.mxu0 0
      %3172 = vmatprep.subr.bf16.mxu0 0
      %3173 = vmatpush1.bf16.msra.mxu0 0
      %3174 = vmatprep.subr.bf16.mxu0 0
      %3175 = vmatpush1.bf16.msra.mxu0 0
      %3176 = vmatprep.mubr.bf16.mxu0 0
      %3177 = vmatmul.mubr.bf16.gmra.mrb[0].mxu0 %v3094
      %v3178 = vpop.f32.mrb[0].mxu0
      %v3179 = vadd.f32 %v2962, %v3178
      %v3180 = vpop.f32.mrb[0].mxu0
      %v3181 = vpop.f32.mrb[0].mxu0
      %v3182 = vadd.f32 %v2965, %v3181
      %v3183 = vpop.f32.mrb[0].mxu0
      %3184 = vmatprep.mubr.bf16.mxu0 0
      %3185 = vmatmul.mubr.bf16.gmra.mrb[0].mxu0 %v3097
      %v3186 = vpop.f32.mrb[0].mxu0
      %v3187 = vadd.f32 %v2970, %v3186
      %v3188 = vpop.f32.mrb[0].mxu0
      %v3189 = vpop.f32.mrb[0].mxu0
      %v3190 = vadd.f32 %v2973, %v3189
      %v3191 = vpop.f32.mrb[0].mxu0
      %3192 = vmatprep.mubr.bf16.mxu0 0
      %3193 = vmatmul.mubr.bf16.gmra.mrb[0].mxu0 %v3100
      %v3194 = vpop.f32.mrb[0].mxu0
      %v3195 = vadd.f32 %v2978, %v3194
      %v3196 = vpop.f32.mrb[0].mxu0
      %v3197 = vpop.f32.mrb[0].mxu0
      %v3198 = vadd.f32 %v2981, %v3197
      %v3199 = vpop.f32.mrb[0].mxu0
      %3200 = vmatprep.mubr.bf16.mxu0 0
      %3201 = vmatmul.mubr.bf16.gmra.mrb[0].mxu0 %v3103
      %v3202 = vpop.f32.mrb[0].mxu0
      %v3203 = vadd.f32 %v2986, %v3202
      %v3204 = vpop.f32.mrb[0].mxu0
      %v3205 = vpop.f32.mrb[0].mxu0
      %v3206 = vadd.f32 %v2989, %v3205
      %v3207 = vpop.f32.mrb[0].mxu0
      %3208 = vmatprep.mubr.bf16.mxu0 0
      %3209 = vmatmul.mubr.bf16.gmra.mrb[0].mxu0 %v3106
      %v3210 = vpop.f32.mrb[0].mxu0
      %v3211 = vadd.f32 %v2994, %v3210
      %v3212 = vpop.f32.mrb[0].mxu0
      %v3213 = vpop.f32.mrb[0].mxu0
      %v3214 = vadd.f32 %v2997, %v3213
      %v3215 = vpop.f32.mrb[0].mxu0
      %3216 = vmatprep.mubr.bf16.mxu0 0
      %3217 = vmatmul.mubr.bf16.gmra.mrb[0].mxu0 %v3109
      %v3218 = vpop.f32.mrb[0].mxu0
      %v3219 = vadd.f32 %v3002, %v3218
      %v3220 = vpop.f32.mrb[0].mxu0
      %v3221 = vpop.f32.mrb[0].mxu0
      %v3222 = vadd.f32 %v3005, %v3221
      %v3223 = vpop.f32.mrb[0].mxu0
      %3224 = vmatprep.mubr.bf16.mxu0 0
      %3225 = vmatmul.mubr.bf16.gmra.mrb[0].mxu0 %v3112
      %v3226 = vpop.f32.mrb[0].mxu0
      %v3227 = vadd.f32 %v3010, %v3226
      %v3228 = vpop.f32.mrb[0].mxu0
      %v3229 = vpop.f32.mrb[0].mxu0
      %v3230 = vadd.f32 %v3013, %v3229
      %v3231 = vpop.f32.mrb[0].mxu0
      %3232 = vmatprep.mubr.bf16.mxu0 0
      %3233 = vmatmul.mubr.bf16.gmra.mrb[0].mxu0 %v3115
      %v3234 = vpop.f32.mrb[0].mxu0
      %v3235 = vadd.f32 %v3018, %v3234
      %v3236 = vpop.f32.mrb[0].mxu0
      %v3237 = vpop.f32.mrb[0].mxu0
      %v3238 = vadd.f32 %v3021, %v3237
      %v3239 = vpop.f32.mrb[0].mxu0
      %3240 = vmatprep.mubr.bf16.mxu0 0
      %3241 = vmatmul.mubr.bf16.gmra.mrb[0].mxu0 %v3118
      %v3242 = vpop.f32.mrb[0].mxu0
      %v3243 = vadd.f32 %v3026, %v3242
      %v3244 = vpop.f32.mrb[0].mxu0
      %v3245 = vpop.f32.mrb[0].mxu0
      %v3246 = vadd.f32 %v3029, %v3245
      %v3247 = vpop.f32.mrb[0].mxu0
      %3248 = vmatprep.mubr.bf16.mxu0 0
      %3249 = vmatmul.mubr.bf16.gmra.mrb[0].mxu0 %v3121
      %v3250 = vpop.f32.mrb[0].mxu0
      %v3251 = vadd.f32 %v3034, %v3250
      %v3252 = vpop.f32.mrb[0].mxu0
      %v3253 = vpop.f32.mrb[0].mxu0
      %v3254 = vadd.f32 %v3037, %v3253
      %v3255 = vpop.f32.mrb[0].mxu0
      %3256 = vmatprep.mubr.bf16.mxu0 0
      %3257 = vmatmul.mubr.bf16.gmra.mrb[0].mxu0 %v3124
      %v3258 = vpop.f32.mrb[0].mxu0
      %v3259 = vadd.f32 %v3042, %v3258
      %v3260 = vpop.f32.mrb[0].mxu0
      %v3261 = vpop.f32.mrb[0].mxu0
      %v3262 = vadd.f32 %v3045, %v3261
      %v3263 = vpop.f32.mrb[0].mxu0
      %3264 = vmatprep.mubr.bf16.mxu0 0
      %3265 = vmatmul.mubr.bf16.gmra.mrb[0].mxu0 %v3127
      %v3266 = vpop.f32.mrb[0].mxu0
      %v3267 = vadd.f32 %v3050, %v3266
      %v3268 = vpop.f32.mrb[0].mxu0
      %v3269 = vpop.f32.mrb[0].mxu0
      %v3270 = vadd.f32 %v3053, %v3269
      %v3271 = vpop.f32.mrb[0].mxu0
      %3272 = vmatprep.mubr.bf16.mxu0 0
      %3273 = vmatmul.mubr.bf16.gmra.mrb[0].mxu0 %v3130
      %v3274 = vpop.f32.mrb[0].mxu0
      %v3275 = vadd.f32 %v3058, %v3274
      %v3276 = vpop.f32.mrb[0].mxu0
      %v3277 = vpop.f32.mrb[0].mxu0
      %v3278 = vadd.f32 %v3061, %v3277
      %v3279 = vpop.f32.mrb[0].mxu0
      %3280 = vmatprep.mubr.bf16.mxu0 0
      %3281 = vmatmul.mubr.bf16.gmra.mrb[0].mxu0 %v3133
      %v3282 = vpop.f32.mrb[0].mxu0
      %v3283 = vadd.f32 %v3066, %v3282
      %v3284 = vpop.f32.mrb[0].mxu0
      %v3285 = vpop.f32.mrb[0].mxu0
      %v3286 = vadd.f32 %v3069, %v3285
      %v3287 = vpop.f32.mrb[0].mxu0
      %3288 = vmatprep.mubr.bf16.mxu0 0
      %3289 = vmatmul.mubr.bf16.gmra.mrb[0].mxu0 %v3136
      %v3290 = vpop.f32.mrb[0].mxu0
      %v3291 = vadd.f32 %v3074, %v3290
      %v3292 = vpop.f32.mrb[0].mxu0
      %v3293 = vpop.f32.mrb[0].mxu0
      %v3294 = vadd.f32 %v3077, %v3293
      %v3295 = vpop.f32.mrb[0].mxu0
      %3296 = vmatprep.mubr.bf16.mxu0 0
      %3297 = vmatmul.mubr.bf16.gmra.mrb[0].mxu0 %v3139
      %v3298 = vpop.f32.mrb[0].mxu0
      %v3299 = vadd.f32 %v3082, %v3298
      %v3300 = vpop.f32.mrb[0].mxu0
      %v3301 = vpop.f32.mrb[0].mxu0
      %v3302 = vadd.f32 %v3085, %v3301
      %v3303 = vpop.f32.mrb[0].mxu0
      %3304 = vdwg.mxu0
      %s3305 = scalar_lea.vmem [#allocation2], 24
      %v3306 = vld [vmem:[%s3305] sm:$0xf]
      %v3307 = vld [vmem:[%s3305 + $0x4] sm:$0xf]
      %v3308 = vld [vmem:[%s3305 + $0xc] sm:$0xf]
      %v3309 = vld [vmem:[%s3305 + $0x10] sm:$0xf]
      %v3310 = vld [vmem:[%s3305 + $0x18] sm:$0xf]
      %v3311 = vld [vmem:[%s3305 + $0x1c] sm:$0xf]
      %v3312 = vld [vmem:[%s3305 + $0x24] sm:$0xf]
      %v3313 = vld [vmem:[%s3305 + $0x28] sm:$0xf]
      %v3314 = vld [vmem:[%s3305 + $0x30] sm:$0xf]
      %v3315 = vld [vmem:[%s3305 + $0x34] sm:$0xf]
      %v3316 = vld [vmem:[%s3305 + $0x3c] sm:$0xf]
      %v3317 = vld [vmem:[%s3305 + $0x40] sm:$0xf]
      %v3318 = vld [vmem:[%s3305 + $0x48] sm:$0xf]
      %v3319 = vld [vmem:[%s3305 + $0x4c] sm:$0xf]
      %v3320 = vld [vmem:[%s3305 + $0x54] sm:$0xf]
      %v3321 = vld [vmem:[%s3305 + $0x58] sm:$0xf]
      %v3322 = vld [vmem:[%s3305 + $0x60] sm:$0xf]
      %v3323 = vld [vmem:[%s3305 + $0x64] sm:$0xf]
      %v3324 = vld [vmem:[%s3305 + $0x6c] sm:$0xf]
      %v3325 = vld [vmem:[%s3305 + $0x70] sm:$0xf]
      %v3326 = vld [vmem:[%s3305 + $0x78] sm:$0xf]
      %v3327 = vld [vmem:[%s3305 + $0x7c] sm:$0xf]
      %v3328 = vld [vmem:[%s3305 + $0x84] sm:$0xf]
      %v3329 = vld [vmem:[%s3305 + $0x88] sm:$0xf]
      %v3330 = vld [vmem:[%s3305 + $0x90] sm:$0xf]
      %v3331 = vld [vmem:[%s3305 + $0x94] sm:$0xf]
      %v3332 = vld [vmem:[%s3305 + $0x9c] sm:$0xf]
      %v3333 = vld [vmem:[%s3305 + $0xa0] sm:$0xf]
      %v3334 = vld [vmem:[%s3305 + $0xa8] sm:$0xf]
      %v3335 = vld [vmem:[%s3305 + $0xac] sm:$0xf]
      %v3336 = vld [vmem:[%s3305 + $0xb4] sm:$0xf]
      %v3337 = vld [vmem:[%s3305 + $0xb8] sm:$0xf]
      %v3370 = vunpack.c.l.b16 %v3306
      %v3371 = vunpack.c.l.b16 %v3307
      %v3372 = vunpack.c.l.b16 %v3308
      %v3373 = vunpack.c.l.b16 %v3309
      %v3374 = vunpack.c.l.b16 %v3310
      %v3375 = vunpack.c.l.b16 %v3311
      %v3376 = vunpack.c.l.b16 %v3312
      %v3377 = vunpack.c.l.b16 %v3313
      %v3378 = vunpack.c.l.b16 %v3314
      %v3379 = vunpack.c.l.b16 %v3315
      %v3380 = vunpack.c.l.b16 %v3316
      %v3381 = vunpack.c.l.b16 %v3317
      %v3382 = vunpack.c.l.b16 %v3318
      %v3383 = vunpack.c.l.b16 %v3319
      %v3384 = vunpack.c.l.b16 %v3320
      %v3385 = vunpack.c.l.b16 %v3321
      %v3386 = vunpack.c.l.b16 %v3322
      %v3387 = vunpack.c.l.b16 %v3323
      %v3388 = vunpack.c.l.b16 %v3324
      %v3389 = vunpack.c.l.b16 %v3325
      %v3390 = vunpack.c.l.b16 %v3326
      %v3391 = vunpack.c.l.b16 %v3327
      %v3392 = vunpack.c.l.b16 %v3328
      %v3393 = vunpack.c.l.b16 %v3329
      %v3394 = vunpack.c.l.b16 %v3330
      %v3395 = vunpack.c.l.b16 %v3331
      %v3396 = vunpack.c.l.b16 %v3332
      %v3397 = vunpack.c.l.b16 %v3333
      %v3398 = vunpack.c.l.b16 %v3334
      %v3399 = vunpack.c.l.b16 %v3335
      %v3400 = vunpack.c.l.b16 %v3336
      %v3401 = vunpack.c.l.b16 %v3337
      %v3402 = vpack.c.b16 %v3371, %v3370
      %v3403 = vpack.c.b16 %v3373, %v3372
      %v3404 = vpack.c.b16 %v3375, %v3374
      %v3405 = vpack.c.b16 %v3377, %v3376
      %v3406 = vpack.c.b16 %v3379, %v3378
      %v3407 = vpack.c.b16 %v3381, %v3380
      %v3408 = vpack.c.b16 %v3383, %v3382
      %v3409 = vpack.c.b16 %v3385, %v3384
      %v3410 = vpack.c.b16 %v3387, %v3386
      %v3411 = vpack.c.b16 %v3389, %v3388
      %v3412 = vpack.c.b16 %v3391, %v3390
      %v3413 = vpack.c.b16 %v3393, %v3392
      %v3414 = vpack.c.b16 %v3395, %v3394
      %v3415 = vpack.c.b16 %v3397, %v3396
      %v3416 = vpack.c.b16 %v3399, %v3398
      %v3417 = vpack.c.b16 %v3401, %v3400
      %3434 = vst.msk [vmem:[#allocation3] sm:$0xff] %vm935, %v3402
      %3435 = vst.msk [vmem:[#allocation3 + $0x8] sm:$0xff] %vm935, %v3403
      %3436 = vst.msk [vmem:[#allocation3 + $0x10] sm:$0xff] %vm935, %v3404
      %3437 = vst.msk [vmem:[#allocation3 + $0x18] sm:$0xff] %vm935, %v3405
      %3438 = vst.msk [vmem:[#allocation3 + $0x20] sm:$0xff] %vm935, %v3406
      %3439 = vst.msk [vmem:[#allocation3 + $0x28] sm:$0xff] %vm935, %v3407
      %3440 = vst.msk [vmem:[#allocation3 + $0x30] sm:$0xff] %vm935, %v3408
      %3441 = vst.msk [vmem:[#allocation3 + $0x38] sm:$0xff] %vm935, %v3409
      %3442 = vst.msk [vmem:[#allocation3 + $0x40] sm:$0xff] %vm935, %v3410
      %3443 = vst.msk [vmem:[#allocation3 + $0x48] sm:$0xff] %vm935, %v3411
      %3444 = vst.msk [vmem:[#allocation3 + $0x50] sm:$0xff] %vm935, %v3412
      %3445 = vst.msk [vmem:[#allocation3 + $0x58] sm:$0xff] %vm935, %v3413
      %3446 = vst.msk [vmem:[#allocation3 + $0x60] sm:$0xff] %vm935, %v3414
      %3447 = vst.msk [vmem:[#allocation3 + $0x68] sm:$0xff] %vm935, %v3415
      %3448 = vst.msk [vmem:[#allocation3 + $0x70] sm:$0xff] %vm935, %v3416
      %3449 = vst.msk [vmem:[#allocation3 + $0x78] sm:$0xff] %vm935, %v3417
      %v3450 = vld [vmem:[%s3305] sm:$0xf]
      %v3451 = vld [vmem:[%s3305 + $0x4] sm:$0xf]
      %v3452 = vld [vmem:[%s3305 + $0x8] sm:$0x1]
      %v3453 = vld [vmem:[%s3305 + $0xc] sm:$0xf]
      %v3454 = vld [vmem:[%s3305 + $0x10] sm:$0xf]
      %v3455 = vld [vmem:[%s3305 + $0x14] sm:$0x1]
      %v3456 = vld [vmem:[%s3305 + $0x18] sm:$0xf]
      %v3457 = vld [vmem:[%s3305 + $0x1c] sm:$0xf]
      %v3458 = vld [vmem:[%s3305 + $0x20] sm:$0x1]
      %v3459 = vld [vmem:[%s3305 + $0x24] sm:$0xf]
      %v3460 = vld [vmem:[%s3305 + $0x28] sm:$0xf]
      %v3461 = vld [vmem:[%s3305 + $0x2c] sm:$0x1]
      %v3462 = vld [vmem:[%s3305 + $0x30] sm:$0xf]
      %v3463 = vld [vmem:[%s3305 + $0x34] sm:$0xf]
      %v3464 = vld [vmem:[%s3305 + $0x38] sm:$0x1]
      %v3465 = vld [vmem:[%s3305 + $0x3c] sm:$0xf]
      %v3466 = vld [vmem:[%s3305 + $0x40] sm:$0xf]
      %v3467 = vld [vmem:[%s3305 + $0x44] sm:$0x1]
      %v3468 = vld [vmem:[%s3305 + $0x48] sm:$0xf]
      %v3469 = vld [vmem:[%s3305 + $0x4c] sm:$0xf]
      %v3470 = vld [vmem:[%s3305 + $0x50] sm:$0x1]
      %v3471 = vld [vmem:[%s3305 + $0x54] sm:$0xf]
      %v3472 = vld [vmem:[%s3305 + $0x58] sm:$0xf]
      %v3473 = vld [vmem:[%s3305 + $0x5c] sm:$0x1]
      %v3474 = vld [vmem:[%s3305 + $0x60] sm:$0xf]
      %v3475 = vld [vmem:[%s3305 + $0x64] sm:$0xf]
      %v3476 = vld [vmem:[%s3305 + $0x68] sm:$0x1]
      %v3477 = vld [vmem:[%s3305 + $0x6c] sm:$0xf]
      %v3478 = vld [vmem:[%s3305 + $0x70] sm:$0xf]
      %v3479 = vld [vmem:[%s3305 + $0x74] sm:$0x1]
      %v3480 = vld [vmem:[%s3305 + $0x78] sm:$0xf]
      %v3481 = vld [vmem:[%s3305 + $0x7c] sm:$0xf]
      %v3482 = vld [vmem:[%s3305 + $0x80] sm:$0x1]
      %v3483 = vld [vmem:[%s3305 + $0x84] sm:$0xf]
      %v3484 = vld [vmem:[%s3305 + $0x88] sm:$0xf]
      %v3485 = vld [vmem:[%s3305 + $0x8c] sm:$0x1]
      %v3486 = vld [vmem:[%s3305 + $0x90] sm:$0xf]
      %v3487 = vld [vmem:[%s3305 + $0x94] sm:$0xf]
      %v3488 = vld [vmem:[%s3305 + $0x98] sm:$0x1]
      %v3489 = vld [vmem:[%s3305 + $0x9c] sm:$0xf]
      %v3490 = vld [vmem:[%s3305 + $0xa0] sm:$0xf]
      %v3491 = vld [vmem:[%s3305 + $0xa4] sm:$0x1]
      %v3492 = vld [vmem:[%s3305 + $0xa8] sm:$0xf]
      %v3493 = vld [vmem:[%s3305 + $0xac] sm:$0xf]
      %v3494 = vld [vmem:[%s3305 + $0xb0] sm:$0x1]
      %v3495 = vld [vmem:[%s3305 + $0xb4] sm:$0xf]
      %v3496 = vld [vmem:[%s3305 + $0xb8] sm:$0xf]
      %v3497 = vld [vmem:[%s3305 + $0xbc] sm:$0x1]
      %v3499 = vshrl.u32 %v3450, 16
      %v3501 = vrot.slane %v3499, 4
      %v3502 = vshll.u32 %v3450, 16
      %v3504 = vrot.slane %v3502, 5
      %v3505 = vor.u32 %v3501, %v3504
      %v3506 = vrot.slane %v3505, 4
      %v3508 = vshll.u32 %v3451, 16
      %v3510 = vrot.slane %v3508, 5
      %v3511 = vsel %vm1002, %v3506, %v3510
      %v3512 = vshrl.u32 %v3451, 16
      %v3514 = vrot.slane %v3512, 4
      %v3515 = vor.u32 %v3514, %v3510
      %v3516 = vrot.slane %v3515, 4
      %v3518 = vshll.u32 %v3452, 16
      %v3520 = vrot.slane %v3518, 5
      %v3521 = vsel %vm1002, %v3516, %v3520
      %v3523 = vshrl.u32 %v3453, 16
      %v3525 = vrot.slane %v3523, 4
      %v3526 = vshll.u32 %v3453, 16
      %v3528 = vrot.slane %v3526, 5
      %v3529 = vor.u32 %v3525, %v3528
      %v3530 = vrot.slane %v3529, 4
      %v3532 = vshll.u32 %v3454, 16
      %v3534 = vrot.slane %v3532, 5
      %v3535 = vsel %vm1002, %v3530, %v3534
      %v3536 = vshrl.u32 %v3454, 16
      %v3538 = vrot.slane %v3536, 4
      %v3539 = vor.u32 %v3538, %v3534
      %v3540 = vrot.slane %v3539, 4
      %v3542 = vshll.u32 %v3455, 16
      %v3544 = vrot.slane %v3542, 5
      %v3545 = vsel %vm1002, %v3540, %v3544
      %v3547 = vshrl.u32 %v3456, 16
      %v3549 = vrot.slane %v3547, 4
      %v3550 = vshll.u32 %v3456, 16
      %v3552 = vrot.slane %v3550, 5
      %v3553 = vor.u32 %v3549, %v3552
      %v3554 = vrot.slane %v3553, 4
      %v3556 = vshll.u32 %v3457, 16
      %v3558 = vrot.slane %v3556, 5
      %v3559 = vsel %vm1002, %v3554, %v3558
      %v3560 = vshrl.u32 %v3457, 16
      %v3562 = vrot.slane %v3560, 4
      %v3563 = vor.u32 %v3562, %v3558
      %v3564 = vrot.slane %v3563, 4
      %v3566 = vshll.u32 %v3458, 16
      %v3568 = vrot.slane %v3566, 5
      %v3569 = vsel %vm1002, %v3564, %v3568
      %v3571 = vshrl.u32 %v3459, 16
      %v3573 = vrot.slane %v3571, 4
      %v3574 = vshll.u32 %v3459, 16
      %v3576 = vrot.slane %v3574, 5
      %v3577 = vor.u32 %v3573, %v3576
      %v3578 = vrot.slane %v3577, 4
      %v3580 = vshll.u32 %v3460, 16
      %v3582 = vrot.slane %v3580, 5
      %v3583 = vsel %vm1002, %v3578, %v3582
      %v3584 = vshrl.u32 %v3460, 16
      %v3586 = vrot.slane %v3584, 4
      %v3587 = vor.u32 %v3586, %v3582
      %v3588 = vrot.slane %v3587, 4
      %v3590 = vshll.u32 %v3461, 16
      %v3592 = vrot.slane %v3590, 5
      %v3593 = vsel %vm1002, %v3588, %v3592
      %v3595 = vshrl.u32 %v3462, 16
      %v3597 = vrot.slane %v3595, 4
      %v3598 = vshll.u32 %v3462, 16
      %v3600 = vrot.slane %v3598, 5
      %v3601 = vor.u32 %v3597, %v3600
      %v3602 = vrot.slane %v3601, 4
      %v3604 = vshll.u32 %v3463, 16
      %v3606 = vrot.slane %v3604, 5
      %v3607 = vsel %vm1002, %v3602, %v3606
      %v3608 = vshrl.u32 %v3463, 16
      %v3610 = vrot.slane %v3608, 4
      %v3611 = vor.u32 %v3610, %v3606
      %v3612 = vrot.slane %v3611, 4
      %v3614 = vshll.u32 %v3464, 16
      %v3616 = vrot.slane %v3614, 5
      %v3617 = vsel %vm1002, %v3612, %v3616
      %v3619 = vshrl.u32 %v3465, 16
      %v3621 = vrot.slane %v3619, 4
      %v3622 = vshll.u32 %v3465, 16
      %v3624 = vrot.slane %v3622, 5
      %v3625 = vor.u32 %v3621, %v3624
      %v3626 = vrot.slane %v3625, 4
      %v3628 = vshll.u32 %v3466, 16
      %v3630 = vrot.slane %v3628, 5
      %v3631 = vsel %vm1002, %v3626, %v3630
      %v3632 = vshrl.u32 %v3466, 16
      %v3634 = vrot.slane %v3632, 4
      %v3635 = vor.u32 %v3634, %v3630
      %v3636 = vrot.slane %v3635, 4
      %v3638 = vshll.u32 %v3467, 16
      %v3640 = vrot.slane %v3638, 5
      %v3641 = vsel %vm1002, %v3636, %v3640
      %v3643 = vshrl.u32 %v3468, 16
      %v3645 = vrot.slane %v3643, 4
      %v3646 = vshll.u32 %v3468, 16
      %v3648 = vrot.slane %v3646, 5
      %v3649 = vor.u32 %v3645, %v3648
      %v3650 = vrot.slane %v3649, 4
      %v3652 = vshll.u32 %v3469, 16
      %v3654 = vrot.slane %v3652, 5
      %v3655 = vsel %vm1002, %v3650, %v3654
      %v3656 = vshrl.u32 %v3469, 16
      %v3658 = vrot.slane %v3656, 4
      %v3659 = vor.u32 %v3658, %v3654
      %v3660 = vrot.slane %v3659, 4
      %v3662 = vshll.u32 %v3470, 16
      %v3664 = vrot.slane %v3662, 5
      %v3665 = vsel %vm1002, %v3660, %v3664
      %v3667 = vshrl.u32 %v3471, 16
      %v3669 = vrot.slane %v3667, 4
      %v3670 = vshll.u32 %v3471, 16
      %v3672 = vrot.slane %v3670, 5
      %v3673 = vor.u32 %v3669, %v3672
      %v3674 = vrot.slane %v3673, 4
      %v3676 = vshll.u32 %v3472, 16
      %v3678 = vrot.slane %v3676, 5
      %v3679 = vsel %vm1002, %v3674, %v3678
      %v3680 = vshrl.u32 %v3472, 16
      %v3682 = vrot.slane %v3680, 4
      %v3683 = vor.u32 %v3682, %v3678
      %v3684 = vrot.slane %v3683, 4
      %v3686 = vshll.u32 %v3473, 16
      %v3688 = vrot.slane %v3686, 5
      %v3689 = vsel %vm1002, %v3684, %v3688
      %v3691 = vshrl.u32 %v3474, 16
      %v3693 = vrot.slane %v3691, 4
      %v3694 = vshll.u32 %v3474, 16
      %v3696 = vrot.slane %v3694, 5
      %v3697 = vor.u32 %v3693, %v3696
      %v3698 = vrot.slane %v3697, 4
      %v3700 = vshll.u32 %v3475, 16
      %v3702 = vrot.slane %v3700, 5
      %v3703 = vsel %vm1002, %v3698, %v3702
      %v3704 = vshrl.u32 %v3475, 16
      %v3706 = vrot.slane %v3704, 4
      %v3707 = vor.u32 %v3706, %v3702
      %v3708 = vrot.slane %v3707, 4
      %v3710 = vshll.u32 %v3476, 16
      %v3712 = vrot.slane %v3710, 5
      %v3713 = vsel %vm1002, %v3708, %v3712
      %v3715 = vshrl.u32 %v3477, 16
      %v3717 = vrot.slane %v3715, 4
      %v3718 = vshll.u32 %v3477, 16
      %v3720 = vrot.slane %v3718, 5
      %v3721 = vor.u32 %v3717, %v3720
      %v3722 = vrot.slane %v3721, 4
      %v3724 = vshll.u32 %v3478, 16
      %v3726 = vrot.slane %v3724, 5
      %v3727 = vsel %vm1002, %v3722, %v3726
      %v3728 = vshrl.u32 %v3478, 16
      %v3730 = vrot.slane %v3728, 4
      %v3731 = vor.u32 %v3730, %v3726
      %v3732 = vrot.slane %v3731, 4
      %v3734 = vshll.u32 %v3479, 16
      %v3736 = vrot.slane %v3734, 5
      %v3737 = vsel %vm1002, %v3732, %v3736
      %v3739 = vshrl.u32 %v3480, 16
      %v3741 = vrot.slane %v3739, 4
      %v3742 = vshll.u32 %v3480, 16
      %v3744 = vrot.slane %v3742, 5
      %v3745 = vor.u32 %v3741, %v3744
      %v3746 = vrot.slane %v3745, 4
      %v3748 = vshll.u32 %v3481, 16
      %v3750 = vrot.slane %v3748, 5
      %v3751 = vsel %vm1002, %v3746, %v3750
      %v3752 = vshrl.u32 %v3481, 16
      %v3754 = vrot.slane %v3752, 4
      %v3755 = vor.u32 %v3754, %v3750
      %v3756 = vrot.slane %v3755, 4
      %v3758 = vshll.u32 %v3482, 16
      %v3760 = vrot.slane %v3758, 5
      %v3761 = vsel %vm1002, %v3756, %v3760
      %v3763 = vshrl.u32 %v3483, 16
      %v3765 = vrot.slane %v3763, 4
      %v3766 = vshll.u32 %v3483, 16
      %v3768 = vrot.slane %v3766, 5
      %v3769 = vor.u32 %v3765, %v3768
      %v3770 = vrot.slane %v3769, 4
      %v3772 = vshll.u32 %v3484, 16
      %v3774 = vrot.slane %v3772, 5
      %v3775 = vsel %vm1002, %v3770, %v3774
      %v3776 = vshrl.u32 %v3484, 16
      %v3778 = vrot.slane %v3776, 4
      %v3779 = vor.u32 %v3778, %v3774
      %v3780 = vrot.slane %v3779, 4
      %v3782 = vshll.u32 %v3485, 16
      %v3784 = vrot.slane %v3782, 5
      %v3785 = vsel %vm1002, %v3780, %v3784
      %v3787 = vshrl.u32 %v3486, 16
      %v3789 = vrot.slane %v3787, 4
      %v3790 = vshll.u32 %v3486, 16
      %v3792 = vrot.slane %v3790, 5
      %v3793 = vor.u32 %v3789, %v3792
      %v3794 = vrot.slane %v3793, 4
      %v3796 = vshll.u32 %v3487, 16
      %v3798 = vrot.slane %v3796, 5
      %v3799 = vsel %vm1002, %v3794, %v3798
      %v3800 = vshrl.u32 %v3487, 16
      %v3802 = vrot.slane %v3800, 4
      %v3803 = vor.u32 %v3802, %v3798
      %v3804 = vrot.slane %v3803, 4
      %v3806 = vshll.u32 %v3488, 16
      %v3808 = vrot.slane %v3806, 5
      %v3809 = vsel %vm1002, %v3804, %v3808
      %v3811 = vshrl.u32 %v3489, 16
      %v3813 = vrot.slane %v3811, 4
      %v3814 = vshll.u32 %v3489, 16
      %v3816 = vrot.slane %v3814, 5
      %v3817 = vor.u32 %v3813, %v3816
      %v3818 = vrot.slane %v3817, 4
      %v3820 = vshll.u32 %v3490, 16
      %v3822 = vrot.slane %v3820, 5
      %v3823 = vsel %vm1002, %v3818, %v3822
      %v3824 = vshrl.u32 %v3490, 16
      %v3826 = vrot.slane %v3824, 4
      %v3827 = vor.u32 %v3826, %v3822
      %v3828 = vrot.slane %v3827, 4
      %v3830 = vshll.u32 %v3491, 16
      %v3832 = vrot.slane %v3830, 5
      %v3833 = vsel %vm1002, %v3828, %v3832
      %v3835 = vshrl.u32 %v3492, 16
      %v3837 = vrot.slane %v3835, 4
      %v3838 = vshll.u32 %v3492, 16
      %v3840 = vrot.slane %v3838, 5
      %v3841 = vor.u32 %v3837, %v3840
      %v3842 = vrot.slane %v3841, 4
      %v3844 = vshll.u32 %v3493, 16
      %v3846 = vrot.slane %v3844, 5
      %v3847 = vsel %vm1002, %v3842, %v3846
      %v3848 = vshrl.u32 %v3493, 16
      %v3850 = vrot.slane %v3848, 4
      %v3851 = vor.u32 %v3850, %v3846
      %v3852 = vrot.slane %v3851, 4
      %v3854 = vshll.u32 %v3494, 16
      %v3856 = vrot.slane %v3854, 5
      %v3857 = vsel %vm1002, %v3852, %v3856
      %v3859 = vshrl.u32 %v3495, 16
      %v3861 = vrot.slane %v3859, 4
      %v3862 = vshll.u32 %v3495, 16
      %v3864 = vrot.slane %v3862, 5
      %v3865 = vor.u32 %v3861, %v3864
      %v3866 = vrot.slane %v3865, 4
      %v3868 = vshll.u32 %v3496, 16
      %v3870 = vrot.slane %v3868, 5
      %v3871 = vsel %vm1002, %v3866, %v3870
      %v3872 = vshrl.u32 %v3496, 16
      %v3874 = vrot.slane %v3872, 4
      %v3875 = vor.u32 %v3874, %v3870
      %v3876 = vrot.slane %v3875, 4
      %v3878 = vshll.u32 %v3497, 16
      %v3880 = vrot.slane %v3878, 5
      %v3881 = vsel %vm1002, %v3876, %v3880
      %v3882 = vunpack.c.l.b16 %v3511
      %v3883 = vunpack.c.l.b16 %v3521
      %v3884 = vunpack.c.l.b16 %v3535
      %v3885 = vunpack.c.l.b16 %v3545
      %v3886 = vunpack.c.l.b16 %v3559
      %v3887 = vunpack.c.l.b16 %v3569
      %v3888 = vunpack.c.l.b16 %v3583
      %v3889 = vunpack.c.l.b16 %v3593
      %v3890 = vunpack.c.l.b16 %v3607
      %v3891 = vunpack.c.l.b16 %v3617
      %v3892 = vunpack.c.l.b16 %v3631
      %v3893 = vunpack.c.l.b16 %v3641
      %v3894 = vunpack.c.l.b16 %v3655
      %v3895 = vunpack.c.l.b16 %v3665
      %v3896 = vunpack.c.l.b16 %v3679
      %v3897 = vunpack.c.l.b16 %v3689
      %v3898 = vunpack.c.l.b16 %v3703
      %v3899 = vunpack.c.l.b16 %v3713
      %v3900 = vunpack.c.l.b16 %v3727
      %v3901 = vunpack.c.l.b16 %v3737
      %v3902 = vunpack.c.l.b16 %v3751
      %v3903 = vunpack.c.l.b16 %v3761
      %v3904 = vunpack.c.l.b16 %v3775
      %v3905 = vunpack.c.l.b16 %v3785
      %v3906 = vunpack.c.l.b16 %v3799
      %v3907 = vunpack.c.l.b16 %v3809
      %v3908 = vunpack.c.l.b16 %v3823
      %v3909 = vunpack.c.l.b16 %v3833
      %v3910 = vunpack.c.l.b16 %v3847
      %v3911 = vunpack.c.l.b16 %v3857
      %v3912 = vunpack.c.l.b16 %v3871
      %v3913 = vunpack.c.l.b16 %v3881
      %v3914 = vpack.c.b16 %v3883, %v3882
      %v3915 = vpack.c.b16 %v3885, %v3884
      %v3916 = vpack.c.b16 %v3887, %v3886
      %v3917 = vpack.c.b16 %v3889, %v3888
      %v3918 = vpack.c.b16 %v3891, %v3890
      %v3919 = vpack.c.b16 %v3893, %v3892
      %v3920 = vpack.c.b16 %v3895, %v3894
      %v3921 = vpack.c.b16 %v3897, %v3896
      %v3922 = vpack.c.b16 %v3899, %v3898
      %v3923 = vpack.c.b16 %v3901, %v3900
      %v3924 = vpack.c.b16 %v3903, %v3902
      %v3925 = vpack.c.b16 %v3905, %v3904
      %v3926 = vpack.c.b16 %v3907, %v3906
      %v3927 = vpack.c.b16 %v3909, %v3908
      %v3928 = vpack.c.b16 %v3911, %v3910
      %v3929 = vpack.c.b16 %v3913, %v3912
      %3930 = vrot.lane.b32.xlu0 %v3914, 4
      %v3931 = vpop.permute.xlu0 %3930
      %3932 = vrot.lane.b32.xlu0 %v3915, 4
      %v3933 = vpop.permute.xlu0 %3932
      %3934 = vrot.lane.b32.xlu0 %v3916, 4
      %v3935 = vpop.permute.xlu0 %3934
      %3936 = vrot.lane.b32.xlu0 %v3917, 4
      %v3937 = vpop.permute.xlu0 %3936
      %3938 = vrot.lane.b32.xlu0 %v3918, 4
      %v3939 = vpop.permute.xlu0 %3938
      %3940 = vrot.lane.b32.xlu0 %v3919, 4
      %v3941 = vpop.permute.xlu0 %3940
      %3942 = vrot.lane.b32.xlu0 %v3920, 4
      %v3943 = vpop.permute.xlu0 %3942
      %3944 = vrot.lane.b32.xlu0 %v3921, 4
      %v3945 = vpop.permute.xlu0 %3944
      %3946 = vrot.lane.b32.xlu0 %v3922, 4
      %v3947 = vpop.permute.xlu0 %3946
      %3948 = vrot.lane.b32.xlu0 %v3923, 4
      %v3949 = vpop.permute.xlu0 %3948
      %3950 = vrot.lane.b32.xlu0 %v3924, 4
      %v3951 = vpop.permute.xlu0 %3950
      %3952 = vrot.lane.b32.xlu0 %v3925, 4
      %v3953 = vpop.permute.xlu0 %3952
      %3954 = vrot.lane.b32.xlu0 %v3926, 4
      %v3955 = vpop.permute.xlu0 %3954
      %3956 = vrot.lane.b32.xlu0 %v3927, 4
      %v3957 = vpop.permute.xlu0 %3956
      %3958 = vrot.lane.b32.xlu0 %v3928, 4
      %v3959 = vpop.permute.xlu0 %3958
      %3960 = vrot.lane.b32.xlu0 %v3929, 4
      %v3961 = vpop.permute.xlu0 %3960
      %3978 = vst.msk [vmem:[#allocation3] sm:$0xff] %vm1483, %v3931
      %3979 = vst.msk [vmem:[#allocation3 + $0x8] sm:$0xff] %vm1483, %v3933
      %3980 = vst.msk [vmem:[#allocation3 + $0x10] sm:$0xff] %vm1483, %v3935
      %3981 = vst.msk [vmem:[#allocation3 + $0x18] sm:$0xff] %vm1483, %v3937
      %3982 = vst.msk [vmem:[#allocation3 + $0x20] sm:$0xff] %vm1483, %v3939
      %3983 = vst.msk [vmem:[#allocation3 + $0x28] sm:$0xff] %vm1483, %v3941
      %3984 = vst.msk [vmem:[#allocation3 + $0x30] sm:$0xff] %vm1483, %v3943
      %3985 = vst.msk [vmem:[#allocation3 + $0x38] sm:$0xff] %vm1483, %v3945
      %3986 = vst.msk [vmem:[#allocation3 + $0x40] sm:$0xff] %vm1483, %v3947
      %3987 = vst.msk [vmem:[#allocation3 + $0x48] sm:$0xff] %vm1483, %v3949
      %3988 = vst.msk [vmem:[#allocation3 + $0x50] sm:$0xff] %vm1483, %v3951
      %3989 = vst.msk [vmem:[#allocation3 + $0x58] sm:$0xff] %vm1483, %v3953
      %3990 = vst.msk [vmem:[#allocation3 + $0x60] sm:$0xff] %vm1483, %v3955
      %3991 = vst.msk [vmem:[#allocation3 + $0x68] sm:$0xff] %vm1483, %v3957
      %3992 = vst.msk [vmem:[#allocation3 + $0x70] sm:$0xff] %vm1483, %v3959
      %3993 = vst.msk [vmem:[#allocation3 + $0x78] sm:$0xff] %vm1483, %v3961
      %v3994 = vld [vmem:[%s3305] sm:$0xe]
      %v3995 = vld [vmem:[%s3305 + $0x4] sm:$0xf]
      %v3996 = vld [vmem:[%s3305 + $0x8] sm:$0x1]
      %v3997 = vld [vmem:[%s3305 + $0xc] sm:$0xe]
      %v3998 = vld [vmem:[%s3305 + $0x10] sm:$0xf]
      %v3999 = vld [vmem:[%s3305 + $0x14] sm:$0x1]
      %v4000 = vld [vmem:[%s3305 + $0x18] sm:$0xe]
      %v4001 = vld [vmem:[%s3305 + $0x1c] sm:$0xf]
      %v4002 = vld [vmem:[%s3305 + $0x20] sm:$0x1]
      %v4003 = vld [vmem:[%s3305 + $0x24] sm:$0xe]
      %v4004 = vld [vmem:[%s3305 + $0x28] sm:$0xf]
      %v4005 = vld [vmem:[%s3305 + $0x2c] sm:$0x1]
      %v4006 = vld [vmem:[%s3305 + $0x30] sm:$0xe]
      %v4007 = vld [vmem:[%s3305 + $0x34] sm:$0xf]
      %v4008 = vld [vmem:[%s3305 + $0x38] sm:$0x1]
      %v4009 = vld [vmem:[%s3305 + $0x3c] sm:$0xe]
      %v4010 = vld [vmem:[%s3305 + $0x40] sm:$0xf]
      %v4011 = vld [vmem:[%s3305 + $0x44] sm:$0x1]
      %v4012 = vld [vmem:[%s3305 + $0x48] sm:$0xe]
      %v4013 = vld [vmem:[%s3305 + $0x4c] sm:$0xf]
      %v4014 = vld [vmem:[%s3305 + $0x50] sm:$0x1]
      %v4015 = vld [vmem:[%s3305 + $0x54] sm:$0xe]
      %v4016 = vld [vmem:[%s3305 + $0x58] sm:$0xf]
      %v4017 = vld [vmem:[%s3305 + $0x5c] sm:$0x1]
      %v4018 = vld [vmem:[%s3305 + $0x60] sm:$0xe]
      %v4019 = vld [vmem:[%s3305 + $0x64] sm:$0xf]
      %v4020 = vld [vmem:[%s3305 + $0x68] sm:$0x1]
      %v4021 = vld [vmem:[%s3305 + $0x6c] sm:$0xe]
      %v4022 = vld [vmem:[%s3305 + $0x70] sm:$0xf]
      %v4023 = vld [vmem:[%s3305 + $0x74] sm:$0x1]
      %v4024 = vld [vmem:[%s3305 + $0x78] sm:$0xe]
      %v4025 = vld [vmem:[%s3305 + $0x7c] sm:$0xf]
      %v4026 = vld [vmem:[%s3305 + $0x80] sm:$0x1]
      %v4027 = vld [vmem:[%s3305 + $0x84] sm:$0xe]
      %v4028 = vld [vmem:[%s3305 + $0x88] sm:$0xf]
      %v4029 = vld [vmem:[%s3305 + $0x8c] sm:$0x1]
      %v4030 = vld [vmem:[%s3305 + $0x90] sm:$0xe]
      %v4031 = vld [vmem:[%s3305 + $0x94] sm:$0xf]
      %v4032 = vld [vmem:[%s3305 + $0x98] sm:$0x1]
      %v4033 = vld [vmem:[%s3305 + $0x9c] sm:$0xe]
      %v4034 = vld [vmem:[%s3305 + $0xa0] sm:$0xf]
      %v4035 = vld [vmem:[%s3305 + $0xa4] sm:$0x1]
      %v4036 = vld [vmem:[%s3305 + $0xa8] sm:$0xe]
      %v4037 = vld [vmem:[%s3305 + $0xac] sm:$0xf]
      %v4038 = vld [vmem:[%s3305 + $0xb0] sm:$0x1]
      %v4039 = vld [vmem:[%s3305 + $0xb4] sm:$0xe]
      %v4040 = vld [vmem:[%s3305 + $0xb8] sm:$0xf]
      %v4041 = vld [vmem:[%s3305 + $0xbc] sm:$0x1]
      %v4090 = vrot.slane %v3994, 5
      %v4091 = vrot.slane %v4090, 4
      %v4092 = vrot.slane %v3995, 5
      %v4093 = vsel %vm1598, %v4091, %v4092
      %v4094 = vrot.slane %v4092, 4
      %v4095 = vrot.slane %v3996, 5
      %v4096 = vsel %vm1598, %v4094, %v4095
      %v4097 = vrot.slane %v3997, 5
      %v4098 = vrot.slane %v4097, 4
      %v4099 = vrot.slane %v3998, 5
      %v4100 = vsel %vm1598, %v4098, %v4099
      %v4101 = vrot.slane %v4099, 4
      %v4102 = vrot.slane %v3999, 5
      %v4103 = vsel %vm1598, %v4101, %v4102
      %v4104 = vrot.slane %v4000, 5
      %v4105 = vrot.slane %v4104, 4
      %v4106 = vrot.slane %v4001, 5
      %v4107 = vsel %vm1598, %v4105, %v4106
      %v4108 = vrot.slane %v4106, 4
      %v4109 = vrot.slane %v4002, 5
      %v4110 = vsel %vm1598, %v4108, %v4109
      %v4111 = vrot.slane %v4003, 5
      %v4112 = vrot.slane %v4111, 4
      %v4113 = vrot.slane %v4004, 5
      %v4114 = vsel %vm1598, %v4112, %v4113
      %v4115 = vrot.slane %v4113, 4
      %v4116 = vrot.slane %v4005, 5
      %v4117 = vsel %vm1598, %v4115, %v4116
      %v4118 = vrot.slane %v4006, 5
      %v4119 = vrot.slane %v4118, 4
      %v4120 = vrot.slane %v4007, 5
      %v4121 = vsel %vm1598, %v4119, %v4120
      %v4122 = vrot.slane %v4120, 4
      %v4123 = vrot.slane %v4008, 5
      %v4124 = vsel %vm1598, %v4122, %v4123
      %v4125 = vrot.slane %v4009, 5
      %v4126 = vrot.slane %v4125, 4
      %v4127 = vrot.slane %v4010, 5
      %v4128 = vsel %vm1598, %v4126, %v4127
      %v4129 = vrot.slane %v4127, 4
      %v4130 = vrot.slane %v4011, 5
      %v4131 = vsel %vm1598, %v4129, %v4130
      %v4132 = vrot.slane %v4012, 5
      %v4133 = vrot.slane %v4132, 4
      %v4134 = vrot.slane %v4013, 5
      %v4135 = vsel %vm1598, %v4133, %v4134
      %v4136 = vrot.slane %v4134, 4
      %v4137 = vrot.slane %v4014, 5
      %v4138 = vsel %vm1598, %v4136, %v4137
      %v4139 = vrot.slane %v4015, 5
      %v4140 = vrot.slane %v4139, 4
      %v4141 = vrot.slane %v4016, 5
      %v4142 = vsel %vm1598, %v4140, %v4141
      %v4143 = vrot.slane %v4141, 4
      %v4144 = vrot.slane %v4017, 5
      %v4145 = vsel %vm1598, %v4143, %v4144
      %v4146 = vrot.slane %v4018, 5
      %v4147 = vrot.slane %v4146, 4
      %v4148 = vrot.slane %v4019, 5
      %v4149 = vsel %vm1598, %v4147, %v4148
      %v4150 = vrot.slane %v4148, 4
      %v4151 = vrot.slane %v4020, 5
      %v4152 = vsel %vm1598, %v4150, %v4151
      %v4153 = vrot.slane %v4021, 5
      %v4154 = vrot.slane %v4153, 4
      %v4155 = vrot.slane %v4022, 5
      %v4156 = vsel %vm1598, %v4154, %v4155
      %v4157 = vrot.slane %v4155, 4
      %v4158 = vrot.slane %v4023, 5
      %v4159 = vsel %vm1598, %v4157, %v4158
      %v4160 = vrot.slane %v4024, 5
      %v4161 = vrot.slane %v4160, 4
      %v4162 = vrot.slane %v4025, 5
      %v4163 = vsel %vm1598, %v4161, %v4162
      %v4164 = vrot.slane %v4162, 4
      %v4165 = vrot.slane %v4026, 5
      %v4166 = vsel %vm1598, %v4164, %v4165
      %v4167 = vrot.slane %v4027, 5
      %v4168 = vrot.slane %v4167, 4
      %v4169 = vrot.slane %v4028, 5
      %v4170 = vsel %vm1598, %v4168, %v4169
      %v4171 = vrot.slane %v4169, 4
      %v4172 = vrot.slane %v4029, 5
      %v4173 = vsel %vm1598, %v4171, %v4172
      %v4174 = vrot.slane %v4030, 5
      %v4175 = vrot.slane %v4174, 4
      %v4176 = vrot.slane %v4031, 5
      %v4177 = vsel %vm1598, %v4175, %v4176
      %v4178 = vrot.slane %v4176, 4
      %v4179 = vrot.slane %v4032, 5
      %v4180 = vsel %vm1598, %v4178, %v4179
      %v4181 = vrot.slane %v4033, 5
      %v4182 = vrot.slane %v4181, 4
      %v4183 = vrot.slane %v4034, 5
      %v4184 = vsel %vm1598, %v4182, %v4183
      %v4185 = vrot.slane %v4183, 4
      %v4186 = vrot.slane %v4035, 5
      %v4187 = vsel %vm1598, %v4185, %v4186
      %v4188 = vrot.slane %v4036, 5
      %v4189 = vrot.slane %v4188, 4
      %v4190 = vrot.slane %v4037, 5
      %v4191 = vsel %vm1598, %v4189, %v4190
      %v4192 = vrot.slane %v4190, 4
      %v4193 = vrot.slane %v4038, 5
      %v4194 = vsel %vm1598, %v4192, %v4193
      %v4195 = vrot.slane %v4039, 5
      %v4196 = vrot.slane %v4195, 4
      %v4197 = vrot.slane %v4040, 5
      %v4198 = vsel %vm1598, %v4196, %v4197
      %v4199 = vrot.slane %v4197, 4
      %v4200 = vrot.slane %v4041, 5
      %v4201 = vsel %vm1598, %v4199, %v4200
      %v4202 = vunpack.c.l.b16 %v4093
      %v4203 = vunpack.c.l.b16 %v4096
      %v4204 = vunpack.c.l.b16 %v4100
      %v4205 = vunpack.c.l.b16 %v4103
      %v4206 = vunpack.c.l.b16 %v4107
      %v4207 = vunpack.c.l.b16 %v4110
      %v4208 = vunpack.c.l.b16 %v4114
      %v4209 = vunpack.c.l.b16 %v4117
      %v4210 = vunpack.c.l.b16 %v4121
      %v4211 = vunpack.c.l.b16 %v4124
      %v4212 = vunpack.c.l.b16 %v4128
      %v4213 = vunpack.c.l.b16 %v4131
      %v4214 = vunpack.c.l.b16 %v4135
      %v4215 = vunpack.c.l.b16 %v4138
      %v4216 = vunpack.c.l.b16 %v4142
      %v4217 = vunpack.c.l.b16 %v4145
      %v4218 = vunpack.c.l.b16 %v4149
      %v4219 = vunpack.c.l.b16 %v4152
      %v4220 = vunpack.c.l.b16 %v4156
      %v4221 = vunpack.c.l.b16 %v4159
      %v4222 = vunpack.c.l.b16 %v4163
      %v4223 = vunpack.c.l.b16 %v4166
      %v4224 = vunpack.c.l.b16 %v4170
      %v4225 = vunpack.c.l.b16 %v4173
      %v4226 = vunpack.c.l.b16 %v4177
      %v4227 = vunpack.c.l.b16 %v4180
      %v4228 = vunpack.c.l.b16 %v4184
      %v4229 = vunpack.c.l.b16 %v4187
      %v4230 = vunpack.c.l.b16 %v4191
      %v4231 = vunpack.c.l.b16 %v4194
      %v4232 = vunpack.c.l.b16 %v4198
      %v4233 = vunpack.c.l.b16 %v4201
      %v4234 = vpack.c.b16 %v4203, %v4202
      %v4235 = vpack.c.b16 %v4205, %v4204
      %v4236 = vpack.c.b16 %v4207, %v4206
      %v4237 = vpack.c.b16 %v4209, %v4208
      %v4238 = vpack.c.b16 %v4211, %v4210
      %v4239 = vpack.c.b16 %v4213, %v4212
      %v4240 = vpack.c.b16 %v4215, %v4214
      %v4241 = vpack.c.b16 %v4217, %v4216
      %v4242 = vpack.c.b16 %v4219, %v4218
      %v4243 = vpack.c.b16 %v4221, %v4220
      %v4244 = vpack.c.b16 %v4223, %v4222
      %v4245 = vpack.c.b16 %v4225, %v4224
      %v4246 = vpack.c.b16 %v4227, %v4226
      %v4247 = vpack.c.b16 %v4229, %v4228
      %v4248 = vpack.c.b16 %v4231, %v4230
      %v4249 = vpack.c.b16 %v4233, %v4232
      %4250 = vrot.lane.b32.xlu0 %v4234, 8
      %v4251 = vpop.permute.xlu0 %4250
      %4252 = vrot.lane.b32.xlu0 %v4235, 8
      %v4253 = vpop.permute.xlu0 %4252
      %4254 = vrot.lane.b32.xlu0 %v4236, 8
      %v4255 = vpop.permute.xlu0 %4254
      %4256 = vrot.lane.b32.xlu0 %v4237, 8
      %v4257 = vpop.permute.xlu0 %4256
      %4258 = vrot.lane.b32.xlu0 %v4238, 8
      %v4259 = vpop.permute.xlu0 %4258
      %4260 = vrot.lane.b32.xlu0 %v4239, 8
      %v4261 = vpop.permute.xlu0 %4260
      %4262 = vrot.lane.b32.xlu0 %v4240, 8
      %v4263 = vpop.permute.xlu0 %4262
      %4264 = vrot.lane.b32.xlu0 %v4241, 8
      %v4265 = vpop.permute.xlu0 %4264
      %4266 = vrot.lane.b32.xlu0 %v4242, 8
      %v4267 = vpop.permute.xlu0 %4266
      %4268 = vrot.lane.b32.xlu0 %v4243, 8
      %v4269 = vpop.permute.xlu0 %4268
      %4270 = vrot.lane.b32.xlu0 %v4244, 8
      %v4271 = vpop.permute.xlu0 %4270
      %4272 = vrot.lane.b32.xlu0 %v4245, 8
      %v4273 = vpop.permute.xlu0 %4272
      %4274 = vrot.lane.b32.xlu0 %v4246, 8
      %v4275 = vpop.permute.xlu0 %4274
      %4276 = vrot.lane.b32.xlu0 %v4247, 8
      %v4277 = vpop.permute.xlu0 %4276
      %4278 = vrot.lane.b32.xlu0 %v4248, 8
      %v4279 = vpop.permute.xlu0 %4278
      %4280 = vrot.lane.b32.xlu0 %v4249, 8
      %v4281 = vpop.permute.xlu0 %4280
      %4298 = vst.msk [vmem:[#allocation3] sm:$0xff] %vm1807, %v4251
      %4299 = vst.msk [vmem:[#allocation3 + $0x8] sm:$0xff] %vm1807, %v4253
      %4300 = vst.msk [vmem:[#allocation3 + $0x10] sm:$0xff] %vm1807, %v4255
      %4301 = vst.msk [vmem:[#allocation3 + $0x18] sm:$0xff] %vm1807, %v4257
      %4302 = vst.msk [vmem:[#allocation3 + $0x20] sm:$0xff] %vm1807, %v4259
      %4303 = vst.msk [vmem:[#allocation3 + $0x28] sm:$0xff] %vm1807, %v4261
      %4304 = vst.msk [vmem:[#allocation3 + $0x30] sm:$0xff] %vm1807, %v4263
      %4305 = vst.msk [vmem:[#allocation3 + $0x38] sm:$0xff] %vm1807, %v4265
      %4306 = vst.msk [vmem:[#allocation3 + $0x40] sm:$0xff] %vm1807, %v4267
      %4307 = vst.msk [vmem:[#allocation3 + $0x48] sm:$0xff] %vm1807, %v4269
      %4308 = vst.msk [vmem:[#allocation3 + $0x50] sm:$0xff] %vm1807, %v4271
      %4309 = vst.msk [vmem:[#allocation3 + $0x58] sm:$0xff] %vm1807, %v4273
      %4310 = vst.msk [vmem:[#allocation3 + $0x60] sm:$0xff] %vm1807, %v4275
      %4311 = vst.msk [vmem:[#allocation3 + $0x68] sm:$0xff] %vm1807, %v4277
      %4312 = vst.msk [vmem:[#allocation3 + $0x70] sm:$0xff] %vm1807, %v4279
      %4313 = vst.msk [vmem:[#allocation3 + $0x78] sm:$0xff] %vm1807, %v4281
      %v4314 = vld [vmem:[#allocation3] sm:$0xff]
      %v4315 = vld [vmem:[#allocation3 + $0x8] sm:$0xff]
      %v4316 = vld [vmem:[#allocation3 + $0x10] sm:$0xff]
      %v4317 = vld [vmem:[#allocation3 + $0x18] sm:$0xff]
      %v4318 = vld [vmem:[#allocation3 + $0x20] sm:$0xff]
      %v4319 = vld [vmem:[#allocation3 + $0x28] sm:$0xff]
      %v4320 = vld [vmem:[#allocation3 + $0x30] sm:$0xff]
      %v4321 = vld [vmem:[#allocation3 + $0x38] sm:$0xff]
      %v4322 = vld [vmem:[#allocation3 + $0x40] sm:$0xff]
      %v4323 = vld [vmem:[#allocation3 + $0x48] sm:$0xff]
      %v4324 = vld [vmem:[#allocation3 + $0x50] sm:$0xff]
      %v4325 = vld [vmem:[#allocation3 + $0x58] sm:$0xff]
      %v4326 = vld [vmem:[#allocation3 + $0x60] sm:$0xff]
      %v4327 = vld [vmem:[#allocation3 + $0x68] sm:$0xff]
      %v4328 = vld [vmem:[#allocation3 + $0x70] sm:$0xff]
      %v4329 = vld [vmem:[#allocation3 + $0x78] sm:$0xff]
      %s4330 = scalar_lea.vmem %s1, 16
      %v4331 = vld [vmem:[%s4330] sm:$0xf]
      %v4332 = vld [vmem:[%s4330 + $0x4] sm:$0x3]
      %v4335 = vunpack.c.l.b16 %v4331
      %v4336 = vunpack.c.l.b16 %v4332
      %v4337 = vpack.c.b16 %v4336, %v4335
      %v4339 = vsel %vm2874, %v4314, 0
      %v4342 = vsel %vm2874, %v4315, 0
      %v4345 = vsel %vm2874, %v4316, 0
      %v4348 = vsel %vm2874, %v4317, 0
      %v4351 = vsel %vm2874, %v4318, 0
      %v4354 = vsel %vm2874, %v4319, 0
      %v4357 = vsel %vm2874, %v4320, 0
      %v4360 = vsel %vm2874, %v4321, 0
      %v4363 = vsel %vm2874, %v4322, 0
      %v4366 = vsel %vm2874, %v4323, 0
      %v4369 = vsel %vm2874, %v4324, 0
      %v4372 = vsel %vm2874, %v4325, 0
      %v4375 = vsel %vm2874, %v4326, 0
      %v4378 = vsel %vm2874, %v4327, 0
      %v4381 = vsel %vm2874, %v4328, 0
      %v4384 = vsel %vm2874, %v4329, 0
      %v4387 = vsel %vm2923, %v4337, 0
      %4389 = vmatprep.subr.bf16.mxu0 0
      %4390 = vmatpush1.bf16.msra.mxu0 %v4387
      %4391 = vmatprep.subr.bf16.mxu0 0
      %4392 = vmatpush1.bf16.msra.mxu0 0
      %4393 = vmatprep.subr.bf16.mxu0 0
      %4394 = vmatpush1.bf16.msra.mxu0 0
      %4395 = vmatprep.subr.bf16.mxu0 0
      %4396 = vmatpush1.bf16.msra.mxu0 0
      %4397 = vmatprep.subr.bf16.mxu0 0
      %4398 = vmatpush1.bf16.msra.mxu0 0
      %4399 = vmatprep.subr.bf16.mxu0 0
      %4400 = vmatpush1.bf16.msra.mxu0 0
      %4401 = vmatprep.subr.bf16.mxu0 0
      %4402 = vmatpush1.bf16.msra.mxu0 0
      %4403 = vmatprep.subr.bf16.mxu0 0
      %4404 = vmatpush1.bf16.msra.mxu0 0
      %4405 = vmatprep.subr.bf16.mxu0 0
      %4406 = vmatpush1.bf16.msra.mxu0 0
      %4407 = vmatprep.subr.bf16.mxu0 0
      %4408 = vmatpush1.bf16.msra.mxu0 0
      %4409 = vmatprep.subr.bf16.mxu0 0
      %4410 = vmatpush1.bf16.msra.mxu0 0
      %4411 = vmatprep.subr.bf16.mxu0 0
      %4412 = vmatpush1.bf16.msra.mxu0 0
      %4413 = vmatprep.subr.bf16.mxu0 0
      %4414 = vmatpush1.bf16.msra.mxu0 0
      %4415 = vmatprep.subr.bf16.mxu0 0
      %4416 = vmatpush1.bf16.msra.mxu0 0
      %4417 = vmatprep.subr.bf16.mxu0 0
      %4418 = vmatpush1.bf16.msra.mxu0 0
      %4419 = vmatprep.subr.bf16.mxu0 0
      %4420 = vmatpush1.bf16.msra.mxu0 0
      %4421 = vmatprep.mubr.bf16.mxu0 0
      %4422 = vmatmul.mubr.bf16.gmra.mrb[0].mxu0 %v4339
      %v4423 = vpop.f32.mrb[0].mxu0
      %v4424 = vadd.f32 0.0, %v4423
      %v4425 = vpop.f32.mrb[0].mxu0
      %v4426 = vpop.f32.mrb[0].mxu0
      %v4427 = vadd.f32 0.0, %v4426
      %v4428 = vpop.f32.mrb[0].mxu0
      %4429 = vmatprep.mubr.bf16.mxu0 0
      %4430 = vmatmul.mubr.bf16.gmra.mrb[0].mxu0 %v4342
      %v4431 = vpop.f32.mrb[0].mxu0
      %v4432 = vadd.f32 0.0, %v4431
      %v4433 = vpop.f32.mrb[0].mxu0
      %v4434 = vpop.f32.mrb[0].mxu0
      %v4435 = vadd.f32 0.0, %v4434
      %v4436 = vpop.f32.mrb[0].mxu0
      %4437 = vmatprep.mubr.bf16.mxu0 0
      %4438 = vmatmul.mubr.bf16.gmra.mrb[0].mxu0 %v4345
      %v4439 = vpop.f32.mrb[0].mxu0
      %v4440 = vadd.f32 0.0, %v4439
      %v4441 = vpop.f32.mrb[0].mxu0
      %v4442 = vpop.f32.mrb[0].mxu0
      %v4443 = vadd.f32 0.0, %v4442
      %v4444 = vpop.f32.mrb[0].mxu0
      %4445 = vmatprep.mubr.bf16.mxu0 0
      %4446 = vmatmul.mubr.bf16.gmra.mrb[0].mxu0 %v4348
      %v4447 = vpop.f32.mrb[0].mxu0
      %v4448 = vadd.f32 0.0, %v4447
      %v4449 = vpop.f32.mrb[0].mxu0
      %v4450 = vpop.f32.mrb[0].mxu0
      %v4451 = vadd.f32 0.0, %v4450
      %v4452 = vpop.f32.mrb[0].mxu0
      %4453 = vmatprep.mubr.bf16.mxu0 0
      %4454 = vmatmul.mubr.bf16.gmra.mrb[0].mxu0 %v4351
      %v4455 = vpop.f32.mrb[0].mxu0
      %v4456 = vadd.f32 0.0, %v4455
      %v4457 = vpop.f32.mrb[0].mxu0
      %v4458 = vpop.f32.mrb[0].mxu0
      %v4459 = vadd.f32 0.0, %v4458
      %v4460 = vpop.f32.mrb[0].mxu0
      %4461 = vmatprep.mubr.bf16.mxu0 0
      %4462 = vmatmul.mubr.bf16.gmra.mrb[0].mxu0 %v4354
      %v4463 = vpop.f32.mrb[0].mxu0
      %v4464 = vadd.f32 0.0, %v4463
      %v4465 = vpop.f32.mrb[0].mxu0
      %v4466 = vpop.f32.mrb[0].mxu0
      %v4467 = vadd.f32 0.0, %v4466
      %v4468 = vpop.f32.mrb[0].mxu0
      %4469 = vmatprep.mubr.bf16.mxu0 0
      %4470 = vmatmul.mubr.bf16.gmra.mrb[0].mxu0 %v4357
      %v4471 = vpop.f32.mrb[0].mxu0
      %v4472 = vadd.f32 0.0, %v4471
      %v4473 = vpop.f32.mrb[0].mxu0
      %v4474 = vpop.f32.mrb[0].mxu0
      %v4475 = vadd.f32 0.0, %v4474
      %v4476 = vpop.f32.mrb[0].mxu0
      %4477 = vmatprep.mubr.bf16.mxu0 0
      %4478 = vmatmul.mubr.bf16.gmra.mrb[0].mxu0 %v4360
      %v4479 = vpop.f32.mrb[0].mxu0
      %v4480 = vadd.f32 0.0, %v4479
      %v4481 = vpop.f32.mrb[0].mxu0
      %v4482 = vpop.f32.mrb[0].mxu0
      %v4483 = vadd.f32 0.0, %v4482
      %v4484 = vpop.f32.mrb[0].mxu0
      %4485 = vmatprep.mubr.bf16.mxu0 0
      %4486 = vmatmul.mubr.bf16.gmra.mrb[0].mxu0 %v4363
      %v4487 = vpop.f32.mrb[0].mxu0
      %v4488 = vadd.f32 0.0, %v4487
      %v4489 = vpop.f32.mrb[0].mxu0
      %v4490 = vpop.f32.mrb[0].mxu0
      %v4491 = vadd.f32 0.0, %v4490
      %v4492 = vpop.f32.mrb[0].mxu0
      %4493 = vmatprep.mubr.bf16.mxu0 0
      %4494 = vmatmul.mubr.bf16.gmra.mrb[0].mxu0 %v4366
      %v4495 = vpop.f32.mrb[0].mxu0
      %v4496 = vadd.f32 0.0, %v4495
      %v4497 = vpop.f32.mrb[0].mxu0
      %v4498 = vpop.f32.mrb[0].mxu0
      %v4499 = vadd.f32 0.0, %v4498
      %v4500 = vpop.f32.mrb[0].mxu0
      %4501 = vmatprep.mubr.bf16.mxu0 0
      %4502 = vmatmul.mubr.bf16.gmra.mrb[0].mxu0 %v4369
      %v4503 = vpop.f32.mrb[0].mxu0
      %v4504 = vadd.f32 0.0, %v4503
      %v4505 = vpop.f32.mrb[0].mxu0
      %v4506 = vpop.f32.mrb[0].mxu0
      %v4507 = vadd.f32 0.0, %v4506
      %v4508 = vpop.f32.mrb[0].mxu0
      %4509 = vmatprep.mubr.bf16.mxu0 0
      %4510 = vmatmul.mubr.bf16.gmra.mrb[0].mxu0 %v4372
      %v4511 = vpop.f32.mrb[0].mxu0
      %v4512 = vadd.f32 0.0, %v4511
      %v4513 = vpop.f32.mrb[0].mxu0
      %v4514 = vpop.f32.mrb[0].mxu0
      %v4515 = vadd.f32 0.0, %v4514
      %v4516 = vpop.f32.mrb[0].mxu0
      %4517 = vmatprep.mubr.bf16.mxu0 0
      %4518 = vmatmul.mubr.bf16.gmra.mrb[0].mxu0 %v4375
      %v4519 = vpop.f32.mrb[0].mxu0
      %v4520 = vadd.f32 0.0, %v4519
      %v4521 = vpop.f32.mrb[0].mxu0
      %v4522 = vpop.f32.mrb[0].mxu0
      %v4523 = vadd.f32 0.0, %v4522
      %v4524 = vpop.f32.mrb[0].mxu0
      %4525 = vmatprep.mubr.bf16.mxu0 0
      %4526 = vmatmul.mubr.bf16.gmra.mrb[0].mxu0 %v4378
      %v4527 = vpop.f32.mrb[0].mxu0
      %v4528 = vadd.f32 0.0, %v4527
      %v4529 = vpop.f32.mrb[0].mxu0
      %v4530 = vpop.f32.mrb[0].mxu0
      %v4531 = vadd.f32 0.0, %v4530
      %v4532 = vpop.f32.mrb[0].mxu0
      %4533 = vmatprep.mubr.bf16.mxu0 0
      %4534 = vmatmul.mubr.bf16.gmra.mrb[0].mxu0 %v4381
      %v4535 = vpop.f32.mrb[0].mxu0
      %v4536 = vadd.f32 0.0, %v4535
      %v4537 = vpop.f32.mrb[0].mxu0
      %v4538 = vpop.f32.mrb[0].mxu0
      %v4539 = vadd.f32 0.0, %v4538
      %v4540 = vpop.f32.mrb[0].mxu0
      %4541 = vmatprep.mubr.bf16.mxu0 0
      %4542 = vmatmul.mubr.bf16.gmra.mrb[0].mxu0 %v4384
      %v4543 = vpop.f32.mrb[0].mxu0
      %v4544 = vadd.f32 0.0, %v4543
      %v4545 = vpop.f32.mrb[0].mxu0
      %v4546 = vpop.f32.mrb[0].mxu0
      %v4547 = vadd.f32 0.0, %v4546
      %v4548 = vpop.f32.mrb[0].mxu0
      %4549 = vdwg.mxu0
      %v4550 = vadd.f32 %v3179, %v4424
      %v4551 = vadd.f32 %v3182, %v4427
      %v4552 = vadd.f32 %v3187, %v4432
      %v4553 = vadd.f32 %v3190, %v4435
      %v4554 = vadd.f32 %v3195, %v4440
      %v4555 = vadd.f32 %v3198, %v4443
      %v4556 = vadd.f32 %v3203, %v4448
      %v4557 = vadd.f32 %v3206, %v4451
      %v4558 = vadd.f32 %v3211, %v4456
      %v4559 = vadd.f32 %v3214, %v4459
      %v4560 = vadd.f32 %v3219, %v4464
      %v4561 = vadd.f32 %v3222, %v4467
      %v4562 = vadd.f32 %v3227, %v4472
      %v4563 = vadd.f32 %v3230, %v4475
      %v4564 = vadd.f32 %v3235, %v4480
      %v4565 = vadd.f32 %v3238, %v4483
      %v4566 = vadd.f32 %v3243, %v4488
      %v4567 = vadd.f32 %v3246, %v4491
      %v4568 = vadd.f32 %v3251, %v4496
      %v4569 = vadd.f32 %v3254, %v4499
      %v4570 = vadd.f32 %v3259, %v4504
      %v4571 = vadd.f32 %v3262, %v4507
      %v4572 = vadd.f32 %v3267, %v4512
      %v4573 = vadd.f32 %v3270, %v4515
      %v4574 = vadd.f32 %v3275, %v4520
      %v4575 = vadd.f32 %v3278, %v4523
      %v4576 = vadd.f32 %v3283, %v4528
      %v4577 = vadd.f32 %v3286, %v4531
      %v4578 = vadd.f32 %v3291, %v4536
      %v4579 = vadd.f32 %v3294, %v4539
      %v4580 = vadd.f32 %v3299, %v4544
      %v4581 = vadd.f32 %v3302, %v4547
      %v4582 = vsel %vm935, %v4550, 0.0
      %v4583 = vsel %vm935, %v4551, 0.0
      %v4584 = vadd.f32 %v4582, %v4583
      %v4585 = vsel %vm935, %v4552, 0.0
      %v4586 = vadd.f32 %v4584, %v4585
      %v4587 = vsel %vm935, %v4553, 0.0
      %v4588 = vadd.f32 %v4586, %v4587
      %v4589 = vsel %vm935, %v4554, 0.0
      %v4590 = vadd.f32 %v4588, %v4589
      %v4591 = vsel %vm935, %v4555, 0.0
      %v4592 = vadd.f32 %v4590, %v4591
      %v4593 = vsel %vm935, %v4556, 0.0
      %v4594 = vadd.f32 %v4592, %v4593
      %v4595 = vsel %vm935, %v4557, 0.0
      %v4596 = vadd.f32 %v4594, %v4595
      %v4597 = vsel %vm935, %v4558, 0.0
      %v4598 = vadd.f32 %v4596, %v4597
      %v4599 = vsel %vm935, %v4559, 0.0
      %v4600 = vadd.f32 %v4598, %v4599
      %v4601 = vsel %vm935, %v4560, 0.0
      %v4602 = vadd.f32 %v4600, %v4601
      %v4603 = vsel %vm935, %v4561, 0.0
      %v4604 = vadd.f32 %v4602, %v4603
      %v4605 = vsel %vm935, %v4562, 0.0
      %v4606 = vadd.f32 %v4604, %v4605
      %v4607 = vsel %vm935, %v4563, 0.0
      %v4608 = vadd.f32 %v4606, %v4607
      %v4609 = vsel %vm935, %v4564, 0.0
      %v4610 = vadd.f32 %v4608, %v4609
      %v4611 = vsel %vm935, %v4565, 0.0
      %v4612 = vadd.f32 %v4610, %v4611
      %v4613 = vsel %vm935, %v4566, 0.0
      %v4614 = vadd.f32 %v4612, %v4613
      %v4615 = vsel %vm935, %v4567, 0.0
      %v4616 = vadd.f32 %v4614, %v4615
      %v4617 = vsel %vm935, %v4568, 0.0
      %v4618 = vadd.f32 %v4616, %v4617
      %v4619 = vsel %vm935, %v4569, 0.0
      %v4620 = vadd.f32 %v4618, %v4619
      %v4621 = vsel %vm935, %v4570, 0.0
      %v4622 = vadd.f32 %v4620, %v4621
      %v4623 = vsel %vm935, %v4571, 0.0
      %v4624 = vadd.f32 %v4622, %v4623
      %v4625 = vsel %vm935, %v4572, 0.0
      %v4626 = vadd.f32 %v4624, %v4625
      %v4627 = vsel %vm935, %v4573, 0.0
      %v4628 = vadd.f32 %v4626, %v4627
      %v4629 = vsel %vm935, %v4574, 0.0
      %v4630 = vadd.f32 %v4628, %v4629
      %v4631 = vsel %vm935, %v4575, 0.0
      %v4632 = vadd.f32 %v4630, %v4631
      %v4633 = vsel %vm935, %v4576, 0.0
      %v4634 = vadd.f32 %v4632, %v4633
      %v4635 = vsel %vm935, %v4577, 0.0
      %v4636 = vadd.f32 %v4634, %v4635
      %v4637 = vsel %vm935, %v4578, 0.0
      %v4638 = vadd.f32 %v4636, %v4637
      %v4639 = vsel %vm935, %v4579, 0.0
      %v4640 = vadd.f32 %v4638, %v4639
      %v4641 = vsel %vm935, %v4580, 0.0
      %v4642 = vadd.f32 %v4640, %v4641
      %v4643 = vsel %vm935, %v4581, 0.0
      %v4644 = vadd.f32 %v4642, %v4643
      %v4645 = vrot.slane %v4644, 4
      %v4646 = vadd.f32 %v4644, %v4645
      %v4647 = vrot.slane %v4646, 2
      %v4648 = vadd.f32 %v4646, %v4647
      %v4649 = vrot.slane %v4648, 1
      %v4650 = vadd.f32 %v4648, %v4649
      %4651 = vst.msk [vmem:[%s211] sm:$0x1] %vm219, %v4650
      %v4652 = vmul.f32 %v4550, %v4550
      %v4653 = vmul.f32 %v4551, %v4551
      %v4654 = vmul.f32 %v4552, %v4552
      %v4655 = vmul.f32 %v4553, %v4553
      %v4656 = vmul.f32 %v4554, %v4554
      %v4657 = vmul.f32 %v4555, %v4555
      %v4658 = vmul.f32 %v4556, %v4556
      %v4659 = vmul.f32 %v4557, %v4557
      %v4660 = vmul.f32 %v4558, %v4558
      %v4661 = vmul.f32 %v4559, %v4559
      %v4662 = vmul.f32 %v4560, %v4560
      %v4663 = vmul.f32 %v4561, %v4561
      %v4664 = vmul.f32 %v4562, %v4562
      %v4665 = vmul.f32 %v4563, %v4563
      %v4666 = vmul.f32 %v4564, %v4564
      %v4667 = vmul.f32 %v4565, %v4565
      %v4668 = vmul.f32 %v4566, %v4566
      %v4669 = vmul.f32 %v4567, %v4567
      %v4670 = vmul.f32 %v4568, %v4568
      %v4671 = vmul.f32 %v4569, %v4569
      %v4672 = vmul.f32 %v4570, %v4570
      %v4673 = vmul.f32 %v4571, %v4571
      %v4674 = vmul.f32 %v4572, %v4572
      %v4675 = vmul.f32 %v4573, %v4573
      %v4676 = vmul.f32 %v4574, %v4574
      %v4677 = vmul.f32 %v4575, %v4575
      %v4678 = vmul.f32 %v4576, %v4576
      %v4679 = vmul.f32 %v4577, %v4577
      %v4680 = vmul.f32 %v4578, %v4578
      %v4681 = vmul.f32 %v4579, %v4579
      %v4682 = vmul.f32 %v4580, %v4580
      %v4683 = vmul.f32 %v4581, %v4581
      %v4684 = vsel %vm935, %v4652, 0.0
      %v4685 = vsel %vm935, %v4653, 0.0
      %v4686 = vadd.f32 %v4684, %v4685
      %v4687 = vsel %vm935, %v4654, 0.0
      %v4688 = vadd.f32 %v4686, %v4687
      %v4689 = vsel %vm935, %v4655, 0.0
      %v4690 = vadd.f32 %v4688, %v4689
      %v4691 = vsel %vm935, %v4656, 0.0
      %v4692 = vadd.f32 %v4690, %v4691
      %v4693 = vsel %vm935, %v4657, 0.0
      %v4694 = vadd.f32 %v4692, %v4693
      %v4695 = vsel %vm935, %v4658, 0.0
      %v4696 = vadd.f32 %v4694, %v4695
      %v4697 = vsel %vm935, %v4659, 0.0
      %v4698 = vadd.f32 %v4696, %v4697
      %v4699 = vsel %vm935, %v4660, 0.0
      %v4700 = vadd.f32 %v4698, %v4699
      %v4701 = vsel %vm935, %v4661, 0.0
      %v4702 = vadd.f32 %v4700, %v4701
      %v4703 = vsel %vm935, %v4662, 0.0
      %v4704 = vadd.f32 %v4702, %v4703
      %v4705 = vsel %vm935, %v4663, 0.0
      %v4706 = vadd.f32 %v4704, %v4705
      %v4707 = vsel %vm935, %v4664, 0.0
      %v4708 = vadd.f32 %v4706, %v4707
      %v4709 = vsel %vm935, %v4665, 0.0
      %v4710 = vadd.f32 %v4708, %v4709
      %v4711 = vsel %vm935, %v4666, 0.0
      %v4712 = vadd.f32 %v4710, %v4711
      %v4713 = vsel %vm935, %v4667, 0.0
      %v4714 = vadd.f32 %v4712, %v4713
      %v4715 = vsel %vm935, %v4668, 0.0
      %v4716 = vadd.f32 %v4714, %v4715
      %v4717 = vsel %vm935, %v4669, 0.0
      %v4718 = vadd.f32 %v4716, %v4717
      %v4719 = vsel %vm935, %v4670, 0.0
      %v4720 = vadd.f32 %v4718, %v4719
      %v4721 = vsel %vm935, %v4671, 0.0
      %v4722 = vadd.f32 %v4720, %v4721
      %v4723 = vsel %vm935, %v4672, 0.0
      %v4724 = vadd.f32 %v4722, %v4723
      %v4725 = vsel %vm935, %v4673, 0.0
      %v4726 = vadd.f32 %v4724, %v4725
      %v4727 = vsel %vm935, %v4674, 0.0
      %v4728 = vadd.f32 %v4726, %v4727
      %v4729 = vsel %vm935, %v4675, 0.0
      %v4730 = vadd.f32 %v4728, %v4729
      %v4731 = vsel %vm935, %v4676, 0.0
      %v4732 = vadd.f32 %v4730, %v4731
      %v4733 = vsel %vm935, %v4677, 0.0
      %v4734 = vadd.f32 %v4732, %v4733
      %v4735 = vsel %vm935, %v4678, 0.0
      %v4736 = vadd.f32 %v4734, %v4735
      %v4737 = vsel %vm935, %v4679, 0.0
      %v4738 = vadd.f32 %v4736, %v4737
      %v4739 = vsel %vm935, %v4680, 0.0
      %v4740 = vadd.f32 %v4738, %v4739
      %v4741 = vsel %vm935, %v4681, 0.0
      %v4742 = vadd.f32 %v4740, %v4741
      %v4743 = vsel %vm935, %v4682, 0.0
      %v4744 = vadd.f32 %v4742, %v4743
      %v4745 = vsel %vm935, %v4683, 0.0
      %v4746 = vadd.f32 %v4744, %v4745
      %v4747 = vrot.slane %v4746, 4
      %v4748 = vadd.f32 %v4746, %v4747
      %v4749 = vrot.slane %v4748, 2
      %v4750 = vadd.f32 %v4748, %v4749
      %v4751 = vrot.slane %v4750, 1
      %v4752 = vadd.f32 %v4750, %v4751
      %4753 = vst.msk [vmem:[%s214] sm:$0x1] %vm219, %v4752
      %v4754 = vpack.c.bf16 %v4551, %v4550
      %v4755 = vpack.c.bf16 %v4553, %v4552
      %v4756 = vpack.c.bf16 %v4555, %v4554
      %v4757 = vpack.c.bf16 %v4557, %v4556
      %v4758 = vpack.c.bf16 %v4559, %v4558
      %v4759 = vpack.c.bf16 %v4561, %v4560
      %v4760 = vpack.c.bf16 %v4563, %v4562
      %v4761 = vpack.c.bf16 %v4565, %v4564
      %v4762 = vpack.c.bf16 %v4567, %v4566
      %v4763 = vpack.c.bf16 %v4569, %v4568
      %v4764 = vpack.c.bf16 %v4571, %v4570
      %v4765 = vpack.c.bf16 %v4573, %v4572
      %v4766 = vpack.c.bf16 %v4575, %v4574
      %v4767 = vpack.c.bf16 %v4577, %v4576
      %v4768 = vpack.c.bf16 %v4579, %v4578
      %v4769 = vpack.c.bf16 %v4581, %v4580
      %v4786 = vunpack.c.l.b16 %v4754
      %v4787 = vunpack.c.h.b16 %v4754
      %v4788 = vunpack.c.l.b16 %v4755
      %v4789 = vunpack.c.h.b16 %v4755
      %v4790 = vunpack.c.l.b16 %v4756
      %v4791 = vunpack.c.h.b16 %v4756
      %v4792 = vunpack.c.l.b16 %v4757
      %v4793 = vunpack.c.h.b16 %v4757
      %v4794 = vunpack.c.l.b16 %v4758
      %v4795 = vunpack.c.h.b16 %v4758
      %v4796 = vunpack.c.l.b16 %v4759
      %v4797 = vunpack.c.h.b16 %v4759
      %v4798 = vunpack.c.l.b16 %v4760
      %v4799 = vunpack.c.h.b16 %v4760
      %v4800 = vunpack.c.l.b16 %v4761
      %v4801 = vunpack.c.h.b16 %v4761
      %v4802 = vunpack.c.l.b16 %v4762
      %v4803 = vunpack.c.h.b16 %v4762
      %v4804 = vunpack.c.l.b16 %v4763
      %v4805 = vunpack.c.h.b16 %v4763
      %v4806 = vunpack.c.l.b16 %v4764
      %v4807 = vunpack.c.h.b16 %v4764
      %v4808 = vunpack.c.l.b16 %v4765
      %v4809 = vunpack.c.h.b16 %v4765
      %v4810 = vunpack.c.l.b16 %v4766
      %v4811 = vunpack.c.h.b16 %v4766
      %v4812 = vunpack.c.l.b16 %v4767
      %v4813 = vunpack.c.h.b16 %v4767
      %v4814 = vunpack.c.l.b16 %v4768
      %v4815 = vunpack.c.h.b16 %v4768
      %v4816 = vunpack.c.l.b16 %v4769
      %v4817 = vunpack.c.h.b16 %v4769
      %v4818 = vpack.c.b16 %v4786, %v4786
      %v4819 = vpack.c.b16 %v4787, %v4787
      %v4820 = vpack.c.b16 %v4788, %v4788
      %v4821 = vpack.c.b16 %v4789, %v4789
      %v4822 = vpack.c.b16 %v4790, %v4790
      %v4823 = vpack.c.b16 %v4791, %v4791
      %v4824 = vpack.c.b16 %v4792, %v4792
      %v4825 = vpack.c.b16 %v4793, %v4793
      %v4826 = vpack.c.b16 %v4794, %v4794
      %v4827 = vpack.c.b16 %v4795, %v4795
      %v4828 = vpack.c.b16 %v4796, %v4796
      %v4829 = vpack.c.b16 %v4797, %v4797
      %v4830 = vpack.c.b16 %v4798, %v4798
      %v4831 = vpack.c.b16 %v4799, %v4799
      %v4832 = vpack.c.b16 %v4800, %v4800
      %v4833 = vpack.c.b16 %v4801, %v4801
      %v4834 = vpack.c.b16 %v4802, %v4802
      %v4835 = vpack.c.b16 %v4803, %v4803
      %v4836 = vpack.c.b16 %v4804, %v4804
      %v4837 = vpack.c.b16 %v4805, %v4805
      %v4838 = vpack.c.b16 %v4806, %v4806
      %v4839 = vpack.c.b16 %v4807, %v4807
      %v4840 = vpack.c.b16 %v4808, %v4808
      %v4841 = vpack.c.b16 %v4809, %v4809
      %v4842 = vpack.c.b16 %v4810, %v4810
      %v4843 = vpack.c.b16 %v4811, %v4811
      %v4844 = vpack.c.b16 %v4812, %v4812
      %v4845 = vpack.c.b16 %v4813, %v4813
      %v4846 = vpack.c.b16 %v4814, %v4814
      %v4847 = vpack.c.b16 %v4815, %v4815
      %v4848 = vpack.c.b16 %v4816, %v4816
      %v4849 = vpack.c.b16 %v4817, %v4817
      %4882 = vst.msk [vmem:[%s208] sm:$0xf] %vm216, %v4818
      %4883 = vst.msk [vmem:[%s208 + $0x4] sm:$0xf] %vm216, %v4819
      %4884 = vst.msk [vmem:[%s208 + $0x8] sm:$0xf] %vm216, %v4820
      %4885 = vst.msk [vmem:[%s208 + $0xc] sm:$0xf] %vm216, %v4821
      %4886 = vst.msk [vmem:[%s208 + $0x10] sm:$0xf] %vm216, %v4822
      %4887 = vst.msk [vmem:[%s208 + $0x14] sm:$0xf] %vm216, %v4823
      %4888 = vst.msk [vmem:[%s208 + $0x18] sm:$0xf] %vm216, %v4824
      %4889 = vst.msk [vmem:[%s208 + $0x1c] sm:$0xf] %vm216, %v4825
      %4890 = vst.msk [vmem:[%s208 + $0x20] sm:$0xf] %vm216, %v4826
      %4891 = vst.msk [vmem:[%s208 + $0x24] sm:$0xf] %vm216, %v4827
      %4892 = vst.msk [vmem:[%s208 + $0x28] sm:$0xf] %vm216, %v4828
      %4893 = vst.msk [vmem:[%s208 + $0x2c] sm:$0xf] %vm216, %v4829
      %4894 = vst.msk [vmem:[%s208 + $0x30] sm:$0xf] %vm216, %v4830
      %4895 = vst.msk [vmem:[%s208 + $0x34] sm:$0xf] %vm216, %v4831
      %4896 = vst.msk [vmem:[%s208 + $0x38] sm:$0xf] %vm216, %v4832
      %4897 = vst.msk [vmem:[%s208 + $0x3c] sm:$0xf] %vm216, %v4833
      %4898 = vst.msk [vmem:[%s208 + $0x40] sm:$0xf] %vm216, %v4834
      %4899 = vst.msk [vmem:[%s208 + $0x44] sm:$0xf] %vm216, %v4835
      %4900 = vst.msk [vmem:[%s208 + $0x48] sm:$0xf] %vm216, %v4836
      %4901 = vst.msk [vmem:[%s208 + $0x4c] sm:$0xf] %vm216, %v4837
      %4902 = vst.msk [vmem:[%s208 + $0x50] sm:$0xf] %vm216, %v4838
      %4903 = vst.msk [vmem:[%s208 + $0x54] sm:$0xf] %vm216, %v4839
      %4904 = vst.msk [vmem:[%s208 + $0x58] sm:$0xf] %vm216, %v4840
      %4905 = vst.msk [vmem:[%s208 + $0x5c] sm:$0xf] %vm216, %v4841
      %4906 = vst.msk [vmem:[%s208 + $0x60] sm:$0xf] %vm216, %v4842
      %4907 = vst.msk [vmem:[%s208 + $0x64] sm:$0xf] %vm216, %v4843
      %4908 = vst.msk [vmem:[%s208 + $0x68] sm:$0xf] %vm216, %v4844
      %4909 = vst.msk [vmem:[%s208 + $0x6c] sm:$0xf] %vm216, %v4845
      %4910 = vst.msk [vmem:[%s208 + $0x70] sm:$0xf] %vm216, %v4846
      %4911 = vst.msk [vmem:[%s208 + $0x74] sm:$0xf] %vm216, %v4847
      %4912 = vst.msk [vmem:[%s208 + $0x78] sm:$0xf] %vm216, %v4848
      %4913 = vst.msk [vmem:[%s208 + $0x7c] sm:$0xf] %vm216, %v4849
      %p4914 = scmp.lt.s32.totalorder %s16, 1
      %s4915 = scalar_select %p4914, %s16, 1
      %s4916 = smul.addr %s4915, 32
      %s4917 = smul.addr %s4916, 4
      %s4918 = scalar_lea.vmem %s2, %s4917
      %p4919 = scmp.lt.s32.totalorder %s16, 1
      %s4920 = scalar_select %p4919, %s16, 1
      %s4921 = scalar_lea.vmem %s3, %s4920
      %p4922 = scmp.lt.s32.totalorder %s16, 1
      %s4923 = scalar_select %p4922, %s16, 1
      %s4924 = scalar_lea.vmem %s4, %s4923
      // Predicated region
      $region29: #{residual_block_2d.3} parent=27 // pred_check
        %p4925 = pneg %p81
      $region30: #{residual_block_2d.3} parent=27 // pred_check_branch
        %4927 = sbr.rel (%p4925) target = $region32
      $region31: #{residual_block_2d.3} parent=27 // pred_region
        _
      $region32: #{residual_block_2d.3} parent=27 // pred_fallthru
        _
      // Predicated region
      $region33: #{residual_block_2d.3} parent=27 // pred_check
        %p4928 = pneg %p107
      $region34: #{residual_block_2d.3} parent=27 // pred_check_branch
        %4930 = sbr.rel (%p4928) target = $region36
      $region35: #{residual_block_2d.3} parent=27 // pred_region
        _
      $region36: #{residual_block_2d.3} parent=27 // pred_fallthru
        _
      // Predicated region
      $region37: #{residual_block_2d.3} parent=27 // pred_check
        %p4931 = pneg %p133
      $region38: #{residual_block_2d.3} parent=27 // pred_check_branch
        %4933 = sbr.rel (%p4931) target = $region40
      $region39: #{residual_block_2d.3} parent=27 // pred_region
        _
      $region40: #{residual_block_2d.3} parent=27 // pred_fallthru
        _
    $region28: #{residual_block_2d.3} parent=5 // pred_fallthru
      _
    %p4934 = scmp.le.s32.totalorder 2, %s11
    // Predicated region
    $region41: #{residual_block_2d.3} parent=5 // pred_check
      %p4935 = pneg %p4934
    $region42: #{residual_block_2d.3} parent=5 // pred_check_branch
      %4937 = sbr.rel (%p4935) target = $region44
    $region43: #{residual_block_2d.3} parent=5 // pred_region
      %s4938 = ssub.s32 %s11, 2
      // Predicated region
      $region45: #{residual_block_2d.3} parent=43 // pred_check
        %p4939 = pneg %p87
      $region46: #{residual_block_2d.3} parent=43 // pred_check_branch
        %4941 = sbr.rel (%p4939) target = $region48
      $region47: #{residual_block_2d.3} parent=43 // pred_region
        %p4942 = scmp.lt.s32.totalorder %s17, 1
        %s4943 = scalar_select %p4942, %s17, 1
        %s4944 = smul.addr %s4943, 32
        %s4945 = smul.addr %s4944, 4
        %s4946 = scalar_lea.vmem %s2, %s4945
      $region48: #{residual_block_2d.3} parent=43 // pred_fallthru
        _
      // Predicated region
      $region49: #{residual_block_2d.3} parent=43 // pred_check
        %p4947 = pneg %p113
      $region50: #{residual_block_2d.3} parent=43 // pred_check_branch
        %4949 = sbr.rel (%p4947) target = $region52
      $region51: #{residual_block_2d.3} parent=43 // pred_region
        %p4950 = scmp.lt.s32.totalorder %s17, 1
        %s4951 = scalar_select %p4950, %s17, 1
        %s4952 = scalar_lea.vmem %s3, %s4951
      $region52: #{residual_block_2d.3} parent=43 // pred_fallthru
        _
      // Predicated region
      $region53: #{residual_block_2d.3} parent=43 // pred_check
        %p4953 = pneg %p139
      $region54: #{residual_block_2d.3} parent=43 // pred_check_branch
        %4955 = sbr.rel (%p4953) target = $region56
      $region55: #{residual_block_2d.3} parent=43 // pred_region
        %p4956 = scmp.lt.s32.totalorder %s17, 1
        %s4957 = scalar_select %p4956, %s17, 1
        %s4958 = scalar_lea.vmem %s4, %s4957
      $region56: #{residual_block_2d.3} parent=43 // pred_fallthru
        _
    $region44: #{residual_block_2d.3} parent=5 // pred_fallthru
      _
  $region6: #{residual_block_2d.3} parent=0 // loop_footer
    %s15 = sadd.s32 1, %s11
  $region7: #{residual_block_2d.3} parent=0 // loop_footer_branch
    %10 = sbr.rel target = $region3
  $region8: #{residual_block_2d.3} parent=0 // loop_exit
    _

</llo_original>
